<compile_context>
chip_gen: v7x
topology: tpu7x:2x2x1
jax: 0.10.0
libtpu: 0.0.40
codegen_flags: <defaults>
</compile_context>

<pallas_src>
import jax
import jax.numpy as jnp
from jax.experimental import pallas as pl
from jax.experimental.pallas import tpu as pltpu

# Small, module-consistent sizes (original: nz=100, ngf=64, nc=3)
NZ, NGF, NC = 16, 8, 3
KSIZE = 4
BN_EPS = 1e-5
CPAD = 128        # padded output-channel width (lane-dense)
TM_CAP = 2048     # matmul row-tile cap


# ----------------------------- Pallas kernels -----------------------------

def _conv_bn_stats_kernel(a_ref, w_ref, y_ref, s_ref, q_ref):
    # (M, K) bf16 @ (K, 128) bf16 -> f32 output, plus fused per-channel
    # sum and sum-of-squares for training-mode BatchNorm.
    y = jnp.dot(a_ref[...], w_ref[...], preferred_element_type=jnp.float32)
    y_ref[...] = y
    s_ref[...] = jnp.sum(y, axis=0, keepdims=True)
    q_ref[...] = jnp.sum(y * y, axis=0, keepdims=True)


def pallas_conv_bn_stats(a, w):
    M, K = a.shape
    return pl.pallas_call(
        _conv_bn_stats_kernel,
        out_shape=(jax.ShapeDtypeStruct((M, CPAD), jnp.float32),
                   jax.ShapeDtypeStruct((1, CPAD), jnp.float32),
                   jax.ShapeDtypeStruct((1, CPAD), jnp.float32)),
        grid=(1,),
        in_specs=[pl.BlockSpec((M, K), lambda i: (0, 0)),
                  pl.BlockSpec((K, CPAD), lambda i: (0, 0))],
        out_specs=(pl.BlockSpec((M, CPAD), lambda i: (0, 0)),
                   pl.BlockSpec((1, CPAD), lambda i: (0, 0)),
                   pl.BlockSpec((1, CPAD), lambda i: (0, 0))),
        compiler_params=pltpu.CompilerParams(
            dimension_semantics=("arbitrary",)),
    )(a, w)


def _bn_relu_kernel(y_ref, scale_ref, shift_ref, o_ref):
    y = y_ref[...] * scale_ref[...] + shift_ref[...]
    o_ref[...] = jnp.maximum(y, 0.0).astype(o_ref.dtype)


def pallas_bn_relu(y, scale, shift):
    # Whole array in one block (<= ~1 MiB); emits bf16 for the next matmul.
    M, C = y.shape
    return pl.pallas_call(
        _bn_relu_kernel,
        out_shape=jax.ShapeDtypeStruct((M, C), jnp.bfloat16),
        grid=(1,),
        in_specs=[pl.BlockSpec((M, C), lambda i: (0, 0)),
                  pl.BlockSpec((1, C), lambda i: (0, 0)),
                  pl.BlockSpec((1, C), lambda i: (0, 0))],
        out_specs=pl.BlockSpec((M, C), lambda i: (0, 0)),
        compiler_params=pltpu.CompilerParams(
            dimension_semantics=("arbitrary",)),
    )(y, scale, shift)


def _conv_tanh_kernel(a_ref, w_ref, o_ref):
    y = jnp.dot(a_ref[...], w_ref[...], preferred_element_type=jnp.float32)
    o_ref[...] = jnp.tanh(y)


def pallas_conv_tanh(a, w):
    M, K = a.shape
    tm = M if M <= TM_CAP else TM_CAP
    while M % tm != 0:
        tm //= 2
    return pl.pallas_call(
        _conv_tanh_kernel,
        out_shape=jax.ShapeDtypeStruct((M, CPAD), jnp.float32),
        grid=(M // tm,),
        in_specs=[pl.BlockSpec((tm, K), lambda i: (i, 0)),
                  pl.BlockSpec((K, CPAD), lambda i: (0, 0))],
        out_specs=pl.BlockSpec((tm, CPAD), lambda i: (i, 0)),
        compiler_params=pltpu.CompilerParams(
            dimension_semantics=("parallel",)),
    )(a, w)


# ------------------------------ JAX glue -----------------------------------

def _dilate_pad_nhwc(x, stride, pad):
    # x: (N, H, W, C) -> zero-insert upsample by `stride`, pad spatially.
    n, h, w, c = x.shape
    if stride > 1:
        hd, wd = (h - 1) * stride + 1, (w - 1) * stride + 1
        xd = jnp.zeros((n, hd, wd, c), x.dtype)
        xd = xd.at[:, ::stride, ::stride, :].set(x)
    else:
        xd = x
    return jnp.pad(xd, ((0, 0), (pad, pad), (pad, pad), (0, 0)))


def _im2col_nhwc(xp, k, h_out, w_out):
    # xp: (N, Hp, Wp, C) -> (N*Ho*Wo, k*k*C), column order (ky, kx, ci).
    # Channels-last + tap axis next to C => stack + reshape only, no transpose.
    n, c = xp.shape[0], xp.shape[3]
    taps = [xp[:, ky:ky + h_out, kx:kx + w_out, :]
            for ky in range(k) for kx in range(k)]
    pat = jnp.stack(taps, axis=3)                  # (N, Ho, Wo, k*k, C)
    return pat.reshape(n * h_out * w_out, k * k * c)


def _weight_matrix(w_t, k):
    # w_t: ConvTranspose2d weight (C_in, C_out, k, k) -> equivalent forward
    # conv weight as (k*k*C_in, CPAD) bf16, row order (ky, kx, ci), taps
    # spatially flipped, output channels zero-padded to 128 lanes.
    c_in, c_out = w_t.shape[:2]
    wf = w_t[:, :, ::-1, ::-1]                     # spatial flip
    wm = wf.transpose(2, 3, 0, 1).reshape(k * k * c_in, c_out)
    wm = jnp.pad(wm, ((0, 0), (0, CPAD - c_out)))
    return wm.astype(jnp.bfloat16)


def conv_transpose_patches(x, stride, padding):
    # x: (N, H, W, C) bf16 channels-last activation.
    n, h, w, c = x.shape
    h_out = (h - 1) * stride - 2 * padding + KSIZE
    w_out = (w - 1) * stride - 2 * padding + KSIZE
    xp = _dilate_pad_nhwc(x, stride, KSIZE - 1 - padding)
    a = _im2col_nhwc(xp, KSIZE, h_out, w_out)      # (M, k*k*C) bf16
    return a, (n, h_out, w_out)


def init_params(key):
    specs = [  # (C_in, C_out, stride, padding)
        (NZ,      NGF * 8, 1, 0),
        (NGF * 8, NGF * 4, 2, 1),
        (NGF * 4, NGF * 2, 2, 1),
        (NGF * 2, NGF,     2, 1),
        (NGF,     NC,      2, 1),
    ]
    params = []
    for i, (ci, co, s, p) in enumerate(specs):
        key, wk = jax.random.split(key)
        w = 0.05 * jax.random.normal(wk, (ci, co, KSIZE, KSIZE), jnp.float32)
        gamma = jnp.ones((co,), jnp.float32)   # PyTorch BN default init
        beta = jnp.zeros((co,), jnp.float32)
        params.append(dict(w=w, gamma=gamma, beta=beta, stride=s, pad=p,
                           has_bn=(i < 4)))
    return params


def generator_forward(params, z):
    # z: (N, NZ, 1, 1) NCHW -> channels-last bf16.
    x = z.transpose(0, 2, 3, 1).astype(jnp.bfloat16)

    for layer in params[:-1]:
        a, (n, ho, wo) = conv_transpose_patches(x, layer["stride"],
                                                layer["pad"])
        wm = _weight_matrix(layer["w"], KSIZE)
        y, s, q = pallas_conv_bn_stats(a, wm)        # (M, 128) f32 + stats
        m = y.shape[0]
        mean = s / m
        var = jnp.maximum(q / m - mean * mean, 0.0)  # biased var, clamped >= 0
        c_out = layer["w"].shape[1]
        gamma = jnp.pad(layer["gamma"], (0, CPAD - c_out))   # pad lanes -> 0
        beta = jnp.pad(layer["beta"], (0, CPAD - c_out))
        scale = gamma[None, :] * jax.lax.rsqrt(var + BN_EPS)
        shift = beta[None, :] - mean * scale
        xn = pallas_bn_relu(y, scale, shift)         # (M, 128) bf16
        x = xn[:, :c_out].reshape(n, ho, wo, c_out)  # drop pad lanes

    last = params[-1]
    a, (n, ho, wo) = conv_transpose_patches(x, last["stride"], last["pad"])
    wm = _weight_matrix(last["w"], KSIZE)
    y = pallas_conv_tanh(a, wm)                      # (M, 128) f32
    c_out = last["w"].shape[1]
    out = y[:, :c_out].reshape(n, ho, wo, c_out)
    return out.transpose(0, 3, 1, 2)                 # (N, nc, 64, 64) NCHW


if __name__ == "__main__":
    key = jax.random.PRNGKey(0)
    key, zk = jax.random.split(key)
    params = init_params(key)
    z = jax.random.normal(zk, (2, NZ, 1, 1), jnp.float32)

    fwd = jax.jit(lambda zz: generator_forward(params, zz))
    out = jax.block_until_ready(fwd(z))

    assert out.shape == (2, NC, 64, 64), out.shape
    assert bool(jnp.all(jnp.isfinite(out)))
    assert bool(jnp.all(jnp.abs(out) <= 1.0 + 1e-6))  # tanh range
    print("KERNEL_OK")
</pallas_src>

<mosaic_0001>
module attributes {stable_mosaic.version = 11 : i64} {
  func.func @_conv_bn_stats_kernel(%arg0: i32, %arg1: memref<32x256xbf16, #tpu.memory_space<vmem>>, %arg2: memref<256x128xbf16, #tpu.memory_space<vmem>>, %arg3: memref<32x128xf32, #tpu.memory_space<vmem>>, %arg4: memref<1x128xf32, #tpu.memory_space<vmem>>, %arg5: memref<1x128xf32, #tpu.memory_space<vmem>>) attributes {dimension_semantics = [#tpu.dimension_semantics<arbitrary>], iteration_bounds = array<i64: 1>, scalar_prefetch = 0 : i64, scratch_operands = 0 : i64, tpu.core_type = #tpu.core_type<tc>, window_params = [{pipeline_mode = #tpu.pipeline_mode<synchronous>, transform_indices = @transform_0, window_bounds = array<i64: 32, 256>}, {pipeline_mode = #tpu.pipeline_mode<synchronous>, transform_indices = @transform_1, window_bounds = array<i64: 256, 128>}, {pipeline_mode = #tpu.pipeline_mode<synchronous>, transform_indices = @transform_2, window_bounds = array<i64: 32, 128>}, {pipeline_mode = #tpu.pipeline_mode<synchronous>, transform_indices = @transform_3, window_bounds = array<i64: 1, 128>}, {pipeline_mode = #tpu.pipeline_mode<synchronous>, transform_indices = @transform_4, window_bounds = array<i64: 1, 128>}]} {
    %c0 = arith.constant 0 : index
    %c0_0 = arith.constant 0 : index
    %0 = vector.load %arg1[%c0, %c0_0] : memref<32x256xbf16, #tpu.memory_space<vmem>>, vector<32x256xbf16>
    %c0_1 = arith.constant 0 : index
    %c0_2 = arith.constant 0 : index
    %1 = vector.load %arg2[%c0_1, %c0_2] : memref<256x128xbf16, #tpu.memory_space<vmem>>, vector<256x128xbf16>
    %cst = arith.constant dense<0.000000e+00> : vector<32x128xf32>
    %2 = tpu.matmul %0, %1, %cst {dimension_numbers = #tpu.dot_dimension_numbers<[1], [0], [0], [1], [0, 0, 1, 1], [], []>} : vector<32x256xbf16>, vector<256x128xbf16>, vector<32x128xf32> -> vector<32x128xf32>
    %c0_3 = arith.constant 0 : index
    %c0_4 = arith.constant 0 : index
    %3 = vector.load %arg3[%c0_3, %c0_4] : memref<32x128xf32, #tpu.memory_space<vmem>>, vector<32x128xf32>
    tpu.vector_store %arg3[%c0_3, %c0_4], %2 {strides = array<i32>} : memref<32x128xf32, #tpu.memory_space<vmem>>, vector<32x128xf32>,
    %cst_5 = arith.constant dense<0.000000e+00> : vector<128xf32>
    %4 = vector.multi_reduction <add>, %2, %cst_5 [0] : vector<32x128xf32> to vector<128xf32>
    %5 = vector.shape_cast %4 : vector<128xf32> to vector<1x128xf32>
    %c0_6 = arith.constant 0 : index
    %c0_7 = arith.constant 0 : index
    %6 = vector.load %arg4[%c0_6, %c0_7] : memref<1x128xf32, #tpu.memory_space<vmem>>, vector<1x128xf32>
    tpu.vector_store %arg4[%c0_6, %c0_7], %5 {strides = array<i32>} : memref<1x128xf32, #tpu.memory_space<vmem>>, vector<1x128xf32>,
    %7 = arith.mulf %2, %2 : vector<32x128xf32>
    %cst_8 = arith.constant dense<0.000000e+00> : vector<128xf32>
    %8 = vector.multi_reduction <add>, %7, %cst_8 [0] : vector<32x128xf32> to vector<128xf32>
    %9 = vector.shape_cast %8 : vector<128xf32> to vector<1x128xf32>
    %c0_9 = arith.constant 0 : index
    %c0_10 = arith.constant 0 : index
    %10 = vector.load %arg5[%c0_9, %c0_10] : memref<1x128xf32, #tpu.memory_space<vmem>>, vector<1x128xf32>
    tpu.vector_store %arg5[%c0_9, %c0_10], %9 {strides = array<i32>} : memref<1x128xf32, #tpu.memory_space<vmem>>, vector<1x128xf32>,
    return
  }
  func.func @transform_0(%arg0: i32) -> (i32, i32) {
    %c0_i32 = arith.constant 0 : i32
    %c0_i32_0 = arith.constant 0 : i32
    %c0_i32_1 = arith.constant 0 : i32
    return %c0_i32, %c0_i32_0 : i32, i32
  }
  func.func @transform_1(%arg0: i32) -> (i32, i32) {
    %c0_i32 = arith.constant 0 : i32
    %c0_i32_0 = arith.constant 0 : i32
    %c0_i32_1 = arith.constant 0 : i32
    return %c0_i32, %c0_i32_0 : i32, i32
  }
  func.func @transform_2(%arg0: i32) -> (i32, i32) {
    %c0_i32 = arith.constant 0 : i32
    %c0_i32_0 = arith.constant 0 : i32
    %c0_i32_1 = arith.constant 0 : i32
    return %c0_i32, %c0_i32_0 : i32, i32
  }
  func.func @transform_3(%arg0: i32) -> (i32, i32) {
    %c0_i32 = arith.constant 0 : i32
    %c0_i32_0 = arith.constant 0 : i32
    %c0_i32_1 = arith.constant 0 : i32
    return %c0_i32, %c0_i32_0 : i32, i32
  }
  func.func @transform_4(%arg0: i32) -> (i32, i32) {
    %c0_i32 = arith.constant 0 : i32
    %c0_i32_0 = arith.constant 0 : i32
    %c0_i32_1 = arith.constant 0 : i32
    return %c0_i32, %c0_i32_0 : i32, i32
  }
}

module attributes {stable_mosaic.version = 11 : i64} {
  func.func @_bn_relu_kernel(%arg0: i32, %arg1: memref<32x128xf32, #tpu.memory_space<vmem>>, %arg2: memref<1x128xf32, #tpu.memory_space<vmem>>, %arg3: memref<1x128xf32, #tpu.memory_space<vmem>>, %arg4: memref<32x128xbf16, #tpu.memory_space<vmem>>) attributes {dimension_semantics = [#tpu.dimension_semantics<arbitrary>], iteration_bounds = array<i64: 1>, scalar_prefetch = 0 : i64, scratch_operands = 0 : i64, tpu.core_type = #tpu.core_type<tc>, window_params = [{pipeline_mode = #tpu.pipeline_mode<synchronous>, transform_indices = @transform_0, window_bounds = array<i64: 32, 128>}, {pipeline_mode = #tpu.pipeline_mode<synchronous>, transform_indices = @transform_1, window_bounds = array<i64: 1, 128>}, {pipeline_mode = #tpu.pipeline_mode<synchronous>, transform_indices = @transform_2, window_bounds = array<i64: 1, 128>}, {pipeline_mode = #tpu.pipeline_mode<synchronous>, transform_indices = @transform_3, window_bounds = array<i64: 32, 128>}]} {
    %c0 = arith.constant 0 : index
    %c0_0 = arith.constant 0 : index
    %0 = vector.load %arg1[%c0, %c0_0] : memref<32x128xf32, #tpu.memory_space<vmem>>, vector<32x128xf32>
    %c0_1 = arith.constant 0 : index
    %c0_2 = arith.constant 0 : index
    %1 = vector.load %arg2[%c0_1, %c0_2] : memref<1x128xf32, #tpu.memory_space<vmem>>, vector<1x128xf32>
    %2 = vector.broadcast %1 : vector<1x128xf32> to vector<32x128xf32>
    %3 = arith.mulf %0, %2 : vector<32x128xf32>
    %c0_3 = arith.constant 0 : index
    %c0_4 = arith.constant 0 : index
    %4 = vector.load %arg3[%c0_3, %c0_4] : memref<1x128xf32, #tpu.memory_space<vmem>>, vector<1x128xf32>
    %5 = vector.broadcast %4 : vector<1x128xf32> to vector<32x128xf32>
    %6 = arith.addf %3, %5 : vector<32x128xf32>
    %cst = arith.constant 0.000000e+00 : f32
    %7 = vector.broadcast %cst : f32 to vector<32x128xf32>
    %8 = arith.maximumf %6, %7 : vector<32x128xf32>
    %9 = arith.truncf %8 : vector<32x128xf32> to vector<32x128xbf16>
    %c0_5 = arith.constant 0 : index
    %c0_6 = arith.constant 0 : index
    %10 = vector.load %arg4[%c0_5, %c0_6] : memref<32x128xbf16, #tpu.memory_space<vmem>>, vector<32x128xbf16>
    tpu.vector_store %arg4[%c0_5, %c0_6], %9 {strides = array<i32>} : memref<32x128xbf16, #tpu.memory_space<vmem>>, vector<32x128xbf16>,
    return
  }
  func.func @transform_0(%arg0: i32) -> (i32, i32) {
    %c0_i32 = arith.constant 0 : i32
    %c0_i32_0 = arith.constant 0 : i32
    %c0_i32_1 = arith.constant 0 : i32
    return %c0_i32, %c0_i32_0 : i32, i32
  }
  func.func @transform_1(%arg0: i32) -> (i32, i32) {
    %c0_i32 = arith.constant 0 : i32
    %c0_i32_0 = arith.constant 0 : i32
    %c0_i32_1 = arith.constant 0 : i32
    return %c0_i32, %c0_i32_0 : i32, i32
  }
  func.func @transform_2(%arg0: i32) -> (i32, i32) {
    %c0_i32 = arith.constant 0 : i32
    %c0_i32_0 = arith.constant 0 : i32
    %c0_i32_1 = arith.constant 0 : i32
    return %c0_i32, %c0_i32_0 : i32, i32
  }
  func.func @transform_3(%arg0: i32) -> (i32, i32) {
    %c0_i32 = arith.constant 0 : i32
    %c0_i32_0 = arith.constant 0 : i32
    %c0_i32_1 = arith.constant 0 : i32
    return %c0_i32, %c0_i32_0 : i32, i32
  }
}

module attributes {stable_mosaic.version = 11 : i64} {
  func.func @_conv_bn_stats_kernel(%arg0: i32, %arg1: memref<128x1024xbf16, #tpu.memory_space<vmem>>, %arg2: memref<1024x128xbf16, #tpu.memory_space<vmem>>, %arg3: memref<128x128xf32, #tpu.memory_space<vmem>>, %arg4: memref<1x128xf32, #tpu.memory_space<vmem>>, %arg5: memref<1x128xf32, #tpu.memory_space<vmem>>) attributes {dimension_semantics = [#tpu.dimension_semantics<arbitrary>], iteration_bounds = array<i64: 1>, scalar_prefetch = 0 : i64, scratch_operands = 0 : i64, tpu.core_type = #tpu.core_type<tc>, window_params = [{pipeline_mode = #tpu.pipeline_mode<synchronous>, transform_indices = @transform_0, window_bounds = array<i64: 128, 1024>}, {pipeline_mode = #tpu.pipeline_mode<synchronous>, transform_indices = @transform_1, window_bounds = array<i64: 1024, 128>}, {pipeline_mode = #tpu.pipeline_mode<synchronous>, transform_indices = @transform_2, window_bounds = array<i64: 128, 128>}, {pipeline_mode = #tpu.pipeline_mode<synchronous>, transform_indices = @transform_3, window_bounds = array<i64: 1, 128>}, {pipeline_mode = #tpu.pipeline_mode<synchronous>, transform_indices = @transform_4, window_bounds = array<i64: 1, 128>}]} {
    %c0 = arith.constant 0 : index
    %c0_0 = arith.constant 0 : index
    %0 = vector.load %arg1[%c0, %c0_0] : memref<128x1024xbf16, #tpu.memory_space<vmem>>, vector<128x1024xbf16>
    %c0_1 = arith.constant 0 : index
    %c0_2 = arith.constant 0 : index
    %1 = vector.load %arg2[%c0_1, %c0_2] : memref<1024x128xbf16, #tpu.memory_space<vmem>>, vector<1024x128xbf16>
    %cst = arith.constant dense<0.000000e+00> : vector<128x128xf32>
    %2 = tpu.matmul %0, %1, %cst {dimension_numbers = #tpu.dot_dimension_numbers<[1], [0], [0], [1], [0, 0, 1, 1], [], []>} : vector<128x1024xbf16>, vector<1024x128xbf16>, vector<128x128xf32> -> vector<128x128xf32>
    %c0_3 = arith.constant 0 : index
    %c0_4 = arith.constant 0 : index
    %3 = vector.load %arg3[%c0_3, %c0_4] : memref<128x128xf32, #tpu.memory_space<vmem>>, vector<128x128xf32>
    tpu.vector_store %arg3[%c0_3, %c0_4], %2 {strides = array<i32>} : memref<128x128xf32, #tpu.memory_space<vmem>>, vector<128x128xf32>,
    %cst_5 = arith.constant dense<0.000000e+00> : vector<128xf32>
    %4 = vector.multi_reduction <add>, %2, %cst_5 [0] : vector<128x128xf32> to vector<128xf32>
    %5 = vector.shape_cast %4 : vector<128xf32> to vector<1x128xf32>
    %c0_6 = arith.constant 0 : index
    %c0_7 = arith.constant 0 : index
    %6 = vector.load %arg4[%c0_6, %c0_7] : memref<1x128xf32, #tpu.memory_space<vmem>>, vector<1x128xf32>
    tpu.vector_store %arg4[%c0_6, %c0_7], %5 {strides = array<i32>} : memref<1x128xf32, #tpu.memory_space<vmem>>, vector<1x128xf32>,
    %7 = arith.mulf %2, %2 : vector<128x128xf32>
    %cst_8 = arith.constant dense<0.000000e+00> : vector<128xf32>
    %8 = vector.multi_reduction <add>, %7, %cst_8 [0] : vector<128x128xf32> to vector<128xf32>
    %9 = vector.shape_cast %8 : vector<128xf32> to vector<1x128xf32>
    %c0_9 = arith.constant 0 : index
    %c0_10 = arith.constant 0 : index
    %10 = vector.load %arg5[%c0_9, %c0_10] : memref<1x128xf32, #tpu.memory_space<vmem>>, vector<1x128xf32>
    tpu.vector_store %arg5[%c0_9, %c0_10], %9 {strides = array<i32>} : memref<1x128xf32, #tpu.memory_space<vmem>>, vector<1x128xf32>,
    return
  }
  func.func @transform_0(%arg0: i32) -> (i32, i32) {
    %c0_i32 = arith.constant 0 : i32
    %c0_i32_0 = arith.constant 0 : i32
    %c0_i32_1 = arith.constant 0 : i32
    return %c0_i32, %c0_i32_0 : i32, i32
  }
  func.func @transform_1(%arg0: i32) -> (i32, i32) {
    %c0_i32 = arith.constant 0 : i32
    %c0_i32_0 = arith.constant 0 : i32
    %c0_i32_1 = arith.constant 0 : i32
    return %c0_i32, %c0_i32_0 : i32, i32
  }
  func.func @transform_2(%arg0: i32) -> (i32, i32) {
    %c0_i32 = arith.constant 0 : i32
    %c0_i32_0 = arith.constant 0 : i32
    %c0_i32_1 = arith.constant 0 : i32
    return %c0_i32, %c0_i32_0 : i32, i32
  }
  func.func @transform_3(%arg0: i32) -> (i32, i32) {
    %c0_i32 = arith.constant 0 : i32
    %c0_i32_0 = arith.constant 0 : i32
    %c0_i32_1 = arith.constant 0 : i32
    return %c0_i32, %c0_i32_0 : i32, i32
  }
  func.func @transform_4(%arg0: i32) -> (i32, i32) {
    %c0_i32 = arith.constant 0 : i32
    %c0_i32_0 = arith.constant 0 : i32
    %c0_i32_1 = arith.constant 0 : i32
    return %c0_i32, %c0_i32_0 : i32, i32
  }
}

module attributes {stable_mosaic.version = 11 : i64} {
  func.func @_bn_relu_kernel(%arg0: i32, %arg1: memref<128x128xf32, #tpu.memory_space<vmem>>, %arg2: memref<1x128xf32, #tpu.memory_space<vmem>>, %arg3: memref<1x128xf32, #tpu.memory_space<vmem>>, %arg4: memref<128x128xbf16, #tpu.memory_space<vmem>>) attributes {dimension_semantics = [#tpu.dimension_semantics<arbitrary>], iteration_bounds = array<i64: 1>, scalar_prefetch = 0 : i64, scratch_operands = 0 : i64, tpu.core_type = #tpu.core_type<tc>, window_params = [{pipeline_mode = #tpu.pipeline_mode<synchronous>, transform_indices = @transform_0, window_bounds = array<i64: 128, 128>}, {pipeline_mode = #tpu.pipeline_mode<synchronous>, transform_indices = @transform_1, window_bounds = array<i64: 1, 128>}, {pipeline_mode = #tpu.pipeline_mode<synchronous>, transform_indices = @transform_2, window_bounds = array<i64: 1, 128>}, {pipeline_mode = #tpu.pipeline_mode<synchronous>, transform_indices = @transform_3, window_bounds = array<i64: 128, 128>}]} {
    %c0 = arith.constant 0 : index
    %c0_0 = arith.constant 0 : index
    %0 = vector.load %arg1[%c0, %c0_0] : memref<128x128xf32, #tpu.memory_space<vmem>>, vector<128x128xf32>
    %c0_1 = arith.constant 0 : index
    %c0_2 = arith.constant 0 : index
    %1 = vector.load %arg2[%c0_1, %c0_2] : memref<1x128xf32, #tpu.memory_space<vmem>>, vector<1x128xf32>
    %2 = vector.broadcast %1 : vector<1x128xf32> to vector<128x128xf32>
    %3 = arith.mulf %0, %2 : vector<128x128xf32>
    %c0_3 = arith.constant 0 : index
    %c0_4 = arith.constant 0 : index
    %4 = vector.load %arg3[%c0_3, %c0_4] : memref<1x128xf32, #tpu.memory_space<vmem>>, vector<1x128xf32>
    %5 = vector.broadcast %4 : vector<1x128xf32> to vector<128x128xf32>
    %6 = arith.addf %3, %5 : vector<128x128xf32>
    %cst = arith.constant 0.000000e+00 : f32
    %7 = vector.broadcast %cst : f32 to vector<128x128xf32>
    %8 = arith.maximumf %6, %7 : vector<128x128xf32>
    %9 = arith.truncf %8 : vector<128x128xf32> to vector<128x128xbf16>
    %c0_5 = arith.constant 0 : index
    %c0_6 = arith.constant 0 : index
    %10 = vector.load %arg4[%c0_5, %c0_6] : memref<128x128xbf16, #tpu.memory_space<vmem>>, vector<128x128xbf16>
    tpu.vector_store %arg4[%c0_5, %c0_6], %9 {strides = array<i32>} : memref<128x128xbf16, #tpu.memory_space<vmem>>, vector<128x128xbf16>,
    return
  }
  func.func @transform_0(%arg0: i32) -> (i32, i32) {
    %c0_i32 = arith.constant 0 : i32
    %c0_i32_0 = arith.constant 0 : i32
    %c0_i32_1 = arith.constant 0 : i32
    return %c0_i32, %c0_i32_0 : i32, i32
  }
  func.func @transform_1(%arg0: i32) -> (i32, i32) {
    %c0_i32 = arith.constant 0 : i32
    %c0_i32_0 = arith.constant 0 : i32
    %c0_i32_1 = arith.constant 0 : i32
    return %c0_i32, %c0_i32_0 : i32, i32
  }
  func.func @transform_2(%arg0: i32) -> (i32, i32) {
    %c0_i32 = arith.constant 0 : i32
    %c0_i32_0 = arith.constant 0 : i32
    %c0_i32_1 = arith.constant 0 : i32
    return %c0_i32, %c0_i32_0 : i32, i32
  }
  func.func @transform_3(%arg0: i32) -> (i32, i32) {
    %c0_i32 = arith.constant 0 : i32
    %c0_i32_0 = arith.constant 0 : i32
    %c0_i32_1 = arith.constant 0 : i32
    return %c0_i32, %c0_i32_0 : i32, i32
  }
}

module attributes {stable_mosaic.version = 11 : i64} {
  func.func @_conv_bn_stats_kernel(%arg0: i32, %arg1: memref<512x512xbf16, #tpu.memory_space<vmem>>, %arg2: memref<512x128xbf16, #tpu.memory_space<vmem>>, %arg3: memref<512x128xf32, #tpu.memory_space<vmem>>, %arg4: memref<1x128xf32, #tpu.memory_space<vmem>>, %arg5: memref<1x128xf32, #tpu.memory_space<vmem>>) attributes {dimension_semantics = [#tpu.dimension_semantics<arbitrary>], iteration_bounds = array<i64: 1>, scalar_prefetch = 0 : i64, scratch_operands = 0 : i64, tpu.core_type = #tpu.core_type<tc>, window_params = [{pipeline_mode = #tpu.pipeline_mode<synchronous>, transform_indices = @transform_0, window_bounds = array<i64: 512, 512>}, {pipeline_mode = #tpu.pipeline_mode<synchronous>, transform_indices = @transform_1, window_bounds = array<i64: 512, 128>}, {pipeline_mode = #tpu.pipeline_mode<synchronous>, transform_indices = @transform_2, window_bounds = array<i64: 512, 128>}, {pipeline_mode = #tpu.pipeline_mode<synchronous>, transform_indices = @transform_3, window_bounds = array<i64: 1, 128>}, {pipeline_mode = #tpu.pipeline_mode<synchronous>, transform_indices = @transform_4, window_bounds = array<i64: 1, 128>}]} {
    %c0 = arith.constant 0 : index
    %c0_0 = arith.constant 0 : index
    %0 = vector.load %arg1[%c0, %c0_0] : memref<512x512xbf16, #tpu.memory_space<vmem>>, vector<512x512xbf16>
    %c0_1 = arith.constant 0 : index
    %c0_2 = arith.constant 0 : index
    %1 = vector.load %arg2[%c0_1, %c0_2] : memref<512x128xbf16, #tpu.memory_space<vmem>>, vector<512x128xbf16>
    %cst = arith.constant dense<0.000000e+00> : vector<512x128xf32>
    %2 = tpu.matmul %0, %1, %cst {dimension_numbers = #tpu.dot_dimension_numbers<[1], [0], [0], [1], [0, 0, 1, 1], [], []>} : vector<512x512xbf16>, vector<512x128xbf16>, vector<512x128xf32> -> vector<512x128xf32>
    %c0_3 = arith.constant 0 : index
    %c0_4 = arith.constant 0 : index
    %3 = vector.load %arg3[%c0_3, %c0_4] : memref<512x128xf32, #tpu.memory_space<vmem>>, vector<512x128xf32>
    tpu.vector_store %arg3[%c0_3, %c0_4], %2 {strides = array<i32>} : memref<512x128xf32, #tpu.memory_space<vmem>>, vector<512x128xf32>,
    %cst_5 = arith.constant dense<0.000000e+00> : vector<128xf32>
    %4 = vector.multi_reduction <add>, %2, %cst_5 [0] : vector<512x128xf32> to vector<128xf32>
    %5 = vector.shape_cast %4 : vector<128xf32> to vector<1x128xf32>
    %c0_6 = arith.constant 0 : index
    %c0_7 = arith.constant 0 : index
    %6 = vector.load %arg4[%c0_6, %c0_7] : memref<1x128xf32, #tpu.memory_space<vmem>>, vector<1x128xf32>
    tpu.vector_store %arg4[%c0_6, %c0_7], %5 {strides = array<i32>} : memref<1x128xf32, #tpu.memory_space<vmem>>, vector<1x128xf32>,
    %7 = arith.mulf %2, %2 : vector<512x128xf32>
    %cst_8 = arith.constant dense<0.000000e+00> : vector<128xf32>
    %8 = vector.multi_reduction <add>, %7, %cst_8 [0] : vector<512x128xf32> to vector<128xf32>
    %9 = vector.shape_cast %8 : vector<128xf32> to vector<1x128xf32>
    %c0_9 = arith.constant 0 : index
    %c0_10 = arith.constant 0 : index
    %10 = vector.load %arg5[%c0_9, %c0_10] : memref<1x128xf32, #tpu.memory_space<vmem>>, vector<1x128xf32>
    tpu.vector_store %arg5[%c0_9, %c0_10], %9 {strides = array<i32>} : memref<1x128xf32, #tpu.memory_space<vmem>>, vector<1x128xf32>,
    return
  }
  func.func @transform_0(%arg0: i32) -> (i32, i32) {
    %c0_i32 = arith.constant 0 : i32
    %c0_i32_0 = arith.constant 0 : i32
    %c0_i32_1 = arith.constant 0 : i32
    return %c0_i32, %c0_i32_0 : i32, i32
  }
  func.func @transform_1(%arg0: i32) -> (i32, i32) {
    %c0_i32 = arith.constant 0 : i32
    %c0_i32_0 = arith.constant 0 : i32
    %c0_i32_1 = arith.constant 0 : i32
    return %c0_i32, %c0_i32_0 : i32, i32
  }
  func.func @transform_2(%arg0: i32) -> (i32, i32) {
    %c0_i32 = arith.constant 0 : i32
    %c0_i32_0 = arith.constant 0 : i32
    %c0_i32_1 = arith.constant 0 : i32
    return %c0_i32, %c0_i32_0 : i32, i32
  }
  func.func @transform_3(%arg0: i32) -> (i32, i32) {
    %c0_i32 = arith.constant 0 : i32
    %c0_i32_0 = arith.constant 0 : i32
    %c0_i32_1 = arith.constant 0 : i32
    return %c0_i32, %c0_i32_0 : i32, i32
  }
  func.func @transform_4(%arg0: i32) -> (i32, i32) {
    %c0_i32 = arith.constant 0 : i32
    %c0_i32_0 = arith.constant 0 : i32
    %c0_i32_1 = arith.constant 0 : i32
    return %c0_i32, %c0_i32_0 : i32, i32
  }
}

module attributes {stable_mosaic.version = 11 : i64} {
  func.func @_bn_relu_kernel(%arg0: i32, %arg1: memref<512x128xf32, #tpu.memory_space<vmem>>, %arg2: memref<1x128xf32, #tpu.memory_space<vmem>>, %arg3: memref<1x128xf32, #tpu.memory_space<vmem>>, %arg4: memref<512x128xbf16, #tpu.memory_space<vmem>>) attributes {dimension_semantics = [#tpu.dimension_semantics<arbitrary>], iteration_bounds = array<i64: 1>, scalar_prefetch = 0 : i64, scratch_operands = 0 : i64, tpu.core_type = #tpu.core_type<tc>, window_params = [{pipeline_mode = #tpu.pipeline_mode<synchronous>, transform_indices = @transform_0, window_bounds = array<i64: 512, 128>}, {pipeline_mode = #tpu.pipeline_mode<synchronous>, transform_indices = @transform_1, window_bounds = array<i64: 1, 128>}, {pipeline_mode = #tpu.pipeline_mode<synchronous>, transform_indices = @transform_2, window_bounds = array<i64: 1, 128>}, {pipeline_mode = #tpu.pipeline_mode<synchronous>, transform_indices = @transform_3, window_bounds = array<i64: 512, 128>}]} {
    %c0 = arith.constant 0 : index
    %c0_0 = arith.constant 0 : index
    %0 = vector.load %arg1[%c0, %c0_0] : memref<512x128xf32, #tpu.memory_space<vmem>>, vector<512x128xf32>
    %c0_1 = arith.constant 0 : index
    %c0_2 = arith.constant 0 : index
    %1 = vector.load %arg2[%c0_1, %c0_2] : memref<1x128xf32, #tpu.memory_space<vmem>>, vector<1x128xf32>
    %2 = vector.broadcast %1 : vector<1x128xf32> to vector<512x128xf32>
    %3 = arith.mulf %0, %2 : vector<512x128xf32>
    %c0_3 = arith.constant 0 : index
    %c0_4 = arith.constant 0 : index
    %4 = vector.load %arg3[%c0_3, %c0_4] : memref<1x128xf32, #tpu.memory_space<vmem>>, vector<1x128xf32>
    %5 = vector.broadcast %4 : vector<1x128xf32> to vector<512x128xf32>
    %6 = arith.addf %3, %5 : vector<512x128xf32>
    %cst = arith.constant 0.000000e+00 : f32
    %7 = vector.broadcast %cst : f32 to vector<512x128xf32>
    %8 = arith.maximumf %6, %7 : vector<512x128xf32>
    %9 = arith.truncf %8 : vector<512x128xf32> to vector<512x128xbf16>
    %c0_5 = arith.constant 0 : index
    %c0_6 = arith.constant 0 : index
    %10 = vector.load %arg4[%c0_5, %c0_6] : memref<512x128xbf16, #tpu.memory_space<vmem>>, vector<512x128xbf16>
    tpu.vector_store %arg4[%c0_5, %c0_6], %9 {strides = array<i32>} : memref<512x128xbf16, #tpu.memory_space<vmem>>, vector<512x128xbf16>,
    return
  }
  func.func @transform_0(%arg0: i32) -> (i32, i32) {
    %c0_i32 = arith.constant 0 : i32
    %c0_i32_0 = arith.constant 0 : i32
    %c0_i32_1 = arith.constant 0 : i32
    return %c0_i32, %c0_i32_0 : i32, i32
  }
  func.func @transform_1(%arg0: i32) -> (i32, i32) {
    %c0_i32 = arith.constant 0 : i32
    %c0_i32_0 = arith.constant 0 : i32
    %c0_i32_1 = arith.constant 0 : i32
    return %c0_i32, %c0_i32_0 : i32, i32
  }
  func.func @transform_2(%arg0: i32) -> (i32, i32) {
    %c0_i32 = arith.constant 0 : i32
    %c0_i32_0 = arith.constant 0 : i32
    %c0_i32_1 = arith.constant 0 : i32
    return %c0_i32, %c0_i32_0 : i32, i32
  }
  func.func @transform_3(%arg0: i32) -> (i32, i32) {
    %c0_i32 = arith.constant 0 : i32
    %c0_i32_0 = arith.constant 0 : i32
    %c0_i32_1 = arith.constant 0 : i32
    return %c0_i32, %c0_i32_0 : i32, i32
  }
}

module attributes {stable_mosaic.version = 11 : i64} {
  func.func @_conv_bn_stats_kernel(%arg0: i32, %arg1: memref<2048x256xbf16, #tpu.memory_space<vmem>>, %arg2: memref<256x128xbf16, #tpu.memory_space<vmem>>, %arg3: memref<2048x128xf32, #tpu.memory_space<vmem>>, %arg4: memref<1x128xf32, #tpu.memory_space<vmem>>, %arg5: memref<1x128xf32, #tpu.memory_space<vmem>>) attributes {dimension_semantics = [#tpu.dimension_semantics<arbitrary>], iteration_bounds = array<i64: 1>, scalar_prefetch = 0 : i64, scratch_operands = 0 : i64, tpu.core_type = #tpu.core_type<tc>, window_params = [{pipeline_mode = #tpu.pipeline_mode<synchronous>, transform_indices = @transform_0, window_bounds = array<i64: 2048, 256>}, {pipeline_mode = #tpu.pipeline_mode<synchronous>, transform_indices = @transform_1, window_bounds = array<i64: 256, 128>}, {pipeline_mode = #tpu.pipeline_mode<synchronous>, transform_indices = @transform_2, window_bounds = array<i64: 2048, 128>}, {pipeline_mode = #tpu.pipeline_mode<synchronous>, transform_indices = @transform_3, window_bounds = array<i64: 1, 128>}, {pipeline_mode = #tpu.pipeline_mode<synchronous>, transform_indices = @transform_4, window_bounds = array<i64: 1, 128>}]} {
    %c0 = arith.constant 0 : index
    %c0_0 = arith.constant 0 : index
    %0 = vector.load %arg1[%c0, %c0_0] : memref<2048x256xbf16, #tpu.memory_space<vmem>>, vector<2048x256xbf16>
    %c0_1 = arith.constant 0 : index
    %c0_2 = arith.constant 0 : index
    %1 = vector.load %arg2[%c0_1, %c0_2] : memref<256x128xbf16, #tpu.memory_space<vmem>>, vector<256x128xbf16>
    %cst = arith.constant dense<0.000000e+00> : vector<2048x128xf32>
    %2 = tpu.matmul %0, %1, %cst {dimension_numbers = #tpu.dot_dimension_numbers<[1], [0], [0], [1], [0, 0, 1, 1], [], []>} : vector<2048x256xbf16>, vector<256x128xbf16>, vector<2048x128xf32> -> vector<2048x128xf32>
    %c0_3 = arith.constant 0 : index
    %c0_4 = arith.constant 0 : index
    %3 = vector.load %arg3[%c0_3, %c0_4] : memref<2048x128xf32, #tpu.memory_space<vmem>>, vector<2048x128xf32>
    tpu.vector_store %arg3[%c0_3, %c0_4], %2 {strides = array<i32>} : memref<2048x128xf32, #tpu.memory_space<vmem>>, vector<2048x128xf32>,
    %cst_5 = arith.constant dense<0.000000e+00> : vector<128xf32>
    %4 = vector.multi_reduction <add>, %2, %cst_5 [0] : vector<2048x128xf32> to vector<128xf32>
    %5 = vector.shape_cast %4 : vector<128xf32> to vector<1x128xf32>
    %c0_6 = arith.constant 0 : index
    %c0_7 = arith.constant 0 : index
    %6 = vector.load %arg4[%c0_6, %c0_7] : memref<1x128xf32, #tpu.memory_space<vmem>>, vector<1x128xf32>
    tpu.vector_store %arg4[%c0_6, %c0_7], %5 {strides = array<i32>} : memref<1x128xf32, #tpu.memory_space<vmem>>, vector<1x128xf32>,
    %7 = arith.mulf %2, %2 : vector<2048x128xf32>
    %cst_8 = arith.constant dense<0.000000e+00> : vector<128xf32>
    %8 = vector.multi_reduction <add>, %7, %cst_8 [0] : vector<2048x128xf32> to vector<128xf32>
    %9 = vector.shape_cast %8 : vector<128xf32> to vector<1x128xf32>
    %c0_9 = arith.constant 0 : index
    %c0_10 = arith.constant 0 : index
    %10 = vector.load %arg5[%c0_9, %c0_10] : memref<1x128xf32, #tpu.memory_space<vmem>>, vector<1x128xf32>
    tpu.vector_store %arg5[%c0_9, %c0_10], %9 {strides = array<i32>} : memref<1x128xf32, #tpu.memory_space<vmem>>, vector<1x128xf32>,
    return
  }
  func.func @transform_0(%arg0: i32) -> (i32, i32) {
    %c0_i32 = arith.constant 0 : i32
    %c0_i32_0 = arith.constant 0 : i32
    %c0_i32_1 = arith.constant 0 : i32
    return %c0_i32, %c0_i32_0 : i32, i32
  }
  func.func @transform_1(%arg0: i32) -> (i32, i32) {
    %c0_i32 = arith.constant 0 : i32
    %c0_i32_0 = arith.constant 0 : i32
    %c0_i32_1 = arith.constant 0 : i32
    return %c0_i32, %c0_i32_0 : i32, i32
  }
  func.func @transform_2(%arg0: i32) -> (i32, i32) {
    %c0_i32 = arith.constant 0 : i32
    %c0_i32_0 = arith.constant 0 : i32
    %c0_i32_1 = arith.constant 0 : i32
    return %c0_i32, %c0_i32_0 : i32, i32
  }
  func.func @transform_3(%arg0: i32) -> (i32, i32) {
    %c0_i32 = arith.constant 0 : i32
    %c0_i32_0 = arith.constant 0 : i32
    %c0_i32_1 = arith.constant 0 : i32
    return %c0_i32, %c0_i32_0 : i32, i32
  }
  func.func @transform_4(%arg0: i32) -> (i32, i32) {
    %c0_i32 = arith.constant 0 : i32
    %c0_i32_0 = arith.constant 0 : i32
    %c0_i32_1 = arith.constant 0 : i32
    return %c0_i32, %c0_i32_0 : i32, i32
  }
}

module attributes {stable_mosaic.version = 11 : i64} {
  func.func @_bn_relu_kernel(%arg0: i32, %arg1: memref<2048x128xf32, #tpu.memory_space<vmem>>, %arg2: memref<1x128xf32, #tpu.memory_space<vmem>>, %arg3: memref<1x128xf32, #tpu.memory_space<vmem>>, %arg4: memref<2048x128xbf16, #tpu.memory_space<vmem>>) attributes {dimension_semantics = [#tpu.dimension_semantics<arbitrary>], iteration_bounds = array<i64: 1>, scalar_prefetch = 0 : i64, scratch_operands = 0 : i64, tpu.core_type = #tpu.core_type<tc>, window_params = [{pipeline_mode = #tpu.pipeline_mode<synchronous>, transform_indices = @transform_0, window_bounds = array<i64: 2048, 128>}, {pipeline_mode = #tpu.pipeline_mode<synchronous>, transform_indices = @transform_1, window_bounds = array<i64: 1, 128>}, {pipeline_mode = #tpu.pipeline_mode<synchronous>, transform_indices = @transform_2, window_bounds = array<i64: 1, 128>}, {pipeline_mode = #tpu.pipeline_mode<synchronous>, transform_indices = @transform_3, window_bounds = array<i64: 2048, 128>}]} {
    %c0 = arith.constant 0 : index
    %c0_0 = arith.constant 0 : index
    %0 = vector.load %arg1[%c0, %c0_0] : memref<2048x128xf32, #tpu.memory_space<vmem>>, vector<2048x128xf32>
    %c0_1 = arith.constant 0 : index
    %c0_2 = arith.constant 0 : index
    %1 = vector.load %arg2[%c0_1, %c0_2] : memref<1x128xf32, #tpu.memory_space<vmem>>, vector<1x128xf32>
    %2 = vector.broadcast %1 : vector<1x128xf32> to vector<2048x128xf32>
    %3 = arith.mulf %0, %2 : vector<2048x128xf32>
    %c0_3 = arith.constant 0 : index
    %c0_4 = arith.constant 0 : index
    %4 = vector.load %arg3[%c0_3, %c0_4] : memref<1x128xf32, #tpu.memory_space<vmem>>, vector<1x128xf32>
    %5 = vector.broadcast %4 : vector<1x128xf32> to vector<2048x128xf32>
    %6 = arith.addf %3, %5 : vector<2048x128xf32>
    %cst = arith.constant 0.000000e+00 : f32
    %7 = vector.broadcast %cst : f32 to vector<2048x128xf32>
    %8 = arith.maximumf %6, %7 : vector<2048x128xf32>
    %9 = arith.truncf %8 : vector<2048x128xf32> to vector<2048x128xbf16>
    %c0_5 = arith.constant 0 : index
    %c0_6 = arith.constant 0 : index
    %10 = vector.load %arg4[%c0_5, %c0_6] : memref<2048x128xbf16, #tpu.memory_space<vmem>>, vector<2048x128xbf16>
    tpu.vector_store %arg4[%c0_5, %c0_6], %9 {strides = array<i32>} : memref<2048x128xbf16, #tpu.memory_space<vmem>>, vector<2048x128xbf16>,
    return
  }
  func.func @transform_0(%arg0: i32) -> (i32, i32) {
    %c0_i32 = arith.constant 0 : i32
    %c0_i32_0 = arith.constant 0 : i32
    %c0_i32_1 = arith.constant 0 : i32
    return %c0_i32, %c0_i32_0 : i32, i32
  }
  func.func @transform_1(%arg0: i32) -> (i32, i32) {
    %c0_i32 = arith.constant 0 : i32
    %c0_i32_0 = arith.constant 0 : i32
    %c0_i32_1 = arith.constant 0 : i32
    return %c0_i32, %c0_i32_0 : i32, i32
  }
  func.func @transform_2(%arg0: i32) -> (i32, i32) {
    %c0_i32 = arith.constant 0 : i32
    %c0_i32_0 = arith.constant 0 : i32
    %c0_i32_1 = arith.constant 0 : i32
    return %c0_i32, %c0_i32_0 : i32, i32
  }
  func.func @transform_3(%arg0: i32) -> (i32, i32) {
    %c0_i32 = arith.constant 0 : i32
    %c0_i32_0 = arith.constant 0 : i32
    %c0_i32_1 = arith.constant 0 : i32
    return %c0_i32, %c0_i32_0 : i32, i32
  }
}

module attributes {stable_mosaic.version = 11 : i64} {
  func.func @_conv_tanh_kernel(%arg0: i32, %arg1: memref<2048x128xbf16, #tpu.memory_space<vmem>>, %arg2: memref<128x128xbf16, #tpu.memory_space<vmem>>, %arg3: memref<2048x128xf32, #tpu.memory_space<vmem>>) attributes {dimension_semantics = [#tpu.dimension_semantics<parallel>], iteration_bounds = array<i64: 4>, scalar_prefetch = 0 : i64, scratch_operands = 0 : i64, tpu.core_type = #tpu.core_type<tc>, window_params = [{transform_indices = @transform_0, window_bounds = array<i64: 2048, 128>}, {pipeline_mode = #tpu.pipeline_mode<synchronous>, transform_indices = @transform_1, window_bounds = array<i64: 128, 128>}, {transform_indices = @transform_2, window_bounds = array<i64: 2048, 128>}]} {
    %c0 = arith.constant 0 : index
    %c0_0 = arith.constant 0 : index
    %0 = vector.load %arg1[%c0, %c0_0] : memref<2048x128xbf16, #tpu.memory_space<vmem>>, vector<2048x128xbf16>
    %c0_1 = arith.constant 0 : index
    %c0_2 = arith.constant 0 : index
    %1 = vector.load %arg2[%c0_1, %c0_2] : memref<128x128xbf16, #tpu.memory_space<vmem>>, vector<128x128xbf16>
    %cst = arith.constant dense<0.000000e+00> : vector<2048x128xf32>
    %2 = tpu.matmul %0, %1, %cst {dimension_numbers = #tpu.dot_dimension_numbers<[1], [0], [0], [1], [0, 0, 1, 1], [], []>} : vector<2048x128xbf16>, vector<128x128xbf16>, vector<2048x128xf32> -> vector<2048x128xf32>
    %3 = math.tanh %2 : vector<2048x128xf32>
    %c0_3 = arith.constant 0 : index
    %c0_4 = arith.constant 0 : index
    %4 = vector.load %arg3[%c0_3, %c0_4] : memref<2048x128xf32, #tpu.memory_space<vmem>>, vector<2048x128xf32>
    tpu.vector_store %arg3[%c0_3, %c0_4], %3 {strides = array<i32>} : memref<2048x128xf32, #tpu.memory_space<vmem>>, vector<2048x128xf32>,
    return
  }
  func.func @transform_0(%arg0: i32) -> (i32, i32) {
    %c0_i32 = arith.constant 0 : i32
    %c0_i32_0 = arith.constant 0 : i32
    return %arg0, %c0_i32 : i32, i32
  }
  func.func @transform_1(%arg0: i32) -> (i32, i32) {
    %c0_i32 = arith.constant 0 : i32
    %c0_i32_0 = arith.constant 0 : i32
    %c0_i32_1 = arith.constant 0 : i32
    return %c0_i32, %c0_i32_0 : i32, i32
  }
  func.func @transform_2(%arg0: i32) -> (i32, i32) {
    %c0_i32 = arith.constant 0 : i32
    %c0_i32_0 = arith.constant 0 : i32
    return %arg0, %c0_i32 : i32, i32
  }
}

</mosaic_0001>

<llo_original>
// kernel: _lambda_.10
$region0: #{_lambda_.10}
  #allocation0 [shape = 'u32[]', space=smem, size = 0x4, offset = 0x4, fixed_abs, tag = 'smem constant byte address 0x4 - core index']
  #allocation1 [shape = 'u32[144,128]{1,0:T(1,128)}', space=vmem, size = 0x12000, scoped, tag = 'internal scratch']
  %s0 = inlined_call_operand.vmem [shape: f32[32,128], index: 0, kind: input, shape index: {}]
  %s1 = inlined_call_operand.vmem [shape: f32[1,128], index: 1, kind: input, shape index: {}]
  %s2 = inlined_call_operand.vmem [shape: f32[1,128], index: 2, kind: input, shape index: {}]
  %s3 = inlined_call_operand.vmem [shape: bf16[32,128], index: 3, kind: output, shape index: {}]
  %s4 = sld [smem:[#allocation0]]
  $region22: #{_lambda_.10} parent=0
    _
  %s6 = ssub.s32 1, %s4
  %s7 = scalar_select 0, %s6, %s4
  // Predicated region
  $region2: #{_lambda_.10} parent=0 // pred_check
    _
  $region3: #{_lambda_.10} parent=0 // pred_check_branch
    %9 = sbr.rel (0) target = $region5
  $region4: #{_lambda_.10} parent=0 // pred_region
    _
  $region5: #{_lambda_.10} parent=0 // pred_fallthru
    _
  // Predicated region
  $region6: #{_lambda_.10} parent=0 // pred_check
    _
  $region7: #{_lambda_.10} parent=0 // pred_check_branch
    %11 = sbr.rel (0) target = $region9
  $region8: #{_lambda_.10} parent=0 // pred_region
    _
  $region9: #{_lambda_.10} parent=0 // pred_fallthru
    _
  // Predicated region
  $region10: #{_lambda_.10} parent=0 // pred_check
    _
  $region11: #{_lambda_.10} parent=0 // pred_check_branch
    %13 = sbr.rel (0) target = $region13
  $region12: #{_lambda_.10} parent=0 // pred_region
    _
  $region13: #{_lambda_.10} parent=0 // pred_fallthru
    _
  %v14 = vld [vmem:[%s0] sm:$0xff]
  %v15 = vld [vmem:[%s0 + $0x8] sm:$0xff]
  %v16 = vld [vmem:[%s0 + $0x10] sm:$0xff]
  %v17 = vld [vmem:[%s0 + $0x18] sm:$0xff]
  %v18 = vld [vmem:[%s1] sm:$0x1]
  %v20 = vlaneseq
  %v21 = vshrl.u32 %v20, 7
  %v22 = vsub.s32 0, %v21
  %v23 = vrot.slane %v18, %v22
  %v25 = vmul.f32 %v14, %v23
  %v26 = vmul.f32 %v15, %v23
  %v27 = vmul.f32 %v16, %v23
  %v28 = vmul.f32 %v17, %v23
  %v29 = vld [vmem:[%s2] sm:$0x1]
  %v31 = vlaneseq
  %v32 = vshrl.u32 %v31, 7
  %v33 = vsub.s32 0, %v32
  %v34 = vrot.slane %v29, %v33
  %v36 = vadd.f32 %v25, %v34
  %v37 = vadd.f32 %v26, %v34
  %v38 = vadd.f32 %v27, %v34
  %v39 = vadd.f32 %v28, %v34
  %v40 = vmax.f32 %v36, 0.0
  %v41 = vmax.f32 %v37, 0.0
  %v42 = vmax.f32 %v38, 0.0
  %v43 = vmax.f32 %v39, 0.0
  %v44 = vpack.c.bf16 %v41, %v40
  %v45 = vpack.c.bf16 %v43, %v42
  %v48 = vunpack.c.l.b16 %v44
  %v49 = vunpack.c.h.b16 %v44
  %v50 = vunpack.c.l.b16 %v45
  %v51 = vunpack.c.h.b16 %v45
  %v52 = vpack.c.b16 %v48, %v48
  %v53 = vpack.c.b16 %v49, %v49
  %v54 = vpack.c.b16 %v50, %v50
  %v55 = vpack.c.b16 %v51, %v51
  %60 = vst [vmem:[%s3] sm:$0xf] %v52
  %61 = vst [vmem:[%s3 + $0x4] sm:$0xf] %v53
  %62 = vst [vmem:[%s3 + $0x8] sm:$0xf] %v54
  %63 = vst [vmem:[%s3 + $0xc] sm:$0xf] %v55
  // Predicated region
  $region14: #{_lambda_.10} parent=0 // pred_check
    _
  $region15: #{_lambda_.10} parent=0 // pred_check_branch
    %65 = sbr.rel (0) target = $region17
  $region16: #{_lambda_.10} parent=0 // pred_region
    _
  $region17: #{_lambda_.10} parent=0 // pred_fallthru
    _
  // Predicated region
  $region18: #{_lambda_.10} parent=0 // pred_check
    _
  $region19: #{_lambda_.10} parent=0 // pred_check_branch
    %67 = sbr.rel (0) target = $region21
  $region20: #{_lambda_.10} parent=0 // pred_region
    _
  $region21: #{_lambda_.10} parent=0 // pred_fallthru
    _

// kernel: _lambda_.9
$region0: #{_lambda_.9}
  #allocation0 [shape = 'u32[]', space=smem, size = 0x4, offset = 0x4, fixed_abs, tag = 'smem constant byte address 0x4 - core index']
  #allocation1 [shape = 'u32[144,128]{1,0:T(1,128)}', space=vmem, size = 0x12000, scoped, tag = 'internal scratch']
  %s0 = inlined_call_operand.vmem [shape: bf16[32,256], index: 0, kind: input, shape index: {}]
  %s1 = inlined_call_operand.hbm [shape: bf16[256,128], index: 1, kind: input, shape index: {}]
  %s2 = inlined_call_operand.vmem [shape: f32[32,128], index: 2, kind: output, shape index: {0}]
  %s3 = inlined_call_operand.vmem [shape: f32[1,128], index: 3, kind: output, shape index: {1}]
  %s4 = inlined_call_operand.vmem [shape: f32[1,128], index: 4, kind: output, shape index: {2}]
  %5 = xla_tuple %s2, %s3, %s4
  %s6 = sld [smem:[#allocation0]]
  $region38: #{_lambda_.9} parent=0
    _
  %s8 = ssub.s32 1, %s6
  %s9 = scalar_select 0, %s8, %s6
  $region1: #{_lambda_.9} parent=0
    #allocation2 [shape = 'u8[65536]{0}', space=vmem, size = 0x10000, scoped, tag = 'input window, operand 1, single buffered']
    #allocation3 [shape = 's32[1]{0}', space=sflag, size = 0x4, scoped, tag = 'scoped memory for _lambda_.9']
    %10 = vsyncpa [#allocation3], 0
    // Predicated region
    $region2: #{_lambda_.9} parent=1 // pred_check
      _
    $region3: #{_lambda_.9} parent=1 // pred_check_branch
      %12 = sbr.rel (0) target = $region5
    $region4: #{_lambda_.9} parent=1 // pred_region
      _
    $region5: #{_lambda_.9} parent=1 // pred_fallthru
      _
    // Predicated region
    $region6: #{_lambda_.9} parent=1 // pred_check
      _
    $region7: #{_lambda_.9} parent=1 // pred_check_branch
      %14 = sbr.rel (0) target = $region9
    $region8: #{_lambda_.9} parent=1 // pred_region
      %s16 = ssub.s32 2048, 2048
      %17 = vsyncadd [#allocation3], %s16
      %s18 = sshll.u32 [#allocation2], 4
      %s19 = int_to_ptr.vmem [resolvable:$true] %s18
      %24 = dma.hbm_to_vmem [thread:$0]  %s1, 2048, %s19, [#allocation3], 64, 64, 4
    $region9: #{_lambda_.9} parent=1 // pred_fallthru
      _
    // Predicated region
    $region10: #{_lambda_.9} parent=1 // pred_check
      _
    $region11: #{_lambda_.9} parent=1 // pred_check_branch
      %26 = sbr.rel (0) target = $region13
    $region12: #{_lambda_.9} parent=1 // pred_region
      %27 = dma.done [#allocation3], 2048
    $region13: #{_lambda_.9} parent=1 // pred_fallthru
      _
    %v29 = vld [vmem:[%s0] sm:$0xff]
    %v30 = vld [vmem:[%s0 + $0x8] sm:$0xff]
    %v31 = vld [vmem:[%s0 + $0x10] sm:$0xff]
    %v32 = vld [vmem:[%s0 + $0x18] sm:$0xff]
    %v33 = vld [vmem:[#allocation2] sm:$0xf]
    %v34 = vld [vmem:[#allocation2 + $0x4] sm:$0xf]
    %v35 = vld [vmem:[#allocation2 + $0x8] sm:$0xf]
    %v36 = vld [vmem:[#allocation2 + $0xc] sm:$0xf]
    %v37 = vld [vmem:[#allocation2 + $0x10] sm:$0xf]
    %v38 = vld [vmem:[#allocation2 + $0x14] sm:$0xf]
    %v39 = vld [vmem:[#allocation2 + $0x18] sm:$0xf]
    %v40 = vld [vmem:[#allocation2 + $0x1c] sm:$0xf]
    %v41 = vld [vmem:[#allocation2 + $0x20] sm:$0xf]
    %v42 = vld [vmem:[#allocation2 + $0x24] sm:$0xf]
    %v43 = vld [vmem:[#allocation2 + $0x28] sm:$0xf]
    %v44 = vld [vmem:[#allocation2 + $0x2c] sm:$0xf]
    %v45 = vld [vmem:[#allocation2 + $0x30] sm:$0xf]
    %v46 = vld [vmem:[#allocation2 + $0x34] sm:$0xf]
    %v47 = vld [vmem:[#allocation2 + $0x38] sm:$0xf]
    %v48 = vld [vmem:[#allocation2 + $0x3c] sm:$0xf]
    %v49 = vld [vmem:[#allocation2 + $0x40] sm:$0xf]
    %v50 = vld [vmem:[#allocation2 + $0x44] sm:$0xf]
    %v51 = vld [vmem:[#allocation2 + $0x48] sm:$0xf]
    %v52 = vld [vmem:[#allocation2 + $0x4c] sm:$0xf]
    %v53 = vld [vmem:[#allocation2 + $0x50] sm:$0xf]
    %v54 = vld [vmem:[#allocation2 + $0x54] sm:$0xf]
    %v55 = vld [vmem:[#allocation2 + $0x58] sm:$0xf]
    %v56 = vld [vmem:[#allocation2 + $0x5c] sm:$0xf]
    %v57 = vld [vmem:[#allocation2 + $0x60] sm:$0xf]
    %v58 = vld [vmem:[#allocation2 + $0x64] sm:$0xf]
    %v59 = vld [vmem:[#allocation2 + $0x68] sm:$0xf]
    %v60 = vld [vmem:[#allocation2 + $0x6c] sm:$0xf]
    %v61 = vld [vmem:[#allocation2 + $0x70] sm:$0xf]
    %v62 = vld [vmem:[#allocation2 + $0x74] sm:$0xf]
    %v63 = vld [vmem:[#allocation2 + $0x78] sm:$0xf]
    %v64 = vld [vmem:[#allocation2 + $0x7c] sm:$0xf]
    %v69 = vunpack.c.l.b16 %v29
    %v70 = vunpack.c.h.b16 %v29
    %v71 = vunpack.c.l.b16 %v30
    %v72 = vunpack.c.h.b16 %v30
    %v73 = vunpack.c.l.b16 %v31
    %v74 = vunpack.c.h.b16 %v31
    %v75 = vunpack.c.l.b16 %v32
    %v76 = vunpack.c.h.b16 %v32
    %v77 = vpack.c.b16 %v71, %v69
    %v78 = vpack.c.b16 %v72, %v70
    %v79 = vpack.c.b16 %v75, %v73
    %v80 = vpack.c.b16 %v76, %v74
    %v117 = vunpack.c.l.b16 %v33
    %v118 = vunpack.c.l.b16 %v34
    %v119 = vunpack.c.l.b16 %v35
    %v120 = vunpack.c.l.b16 %v36
    %v121 = vunpack.c.l.b16 %v37
    %v122 = vunpack.c.l.b16 %v38
    %v123 = vunpack.c.l.b16 %v39
    %v124 = vunpack.c.l.b16 %v40
    %v125 = vunpack.c.l.b16 %v41
    %v126 = vunpack.c.l.b16 %v42
    %v127 = vunpack.c.l.b16 %v43
    %v128 = vunpack.c.l.b16 %v44
    %v129 = vunpack.c.l.b16 %v45
    %v130 = vunpack.c.l.b16 %v46
    %v131 = vunpack.c.l.b16 %v47
    %v132 = vunpack.c.l.b16 %v48
    %v133 = vunpack.c.l.b16 %v49
    %v134 = vunpack.c.l.b16 %v50
    %v135 = vunpack.c.l.b16 %v51
    %v136 = vunpack.c.l.b16 %v52
    %v137 = vunpack.c.l.b16 %v53
    %v138 = vunpack.c.l.b16 %v54
    %v139 = vunpack.c.l.b16 %v55
    %v140 = vunpack.c.l.b16 %v56
    %v141 = vunpack.c.l.b16 %v57
    %v142 = vunpack.c.l.b16 %v58
    %v143 = vunpack.c.l.b16 %v59
    %v144 = vunpack.c.l.b16 %v60
    %v145 = vunpack.c.l.b16 %v61
    %v146 = vunpack.c.l.b16 %v62
    %v147 = vunpack.c.l.b16 %v63
    %v148 = vunpack.c.l.b16 %v64
    %v149 = vpack.c.b16 %v118, %v117
    %v150 = vpack.c.b16 %v120, %v119
    %v151 = vpack.c.b16 %v122, %v121
    %v152 = vpack.c.b16 %v124, %v123
    %v153 = vpack.c.b16 %v126, %v125
    %v154 = vpack.c.b16 %v128, %v127
    %v155 = vpack.c.b16 %v130, %v129
    %v156 = vpack.c.b16 %v132, %v131
    %v157 = vpack.c.b16 %v134, %v133
    %v158 = vpack.c.b16 %v136, %v135
    %v159 = vpack.c.b16 %v138, %v137
    %v160 = vpack.c.b16 %v140, %v139
    %v161 = vpack.c.b16 %v142, %v141
    %v162 = vpack.c.b16 %v144, %v143
    %v163 = vpack.c.b16 %v146, %v145
    %v164 = vpack.c.b16 %v148, %v147
    %181 = vmatprep.subr.bf16.mxu0 0
    %182 = vmatpush1.bf16.msra.mxu0 %v149
    %183 = vmatprep.subr.bf16.mxu0 0
    %184 = vmatpush1.bf16.msra.mxu0 %v150
    %185 = vmatprep.subr.bf16.mxu0 0
    %186 = vmatpush1.bf16.msra.mxu0 %v151
    %187 = vmatprep.subr.bf16.mxu0 0
    %188 = vmatpush1.bf16.msra.mxu0 %v152
    %189 = vmatprep.subr.bf16.mxu0 0
    %190 = vmatpush1.bf16.msra.mxu0 %v153
    %191 = vmatprep.subr.bf16.mxu0 0
    %192 = vmatpush1.bf16.msra.mxu0 %v154
    %193 = vmatprep.subr.bf16.mxu0 0
    %194 = vmatpush1.bf16.msra.mxu0 %v155
    %195 = vmatprep.subr.bf16.mxu0 0
    %196 = vmatpush1.bf16.msra.mxu0 %v156
    %197 = vmatprep.subr.bf16.mxu0 0
    %198 = vmatpush1.bf16.msra.mxu0 %v157
    %199 = vmatprep.subr.bf16.mxu0 0
    %200 = vmatpush1.bf16.msra.mxu0 %v158
    %201 = vmatprep.subr.bf16.mxu0 0
    %202 = vmatpush1.bf16.msra.mxu0 %v159
    %203 = vmatprep.subr.bf16.mxu0 0
    %204 = vmatpush1.bf16.msra.mxu0 %v160
    %205 = vmatprep.subr.bf16.mxu0 0
    %206 = vmatpush1.bf16.msra.mxu0 %v161
    %207 = vmatprep.subr.bf16.mxu0 0
    %208 = vmatpush1.bf16.msra.mxu0 %v162
    %209 = vmatprep.subr.bf16.mxu0 0
    %210 = vmatpush1.bf16.msra.mxu0 %v163
    %211 = vmatprep.subr.bf16.mxu0 0
    %212 = vmatpush1.bf16.msra.mxu0 %v164
    %213 = vmatprep.mubr.bf16.mxu0 %v78
    %214 = vmatmul.mubr.bf16.gmra.mrb[0].mxu0 %v77
    %v215 = vpop.f32.mrb[0].mxu0
    %v216 = vadd.f32 0.0, %v215
    %v217 = vpop.f32.mrb[0].mxu0
    %v218 = vpop.f32.mrb[0].mxu0
    %v219 = vadd.f32 0.0, %v218
    %v220 = vpop.f32.mrb[0].mxu0
    %221 = vmatprep.mubr.bf16.mxu0 %v80
    %222 = vmatmul.mubr.bf16.gmra.mrb[0].mxu0 %v79
    %v223 = vpop.f32.mrb[0].mxu0
    %v224 = vadd.f32 0.0, %v223
    %v225 = vpop.f32.mrb[0].mxu0
    %v226 = vpop.f32.mrb[0].mxu0
    %v227 = vadd.f32 0.0, %v226
    %v228 = vpop.f32.mrb[0].mxu0
    %229 = vdwg.mxu0
    %230 = vst [vmem:[%s2] sm:$0xff] %v216
    %231 = vst [vmem:[%s2 + $0x8] sm:$0xff] %v219
    %232 = vst [vmem:[%s2 + $0x10] sm:$0xff] %v224
    %233 = vst [vmem:[%s2 + $0x18] sm:$0xff] %v227
    %v234 = vadd.f32 %v216, %v219
    %v235 = vadd.f32 %v234, %v224
    %v236 = vadd.f32 %v235, %v227
    %v237 = vrot.slane %v236, 4
    %v238 = vadd.f32 %v236, %v237
    %v239 = vrot.slane %v238, 2
    %v240 = vadd.f32 %v238, %v239
    %v241 = vrot.slane %v240, 1
    %v242 = vadd.f32 %v240, %v241
    %243 = vst [vmem:[%s3] sm:$0x1] %v242
    %v244 = vmul.f32 %v216, %v216
    %v245 = vmul.f32 %v219, %v219
    %v246 = vmul.f32 %v224, %v224
    %v247 = vmul.f32 %v227, %v227
    %v248 = vadd.f32 %v244, %v245
    %v249 = vadd.f32 %v248, %v246
    %v250 = vadd.f32 %v249, %v247
    %v251 = vrot.slane %v250, 4
    %v252 = vadd.f32 %v250, %v251
    %v253 = vrot.slane %v252, 2
    %v254 = vadd.f32 %v252, %v253
    %v255 = vrot.slane %v254, 1
    %v256 = vadd.f32 %v254, %v255
    %257 = vst [vmem:[%s4] sm:$0x1] %v256
    // Predicated region
    $region14: #{_lambda_.9} parent=1 // pred_check
      _
    $region15: #{_lambda_.9} parent=1 // pred_check_branch
      %259 = sbr.rel (0) target = $region17
    $region16: #{_lambda_.9} parent=1 // pred_region
      _
    $region17: #{_lambda_.9} parent=1 // pred_fallthru
      _
    // Predicated region
    $region18: #{_lambda_.9} parent=1 // pred_check
      _
    $region19: #{_lambda_.9} parent=1 // pred_check_branch
      %261 = sbr.rel (0) target = $region21
    $region20: #{_lambda_.9} parent=1 // pred_region
      _
    $region21: #{_lambda_.9} parent=1 // pred_fallthru
      _
    // Predicated region
    $region22: #{_lambda_.9} parent=1 // pred_check
      _
    $region23: #{_lambda_.9} parent=1 // pred_check_branch
      %263 = sbr.rel (0) target = $region25
    $region24: #{_lambda_.9} parent=1 // pred_region
      _
    $region25: #{_lambda_.9} parent=1 // pred_fallthru
      _
    // Predicated region
    $region26: #{_lambda_.9} parent=1 // pred_check
      _
    $region27: #{_lambda_.9} parent=1 // pred_check_branch
      %265 = sbr.rel (0) target = $region29
    $region28: #{_lambda_.9} parent=1 // pred_region
      _
    $region29: #{_lambda_.9} parent=1 // pred_fallthru
      _
    // Predicated region
    $region30: #{_lambda_.9} parent=1 // pred_check
      _
    $region31: #{_lambda_.9} parent=1 // pred_check_branch
      %267 = sbr.rel (0) target = $region33
    $region32: #{_lambda_.9} parent=1 // pred_region
      _
    $region33: #{_lambda_.9} parent=1 // pred_fallthru
      _
    // Predicated region
    $region34: #{_lambda_.9} parent=1 // pred_check
      _
    $region35: #{_lambda_.9} parent=1 // pred_check_branch
      %269 = sbr.rel (0) target = $region37
    $region36: #{_lambda_.9} parent=1 // pred_region
      _
    $region37: #{_lambda_.9} parent=1 // pred_fallthru
      _
    %270 = vsyncpa [#allocation3], 1

// kernel: _lambda_.12
$region0: #{_lambda_.12}
  #allocation0 [shape = 'u32[]', space=smem, size = 0x4, offset = 0x4, fixed_abs, tag = 'smem constant byte address 0x4 - core index']
  #allocation1 [shape = 'u32[144,128]{1,0:T(1,128)}', space=vmem, size = 0x12000, scoped, tag = 'internal scratch']
  %s0 = inlined_call_operand.vmem [shape: f32[128,128], index: 0, kind: input, shape index: {}]
  %s1 = inlined_call_operand.vmem [shape: f32[1,128], index: 1, kind: input, shape index: {}]
  %s2 = inlined_call_operand.vmem [shape: f32[1,128], index: 2, kind: input, shape index: {}]
  %s3 = inlined_call_operand.vmem [shape: bf16[128,128], index: 3, kind: output, shape index: {}]
  %s4 = sld [smem:[#allocation0]]
  $region22: #{_lambda_.12} parent=0
    _
  %s6 = ssub.s32 1, %s4
  %s7 = scalar_select 0, %s6, %s4
  // Predicated region
  $region2: #{_lambda_.12} parent=0 // pred_check
    _
  $region3: #{_lambda_.12} parent=0 // pred_check_branch
    %9 = sbr.rel (0) target = $region5
  $region4: #{_lambda_.12} parent=0 // pred_region
    _
  $region5: #{_lambda_.12} parent=0 // pred_fallthru
    _
  // Predicated region
  $region6: #{_lambda_.12} parent=0 // pred_check
    _
  $region7: #{_lambda_.12} parent=0 // pred_check_branch
    %11 = sbr.rel (0) target = $region9
  $region8: #{_lambda_.12} parent=0 // pred_region
    _
  $region9: #{_lambda_.12} parent=0 // pred_fallthru
    _
  // Predicated region
  $region10: #{_lambda_.12} parent=0 // pred_check
    _
  $region11: #{_lambda_.12} parent=0 // pred_check_branch
    %13 = sbr.rel (0) target = $region13
  $region12: #{_lambda_.12} parent=0 // pred_region
    _
  $region13: #{_lambda_.12} parent=0 // pred_fallthru
    _
  %v14 = vld [vmem:[%s0] sm:$0xff]
  %v15 = vld [vmem:[%s0 + $0x8] sm:$0xff]
  %v16 = vld [vmem:[%s0 + $0x10] sm:$0xff]
  %v17 = vld [vmem:[%s0 + $0x18] sm:$0xff]
  %v18 = vld [vmem:[%s0 + $0x20] sm:$0xff]
  %v19 = vld [vmem:[%s0 + $0x28] sm:$0xff]
  %v20 = vld [vmem:[%s0 + $0x30] sm:$0xff]
  %v21 = vld [vmem:[%s0 + $0x38] sm:$0xff]
  %v22 = vld [vmem:[%s0 + $0x40] sm:$0xff]
  %v23 = vld [vmem:[%s0 + $0x48] sm:$0xff]
  %v24 = vld [vmem:[%s0 + $0x50] sm:$0xff]
  %v25 = vld [vmem:[%s0 + $0x58] sm:$0xff]
  %v26 = vld [vmem:[%s0 + $0x60] sm:$0xff]
  %v27 = vld [vmem:[%s0 + $0x68] sm:$0xff]
  %v28 = vld [vmem:[%s0 + $0x70] sm:$0xff]
  %v29 = vld [vmem:[%s0 + $0x78] sm:$0xff]
  %v30 = vld [vmem:[%s1] sm:$0x1]
  %v32 = vlaneseq
  %v33 = vshrl.u32 %v32, 7
  %v34 = vsub.s32 0, %v33
  %v35 = vrot.slane %v30, %v34
  %v37 = vmul.f32 %v14, %v35
  %v38 = vmul.f32 %v15, %v35
  %v39 = vmul.f32 %v16, %v35
  %v40 = vmul.f32 %v17, %v35
  %v41 = vmul.f32 %v18, %v35
  %v42 = vmul.f32 %v19, %v35
  %v43 = vmul.f32 %v20, %v35
  %v44 = vmul.f32 %v21, %v35
  %v45 = vmul.f32 %v22, %v35
  %v46 = vmul.f32 %v23, %v35
  %v47 = vmul.f32 %v24, %v35
  %v48 = vmul.f32 %v25, %v35
  %v49 = vmul.f32 %v26, %v35
  %v50 = vmul.f32 %v27, %v35
  %v51 = vmul.f32 %v28, %v35
  %v52 = vmul.f32 %v29, %v35
  %v53 = vld [vmem:[%s2] sm:$0x1]
  %v55 = vlaneseq
  %v56 = vshrl.u32 %v55, 7
  %v57 = vsub.s32 0, %v56
  %v58 = vrot.slane %v53, %v57
  %v60 = vadd.f32 %v37, %v58
  %v61 = vadd.f32 %v38, %v58
  %v62 = vadd.f32 %v39, %v58
  %v63 = vadd.f32 %v40, %v58
  %v64 = vadd.f32 %v41, %v58
  %v65 = vadd.f32 %v42, %v58
  %v66 = vadd.f32 %v43, %v58
  %v67 = vadd.f32 %v44, %v58
  %v68 = vadd.f32 %v45, %v58
  %v69 = vadd.f32 %v46, %v58
  %v70 = vadd.f32 %v47, %v58
  %v71 = vadd.f32 %v48, %v58
  %v72 = vadd.f32 %v49, %v58
  %v73 = vadd.f32 %v50, %v58
  %v74 = vadd.f32 %v51, %v58
  %v75 = vadd.f32 %v52, %v58
  %v76 = vmax.f32 %v60, 0.0
  %v77 = vmax.f32 %v61, 0.0
  %v78 = vmax.f32 %v62, 0.0
  %v79 = vmax.f32 %v63, 0.0
  %v80 = vmax.f32 %v64, 0.0
  %v81 = vmax.f32 %v65, 0.0
  %v82 = vmax.f32 %v66, 0.0
  %v83 = vmax.f32 %v67, 0.0
  %v84 = vmax.f32 %v68, 0.0
  %v85 = vmax.f32 %v69, 0.0
  %v86 = vmax.f32 %v70, 0.0
  %v87 = vmax.f32 %v71, 0.0
  %v88 = vmax.f32 %v72, 0.0
  %v89 = vmax.f32 %v73, 0.0
  %v90 = vmax.f32 %v74, 0.0
  %v91 = vmax.f32 %v75, 0.0
  %v92 = vpack.c.bf16 %v77, %v76
  %v93 = vpack.c.bf16 %v79, %v78
  %v94 = vpack.c.bf16 %v81, %v80
  %v95 = vpack.c.bf16 %v83, %v82
  %v96 = vpack.c.bf16 %v85, %v84
  %v97 = vpack.c.bf16 %v87, %v86
  %v98 = vpack.c.bf16 %v89, %v88
  %v99 = vpack.c.bf16 %v91, %v90
  %v108 = vunpack.c.l.b16 %v92
  %v109 = vunpack.c.h.b16 %v92
  %v110 = vunpack.c.l.b16 %v93
  %v111 = vunpack.c.h.b16 %v93
  %v112 = vunpack.c.l.b16 %v94
  %v113 = vunpack.c.h.b16 %v94
  %v114 = vunpack.c.l.b16 %v95
  %v115 = vunpack.c.h.b16 %v95
  %v116 = vunpack.c.l.b16 %v96
  %v117 = vunpack.c.h.b16 %v96
  %v118 = vunpack.c.l.b16 %v97
  %v119 = vunpack.c.h.b16 %v97
  %v120 = vunpack.c.l.b16 %v98
  %v121 = vunpack.c.h.b16 %v98
  %v122 = vunpack.c.l.b16 %v99
  %v123 = vunpack.c.h.b16 %v99
  %v124 = vpack.c.b16 %v108, %v108
  %v125 = vpack.c.b16 %v109, %v109
  %v126 = vpack.c.b16 %v110, %v110
  %v127 = vpack.c.b16 %v111, %v111
  %v128 = vpack.c.b16 %v112, %v112
  %v129 = vpack.c.b16 %v113, %v113
  %v130 = vpack.c.b16 %v114, %v114
  %v131 = vpack.c.b16 %v115, %v115
  %v132 = vpack.c.b16 %v116, %v116
  %v133 = vpack.c.b16 %v117, %v117
  %v134 = vpack.c.b16 %v118, %v118
  %v135 = vpack.c.b16 %v119, %v119
  %v136 = vpack.c.b16 %v120, %v120
  %v137 = vpack.c.b16 %v121, %v121
  %v138 = vpack.c.b16 %v122, %v122
  %v139 = vpack.c.b16 %v123, %v123
  %156 = vst [vmem:[%s3] sm:$0xf] %v124
  %157 = vst [vmem:[%s3 + $0x4] sm:$0xf] %v125
  %158 = vst [vmem:[%s3 + $0x8] sm:$0xf] %v126
  %159 = vst [vmem:[%s3 + $0xc] sm:$0xf] %v127
  %160 = vst [vmem:[%s3 + $0x10] sm:$0xf] %v128
  %161 = vst [vmem:[%s3 + $0x14] sm:$0xf] %v129
  %162 = vst [vmem:[%s3 + $0x18] sm:$0xf] %v130
  %163 = vst [vmem:[%s3 + $0x1c] sm:$0xf] %v131
  %164 = vst [vmem:[%s3 + $0x20] sm:$0xf] %v132
  %165 = vst [vmem:[%s3 + $0x24] sm:$0xf] %v133
  %166 = vst [vmem:[%s3 + $0x28] sm:$0xf] %v134
  %167 = vst [vmem:[%s3 + $0x2c] sm:$0xf] %v135
  %168 = vst [vmem:[%s3 + $0x30] sm:$0xf] %v136
  %169 = vst [vmem:[%s3 + $0x34] sm:$0xf] %v137
  %170 = vst [vmem:[%s3 + $0x38] sm:$0xf] %v138
  %171 = vst [vmem:[%s3 + $0x3c] sm:$0xf] %v139
  // Predicated region
  $region14: #{_lambda_.12} parent=0 // pred_check
    _
  $region15: #{_lambda_.12} parent=0 // pred_check_branch
    %173 = sbr.rel (0) target = $region17
  $region16: #{_lambda_.12} parent=0 // pred_region
    _
  $region17: #{_lambda_.12} parent=0 // pred_fallthru
    _
  // Predicated region
  $region18: #{_lambda_.12} parent=0 // pred_check
    _
  $region19: #{_lambda_.12} parent=0 // pred_check_branch
    %175 = sbr.rel (0) target = $region21
  $region20: #{_lambda_.12} parent=0 // pred_region
    _
  $region21: #{_lambda_.12} parent=0 // pred_fallthru
    _

// kernel: _lambda_.11
$region0: #{_lambda_.11}
  #allocation0 [shape = 'u32[]', space=smem, size = 0x4, offset = 0x4, fixed_abs, tag = 'smem constant byte address 0x4 - core index']
  #allocation1 [shape = 'u32[144,128]{1,0:T(1,128)}', space=vmem, size = 0x12000, scoped, tag = 'internal scratch']
  %s0 = inlined_call_operand.vmem [shape: bf16[128,1024], index: 0, kind: input, shape index: {}]
  %s1 = inlined_call_operand.hbm [shape: bf16[1024,128], index: 1, kind: input, shape index: {}]
  %s2 = inlined_call_operand.vmem [shape: f32[128,128], index: 2, kind: output, shape index: {0}]
  %s3 = inlined_call_operand.vmem [shape: f32[1,128], index: 3, kind: output, shape index: {1}]
  %s4 = inlined_call_operand.vmem [shape: f32[1,128], index: 4, kind: output, shape index: {2}]
  %5 = xla_tuple %s2, %s3, %s4
  %s6 = sld [smem:[#allocation0]]
  $region38: #{_lambda_.11} parent=0
    _
  %s8 = ssub.s32 1, %s6
  %s9 = scalar_select 0, %s8, %s6
  $region1: #{_lambda_.11} parent=0
    #allocation2 [shape = 'u8[262144]{0}', space=vmem, size = 0x40000, scoped, tag = 'input window, operand 1, single buffered']
    #allocation3 [shape = 's32[1]{0}', space=sflag, size = 0x4, scoped, tag = 'scoped memory for _lambda_.11']
    %10 = vsyncpa [#allocation3], 0
    // Predicated region
    $region2: #{_lambda_.11} parent=1 // pred_check
      _
    $region3: #{_lambda_.11} parent=1 // pred_check_branch
      %12 = sbr.rel (0) target = $region5
    $region4: #{_lambda_.11} parent=1 // pred_region
      _
    $region5: #{_lambda_.11} parent=1 // pred_fallthru
      _
    // Predicated region
    $region6: #{_lambda_.11} parent=1 // pred_check
      _
    $region7: #{_lambda_.11} parent=1 // pred_check_branch
      %14 = sbr.rel (0) target = $region9
    $region8: #{_lambda_.11} parent=1 // pred_region
      %s16 = ssub.s32 8192, 8192
      %17 = vsyncadd [#allocation3], %s16
      %s18 = sshll.u32 [#allocation2], 4
      %s19 = int_to_ptr.vmem [resolvable:$true] %s18
      %24 = dma.hbm_to_vmem [thread:$0]  %s1, 8192, %s19, [#allocation3], 64, 64, 4
    $region9: #{_lambda_.11} parent=1 // pred_fallthru
      _
    // Predicated region
    $region10: #{_lambda_.11} parent=1 // pred_check
      _
    $region11: #{_lambda_.11} parent=1 // pred_check_branch
      %26 = sbr.rel (0) target = $region13
    $region12: #{_lambda_.11} parent=1 // pred_region
      %27 = dma.done [#allocation3], 8192
    $region13: #{_lambda_.11} parent=1 // pred_fallthru
      _
    %v29 = vld [vmem:[%s0] sm:$0xff]
    %v30 = vld [vmem:[%s0 + $0x8] sm:$0xff]
    %v31 = vld [vmem:[%s0 + $0x10] sm:$0xff]
    %v32 = vld [vmem:[%s0 + $0x18] sm:$0xff]
    %v33 = vld [vmem:[%s0 + $0x20] sm:$0xff]
    %v34 = vld [vmem:[%s0 + $0x28] sm:$0xff]
    %v35 = vld [vmem:[%s0 + $0x30] sm:$0xff]
    %v36 = vld [vmem:[%s0 + $0x38] sm:$0xff]
    %v37 = vld [vmem:[%s0 + $0x40] sm:$0xff]
    %v38 = vld [vmem:[%s0 + $0x48] sm:$0xff]
    %v39 = vld [vmem:[%s0 + $0x50] sm:$0xff]
    %v40 = vld [vmem:[%s0 + $0x58] sm:$0xff]
    %v41 = vld [vmem:[%s0 + $0x60] sm:$0xff]
    %v42 = vld [vmem:[%s0 + $0x68] sm:$0xff]
    %v43 = vld [vmem:[%s0 + $0x70] sm:$0xff]
    %v44 = vld [vmem:[%s0 + $0x78] sm:$0xff]
    %v45 = vld [vmem:[%s0 + $0x80] sm:$0xff]
    %v46 = vld [vmem:[%s0 + $0x88] sm:$0xff]
    %v47 = vld [vmem:[%s0 + $0x90] sm:$0xff]
    %v48 = vld [vmem:[%s0 + $0x98] sm:$0xff]
    %v49 = vld [vmem:[%s0 + $0xa0] sm:$0xff]
    %v50 = vld [vmem:[%s0 + $0xa8] sm:$0xff]
    %v51 = vld [vmem:[%s0 + $0xb0] sm:$0xff]
    %v52 = vld [vmem:[%s0 + $0xb8] sm:$0xff]
    %v53 = vld [vmem:[%s0 + $0xc0] sm:$0xff]
    %v54 = vld [vmem:[%s0 + $0xc8] sm:$0xff]
    %v55 = vld [vmem:[%s0 + $0xd0] sm:$0xff]
    %v56 = vld [vmem:[%s0 + $0xd8] sm:$0xff]
    %v57 = vld [vmem:[%s0 + $0xe0] sm:$0xff]
    %v58 = vld [vmem:[%s0 + $0xe8] sm:$0xff]
    %v59 = vld [vmem:[%s0 + $0xf0] sm:$0xff]
    %v60 = vld [vmem:[%s0 + $0xf8] sm:$0xff]
    %v61 = vld [vmem:[%s0 + $0x100] sm:$0xff]
    %v62 = vld [vmem:[%s0 + $0x108] sm:$0xff]
    %v63 = vld [vmem:[%s0 + $0x110] sm:$0xff]
    %v64 = vld [vmem:[%s0 + $0x118] sm:$0xff]
    %v65 = vld [vmem:[%s0 + $0x120] sm:$0xff]
    %v66 = vld [vmem:[%s0 + $0x128] sm:$0xff]
    %v67 = vld [vmem:[%s0 + $0x130] sm:$0xff]
    %v68 = vld [vmem:[%s0 + $0x138] sm:$0xff]
    %v69 = vld [vmem:[%s0 + $0x140] sm:$0xff]
    %v70 = vld [vmem:[%s0 + $0x148] sm:$0xff]
    %v71 = vld [vmem:[%s0 + $0x150] sm:$0xff]
    %v72 = vld [vmem:[%s0 + $0x158] sm:$0xff]
    %v73 = vld [vmem:[%s0 + $0x160] sm:$0xff]
    %v74 = vld [vmem:[%s0 + $0x168] sm:$0xff]
    %v75 = vld [vmem:[%s0 + $0x170] sm:$0xff]
    %v76 = vld [vmem:[%s0 + $0x178] sm:$0xff]
    %v77 = vld [vmem:[%s0 + $0x180] sm:$0xff]
    %v78 = vld [vmem:[%s0 + $0x188] sm:$0xff]
    %v79 = vld [vmem:[%s0 + $0x190] sm:$0xff]
    %v80 = vld [vmem:[%s0 + $0x198] sm:$0xff]
    %v81 = vld [vmem:[%s0 + $0x1a0] sm:$0xff]
    %v82 = vld [vmem:[%s0 + $0x1a8] sm:$0xff]
    %v83 = vld [vmem:[%s0 + $0x1b0] sm:$0xff]
    %v84 = vld [vmem:[%s0 + $0x1b8] sm:$0xff]
    %v85 = vld [vmem:[%s0 + $0x1c0] sm:$0xff]
    %v86 = vld [vmem:[%s0 + $0x1c8] sm:$0xff]
    %v87 = vld [vmem:[%s0 + $0x1d0] sm:$0xff]
    %v88 = vld [vmem:[%s0 + $0x1d8] sm:$0xff]
    %v89 = vld [vmem:[%s0 + $0x1e0] sm:$0xff]
    %v90 = vld [vmem:[%s0 + $0x1e8] sm:$0xff]
    %v91 = vld [vmem:[%s0 + $0x1f0] sm:$0xff]
    %v92 = vld [vmem:[%s0 + $0x1f8] sm:$0xff]
    %v93 = vld [vmem:[#allocation2] sm:$0xf]
    %v94 = vld [vmem:[#allocation2 + $0x4] sm:$0xf]
    %v95 = vld [vmem:[#allocation2 + $0x8] sm:$0xf]
    %v96 = vld [vmem:[#allocation2 + $0xc] sm:$0xf]
    %v97 = vld [vmem:[#allocation2 + $0x10] sm:$0xf]
    %v98 = vld [vmem:[#allocation2 + $0x14] sm:$0xf]
    %v99 = vld [vmem:[#allocation2 + $0x18] sm:$0xf]
    %v100 = vld [vmem:[#allocation2 + $0x1c] sm:$0xf]
    %v101 = vld [vmem:[#allocation2 + $0x20] sm:$0xf]
    %v102 = vld [vmem:[#allocation2 + $0x24] sm:$0xf]
    %v103 = vld [vmem:[#allocation2 + $0x28] sm:$0xf]
    %v104 = vld [vmem:[#allocation2 + $0x2c] sm:$0xf]
    %v105 = vld [vmem:[#allocation2 + $0x30] sm:$0xf]
    %v106 = vld [vmem:[#allocation2 + $0x34] sm:$0xf]
    %v107 = vld [vmem:[#allocation2 + $0x38] sm:$0xf]
    %v108 = vld [vmem:[#allocation2 + $0x3c] sm:$0xf]
    %v109 = vld [vmem:[#allocation2 + $0x40] sm:$0xf]
    %v110 = vld [vmem:[#allocation2 + $0x44] sm:$0xf]
    %v111 = vld [vmem:[#allocation2 + $0x48] sm:$0xf]
    %v112 = vld [vmem:[#allocation2 + $0x4c] sm:$0xf]
    %v113 = vld [vmem:[#allocation2 + $0x50] sm:$0xf]
    %v114 = vld [vmem:[#allocation2 + $0x54] sm:$0xf]
    %v115 = vld [vmem:[#allocation2 + $0x58] sm:$0xf]
    %v116 = vld [vmem:[#allocation2 + $0x5c] sm:$0xf]
    %v117 = vld [vmem:[#allocation2 + $0x60] sm:$0xf]
    %v118 = vld [vmem:[#allocation2 + $0x64] sm:$0xf]
    %v119 = vld [vmem:[#allocation2 + $0x68] sm:$0xf]
    %v120 = vld [vmem:[#allocation2 + $0x6c] sm:$0xf]
    %v121 = vld [vmem:[#allocation2 + $0x70] sm:$0xf]
    %v122 = vld [vmem:[#allocation2 + $0x74] sm:$0xf]
    %v123 = vld [vmem:[#allocation2 + $0x78] sm:$0xf]
    %v124 = vld [vmem:[#allocation2 + $0x7c] sm:$0xf]
    %v125 = vld [vmem:[#allocation2 + $0x80] sm:$0xf]
    %v126 = vld [vmem:[#allocation2 + $0x84] sm:$0xf]
    %v127 = vld [vmem:[#allocation2 + $0x88] sm:$0xf]
    %v128 = vld [vmem:[#allocation2 + $0x8c] sm:$0xf]
    %v129 = vld [vmem:[#allocation2 + $0x90] sm:$0xf]
    %v130 = vld [vmem:[#allocation2 + $0x94] sm:$0xf]
    %v131 = vld [vmem:[#allocation2 + $0x98] sm:$0xf]
    %v132 = vld [vmem:[#allocation2 + $0x9c] sm:$0xf]
    %v133 = vld [vmem:[#allocation2 + $0xa0] sm:$0xf]
    %v134 = vld [vmem:[#allocation2 + $0xa4] sm:$0xf]
    %v135 = vld [vmem:[#allocation2 + $0xa8] sm:$0xf]
    %v136 = vld [vmem:[#allocation2 + $0xac] sm:$0xf]
    %v137 = vld [vmem:[#allocation2 + $0xb0] sm:$0xf]
    %v138 = vld [vmem:[#allocation2 + $0xb4] sm:$0xf]
    %v139 = vld [vmem:[#allocation2 + $0xb8] sm:$0xf]
    %v140 = vld [vmem:[#allocation2 + $0xbc] sm:$0xf]
    %v141 = vld [vmem:[#allocation2 + $0xc0] sm:$0xf]
    %v142 = vld [vmem:[#allocation2 + $0xc4] sm:$0xf]
    %v143 = vld [vmem:[#allocation2 + $0xc8] sm:$0xf]
    %v144 = vld [vmem:[#allocation2 + $0xcc] sm:$0xf]
    %v145 = vld [vmem:[#allocation2 + $0xd0] sm:$0xf]
    %v146 = vld [vmem:[#allocation2 + $0xd4] sm:$0xf]
    %v147 = vld [vmem:[#allocation2 + $0xd8] sm:$0xf]
    %v148 = vld [vmem:[#allocation2 + $0xdc] sm:$0xf]
    %v149 = vld [vmem:[#allocation2 + $0xe0] sm:$0xf]
    %v150 = vld [vmem:[#allocation2 + $0xe4] sm:$0xf]
    %v151 = vld [vmem:[#allocation2 + $0xe8] sm:$0xf]
    %v152 = vld [vmem:[#allocation2 + $0xec] sm:$0xf]
    %v153 = vld [vmem:[#allocation2 + $0xf0] sm:$0xf]
    %v154 = vld [vmem:[#allocation2 + $0xf4] sm:$0xf]
    %v155 = vld [vmem:[#allocation2 + $0xf8] sm:$0xf]
    %v156 = vld [vmem:[#allocation2 + $0xfc] sm:$0xf]
    %v157 = vld [vmem:[#allocation2 + $0x100] sm:$0xf]
    %v158 = vld [vmem:[#allocation2 + $0x104] sm:$0xf]
    %v159 = vld [vmem:[#allocation2 + $0x108] sm:$0xf]
    %v160 = vld [vmem:[#allocation2 + $0x10c] sm:$0xf]
    %v161 = vld [vmem:[#allocation2 + $0x110] sm:$0xf]
    %v162 = vld [vmem:[#allocation2 + $0x114] sm:$0xf]
    %v163 = vld [vmem:[#allocation2 + $0x118] sm:$0xf]
    %v164 = vld [vmem:[#allocation2 + $0x11c] sm:$0xf]
    %v165 = vld [vmem:[#allocation2 + $0x120] sm:$0xf]
    %v166 = vld [vmem:[#allocation2 + $0x124] sm:$0xf]
    %v167 = vld [vmem:[#allocation2 + $0x128] sm:$0xf]
    %v168 = vld [vmem:[#allocation2 + $0x12c] sm:$0xf]
    %v169 = vld [vmem:[#allocation2 + $0x130] sm:$0xf]
    %v170 = vld [vmem:[#allocation2 + $0x134] sm:$0xf]
    %v171 = vld [vmem:[#allocation2 + $0x138] sm:$0xf]
    %v172 = vld [vmem:[#allocation2 + $0x13c] sm:$0xf]
    %v173 = vld [vmem:[#allocation2 + $0x140] sm:$0xf]
    %v174 = vld [vmem:[#allocation2 + $0x144] sm:$0xf]
    %v175 = vld [vmem:[#allocation2 + $0x148] sm:$0xf]
    %v176 = vld [vmem:[#allocation2 + $0x14c] sm:$0xf]
    %v177 = vld [vmem:[#allocation2 + $0x150] sm:$0xf]
    %v178 = vld [vmem:[#allocation2 + $0x154] sm:$0xf]
    %v179 = vld [vmem:[#allocation2 + $0x158] sm:$0xf]
    %v180 = vld [vmem:[#allocation2 + $0x15c] sm:$0xf]
    %v181 = vld [vmem:[#allocation2 + $0x160] sm:$0xf]
    %v182 = vld [vmem:[#allocation2 + $0x164] sm:$0xf]
    %v183 = vld [vmem:[#allocation2 + $0x168] sm:$0xf]
    %v184 = vld [vmem:[#allocation2 + $0x16c] sm:$0xf]
    %v185 = vld [vmem:[#allocation2 + $0x170] sm:$0xf]
    %v186 = vld [vmem:[#allocation2 + $0x174] sm:$0xf]
    %v187 = vld [vmem:[#allocation2 + $0x178] sm:$0xf]
    %v188 = vld [vmem:[#allocation2 + $0x17c] sm:$0xf]
    %v189 = vld [vmem:[#allocation2 + $0x180] sm:$0xf]
    %v190 = vld [vmem:[#allocation2 + $0x184] sm:$0xf]
    %v191 = vld [vmem:[#allocation2 + $0x188] sm:$0xf]
    %v192 = vld [vmem:[#allocation2 + $0x18c] sm:$0xf]
    %v193 = vld [vmem:[#allocation2 + $0x190] sm:$0xf]
    %v194 = vld [vmem:[#allocation2 + $0x194] sm:$0xf]
    %v195 = vld [vmem:[#allocation2 + $0x198] sm:$0xf]
    %v196 = vld [vmem:[#allocation2 + $0x19c] sm:$0xf]
    %v197 = vld [vmem:[#allocation2 + $0x1a0] sm:$0xf]
    %v198 = vld [vmem:[#allocation2 + $0x1a4] sm:$0xf]
    %v199 = vld [vmem:[#allocation2 + $0x1a8] sm:$0xf]
    %v200 = vld [vmem:[#allocation2 + $0x1ac] sm:$0xf]
    %v201 = vld [vmem:[#allocation2 + $0x1b0] sm:$0xf]
    %v202 = vld [vmem:[#allocation2 + $0x1b4] sm:$0xf]
    %v203 = vld [vmem:[#allocation2 + $0x1b8] sm:$0xf]
    %v204 = vld [vmem:[#allocation2 + $0x1bc] sm:$0xf]
    %v205 = vld [vmem:[#allocation2 + $0x1c0] sm:$0xf]
    %v206 = vld [vmem:[#allocation2 + $0x1c4] sm:$0xf]
    %v207 = vld [vmem:[#allocation2 + $0x1c8] sm:$0xf]
    %v208 = vld [vmem:[#allocation2 + $0x1cc] sm:$0xf]
    %v209 = vld [vmem:[#allocation2 + $0x1d0] sm:$0xf]
    %v210 = vld [vmem:[#allocation2 + $0x1d4] sm:$0xf]
    %v211 = vld [vmem:[#allocation2 + $0x1d8] sm:$0xf]
    %v212 = vld [vmem:[#allocation2 + $0x1dc] sm:$0xf]
    %v213 = vld [vmem:[#allocation2 + $0x1e0] sm:$0xf]
    %v214 = vld [vmem:[#allocation2 + $0x1e4] sm:$0xf]
    %v215 = vld [vmem:[#allocation2 + $0x1e8] sm:$0xf]
    %v216 = vld [vmem:[#allocation2 + $0x1ec] sm:$0xf]
    %v217 = vld [vmem:[#allocation2 + $0x1f0] sm:$0xf]
    %v218 = vld [vmem:[#allocation2 + $0x1f4] sm:$0xf]
    %v219 = vld [vmem:[#allocation2 + $0x1f8] sm:$0xf]
    %v220 = vld [vmem:[#allocation2 + $0x1fc] sm:$0xf]
    %v285 = vunpack.c.l.b16 %v29
    %v286 = vunpack.c.h.b16 %v29
    %v287 = vunpack.c.l.b16 %v30
    %v288 = vunpack.c.h.b16 %v30
    %v289 = vunpack.c.l.b16 %v31
    %v290 = vunpack.c.h.b16 %v31
    %v291 = vunpack.c.l.b16 %v32
    %v292 = vunpack.c.h.b16 %v32
    %v293 = vunpack.c.l.b16 %v33
    %v294 = vunpack.c.h.b16 %v33
    %v295 = vunpack.c.l.b16 %v34
    %v296 = vunpack.c.h.b16 %v34
    %v297 = vunpack.c.l.b16 %v35
    %v298 = vunpack.c.h.b16 %v35
    %v299 = vunpack.c.l.b16 %v36
    %v300 = vunpack.c.h.b16 %v36
    %v301 = vunpack.c.l.b16 %v37
    %v302 = vunpack.c.h.b16 %v37
    %v303 = vunpack.c.l.b16 %v38
    %v304 = vunpack.c.h.b16 %v38
    %v305 = vunpack.c.l.b16 %v39
    %v306 = vunpack.c.h.b16 %v39
    %v307 = vunpack.c.l.b16 %v40
    %v308 = vunpack.c.h.b16 %v40
    %v309 = vunpack.c.l.b16 %v41
    %v310 = vunpack.c.h.b16 %v41
    %v311 = vunpack.c.l.b16 %v42
    %v312 = vunpack.c.h.b16 %v42
    %v313 = vunpack.c.l.b16 %v43
    %v314 = vunpack.c.h.b16 %v43
    %v315 = vunpack.c.l.b16 %v44
    %v316 = vunpack.c.h.b16 %v44
    %v317 = vunpack.c.l.b16 %v45
    %v318 = vunpack.c.h.b16 %v45
    %v319 = vunpack.c.l.b16 %v46
    %v320 = vunpack.c.h.b16 %v46
    %v321 = vunpack.c.l.b16 %v47
    %v322 = vunpack.c.h.b16 %v47
    %v323 = vunpack.c.l.b16 %v48
    %v324 = vunpack.c.h.b16 %v48
    %v325 = vunpack.c.l.b16 %v49
    %v326 = vunpack.c.h.b16 %v49
    %v327 = vunpack.c.l.b16 %v50
    %v328 = vunpack.c.h.b16 %v50
    %v329 = vunpack.c.l.b16 %v51
    %v330 = vunpack.c.h.b16 %v51
    %v331 = vunpack.c.l.b16 %v52
    %v332 = vunpack.c.h.b16 %v52
    %v333 = vunpack.c.l.b16 %v53
    %v334 = vunpack.c.h.b16 %v53
    %v335 = vunpack.c.l.b16 %v54
    %v336 = vunpack.c.h.b16 %v54
    %v337 = vunpack.c.l.b16 %v55
    %v338 = vunpack.c.h.b16 %v55
    %v339 = vunpack.c.l.b16 %v56
    %v340 = vunpack.c.h.b16 %v56
    %v341 = vunpack.c.l.b16 %v57
    %v342 = vunpack.c.h.b16 %v57
    %v343 = vunpack.c.l.b16 %v58
    %v344 = vunpack.c.h.b16 %v58
    %v345 = vunpack.c.l.b16 %v59
    %v346 = vunpack.c.h.b16 %v59
    %v347 = vunpack.c.l.b16 %v60
    %v348 = vunpack.c.h.b16 %v60
    %v349 = vunpack.c.l.b16 %v61
    %v350 = vunpack.c.h.b16 %v61
    %v351 = vunpack.c.l.b16 %v62
    %v352 = vunpack.c.h.b16 %v62
    %v353 = vunpack.c.l.b16 %v63
    %v354 = vunpack.c.h.b16 %v63
    %v355 = vunpack.c.l.b16 %v64
    %v356 = vunpack.c.h.b16 %v64
    %v357 = vunpack.c.l.b16 %v65
    %v358 = vunpack.c.h.b16 %v65
    %v359 = vunpack.c.l.b16 %v66
    %v360 = vunpack.c.h.b16 %v66
    %v361 = vunpack.c.l.b16 %v67
    %v362 = vunpack.c.h.b16 %v67
    %v363 = vunpack.c.l.b16 %v68
    %v364 = vunpack.c.h.b16 %v68
    %v365 = vunpack.c.l.b16 %v69
    %v366 = vunpack.c.h.b16 %v69
    %v367 = vunpack.c.l.b16 %v70
    %v368 = vunpack.c.h.b16 %v70
    %v369 = vunpack.c.l.b16 %v71
    %v370 = vunpack.c.h.b16 %v71
    %v371 = vunpack.c.l.b16 %v72
    %v372 = vunpack.c.h.b16 %v72
    %v373 = vunpack.c.l.b16 %v73
    %v374 = vunpack.c.h.b16 %v73
    %v375 = vunpack.c.l.b16 %v74
    %v376 = vunpack.c.h.b16 %v74
    %v377 = vunpack.c.l.b16 %v75
    %v378 = vunpack.c.h.b16 %v75
    %v379 = vunpack.c.l.b16 %v76
    %v380 = vunpack.c.h.b16 %v76
    %v381 = vunpack.c.l.b16 %v77
    %v382 = vunpack.c.h.b16 %v77
    %v383 = vunpack.c.l.b16 %v78
    %v384 = vunpack.c.h.b16 %v78
    %v385 = vunpack.c.l.b16 %v79
    %v386 = vunpack.c.h.b16 %v79
    %v387 = vunpack.c.l.b16 %v80
    %v388 = vunpack.c.h.b16 %v80
    %v389 = vunpack.c.l.b16 %v81
    %v390 = vunpack.c.h.b16 %v81
    %v391 = vunpack.c.l.b16 %v82
    %v392 = vunpack.c.h.b16 %v82
    %v393 = vunpack.c.l.b16 %v83
    %v394 = vunpack.c.h.b16 %v83
    %v395 = vunpack.c.l.b16 %v84
    %v396 = vunpack.c.h.b16 %v84
    %v397 = vunpack.c.l.b16 %v85
    %v398 = vunpack.c.h.b16 %v85
    %v399 = vunpack.c.l.b16 %v86
    %v400 = vunpack.c.h.b16 %v86
    %v401 = vunpack.c.l.b16 %v87
    %v402 = vunpack.c.h.b16 %v87
    %v403 = vunpack.c.l.b16 %v88
    %v404 = vunpack.c.h.b16 %v88
    %v405 = vunpack.c.l.b16 %v89
    %v406 = vunpack.c.h.b16 %v89
    %v407 = vunpack.c.l.b16 %v90
    %v408 = vunpack.c.h.b16 %v90
    %v409 = vunpack.c.l.b16 %v91
    %v410 = vunpack.c.h.b16 %v91
    %v411 = vunpack.c.l.b16 %v92
    %v412 = vunpack.c.h.b16 %v92
    %v413 = vpack.c.b16 %v293, %v285
    %v414 = vpack.c.b16 %v294, %v286
    %v415 = vpack.c.b16 %v295, %v287
    %v416 = vpack.c.b16 %v296, %v288
    %v417 = vpack.c.b16 %v297, %v289
    %v418 = vpack.c.b16 %v298, %v290
    %v419 = vpack.c.b16 %v299, %v291
    %v420 = vpack.c.b16 %v300, %v292
    %v421 = vpack.c.b16 %v309, %v301
    %v422 = vpack.c.b16 %v310, %v302
    %v423 = vpack.c.b16 %v311, %v303
    %v424 = vpack.c.b16 %v312, %v304
    %v425 = vpack.c.b16 %v313, %v305
    %v426 = vpack.c.b16 %v314, %v306
    %v427 = vpack.c.b16 %v315, %v307
    %v428 = vpack.c.b16 %v316, %v308
    %v429 = vpack.c.b16 %v325, %v317
    %v430 = vpack.c.b16 %v326, %v318
    %v431 = vpack.c.b16 %v327, %v319
    %v432 = vpack.c.b16 %v328, %v320
    %v433 = vpack.c.b16 %v329, %v321
    %v434 = vpack.c.b16 %v330, %v322
    %v435 = vpack.c.b16 %v331, %v323
    %v436 = vpack.c.b16 %v332, %v324
    %v437 = vpack.c.b16 %v341, %v333
    %v438 = vpack.c.b16 %v342, %v334
    %v439 = vpack.c.b16 %v343, %v335
    %v440 = vpack.c.b16 %v344, %v336
    %v441 = vpack.c.b16 %v345, %v337
    %v442 = vpack.c.b16 %v346, %v338
    %v443 = vpack.c.b16 %v347, %v339
    %v444 = vpack.c.b16 %v348, %v340
    %v445 = vpack.c.b16 %v357, %v349
    %v446 = vpack.c.b16 %v358, %v350
    %v447 = vpack.c.b16 %v359, %v351
    %v448 = vpack.c.b16 %v360, %v352
    %v449 = vpack.c.b16 %v361, %v353
    %v450 = vpack.c.b16 %v362, %v354
    %v451 = vpack.c.b16 %v363, %v355
    %v452 = vpack.c.b16 %v364, %v356
    %v453 = vpack.c.b16 %v373, %v365
    %v454 = vpack.c.b16 %v374, %v366
    %v455 = vpack.c.b16 %v375, %v367
    %v456 = vpack.c.b16 %v376, %v368
    %v457 = vpack.c.b16 %v377, %v369
    %v458 = vpack.c.b16 %v378, %v370
    %v459 = vpack.c.b16 %v379, %v371
    %v460 = vpack.c.b16 %v380, %v372
    %v461 = vpack.c.b16 %v389, %v381
    %v462 = vpack.c.b16 %v390, %v382
    %v463 = vpack.c.b16 %v391, %v383
    %v464 = vpack.c.b16 %v392, %v384
    %v465 = vpack.c.b16 %v393, %v385
    %v466 = vpack.c.b16 %v394, %v386
    %v467 = vpack.c.b16 %v395, %v387
    %v468 = vpack.c.b16 %v396, %v388
    %v469 = vpack.c.b16 %v405, %v397
    %v470 = vpack.c.b16 %v406, %v398
    %v471 = vpack.c.b16 %v407, %v399
    %v472 = vpack.c.b16 %v408, %v400
    %v473 = vpack.c.b16 %v409, %v401
    %v474 = vpack.c.b16 %v410, %v402
    %v475 = vpack.c.b16 %v411, %v403
    %v476 = vpack.c.b16 %v412, %v404
    %v669 = vunpack.c.l.b16 %v93
    %v670 = vunpack.c.l.b16 %v94
    %v671 = vunpack.c.l.b16 %v95
    %v672 = vunpack.c.l.b16 %v96
    %v673 = vunpack.c.l.b16 %v97
    %v674 = vunpack.c.l.b16 %v98
    %v675 = vunpack.c.l.b16 %v99
    %v676 = vunpack.c.l.b16 %v100
    %v677 = vunpack.c.l.b16 %v101
    %v678 = vunpack.c.l.b16 %v102
    %v679 = vunpack.c.l.b16 %v103
    %v680 = vunpack.c.l.b16 %v104
    %v681 = vunpack.c.l.b16 %v105
    %v682 = vunpack.c.l.b16 %v106
    %v683 = vunpack.c.l.b16 %v107
    %v684 = vunpack.c.l.b16 %v108
    %v685 = vunpack.c.l.b16 %v109
    %v686 = vunpack.c.l.b16 %v110
    %v687 = vunpack.c.l.b16 %v111
    %v688 = vunpack.c.l.b16 %v112
    %v689 = vunpack.c.l.b16 %v113
    %v690 = vunpack.c.l.b16 %v114
    %v691 = vunpack.c.l.b16 %v115
    %v692 = vunpack.c.l.b16 %v116
    %v693 = vunpack.c.l.b16 %v117
    %v694 = vunpack.c.l.b16 %v118
    %v695 = vunpack.c.l.b16 %v119
    %v696 = vunpack.c.l.b16 %v120
    %v697 = vunpack.c.l.b16 %v121
    %v698 = vunpack.c.l.b16 %v122
    %v699 = vunpack.c.l.b16 %v123
    %v700 = vunpack.c.l.b16 %v124
    %v701 = vunpack.c.l.b16 %v125
    %v702 = vunpack.c.l.b16 %v126
    %v703 = vunpack.c.l.b16 %v127
    %v704 = vunpack.c.l.b16 %v128
    %v705 = vunpack.c.l.b16 %v129
    %v706 = vunpack.c.l.b16 %v130
    %v707 = vunpack.c.l.b16 %v131
    %v708 = vunpack.c.l.b16 %v132
    %v709 = vunpack.c.l.b16 %v133
    %v710 = vunpack.c.l.b16 %v134
    %v711 = vunpack.c.l.b16 %v135
    %v712 = vunpack.c.l.b16 %v136
    %v713 = vunpack.c.l.b16 %v137
    %v714 = vunpack.c.l.b16 %v138
    %v715 = vunpack.c.l.b16 %v139
    %v716 = vunpack.c.l.b16 %v140
    %v717 = vunpack.c.l.b16 %v141
    %v718 = vunpack.c.l.b16 %v142
    %v719 = vunpack.c.l.b16 %v143
    %v720 = vunpack.c.l.b16 %v144
    %v721 = vunpack.c.l.b16 %v145
    %v722 = vunpack.c.l.b16 %v146
    %v723 = vunpack.c.l.b16 %v147
    %v724 = vunpack.c.l.b16 %v148
    %v725 = vunpack.c.l.b16 %v149
    %v726 = vunpack.c.l.b16 %v150
    %v727 = vunpack.c.l.b16 %v151
    %v728 = vunpack.c.l.b16 %v152
    %v729 = vunpack.c.l.b16 %v153
    %v730 = vunpack.c.l.b16 %v154
    %v731 = vunpack.c.l.b16 %v155
    %v732 = vunpack.c.l.b16 %v156
    %v733 = vunpack.c.l.b16 %v157
    %v734 = vunpack.c.l.b16 %v158
    %v735 = vunpack.c.l.b16 %v159
    %v736 = vunpack.c.l.b16 %v160
    %v737 = vunpack.c.l.b16 %v161
    %v738 = vunpack.c.l.b16 %v162
    %v739 = vunpack.c.l.b16 %v163
    %v740 = vunpack.c.l.b16 %v164
    %v741 = vunpack.c.l.b16 %v165
    %v742 = vunpack.c.l.b16 %v166
    %v743 = vunpack.c.l.b16 %v167
    %v744 = vunpack.c.l.b16 %v168
    %v745 = vunpack.c.l.b16 %v169
    %v746 = vunpack.c.l.b16 %v170
    %v747 = vunpack.c.l.b16 %v171
    %v748 = vunpack.c.l.b16 %v172
    %v749 = vunpack.c.l.b16 %v173
    %v750 = vunpack.c.l.b16 %v174
    %v751 = vunpack.c.l.b16 %v175
    %v752 = vunpack.c.l.b16 %v176
    %v753 = vunpack.c.l.b16 %v177
    %v754 = vunpack.c.l.b16 %v178
    %v755 = vunpack.c.l.b16 %v179
    %v756 = vunpack.c.l.b16 %v180
    %v757 = vunpack.c.l.b16 %v181
    %v758 = vunpack.c.l.b16 %v182
    %v759 = vunpack.c.l.b16 %v183
    %v760 = vunpack.c.l.b16 %v184
    %v761 = vunpack.c.l.b16 %v185
    %v762 = vunpack.c.l.b16 %v186
    %v763 = vunpack.c.l.b16 %v187
    %v764 = vunpack.c.l.b16 %v188
    %v765 = vunpack.c.l.b16 %v189
    %v766 = vunpack.c.l.b16 %v190
    %v767 = vunpack.c.l.b16 %v191
    %v768 = vunpack.c.l.b16 %v192
    %v769 = vunpack.c.l.b16 %v193
    %v770 = vunpack.c.l.b16 %v194
    %v771 = vunpack.c.l.b16 %v195
    %v772 = vunpack.c.l.b16 %v196
    %v773 = vunpack.c.l.b16 %v197
    %v774 = vunpack.c.l.b16 %v198
    %v775 = vunpack.c.l.b16 %v199
    %v776 = vunpack.c.l.b16 %v200
    %v777 = vunpack.c.l.b16 %v201
    %v778 = vunpack.c.l.b16 %v202
    %v779 = vunpack.c.l.b16 %v203
    %v780 = vunpack.c.l.b16 %v204
    %v781 = vunpack.c.l.b16 %v205
    %v782 = vunpack.c.l.b16 %v206
    %v783 = vunpack.c.l.b16 %v207
    %v784 = vunpack.c.l.b16 %v208
    %v785 = vunpack.c.l.b16 %v209
    %v786 = vunpack.c.l.b16 %v210
    %v787 = vunpack.c.l.b16 %v211
    %v788 = vunpack.c.l.b16 %v212
    %v789 = vunpack.c.l.b16 %v213
    %v790 = vunpack.c.l.b16 %v214
    %v791 = vunpack.c.l.b16 %v215
    %v792 = vunpack.c.l.b16 %v216
    %v793 = vunpack.c.l.b16 %v217
    %v794 = vunpack.c.l.b16 %v218
    %v795 = vunpack.c.l.b16 %v219
    %v796 = vunpack.c.l.b16 %v220
    %v797 = vpack.c.b16 %v670, %v669
    %v798 = vpack.c.b16 %v672, %v671
    %v799 = vpack.c.b16 %v674, %v673
    %v800 = vpack.c.b16 %v676, %v675
    %v801 = vpack.c.b16 %v678, %v677
    %v802 = vpack.c.b16 %v680, %v679
    %v803 = vpack.c.b16 %v682, %v681
    %v804 = vpack.c.b16 %v684, %v683
    %v805 = vpack.c.b16 %v686, %v685
    %v806 = vpack.c.b16 %v688, %v687
    %v807 = vpack.c.b16 %v690, %v689
    %v808 = vpack.c.b16 %v692, %v691
    %v809 = vpack.c.b16 %v694, %v693
    %v810 = vpack.c.b16 %v696, %v695
    %v811 = vpack.c.b16 %v698, %v697
    %v812 = vpack.c.b16 %v700, %v699
    %v813 = vpack.c.b16 %v702, %v701
    %v814 = vpack.c.b16 %v704, %v703
    %v815 = vpack.c.b16 %v706, %v705
    %v816 = vpack.c.b16 %v708, %v707
    %v817 = vpack.c.b16 %v710, %v709
    %v818 = vpack.c.b16 %v712, %v711
    %v819 = vpack.c.b16 %v714, %v713
    %v820 = vpack.c.b16 %v716, %v715
    %v821 = vpack.c.b16 %v718, %v717
    %v822 = vpack.c.b16 %v720, %v719
    %v823 = vpack.c.b16 %v722, %v721
    %v824 = vpack.c.b16 %v724, %v723
    %v825 = vpack.c.b16 %v726, %v725
    %v826 = vpack.c.b16 %v728, %v727
    %v827 = vpack.c.b16 %v730, %v729
    %v828 = vpack.c.b16 %v732, %v731
    %v829 = vpack.c.b16 %v734, %v733
    %v830 = vpack.c.b16 %v736, %v735
    %v831 = vpack.c.b16 %v738, %v737
    %v832 = vpack.c.b16 %v740, %v739
    %v833 = vpack.c.b16 %v742, %v741
    %v834 = vpack.c.b16 %v744, %v743
    %v835 = vpack.c.b16 %v746, %v745
    %v836 = vpack.c.b16 %v748, %v747
    %v837 = vpack.c.b16 %v750, %v749
    %v838 = vpack.c.b16 %v752, %v751
    %v839 = vpack.c.b16 %v754, %v753
    %v840 = vpack.c.b16 %v756, %v755
    %v841 = vpack.c.b16 %v758, %v757
    %v842 = vpack.c.b16 %v760, %v759
    %v843 = vpack.c.b16 %v762, %v761
    %v844 = vpack.c.b16 %v764, %v763
    %v845 = vpack.c.b16 %v766, %v765
    %v846 = vpack.c.b16 %v768, %v767
    %v847 = vpack.c.b16 %v770, %v769
    %v848 = vpack.c.b16 %v772, %v771
    %v849 = vpack.c.b16 %v774, %v773
    %v850 = vpack.c.b16 %v776, %v775
    %v851 = vpack.c.b16 %v778, %v777
    %v852 = vpack.c.b16 %v780, %v779
    %v853 = vpack.c.b16 %v782, %v781
    %v854 = vpack.c.b16 %v784, %v783
    %v855 = vpack.c.b16 %v786, %v785
    %v856 = vpack.c.b16 %v788, %v787
    %v857 = vpack.c.b16 %v790, %v789
    %v858 = vpack.c.b16 %v792, %v791
    %v859 = vpack.c.b16 %v794, %v793
    %v860 = vpack.c.b16 %v796, %v795
    %925 = vmatprep.subr.bf16.mxu0 0
    %926 = vmatpush1.bf16.msra.mxu0 %v797
    %927 = vmatprep.subr.bf16.mxu0 0
    %928 = vmatpush1.bf16.msra.mxu0 %v798
    %929 = vmatprep.subr.bf16.mxu0 0
    %930 = vmatpush1.bf16.msra.mxu0 %v799
    %931 = vmatprep.subr.bf16.mxu0 0
    %932 = vmatpush1.bf16.msra.mxu0 %v800
    %933 = vmatprep.subr.bf16.mxu0 0
    %934 = vmatpush1.bf16.msra.mxu0 %v801
    %935 = vmatprep.subr.bf16.mxu0 0
    %936 = vmatpush1.bf16.msra.mxu0 %v802
    %937 = vmatprep.subr.bf16.mxu0 0
    %938 = vmatpush1.bf16.msra.mxu0 %v803
    %939 = vmatprep.subr.bf16.mxu0 0
    %940 = vmatpush1.bf16.msra.mxu0 %v804
    %941 = vmatprep.subr.bf16.mxu0 0
    %942 = vmatpush1.bf16.msra.mxu0 %v805
    %943 = vmatprep.subr.bf16.mxu0 0
    %944 = vmatpush1.bf16.msra.mxu0 %v806
    %945 = vmatprep.subr.bf16.mxu0 0
    %946 = vmatpush1.bf16.msra.mxu0 %v807
    %947 = vmatprep.subr.bf16.mxu0 0
    %948 = vmatpush1.bf16.msra.mxu0 %v808
    %949 = vmatprep.subr.bf16.mxu0 0
    %950 = vmatpush1.bf16.msra.mxu0 %v809
    %951 = vmatprep.subr.bf16.mxu0 0
    %952 = vmatpush1.bf16.msra.mxu0 %v810
    %953 = vmatprep.subr.bf16.mxu0 0
    %954 = vmatpush1.bf16.msra.mxu0 %v811
    %955 = vmatprep.subr.bf16.mxu0 0
    %956 = vmatpush1.bf16.msra.mxu0 %v812
    %957 = vmatprep.mubr.bf16.mxu0 %v414
    %958 = vmatmul.mubr.bf16.gmra.mrb[0].mxu0 %v413
    %v959 = vpop.f32.mrb[0].mxu0
    %v960 = vadd.f32 0.0, %v959
    %v961 = vpop.f32.mrb[0].mxu0
    %v962 = vpop.f32.mrb[0].mxu0
    %v963 = vadd.f32 0.0, %v962
    %v964 = vpop.f32.mrb[0].mxu0
    %965 = vmatprep.mubr.bf16.mxu0 %v422
    %966 = vmatmul.mubr.bf16.gmra.mrb[0].mxu0 %v421
    %v967 = vpop.f32.mrb[0].mxu0
    %v968 = vadd.f32 0.0, %v967
    %v969 = vpop.f32.mrb[0].mxu0
    %v970 = vpop.f32.mrb[0].mxu0
    %v971 = vadd.f32 0.0, %v970
    %v972 = vpop.f32.mrb[0].mxu0
    %973 = vmatprep.mubr.bf16.mxu0 %v430
    %974 = vmatmul.mubr.bf16.gmra.mrb[0].mxu0 %v429
    %v975 = vpop.f32.mrb[0].mxu0
    %v976 = vadd.f32 0.0, %v975
    %v977 = vpop.f32.mrb[0].mxu0
    %v978 = vpop.f32.mrb[0].mxu0
    %v979 = vadd.f32 0.0, %v978
    %v980 = vpop.f32.mrb[0].mxu0
    %981 = vmatprep.mubr.bf16.mxu0 %v438
    %982 = vmatmul.mubr.bf16.gmra.mrb[0].mxu0 %v437
    %v983 = vpop.f32.mrb[0].mxu0
    %v984 = vadd.f32 0.0, %v983
    %v985 = vpop.f32.mrb[0].mxu0
    %v986 = vpop.f32.mrb[0].mxu0
    %v987 = vadd.f32 0.0, %v986
    %v988 = vpop.f32.mrb[0].mxu0
    %989 = vmatprep.mubr.bf16.mxu0 %v446
    %990 = vmatmul.mubr.bf16.gmra.mrb[0].mxu0 %v445
    %v991 = vpop.f32.mrb[0].mxu0
    %v992 = vadd.f32 0.0, %v991
    %v993 = vpop.f32.mrb[0].mxu0
    %v994 = vpop.f32.mrb[0].mxu0
    %v995 = vadd.f32 0.0, %v994
    %v996 = vpop.f32.mrb[0].mxu0
    %997 = vmatprep.mubr.bf16.mxu0 %v454
    %998 = vmatmul.mubr.bf16.gmra.mrb[0].mxu0 %v453
    %v999 = vpop.f32.mrb[0].mxu0
    %v1000 = vadd.f32 0.0, %v999
    %v1001 = vpop.f32.mrb[0].mxu0
    %v1002 = vpop.f32.mrb[0].mxu0
    %v1003 = vadd.f32 0.0, %v1002
    %v1004 = vpop.f32.mrb[0].mxu0
    %1005 = vmatprep.mubr.bf16.mxu0 %v462
    %1006 = vmatmul.mubr.bf16.gmra.mrb[0].mxu0 %v461
    %v1007 = vpop.f32.mrb[0].mxu0
    %v1008 = vadd.f32 0.0, %v1007
    %v1009 = vpop.f32.mrb[0].mxu0
    %v1010 = vpop.f32.mrb[0].mxu0
    %v1011 = vadd.f32 0.0, %v1010
    %v1012 = vpop.f32.mrb[0].mxu0
    %1013 = vmatprep.mubr.bf16.mxu0 %v470
    %1014 = vmatmul.mubr.bf16.gmra.mrb[0].mxu0 %v469
    %v1015 = vpop.f32.mrb[0].mxu0
    %v1016 = vadd.f32 0.0, %v1015
    %v1017 = vpop.f32.mrb[0].mxu0
    %v1018 = vpop.f32.mrb[0].mxu0
    %v1019 = vadd.f32 0.0, %v1018
    %v1020 = vpop.f32.mrb[0].mxu0
    %1021 = vdwg.mxu0
    %1022 = vmatprep.subr.bf16.mxu0 0
    %1023 = vmatpush1.bf16.msra.mxu0 %v813
    %1024 = vmatprep.subr.bf16.mxu0 0
    %1025 = vmatpush1.bf16.msra.mxu0 %v814
    %1026 = vmatprep.subr.bf16.mxu0 0
    %1027 = vmatpush1.bf16.msra.mxu0 %v815
    %1028 = vmatprep.subr.bf16.mxu0 0
    %1029 = vmatpush1.bf16.msra.mxu0 %v816
    %1030 = vmatprep.subr.bf16.mxu0 0
    %1031 = vmatpush1.bf16.msra.mxu0 %v817
    %1032 = vmatprep.subr.bf16.mxu0 0
    %1033 = vmatpush1.bf16.msra.mxu0 %v818
    %1034 = vmatprep.subr.bf16.mxu0 0
    %1035 = vmatpush1.bf16.msra.mxu0 %v819
    %1036 = vmatprep.subr.bf16.mxu0 0
    %1037 = vmatpush1.bf16.msra.mxu0 %v820
    %1038 = vmatprep.subr.bf16.mxu0 0
    %1039 = vmatpush1.bf16.msra.mxu0 %v821
    %1040 = vmatprep.subr.bf16.mxu0 0
    %1041 = vmatpush1.bf16.msra.mxu0 %v822
    %1042 = vmatprep.subr.bf16.mxu0 0
    %1043 = vmatpush1.bf16.msra.mxu0 %v823
    %1044 = vmatprep.subr.bf16.mxu0 0
    %1045 = vmatpush1.bf16.msra.mxu0 %v824
    %1046 = vmatprep.subr.bf16.mxu0 0
    %1047 = vmatpush1.bf16.msra.mxu0 %v825
    %1048 = vmatprep.subr.bf16.mxu0 0
    %1049 = vmatpush1.bf16.msra.mxu0 %v826
    %1050 = vmatprep.subr.bf16.mxu0 0
    %1051 = vmatpush1.bf16.msra.mxu0 %v827
    %1052 = vmatprep.subr.bf16.mxu0 0
    %1053 = vmatpush1.bf16.msra.mxu0 %v828
    %1054 = vmatprep.mubr.bf16.mxu0 %v416
    %1055 = vmatmul.mubr.bf16.gmra.mrb[0].mxu0 %v415
    %v1056 = vpop.f32.mrb[0].mxu0
    %v1057 = vadd.f32 %v960, %v1056
    %v1058 = vpop.f32.mrb[0].mxu0
    %v1059 = vpop.f32.mrb[0].mxu0
    %v1060 = vadd.f32 %v963, %v1059
    %v1061 = vpop.f32.mrb[0].mxu0
    %1062 = vmatprep.mubr.bf16.mxu0 %v424
    %1063 = vmatmul.mubr.bf16.gmra.mrb[0].mxu0 %v423
    %v1064 = vpop.f32.mrb[0].mxu0
    %v1065 = vadd.f32 %v968, %v1064
    %v1066 = vpop.f32.mrb[0].mxu0
    %v1067 = vpop.f32.mrb[0].mxu0
    %v1068 = vadd.f32 %v971, %v1067
    %v1069 = vpop.f32.mrb[0].mxu0
    %1070 = vmatprep.mubr.bf16.mxu0 %v432
    %1071 = vmatmul.mubr.bf16.gmra.mrb[0].mxu0 %v431
    %v1072 = vpop.f32.mrb[0].mxu0
    %v1073 = vadd.f32 %v976, %v1072
    %v1074 = vpop.f32.mrb[0].mxu0
    %v1075 = vpop.f32.mrb[0].mxu0
    %v1076 = vadd.f32 %v979, %v1075
    %v1077 = vpop.f32.mrb[0].mxu0
    %1078 = vmatprep.mubr.bf16.mxu0 %v440
    %1079 = vmatmul.mubr.bf16.gmra.mrb[0].mxu0 %v439
    %v1080 = vpop.f32.mrb[0].mxu0
    %v1081 = vadd.f32 %v984, %v1080
    %v1082 = vpop.f32.mrb[0].mxu0
    %v1083 = vpop.f32.mrb[0].mxu0
    %v1084 = vadd.f32 %v987, %v1083
    %v1085 = vpop.f32.mrb[0].mxu0
    %1086 = vmatprep.mubr.bf16.mxu0 %v448
    %1087 = vmatmul.mubr.bf16.gmra.mrb[0].mxu0 %v447
    %v1088 = vpop.f32.mrb[0].mxu0
    %v1089 = vadd.f32 %v992, %v1088
    %v1090 = vpop.f32.mrb[0].mxu0
    %v1091 = vpop.f32.mrb[0].mxu0
    %v1092 = vadd.f32 %v995, %v1091
    %v1093 = vpop.f32.mrb[0].mxu0
    %1094 = vmatprep.mubr.bf16.mxu0 %v456
    %1095 = vmatmul.mubr.bf16.gmra.mrb[0].mxu0 %v455
    %v1096 = vpop.f32.mrb[0].mxu0
    %v1097 = vadd.f32 %v1000, %v1096
    %v1098 = vpop.f32.mrb[0].mxu0
    %v1099 = vpop.f32.mrb[0].mxu0
    %v1100 = vadd.f32 %v1003, %v1099
    %v1101 = vpop.f32.mrb[0].mxu0
    %1102 = vmatprep.mubr.bf16.mxu0 %v464
    %1103 = vmatmul.mubr.bf16.gmra.mrb[0].mxu0 %v463
    %v1104 = vpop.f32.mrb[0].mxu0
    %v1105 = vadd.f32 %v1008, %v1104
    %v1106 = vpop.f32.mrb[0].mxu0
    %v1107 = vpop.f32.mrb[0].mxu0
    %v1108 = vadd.f32 %v1011, %v1107
    %v1109 = vpop.f32.mrb[0].mxu0
    %1110 = vmatprep.mubr.bf16.mxu0 %v472
    %1111 = vmatmul.mubr.bf16.gmra.mrb[0].mxu0 %v471
    %v1112 = vpop.f32.mrb[0].mxu0
    %v1113 = vadd.f32 %v1016, %v1112
    %v1114 = vpop.f32.mrb[0].mxu0
    %v1115 = vpop.f32.mrb[0].mxu0
    %v1116 = vadd.f32 %v1019, %v1115
    %v1117 = vpop.f32.mrb[0].mxu0
    %1118 = vdwg.mxu0
    %1119 = vmatprep.subr.bf16.mxu0 0
    %1120 = vmatpush1.bf16.msra.mxu0 %v829
    %1121 = vmatprep.subr.bf16.mxu0 0
    %1122 = vmatpush1.bf16.msra.mxu0 %v830
    %1123 = vmatprep.subr.bf16.mxu0 0
    %1124 = vmatpush1.bf16.msra.mxu0 %v831
    %1125 = vmatprep.subr.bf16.mxu0 0
    %1126 = vmatpush1.bf16.msra.mxu0 %v832
    %1127 = vmatprep.subr.bf16.mxu0 0
    %1128 = vmatpush1.bf16.msra.mxu0 %v833
    %1129 = vmatprep.subr.bf16.mxu0 0
    %1130 = vmatpush1.bf16.msra.mxu0 %v834
    %1131 = vmatprep.subr.bf16.mxu0 0
    %1132 = vmatpush1.bf16.msra.mxu0 %v835
    %1133 = vmatprep.subr.bf16.mxu0 0
    %1134 = vmatpush1.bf16.msra.mxu0 %v836
    %1135 = vmatprep.subr.bf16.mxu0 0
    %1136 = vmatpush1.bf16.msra.mxu0 %v837
    %1137 = vmatprep.subr.bf16.mxu0 0
    %1138 = vmatpush1.bf16.msra.mxu0 %v838
    %1139 = vmatprep.subr.bf16.mxu0 0
    %1140 = vmatpush1.bf16.msra.mxu0 %v839
    %1141 = vmatprep.subr.bf16.mxu0 0
    %1142 = vmatpush1.bf16.msra.mxu0 %v840
    %1143 = vmatprep.subr.bf16.mxu0 0
    %1144 = vmatpush1.bf16.msra.mxu0 %v841
    %1145 = vmatprep.subr.bf16.mxu0 0
    %1146 = vmatpush1.bf16.msra.mxu0 %v842
    %1147 = vmatprep.subr.bf16.mxu0 0
    %1148 = vmatpush1.bf16.msra.mxu0 %v843
    %1149 = vmatprep.subr.bf16.mxu0 0
    %1150 = vmatpush1.bf16.msra.mxu0 %v844
    %1151 = vmatprep.mubr.bf16.mxu0 %v418
    %1152 = vmatmul.mubr.bf16.gmra.mrb[0].mxu0 %v417
    %v1153 = vpop.f32.mrb[0].mxu0
    %v1154 = vadd.f32 %v1057, %v1153
    %v1155 = vpop.f32.mrb[0].mxu0
    %v1156 = vpop.f32.mrb[0].mxu0
    %v1157 = vadd.f32 %v1060, %v1156
    %v1158 = vpop.f32.mrb[0].mxu0
    %1159 = vmatprep.mubr.bf16.mxu0 %v426
    %1160 = vmatmul.mubr.bf16.gmra.mrb[0].mxu0 %v425
    %v1161 = vpop.f32.mrb[0].mxu0
    %v1162 = vadd.f32 %v1065, %v1161
    %v1163 = vpop.f32.mrb[0].mxu0
    %v1164 = vpop.f32.mrb[0].mxu0
    %v1165 = vadd.f32 %v1068, %v1164
    %v1166 = vpop.f32.mrb[0].mxu0
    %1167 = vmatprep.mubr.bf16.mxu0 %v434
    %1168 = vmatmul.mubr.bf16.gmra.mrb[0].mxu0 %v433
    %v1169 = vpop.f32.mrb[0].mxu0
    %v1170 = vadd.f32 %v1073, %v1169
    %v1171 = vpop.f32.mrb[0].mxu0
    %v1172 = vpop.f32.mrb[0].mxu0
    %v1173 = vadd.f32 %v1076, %v1172
    %v1174 = vpop.f32.mrb[0].mxu0
    %1175 = vmatprep.mubr.bf16.mxu0 %v442
    %1176 = vmatmul.mubr.bf16.gmra.mrb[0].mxu0 %v441
    %v1177 = vpop.f32.mrb[0].mxu0
    %v1178 = vadd.f32 %v1081, %v1177
    %v1179 = vpop.f32.mrb[0].mxu0
    %v1180 = vpop.f32.mrb[0].mxu0
    %v1181 = vadd.f32 %v1084, %v1180
    %v1182 = vpop.f32.mrb[0].mxu0
    %1183 = vmatprep.mubr.bf16.mxu0 %v450
    %1184 = vmatmul.mubr.bf16.gmra.mrb[0].mxu0 %v449
    %v1185 = vpop.f32.mrb[0].mxu0
    %v1186 = vadd.f32 %v1089, %v1185
    %v1187 = vpop.f32.mrb[0].mxu0
    %v1188 = vpop.f32.mrb[0].mxu0
    %v1189 = vadd.f32 %v1092, %v1188
    %v1190 = vpop.f32.mrb[0].mxu0
    %1191 = vmatprep.mubr.bf16.mxu0 %v458
    %1192 = vmatmul.mubr.bf16.gmra.mrb[0].mxu0 %v457
    %v1193 = vpop.f32.mrb[0].mxu0
    %v1194 = vadd.f32 %v1097, %v1193
    %v1195 = vpop.f32.mrb[0].mxu0
    %v1196 = vpop.f32.mrb[0].mxu0
    %v1197 = vadd.f32 %v1100, %v1196
    %v1198 = vpop.f32.mrb[0].mxu0
    %1199 = vmatprep.mubr.bf16.mxu0 %v466
    %1200 = vmatmul.mubr.bf16.gmra.mrb[0].mxu0 %v465
    %v1201 = vpop.f32.mrb[0].mxu0
    %v1202 = vadd.f32 %v1105, %v1201
    %v1203 = vpop.f32.mrb[0].mxu0
    %v1204 = vpop.f32.mrb[0].mxu0
    %v1205 = vadd.f32 %v1108, %v1204
    %v1206 = vpop.f32.mrb[0].mxu0
    %1207 = vmatprep.mubr.bf16.mxu0 %v474
    %1208 = vmatmul.mubr.bf16.gmra.mrb[0].mxu0 %v473
    %v1209 = vpop.f32.mrb[0].mxu0
    %v1210 = vadd.f32 %v1113, %v1209
    %v1211 = vpop.f32.mrb[0].mxu0
    %v1212 = vpop.f32.mrb[0].mxu0
    %v1213 = vadd.f32 %v1116, %v1212
    %v1214 = vpop.f32.mrb[0].mxu0
    %1215 = vdwg.mxu0
    %1216 = vmatprep.subr.bf16.mxu0 0
    %1217 = vmatpush1.bf16.msra.mxu0 %v845
    %1218 = vmatprep.subr.bf16.mxu0 0
    %1219 = vmatpush1.bf16.msra.mxu0 %v846
    %1220 = vmatprep.subr.bf16.mxu0 0
    %1221 = vmatpush1.bf16.msra.mxu0 %v847
    %1222 = vmatprep.subr.bf16.mxu0 0
    %1223 = vmatpush1.bf16.msra.mxu0 %v848
    %1224 = vmatprep.subr.bf16.mxu0 0
    %1225 = vmatpush1.bf16.msra.mxu0 %v849
    %1226 = vmatprep.subr.bf16.mxu0 0
    %1227 = vmatpush1.bf16.msra.mxu0 %v850
    %1228 = vmatprep.subr.bf16.mxu0 0
    %1229 = vmatpush1.bf16.msra.mxu0 %v851
    %1230 = vmatprep.subr.bf16.mxu0 0
    %1231 = vmatpush1.bf16.msra.mxu0 %v852
    %1232 = vmatprep.subr.bf16.mxu0 0
    %1233 = vmatpush1.bf16.msra.mxu0 %v853
    %1234 = vmatprep.subr.bf16.mxu0 0
    %1235 = vmatpush1.bf16.msra.mxu0 %v854
    %1236 = vmatprep.subr.bf16.mxu0 0
    %1237 = vmatpush1.bf16.msra.mxu0 %v855
    %1238 = vmatprep.subr.bf16.mxu0 0
    %1239 = vmatpush1.bf16.msra.mxu0 %v856
    %1240 = vmatprep.subr.bf16.mxu0 0
    %1241 = vmatpush1.bf16.msra.mxu0 %v857
    %1242 = vmatprep.subr.bf16.mxu0 0
    %1243 = vmatpush1.bf16.msra.mxu0 %v858
    %1244 = vmatprep.subr.bf16.mxu0 0
    %1245 = vmatpush1.bf16.msra.mxu0 %v859
    %1246 = vmatprep.subr.bf16.mxu0 0
    %1247 = vmatpush1.bf16.msra.mxu0 %v860
    %1248 = vmatprep.mubr.bf16.mxu0 %v420
    %1249 = vmatmul.mubr.bf16.gmra.mrb[0].mxu0 %v419
    %v1250 = vpop.f32.mrb[0].mxu0
    %v1251 = vadd.f32 %v1154, %v1250
    %v1252 = vpop.f32.mrb[0].mxu0
    %v1253 = vpop.f32.mrb[0].mxu0
    %v1254 = vadd.f32 %v1157, %v1253
    %v1255 = vpop.f32.mrb[0].mxu0
    %1256 = vmatprep.mubr.bf16.mxu0 %v428
    %1257 = vmatmul.mubr.bf16.gmra.mrb[0].mxu0 %v427
    %v1258 = vpop.f32.mrb[0].mxu0
    %v1259 = vadd.f32 %v1162, %v1258
    %v1260 = vpop.f32.mrb[0].mxu0
    %v1261 = vpop.f32.mrb[0].mxu0
    %v1262 = vadd.f32 %v1165, %v1261
    %v1263 = vpop.f32.mrb[0].mxu0
    %1264 = vmatprep.mubr.bf16.mxu0 %v436
    %1265 = vmatmul.mubr.bf16.gmra.mrb[0].mxu0 %v435
    %v1266 = vpop.f32.mrb[0].mxu0
    %v1267 = vadd.f32 %v1170, %v1266
    %v1268 = vpop.f32.mrb[0].mxu0
    %v1269 = vpop.f32.mrb[0].mxu0
    %v1270 = vadd.f32 %v1173, %v1269
    %v1271 = vpop.f32.mrb[0].mxu0
    %1272 = vmatprep.mubr.bf16.mxu0 %v444
    %1273 = vmatmul.mubr.bf16.gmra.mrb[0].mxu0 %v443
    %v1274 = vpop.f32.mrb[0].mxu0
    %v1275 = vadd.f32 %v1178, %v1274
    %v1276 = vpop.f32.mrb[0].mxu0
    %v1277 = vpop.f32.mrb[0].mxu0
    %v1278 = vadd.f32 %v1181, %v1277
    %v1279 = vpop.f32.mrb[0].mxu0
    %1280 = vmatprep.mubr.bf16.mxu0 %v452
    %1281 = vmatmul.mubr.bf16.gmra.mrb[0].mxu0 %v451
    %v1282 = vpop.f32.mrb[0].mxu0
    %v1283 = vadd.f32 %v1186, %v1282
    %v1284 = vpop.f32.mrb[0].mxu0
    %v1285 = vpop.f32.mrb[0].mxu0
    %v1286 = vadd.f32 %v1189, %v1285
    %v1287 = vpop.f32.mrb[0].mxu0
    %1288 = vmatprep.mubr.bf16.mxu0 %v460
    %1289 = vmatmul.mubr.bf16.gmra.mrb[0].mxu0 %v459
    %v1290 = vpop.f32.mrb[0].mxu0
    %v1291 = vadd.f32 %v1194, %v1290
    %v1292 = vpop.f32.mrb[0].mxu0
    %v1293 = vpop.f32.mrb[0].mxu0
    %v1294 = vadd.f32 %v1197, %v1293
    %v1295 = vpop.f32.mrb[0].mxu0
    %1296 = vmatprep.mubr.bf16.mxu0 %v468
    %1297 = vmatmul.mubr.bf16.gmra.mrb[0].mxu0 %v467
    %v1298 = vpop.f32.mrb[0].mxu0
    %v1299 = vadd.f32 %v1202, %v1298
    %v1300 = vpop.f32.mrb[0].mxu0
    %v1301 = vpop.f32.mrb[0].mxu0
    %v1302 = vadd.f32 %v1205, %v1301
    %v1303 = vpop.f32.mrb[0].mxu0
    %1304 = vmatprep.mubr.bf16.mxu0 %v476
    %1305 = vmatmul.mubr.bf16.gmra.mrb[0].mxu0 %v475
    %v1306 = vpop.f32.mrb[0].mxu0
    %v1307 = vadd.f32 %v1210, %v1306
    %v1308 = vpop.f32.mrb[0].mxu0
    %v1309 = vpop.f32.mrb[0].mxu0
    %v1310 = vadd.f32 %v1213, %v1309
    %v1311 = vpop.f32.mrb[0].mxu0
    %1312 = vdwg.mxu0
    %1313 = vst [vmem:[%s2] sm:$0xff] %v1251
    %1314 = vst [vmem:[%s2 + $0x8] sm:$0xff] %v1254
    %1315 = vst [vmem:[%s2 + $0x10] sm:$0xff] %v1259
    %1316 = vst [vmem:[%s2 + $0x18] sm:$0xff] %v1262
    %1317 = vst [vmem:[%s2 + $0x20] sm:$0xff] %v1267
    %1318 = vst [vmem:[%s2 + $0x28] sm:$0xff] %v1270
    %1319 = vst [vmem:[%s2 + $0x30] sm:$0xff] %v1275
    %1320 = vst [vmem:[%s2 + $0x38] sm:$0xff] %v1278
    %1321 = vst [vmem:[%s2 + $0x40] sm:$0xff] %v1283
    %1322 = vst [vmem:[%s2 + $0x48] sm:$0xff] %v1286
    %1323 = vst [vmem:[%s2 + $0x50] sm:$0xff] %v1291
    %1324 = vst [vmem:[%s2 + $0x58] sm:$0xff] %v1294
    %1325 = vst [vmem:[%s2 + $0x60] sm:$0xff] %v1299
    %1326 = vst [vmem:[%s2 + $0x68] sm:$0xff] %v1302
    %1327 = vst [vmem:[%s2 + $0x70] sm:$0xff] %v1307
    %1328 = vst [vmem:[%s2 + $0x78] sm:$0xff] %v1310
    %v1329 = vadd.f32 %v1251, %v1254
    %v1330 = vadd.f32 %v1329, %v1259
    %v1331 = vadd.f32 %v1330, %v1262
    %v1332 = vadd.f32 %v1331, %v1267
    %v1333 = vadd.f32 %v1332, %v1270
    %v1334 = vadd.f32 %v1333, %v1275
    %v1335 = vadd.f32 %v1334, %v1278
    %v1336 = vadd.f32 %v1335, %v1283
    %v1337 = vadd.f32 %v1336, %v1286
    %v1338 = vadd.f32 %v1337, %v1291
    %v1339 = vadd.f32 %v1338, %v1294
    %v1340 = vadd.f32 %v1339, %v1299
    %v1341 = vadd.f32 %v1340, %v1302
    %v1342 = vadd.f32 %v1341, %v1307
    %v1343 = vadd.f32 %v1342, %v1310
    %v1344 = vrot.slane %v1343, 4
    %v1345 = vadd.f32 %v1343, %v1344
    %v1346 = vrot.slane %v1345, 2
    %v1347 = vadd.f32 %v1345, %v1346
    %v1348 = vrot.slane %v1347, 1
    %v1349 = vadd.f32 %v1347, %v1348
    %1350 = vst [vmem:[%s3] sm:$0x1] %v1349
    %v1351 = vmul.f32 %v1251, %v1251
    %v1352 = vmul.f32 %v1254, %v1254
    %v1353 = vmul.f32 %v1259, %v1259
    %v1354 = vmul.f32 %v1262, %v1262
    %v1355 = vmul.f32 %v1267, %v1267
    %v1356 = vmul.f32 %v1270, %v1270
    %v1357 = vmul.f32 %v1275, %v1275
    %v1358 = vmul.f32 %v1278, %v1278
    %v1359 = vmul.f32 %v1283, %v1283
    %v1360 = vmul.f32 %v1286, %v1286
    %v1361 = vmul.f32 %v1291, %v1291
    %v1362 = vmul.f32 %v1294, %v1294
    %v1363 = vmul.f32 %v1299, %v1299
    %v1364 = vmul.f32 %v1302, %v1302
    %v1365 = vmul.f32 %v1307, %v1307
    %v1366 = vmul.f32 %v1310, %v1310
    %v1367 = vadd.f32 %v1351, %v1352
    %v1368 = vadd.f32 %v1367, %v1353
    %v1369 = vadd.f32 %v1368, %v1354
    %v1370 = vadd.f32 %v1369, %v1355
    %v1371 = vadd.f32 %v1370, %v1356
    %v1372 = vadd.f32 %v1371, %v1357
    %v1373 = vadd.f32 %v1372, %v1358
    %v1374 = vadd.f32 %v1373, %v1359
    %v1375 = vadd.f32 %v1374, %v1360
    %v1376 = vadd.f32 %v1375, %v1361
    %v1377 = vadd.f32 %v1376, %v1362
    %v1378 = vadd.f32 %v1377, %v1363
    %v1379 = vadd.f32 %v1378, %v1364
    %v1380 = vadd.f32 %v1379, %v1365
    %v1381 = vadd.f32 %v1380, %v1366
    %v1382 = vrot.slane %v1381, 4
    %v1383 = vadd.f32 %v1381, %v1382
    %v1384 = vrot.slane %v1383, 2
    %v1385 = vadd.f32 %v1383, %v1384
    %v1386 = vrot.slane %v1385, 1
    %v1387 = vadd.f32 %v1385, %v1386
    %1388 = vst [vmem:[%s4] sm:$0x1] %v1387
    // Predicated region
    $region14: #{_lambda_.11} parent=1 // pred_check
      _
    $region15: #{_lambda_.11} parent=1 // pred_check_branch
      %1390 = sbr.rel (0) target = $region17
    $region16: #{_lambda_.11} parent=1 // pred_region
      _
    $region17: #{_lambda_.11} parent=1 // pred_fallthru
      _
    // Predicated region
    $region18: #{_lambda_.11} parent=1 // pred_check
      _
    $region19: #{_lambda_.11} parent=1 // pred_check_branch
      %1392 = sbr.rel (0) target = $region21
    $region20: #{_lambda_.11} parent=1 // pred_region
      _
    $region21: #{_lambda_.11} parent=1 // pred_fallthru
      _
    // Predicated region
    $region22: #{_lambda_.11} parent=1 // pred_check
      _
    $region23: #{_lambda_.11} parent=1 // pred_check_branch
      %1394 = sbr.rel (0) target = $region25
    $region24: #{_lambda_.11} parent=1 // pred_region
      _
    $region25: #{_lambda_.11} parent=1 // pred_fallthru
      _
    // Predicated region
    $region26: #{_lambda_.11} parent=1 // pred_check
      _
    $region27: #{_lambda_.11} parent=1 // pred_check_branch
      %1396 = sbr.rel (0) target = $region29
    $region28: #{_lambda_.11} parent=1 // pred_region
      _
    $region29: #{_lambda_.11} parent=1 // pred_fallthru
      _
    // Predicated region
    $region30: #{_lambda_.11} parent=1 // pred_check
      _
    $region31: #{_lambda_.11} parent=1 // pred_check_branch
      %1398 = sbr.rel (0) target = $region33
    $region32: #{_lambda_.11} parent=1 // pred_region
      _
    $region33: #{_lambda_.11} parent=1 // pred_fallthru
      _
    // Predicated region
    $region34: #{_lambda_.11} parent=1 // pred_check
      _
    $region35: #{_lambda_.11} parent=1 // pred_check_branch
      %1400 = sbr.rel (0) target = $region37
    $region36: #{_lambda_.11} parent=1 // pred_region
      _
    $region37: #{_lambda_.11} parent=1 // pred_fallthru
      _
    %1401 = vsyncpa [#allocation3], 1

// kernel: _lambda_.14
$region0: #{_lambda_.14}
  #allocation0 [shape = 'u32[]', space=smem, size = 0x4, offset = 0x4, fixed_abs, tag = 'smem constant byte address 0x4 - core index']
  #allocation1 [shape = 'u32[144,128]{1,0:T(1,128)}', space=vmem, size = 0x12000, scoped, tag = 'internal scratch']
  %s0 = inlined_call_operand.vmem [shape: f32[512,128], index: 0, kind: input, shape index: {}]
  %s1 = inlined_call_operand.vmem [shape: f32[1,128], index: 1, kind: input, shape index: {}]
  %s2 = inlined_call_operand.vmem [shape: f32[1,128], index: 2, kind: input, shape index: {}]
  %s3 = inlined_call_operand.vmem [shape: bf16[512,128], index: 3, kind: output, shape index: {}]
  %s4 = sld [smem:[#allocation0]]
  $region22: #{_lambda_.14} parent=0
    _
  %s6 = ssub.s32 1, %s4
  %s7 = scalar_select 0, %s6, %s4
  // Predicated region
  $region2: #{_lambda_.14} parent=0 // pred_check
    _
  $region3: #{_lambda_.14} parent=0 // pred_check_branch
    %9 = sbr.rel (0) target = $region5
  $region4: #{_lambda_.14} parent=0 // pred_region
    _
  $region5: #{_lambda_.14} parent=0 // pred_fallthru
    _
  // Predicated region
  $region6: #{_lambda_.14} parent=0 // pred_check
    _
  $region7: #{_lambda_.14} parent=0 // pred_check_branch
    %11 = sbr.rel (0) target = $region9
  $region8: #{_lambda_.14} parent=0 // pred_region
    _
  $region9: #{_lambda_.14} parent=0 // pred_fallthru
    _
  // Predicated region
  $region10: #{_lambda_.14} parent=0 // pred_check
    _
  $region11: #{_lambda_.14} parent=0 // pred_check_branch
    %13 = sbr.rel (0) target = $region13
  $region12: #{_lambda_.14} parent=0 // pred_region
    _
  $region13: #{_lambda_.14} parent=0 // pred_fallthru
    _
  %v14 = vld [vmem:[%s0] sm:$0xff]
  %v15 = vld [vmem:[%s0 + $0x8] sm:$0xff]
  %v16 = vld [vmem:[%s0 + $0x10] sm:$0xff]
  %v17 = vld [vmem:[%s0 + $0x18] sm:$0xff]
  %v18 = vld [vmem:[%s0 + $0x20] sm:$0xff]
  %v19 = vld [vmem:[%s0 + $0x28] sm:$0xff]
  %v20 = vld [vmem:[%s0 + $0x30] sm:$0xff]
  %v21 = vld [vmem:[%s0 + $0x38] sm:$0xff]
  %v22 = vld [vmem:[%s0 + $0x40] sm:$0xff]
  %v23 = vld [vmem:[%s0 + $0x48] sm:$0xff]
  %v24 = vld [vmem:[%s0 + $0x50] sm:$0xff]
  %v25 = vld [vmem:[%s0 + $0x58] sm:$0xff]
  %v26 = vld [vmem:[%s0 + $0x60] sm:$0xff]
  %v27 = vld [vmem:[%s0 + $0x68] sm:$0xff]
  %v28 = vld [vmem:[%s0 + $0x70] sm:$0xff]
  %v29 = vld [vmem:[%s0 + $0x78] sm:$0xff]
  %v30 = vld [vmem:[%s0 + $0x80] sm:$0xff]
  %v31 = vld [vmem:[%s0 + $0x88] sm:$0xff]
  %v32 = vld [vmem:[%s0 + $0x90] sm:$0xff]
  %v33 = vld [vmem:[%s0 + $0x98] sm:$0xff]
  %v34 = vld [vmem:[%s0 + $0xa0] sm:$0xff]
  %v35 = vld [vmem:[%s0 + $0xa8] sm:$0xff]
  %v36 = vld [vmem:[%s0 + $0xb0] sm:$0xff]
  %v37 = vld [vmem:[%s0 + $0xb8] sm:$0xff]
  %v38 = vld [vmem:[%s0 + $0xc0] sm:$0xff]
  %v39 = vld [vmem:[%s0 + $0xc8] sm:$0xff]
  %v40 = vld [vmem:[%s0 + $0xd0] sm:$0xff]
  %v41 = vld [vmem:[%s0 + $0xd8] sm:$0xff]
  %v42 = vld [vmem:[%s0 + $0xe0] sm:$0xff]
  %v43 = vld [vmem:[%s0 + $0xe8] sm:$0xff]
  %v44 = vld [vmem:[%s0 + $0xf0] sm:$0xff]
  %v45 = vld [vmem:[%s0 + $0xf8] sm:$0xff]
  %v46 = vld [vmem:[%s0 + $0x100] sm:$0xff]
  %v47 = vld [vmem:[%s0 + $0x108] sm:$0xff]
  %v48 = vld [vmem:[%s0 + $0x110] sm:$0xff]
  %v49 = vld [vmem:[%s0 + $0x118] sm:$0xff]
  %v50 = vld [vmem:[%s0 + $0x120] sm:$0xff]
  %v51 = vld [vmem:[%s0 + $0x128] sm:$0xff]
  %v52 = vld [vmem:[%s0 + $0x130] sm:$0xff]
  %v53 = vld [vmem:[%s0 + $0x138] sm:$0xff]
  %v54 = vld [vmem:[%s0 + $0x140] sm:$0xff]
  %v55 = vld [vmem:[%s0 + $0x148] sm:$0xff]
  %v56 = vld [vmem:[%s0 + $0x150] sm:$0xff]
  %v57 = vld [vmem:[%s0 + $0x158] sm:$0xff]
  %v58 = vld [vmem:[%s0 + $0x160] sm:$0xff]
  %v59 = vld [vmem:[%s0 + $0x168] sm:$0xff]
  %v60 = vld [vmem:[%s0 + $0x170] sm:$0xff]
  %v61 = vld [vmem:[%s0 + $0x178] sm:$0xff]
  %v62 = vld [vmem:[%s0 + $0x180] sm:$0xff]
  %v63 = vld [vmem:[%s0 + $0x188] sm:$0xff]
  %v64 = vld [vmem:[%s0 + $0x190] sm:$0xff]
  %v65 = vld [vmem:[%s0 + $0x198] sm:$0xff]
  %v66 = vld [vmem:[%s0 + $0x1a0] sm:$0xff]
  %v67 = vld [vmem:[%s0 + $0x1a8] sm:$0xff]
  %v68 = vld [vmem:[%s0 + $0x1b0] sm:$0xff]
  %v69 = vld [vmem:[%s0 + $0x1b8] sm:$0xff]
  %v70 = vld [vmem:[%s0 + $0x1c0] sm:$0xff]
  %v71 = vld [vmem:[%s0 + $0x1c8] sm:$0xff]
  %v72 = vld [vmem:[%s0 + $0x1d0] sm:$0xff]
  %v73 = vld [vmem:[%s0 + $0x1d8] sm:$0xff]
  %v74 = vld [vmem:[%s0 + $0x1e0] sm:$0xff]
  %v75 = vld [vmem:[%s0 + $0x1e8] sm:$0xff]
  %v76 = vld [vmem:[%s0 + $0x1f0] sm:$0xff]
  %v77 = vld [vmem:[%s0 + $0x1f8] sm:$0xff]
  %v78 = vld [vmem:[%s1] sm:$0x1]
  %v80 = vlaneseq
  %v81 = vshrl.u32 %v80, 7
  %v82 = vsub.s32 0, %v81
  %v83 = vrot.slane %v78, %v82
  %v85 = vmul.f32 %v14, %v83
  %v86 = vmul.f32 %v15, %v83
  %v87 = vmul.f32 %v16, %v83
  %v88 = vmul.f32 %v17, %v83
  %v89 = vmul.f32 %v18, %v83
  %v90 = vmul.f32 %v19, %v83
  %v91 = vmul.f32 %v20, %v83
  %v92 = vmul.f32 %v21, %v83
  %v93 = vmul.f32 %v22, %v83
  %v94 = vmul.f32 %v23, %v83
  %v95 = vmul.f32 %v24, %v83
  %v96 = vmul.f32 %v25, %v83
  %v97 = vmul.f32 %v26, %v83
  %v98 = vmul.f32 %v27, %v83
  %v99 = vmul.f32 %v28, %v83
  %v100 = vmul.f32 %v29, %v83
  %v101 = vmul.f32 %v30, %v83
  %v102 = vmul.f32 %v31, %v83
  %v103 = vmul.f32 %v32, %v83
  %v104 = vmul.f32 %v33, %v83
  %v105 = vmul.f32 %v34, %v83
  %v106 = vmul.f32 %v35, %v83
  %v107 = vmul.f32 %v36, %v83
  %v108 = vmul.f32 %v37, %v83
  %v109 = vmul.f32 %v38, %v83
  %v110 = vmul.f32 %v39, %v83
  %v111 = vmul.f32 %v40, %v83
  %v112 = vmul.f32 %v41, %v83
  %v113 = vmul.f32 %v42, %v83
  %v114 = vmul.f32 %v43, %v83
  %v115 = vmul.f32 %v44, %v83
  %v116 = vmul.f32 %v45, %v83
  %v117 = vmul.f32 %v46, %v83
  %v118 = vmul.f32 %v47, %v83
  %v119 = vmul.f32 %v48, %v83
  %v120 = vmul.f32 %v49, %v83
  %v121 = vmul.f32 %v50, %v83
  %v122 = vmul.f32 %v51, %v83
  %v123 = vmul.f32 %v52, %v83
  %v124 = vmul.f32 %v53, %v83
  %v125 = vmul.f32 %v54, %v83
  %v126 = vmul.f32 %v55, %v83
  %v127 = vmul.f32 %v56, %v83
  %v128 = vmul.f32 %v57, %v83
  %v129 = vmul.f32 %v58, %v83
  %v130 = vmul.f32 %v59, %v83
  %v131 = vmul.f32 %v60, %v83
  %v132 = vmul.f32 %v61, %v83
  %v133 = vmul.f32 %v62, %v83
  %v134 = vmul.f32 %v63, %v83
  %v135 = vmul.f32 %v64, %v83
  %v136 = vmul.f32 %v65, %v83
  %v137 = vmul.f32 %v66, %v83
  %v138 = vmul.f32 %v67, %v83
  %v139 = vmul.f32 %v68, %v83
  %v140 = vmul.f32 %v69, %v83
  %v141 = vmul.f32 %v70, %v83
  %v142 = vmul.f32 %v71, %v83
  %v143 = vmul.f32 %v72, %v83
  %v144 = vmul.f32 %v73, %v83
  %v145 = vmul.f32 %v74, %v83
  %v146 = vmul.f32 %v75, %v83
  %v147 = vmul.f32 %v76, %v83
  %v148 = vmul.f32 %v77, %v83
  %v149 = vld [vmem:[%s2] sm:$0x1]
  %v151 = vlaneseq
  %v152 = vshrl.u32 %v151, 7
  %v153 = vsub.s32 0, %v152
  %v154 = vrot.slane %v149, %v153
  %v156 = vadd.f32 %v85, %v154
  %v157 = vadd.f32 %v86, %v154
  %v158 = vadd.f32 %v87, %v154
  %v159 = vadd.f32 %v88, %v154
  %v160 = vadd.f32 %v89, %v154
  %v161 = vadd.f32 %v90, %v154
  %v162 = vadd.f32 %v91, %v154
  %v163 = vadd.f32 %v92, %v154
  %v164 = vadd.f32 %v93, %v154
  %v165 = vadd.f32 %v94, %v154
  %v166 = vadd.f32 %v95, %v154
  %v167 = vadd.f32 %v96, %v154
  %v168 = vadd.f32 %v97, %v154
  %v169 = vadd.f32 %v98, %v154
  %v170 = vadd.f32 %v99, %v154
  %v171 = vadd.f32 %v100, %v154
  %v172 = vadd.f32 %v101, %v154
  %v173 = vadd.f32 %v102, %v154
  %v174 = vadd.f32 %v103, %v154
  %v175 = vadd.f32 %v104, %v154
  %v176 = vadd.f32 %v105, %v154
  %v177 = vadd.f32 %v106, %v154
  %v178 = vadd.f32 %v107, %v154
  %v179 = vadd.f32 %v108, %v154
  %v180 = vadd.f32 %v109, %v154
  %v181 = vadd.f32 %v110, %v154
  %v182 = vadd.f32 %v111, %v154
  %v183 = vadd.f32 %v112, %v154
  %v184 = vadd.f32 %v113, %v154
  %v185 = vadd.f32 %v114, %v154
  %v186 = vadd.f32 %v115, %v154
  %v187 = vadd.f32 %v116, %v154
  %v188 = vadd.f32 %v117, %v154
  %v189 = vadd.f32 %v118, %v154
  %v190 = vadd.f32 %v119, %v154
  %v191 = vadd.f32 %v120, %v154
  %v192 = vadd.f32 %v121, %v154
  %v193 = vadd.f32 %v122, %v154
  %v194 = vadd.f32 %v123, %v154
  %v195 = vadd.f32 %v124, %v154
  %v196 = vadd.f32 %v125, %v154
  %v197 = vadd.f32 %v126, %v154
  %v198 = vadd.f32 %v127, %v154
  %v199 = vadd.f32 %v128, %v154
  %v200 = vadd.f32 %v129, %v154
  %v201 = vadd.f32 %v130, %v154
  %v202 = vadd.f32 %v131, %v154
  %v203 = vadd.f32 %v132, %v154
  %v204 = vadd.f32 %v133, %v154
  %v205 = vadd.f32 %v134, %v154
  %v206 = vadd.f32 %v135, %v154
  %v207 = vadd.f32 %v136, %v154
  %v208 = vadd.f32 %v137, %v154
  %v209 = vadd.f32 %v138, %v154
  %v210 = vadd.f32 %v139, %v154
  %v211 = vadd.f32 %v140, %v154
  %v212 = vadd.f32 %v141, %v154
  %v213 = vadd.f32 %v142, %v154
  %v214 = vadd.f32 %v143, %v154
  %v215 = vadd.f32 %v144, %v154
  %v216 = vadd.f32 %v145, %v154
  %v217 = vadd.f32 %v146, %v154
  %v218 = vadd.f32 %v147, %v154
  %v219 = vadd.f32 %v148, %v154
  %v220 = vmax.f32 %v156, 0.0
  %v221 = vmax.f32 %v157, 0.0
  %v222 = vmax.f32 %v158, 0.0
  %v223 = vmax.f32 %v159, 0.0
  %v224 = vmax.f32 %v160, 0.0
  %v225 = vmax.f32 %v161, 0.0
  %v226 = vmax.f32 %v162, 0.0
  %v227 = vmax.f32 %v163, 0.0
  %v228 = vmax.f32 %v164, 0.0
  %v229 = vmax.f32 %v165, 0.0
  %v230 = vmax.f32 %v166, 0.0
  %v231 = vmax.f32 %v167, 0.0
  %v232 = vmax.f32 %v168, 0.0
  %v233 = vmax.f32 %v169, 0.0
  %v234 = vmax.f32 %v170, 0.0
  %v235 = vmax.f32 %v171, 0.0
  %v236 = vmax.f32 %v172, 0.0
  %v237 = vmax.f32 %v173, 0.0
  %v238 = vmax.f32 %v174, 0.0
  %v239 = vmax.f32 %v175, 0.0
  %v240 = vmax.f32 %v176, 0.0
  %v241 = vmax.f32 %v177, 0.0
  %v242 = vmax.f32 %v178, 0.0
  %v243 = vmax.f32 %v179, 0.0
  %v244 = vmax.f32 %v180, 0.0
  %v245 = vmax.f32 %v181, 0.0
  %v246 = vmax.f32 %v182, 0.0
  %v247 = vmax.f32 %v183, 0.0
  %v248 = vmax.f32 %v184, 0.0
  %v249 = vmax.f32 %v185, 0.0
  %v250 = vmax.f32 %v186, 0.0
  %v251 = vmax.f32 %v187, 0.0
  %v252 = vmax.f32 %v188, 0.0
  %v253 = vmax.f32 %v189, 0.0
  %v254 = vmax.f32 %v190, 0.0
  %v255 = vmax.f32 %v191, 0.0
  %v256 = vmax.f32 %v192, 0.0
  %v257 = vmax.f32 %v193, 0.0
  %v258 = vmax.f32 %v194, 0.0
  %v259 = vmax.f32 %v195, 0.0
  %v260 = vmax.f32 %v196, 0.0
  %v261 = vmax.f32 %v197, 0.0
  %v262 = vmax.f32 %v198, 0.0
  %v263 = vmax.f32 %v199, 0.0
  %v264 = vmax.f32 %v200, 0.0
  %v265 = vmax.f32 %v201, 0.0
  %v266 = vmax.f32 %v202, 0.0
  %v267 = vmax.f32 %v203, 0.0
  %v268 = vmax.f32 %v204, 0.0
  %v269 = vmax.f32 %v205, 0.0
  %v270 = vmax.f32 %v206, 0.0
  %v271 = vmax.f32 %v207, 0.0
  %v272 = vmax.f32 %v208, 0.0
  %v273 = vmax.f32 %v209, 0.0
  %v274 = vmax.f32 %v210, 0.0
  %v275 = vmax.f32 %v211, 0.0
  %v276 = vmax.f32 %v212, 0.0
  %v277 = vmax.f32 %v213, 0.0
  %v278 = vmax.f32 %v214, 0.0
  %v279 = vmax.f32 %v215, 0.0
  %v280 = vmax.f32 %v216, 0.0
  %v281 = vmax.f32 %v217, 0.0
  %v282 = vmax.f32 %v218, 0.0
  %v283 = vmax.f32 %v219, 0.0
  %v284 = vpack.c.bf16 %v221, %v220
  %v285 = vpack.c.bf16 %v223, %v222
  %v286 = vpack.c.bf16 %v225, %v224
  %v287 = vpack.c.bf16 %v227, %v226
  %v288 = vpack.c.bf16 %v229, %v228
  %v289 = vpack.c.bf16 %v231, %v230
  %v290 = vpack.c.bf16 %v233, %v232
  %v291 = vpack.c.bf16 %v235, %v234
  %v292 = vpack.c.bf16 %v237, %v236
  %v293 = vpack.c.bf16 %v239, %v238
  %v294 = vpack.c.bf16 %v241, %v240
  %v295 = vpack.c.bf16 %v243, %v242
  %v296 = vpack.c.bf16 %v245, %v244
  %v297 = vpack.c.bf16 %v247, %v246
  %v298 = vpack.c.bf16 %v249, %v248
  %v299 = vpack.c.bf16 %v251, %v250
  %v300 = vpack.c.bf16 %v253, %v252
  %v301 = vpack.c.bf16 %v255, %v254
  %v302 = vpack.c.bf16 %v257, %v256
  %v303 = vpack.c.bf16 %v259, %v258
  %v304 = vpack.c.bf16 %v261, %v260
  %v305 = vpack.c.bf16 %v263, %v262
  %v306 = vpack.c.bf16 %v265, %v264
  %v307 = vpack.c.bf16 %v267, %v266
  %v308 = vpack.c.bf16 %v269, %v268
  %v309 = vpack.c.bf16 %v271, %v270
  %v310 = vpack.c.bf16 %v273, %v272
  %v311 = vpack.c.bf16 %v275, %v274
  %v312 = vpack.c.bf16 %v277, %v276
  %v313 = vpack.c.bf16 %v279, %v278
  %v314 = vpack.c.bf16 %v281, %v280
  %v315 = vpack.c.bf16 %v283, %v282
  %v348 = vunpack.c.l.b16 %v284
  %v349 = vunpack.c.h.b16 %v284
  %v350 = vunpack.c.l.b16 %v285
  %v351 = vunpack.c.h.b16 %v285
  %v352 = vunpack.c.l.b16 %v286
  %v353 = vunpack.c.h.b16 %v286
  %v354 = vunpack.c.l.b16 %v287
  %v355 = vunpack.c.h.b16 %v287
  %v356 = vunpack.c.l.b16 %v288
  %v357 = vunpack.c.h.b16 %v288
  %v358 = vunpack.c.l.b16 %v289
  %v359 = vunpack.c.h.b16 %v289
  %v360 = vunpack.c.l.b16 %v290
  %v361 = vunpack.c.h.b16 %v290
  %v362 = vunpack.c.l.b16 %v291
  %v363 = vunpack.c.h.b16 %v291
  %v364 = vunpack.c.l.b16 %v292
  %v365 = vunpack.c.h.b16 %v292
  %v366 = vunpack.c.l.b16 %v293
  %v367 = vunpack.c.h.b16 %v293
  %v368 = vunpack.c.l.b16 %v294
  %v369 = vunpack.c.h.b16 %v294
  %v370 = vunpack.c.l.b16 %v295
  %v371 = vunpack.c.h.b16 %v295
  %v372 = vunpack.c.l.b16 %v296
  %v373 = vunpack.c.h.b16 %v296
  %v374 = vunpack.c.l.b16 %v297
  %v375 = vunpack.c.h.b16 %v297
  %v376 = vunpack.c.l.b16 %v298
  %v377 = vunpack.c.h.b16 %v298
  %v378 = vunpack.c.l.b16 %v299
  %v379 = vunpack.c.h.b16 %v299
  %v380 = vunpack.c.l.b16 %v300
  %v381 = vunpack.c.h.b16 %v300
  %v382 = vunpack.c.l.b16 %v301
  %v383 = vunpack.c.h.b16 %v301
  %v384 = vunpack.c.l.b16 %v302
  %v385 = vunpack.c.h.b16 %v302
  %v386 = vunpack.c.l.b16 %v303
  %v387 = vunpack.c.h.b16 %v303
  %v388 = vunpack.c.l.b16 %v304
  %v389 = vunpack.c.h.b16 %v304
  %v390 = vunpack.c.l.b16 %v305
  %v391 = vunpack.c.h.b16 %v305
  %v392 = vunpack.c.l.b16 %v306
  %v393 = vunpack.c.h.b16 %v306
  %v394 = vunpack.c.l.b16 %v307
  %v395 = vunpack.c.h.b16 %v307
  %v396 = vunpack.c.l.b16 %v308
  %v397 = vunpack.c.h.b16 %v308
  %v398 = vunpack.c.l.b16 %v309
  %v399 = vunpack.c.h.b16 %v309
  %v400 = vunpack.c.l.b16 %v310
  %v401 = vunpack.c.h.b16 %v310
  %v402 = vunpack.c.l.b16 %v311
  %v403 = vunpack.c.h.b16 %v311
  %v404 = vunpack.c.l.b16 %v312
  %v405 = vunpack.c.h.b16 %v312
  %v406 = vunpack.c.l.b16 %v313
  %v407 = vunpack.c.h.b16 %v313
  %v408 = vunpack.c.l.b16 %v314
  %v409 = vunpack.c.h.b16 %v314
  %v410 = vunpack.c.l.b16 %v315
  %v411 = vunpack.c.h.b16 %v315
  %v412 = vpack.c.b16 %v348, %v348
  %v413 = vpack.c.b16 %v349, %v349
  %v414 = vpack.c.b16 %v350, %v350
  %v415 = vpack.c.b16 %v351, %v351
  %v416 = vpack.c.b16 %v352, %v352
  %v417 = vpack.c.b16 %v353, %v353
  %v418 = vpack.c.b16 %v354, %v354
  %v419 = vpack.c.b16 %v355, %v355
  %v420 = vpack.c.b16 %v356, %v356
  %v421 = vpack.c.b16 %v357, %v357
  %v422 = vpack.c.b16 %v358, %v358
  %v423 = vpack.c.b16 %v359, %v359
  %v424 = vpack.c.b16 %v360, %v360
  %v425 = vpack.c.b16 %v361, %v361
  %v426 = vpack.c.b16 %v362, %v362
  %v427 = vpack.c.b16 %v363, %v363
  %v428 = vpack.c.b16 %v364, %v364
  %v429 = vpack.c.b16 %v365, %v365
  %v430 = vpack.c.b16 %v366, %v366
  %v431 = vpack.c.b16 %v367, %v367
  %v432 = vpack.c.b16 %v368, %v368
  %v433 = vpack.c.b16 %v369, %v369
  %v434 = vpack.c.b16 %v370, %v370
  %v435 = vpack.c.b16 %v371, %v371
  %v436 = vpack.c.b16 %v372, %v372
  %v437 = vpack.c.b16 %v373, %v373
  %v438 = vpack.c.b16 %v374, %v374
  %v439 = vpack.c.b16 %v375, %v375
  %v440 = vpack.c.b16 %v376, %v376
  %v441 = vpack.c.b16 %v377, %v377
  %v442 = vpack.c.b16 %v378, %v378
  %v443 = vpack.c.b16 %v379, %v379
  %v444 = vpack.c.b16 %v380, %v380
  %v445 = vpack.c.b16 %v381, %v381
  %v446 = vpack.c.b16 %v382, %v382
  %v447 = vpack.c.b16 %v383, %v383
  %v448 = vpack.c.b16 %v384, %v384
  %v449 = vpack.c.b16 %v385, %v385
  %v450 = vpack.c.b16 %v386, %v386
  %v451 = vpack.c.b16 %v387, %v387
  %v452 = vpack.c.b16 %v388, %v388
  %v453 = vpack.c.b16 %v389, %v389
  %v454 = vpack.c.b16 %v390, %v390
  %v455 = vpack.c.b16 %v391, %v391
  %v456 = vpack.c.b16 %v392, %v392
  %v457 = vpack.c.b16 %v393, %v393
  %v458 = vpack.c.b16 %v394, %v394
  %v459 = vpack.c.b16 %v395, %v395
  %v460 = vpack.c.b16 %v396, %v396
  %v461 = vpack.c.b16 %v397, %v397
  %v462 = vpack.c.b16 %v398, %v398
  %v463 = vpack.c.b16 %v399, %v399
  %v464 = vpack.c.b16 %v400, %v400
  %v465 = vpack.c.b16 %v401, %v401
  %v466 = vpack.c.b16 %v402, %v402
  %v467 = vpack.c.b16 %v403, %v403
  %v468 = vpack.c.b16 %v404, %v404
  %v469 = vpack.c.b16 %v405, %v405
  %v470 = vpack.c.b16 %v406, %v406
  %v471 = vpack.c.b16 %v407, %v407
  %v472 = vpack.c.b16 %v408, %v408
  %v473 = vpack.c.b16 %v409, %v409
  %v474 = vpack.c.b16 %v410, %v410
  %v475 = vpack.c.b16 %v411, %v411
  %540 = vst [vmem:[%s3] sm:$0xf] %v412
  %541 = vst [vmem:[%s3 + $0x4] sm:$0xf] %v413
  %542 = vst [vmem:[%s3 + $0x8] sm:$0xf] %v414
  %543 = vst [vmem:[%s3 + $0xc] sm:$0xf] %v415
  %544 = vst [vmem:[%s3 + $0x10] sm:$0xf] %v416
  %545 = vst [vmem:[%s3 + $0x14] sm:$0xf] %v417
  %546 = vst [vmem:[%s3 + $0x18] sm:$0xf] %v418
  %547 = vst [vmem:[%s3 + $0x1c] sm:$0xf] %v419
  %548 = vst [vmem:[%s3 + $0x20] sm:$0xf] %v420
  %549 = vst [vmem:[%s3 + $0x24] sm:$0xf] %v421
  %550 = vst [vmem:[%s3 + $0x28] sm:$0xf] %v422
  %551 = vst [vmem:[%s3 + $0x2c] sm:$0xf] %v423
  %552 = vst [vmem:[%s3 + $0x30] sm:$0xf] %v424
  %553 = vst [vmem:[%s3 + $0x34] sm:$0xf] %v425
  %554 = vst [vmem:[%s3 + $0x38] sm:$0xf] %v426
  %555 = vst [vmem:[%s3 + $0x3c] sm:$0xf] %v427
  %556 = vst [vmem:[%s3 + $0x40] sm:$0xf] %v428
  %557 = vst [vmem:[%s3 + $0x44] sm:$0xf] %v429
  %558 = vst [vmem:[%s3 + $0x48] sm:$0xf] %v430
  %559 = vst [vmem:[%s3 + $0x4c] sm:$0xf] %v431
  %560 = vst [vmem:[%s3 + $0x50] sm:$0xf] %v432
  %561 = vst [vmem:[%s3 + $0x54] sm:$0xf] %v433
  %562 = vst [vmem:[%s3 + $0x58] sm:$0xf] %v434
  %563 = vst [vmem:[%s3 + $0x5c] sm:$0xf] %v435
  %564 = vst [vmem:[%s3 + $0x60] sm:$0xf] %v436
  %565 = vst [vmem:[%s3 + $0x64] sm:$0xf] %v437
  %566 = vst [vmem:[%s3 + $0x68] sm:$0xf] %v438
  %567 = vst [vmem:[%s3 + $0x6c] sm:$0xf] %v439
  %568 = vst [vmem:[%s3 + $0x70] sm:$0xf] %v440
  %569 = vst [vmem:[%s3 + $0x74] sm:$0xf] %v441
  %570 = vst [vmem:[%s3 + $0x78] sm:$0xf] %v442
  %571 = vst [vmem:[%s3 + $0x7c] sm:$0xf] %v443
  %572 = vst [vmem:[%s3 + $0x80] sm:$0xf] %v444
  %573 = vst [vmem:[%s3 + $0x84] sm:$0xf] %v445
  %574 = vst [vmem:[%s3 + $0x88] sm:$0xf] %v446
  %575 = vst [vmem:[%s3 + $0x8c] sm:$0xf] %v447
  %576 = vst [vmem:[%s3 + $0x90] sm:$0xf] %v448
  %577 = vst [vmem:[%s3 + $0x94] sm:$0xf] %v449
  %578 = vst [vmem:[%s3 + $0x98] sm:$0xf] %v450
  %579 = vst [vmem:[%s3 + $0x9c] sm:$0xf] %v451
  %580 = vst [vmem:[%s3 + $0xa0] sm:$0xf] %v452
  %581 = vst [vmem:[%s3 + $0xa4] sm:$0xf] %v453
  %582 = vst [vmem:[%s3 + $0xa8] sm:$0xf] %v454
  %583 = vst [vmem:[%s3 + $0xac] sm:$0xf] %v455
  %584 = vst [vmem:[%s3 + $0xb0] sm:$0xf] %v456
  %585 = vst [vmem:[%s3 + $0xb4] sm:$0xf] %v457
  %586 = vst [vmem:[%s3 + $0xb8] sm:$0xf] %v458
  %587 = vst [vmem:[%s3 + $0xbc] sm:$0xf] %v459
  %588 = vst [vmem:[%s3 + $0xc0] sm:$0xf] %v460
  %589 = vst [vmem:[%s3 + $0xc4] sm:$0xf] %v461
  %590 = vst [vmem:[%s3 + $0xc8] sm:$0xf] %v462
  %591 = vst [vmem:[%s3 + $0xcc] sm:$0xf] %v463
  %592 = vst [vmem:[%s3 + $0xd0] sm:$0xf] %v464
  %593 = vst [vmem:[%s3 + $0xd4] sm:$0xf] %v465
  %594 = vst [vmem:[%s3 + $0xd8] sm:$0xf] %v466
  %595 = vst [vmem:[%s3 + $0xdc] sm:$0xf] %v467
  %596 = vst [vmem:[%s3 + $0xe0] sm:$0xf] %v468
  %597 = vst [vmem:[%s3 + $0xe4] sm:$0xf] %v469
  %598 = vst [vmem:[%s3 + $0xe8] sm:$0xf] %v470
  %599 = vst [vmem:[%s3 + $0xec] sm:$0xf] %v471
  %600 = vst [vmem:[%s3 + $0xf0] sm:$0xf] %v472
  %601 = vst [vmem:[%s3 + $0xf4] sm:$0xf] %v473
  %602 = vst [vmem:[%s3 + $0xf8] sm:$0xf] %v474
  %603 = vst [vmem:[%s3 + $0xfc] sm:$0xf] %v475
  // Predicated region
  $region14: #{_lambda_.14} parent=0 // pred_check
    _
  $region15: #{_lambda_.14} parent=0 // pred_check_branch
    %605 = sbr.rel (0) target = $region17
  $region16: #{_lambda_.14} parent=0 // pred_region
    _
  $region17: #{_lambda_.14} parent=0 // pred_fallthru
    _
  // Predicated region
  $region18: #{_lambda_.14} parent=0 // pred_check
    _
  $region19: #{_lambda_.14} parent=0 // pred_check_branch
    %607 = sbr.rel (0) target = $region21
  $region20: #{_lambda_.14} parent=0 // pred_region
    _
  $region21: #{_lambda_.14} parent=0 // pred_fallthru
    _

// kernel: _lambda_.13
$region0: #{_lambda_.13}
  #allocation0 [shape = 'u32[]', space=smem, size = 0x4, offset = 0x4, fixed_abs, tag = 'smem constant byte address 0x4 - core index']
  #allocation1 [shape = 'u32[144,128]{1,0:T(1,128)}', space=vmem, size = 0x12000, scoped, tag = 'internal scratch']
  %s0 = inlined_call_operand.vmem [shape: bf16[512,512], index: 0, kind: input, shape index: {}]
  %s1 = inlined_call_operand.vmem [shape: bf16[512,128], index: 1, kind: input, shape index: {}]
  %s2 = inlined_call_operand.vmem [shape: f32[512,128], index: 2, kind: output, shape index: {0}]
  %s3 = inlined_call_operand.vmem [shape: f32[1,128], index: 3, kind: output, shape index: {1}]
  %s4 = inlined_call_operand.vmem [shape: f32[1,128], index: 4, kind: output, shape index: {2}]
  %5 = xla_tuple %s2, %s3, %s4
  %s6 = sld [smem:[#allocation0]]
  $region34: #{_lambda_.13} parent=0
    _
  %s8 = ssub.s32 1, %s6
  %s9 = scalar_select 0, %s8, %s6
  // Predicated region
  $region2: #{_lambda_.13} parent=0 // pred_check
    _
  $region3: #{_lambda_.13} parent=0 // pred_check_branch
    %11 = sbr.rel (0) target = $region5
  $region4: #{_lambda_.13} parent=0 // pred_region
    _
  $region5: #{_lambda_.13} parent=0 // pred_fallthru
    _
  // Predicated region
  $region6: #{_lambda_.13} parent=0 // pred_check
    _
  $region7: #{_lambda_.13} parent=0 // pred_check_branch
    %13 = sbr.rel (0) target = $region9
  $region8: #{_lambda_.13} parent=0 // pred_region
    _
  $region9: #{_lambda_.13} parent=0 // pred_fallthru
    _
  %v15 = vld [vmem:[%s0] sm:$0xff]
  %v16 = vld [vmem:[%s0 + $0x8] sm:$0xff]
  %v17 = vld [vmem:[%s0 + $0x10] sm:$0xff]
  %v18 = vld [vmem:[%s0 + $0x18] sm:$0xff]
  %v19 = vld [vmem:[%s0 + $0x20] sm:$0xff]
  %v20 = vld [vmem:[%s0 + $0x28] sm:$0xff]
  %v21 = vld [vmem:[%s0 + $0x30] sm:$0xff]
  %v22 = vld [vmem:[%s0 + $0x38] sm:$0xff]
  %v23 = vld [vmem:[%s0 + $0x40] sm:$0xff]
  %v24 = vld [vmem:[%s0 + $0x48] sm:$0xff]
  %v25 = vld [vmem:[%s0 + $0x50] sm:$0xff]
  %v26 = vld [vmem:[%s0 + $0x58] sm:$0xff]
  %v27 = vld [vmem:[%s0 + $0x60] sm:$0xff]
  %v28 = vld [vmem:[%s0 + $0x68] sm:$0xff]
  %v29 = vld [vmem:[%s0 + $0x70] sm:$0xff]
  %v30 = vld [vmem:[%s0 + $0x78] sm:$0xff]
  %v31 = vld [vmem:[%s0 + $0x80] sm:$0xff]
  %v32 = vld [vmem:[%s0 + $0x88] sm:$0xff]
  %v33 = vld [vmem:[%s0 + $0x90] sm:$0xff]
  %v34 = vld [vmem:[%s0 + $0x98] sm:$0xff]
  %v35 = vld [vmem:[%s0 + $0xa0] sm:$0xff]
  %v36 = vld [vmem:[%s0 + $0xa8] sm:$0xff]
  %v37 = vld [vmem:[%s0 + $0xb0] sm:$0xff]
  %v38 = vld [vmem:[%s0 + $0xb8] sm:$0xff]
  %v39 = vld [vmem:[%s0 + $0xc0] sm:$0xff]
  %v40 = vld [vmem:[%s0 + $0xc8] sm:$0xff]
  %v41 = vld [vmem:[%s0 + $0xd0] sm:$0xff]
  %v42 = vld [vmem:[%s0 + $0xd8] sm:$0xff]
  %v43 = vld [vmem:[%s0 + $0xe0] sm:$0xff]
  %v44 = vld [vmem:[%s0 + $0xe8] sm:$0xff]
  %v45 = vld [vmem:[%s0 + $0xf0] sm:$0xff]
  %v46 = vld [vmem:[%s0 + $0xf8] sm:$0xff]
  %v47 = vld [vmem:[%s0 + $0x100] sm:$0xff]
  %v48 = vld [vmem:[%s0 + $0x108] sm:$0xff]
  %v49 = vld [vmem:[%s0 + $0x110] sm:$0xff]
  %v50 = vld [vmem:[%s0 + $0x118] sm:$0xff]
  %v51 = vld [vmem:[%s0 + $0x120] sm:$0xff]
  %v52 = vld [vmem:[%s0 + $0x128] sm:$0xff]
  %v53 = vld [vmem:[%s0 + $0x130] sm:$0xff]
  %v54 = vld [vmem:[%s0 + $0x138] sm:$0xff]
  %v55 = vld [vmem:[%s0 + $0x140] sm:$0xff]
  %v56 = vld [vmem:[%s0 + $0x148] sm:$0xff]
  %v57 = vld [vmem:[%s0 + $0x150] sm:$0xff]
  %v58 = vld [vmem:[%s0 + $0x158] sm:$0xff]
  %v59 = vld [vmem:[%s0 + $0x160] sm:$0xff]
  %v60 = vld [vmem:[%s0 + $0x168] sm:$0xff]
  %v61 = vld [vmem:[%s0 + $0x170] sm:$0xff]
  %v62 = vld [vmem:[%s0 + $0x178] sm:$0xff]
  %v63 = vld [vmem:[%s0 + $0x180] sm:$0xff]
  %v64 = vld [vmem:[%s0 + $0x188] sm:$0xff]
  %v65 = vld [vmem:[%s0 + $0x190] sm:$0xff]
  %v66 = vld [vmem:[%s0 + $0x198] sm:$0xff]
  %v67 = vld [vmem:[%s0 + $0x1a0] sm:$0xff]
  %v68 = vld [vmem:[%s0 + $0x1a8] sm:$0xff]
  %v69 = vld [vmem:[%s0 + $0x1b0] sm:$0xff]
  %v70 = vld [vmem:[%s0 + $0x1b8] sm:$0xff]
  %v71 = vld [vmem:[%s0 + $0x1c0] sm:$0xff]
  %v72 = vld [vmem:[%s0 + $0x1c8] sm:$0xff]
  %v73 = vld [vmem:[%s0 + $0x1d0] sm:$0xff]
  %v74 = vld [vmem:[%s0 + $0x1d8] sm:$0xff]
  %v75 = vld [vmem:[%s0 + $0x1e0] sm:$0xff]
  %v76 = vld [vmem:[%s0 + $0x1e8] sm:$0xff]
  %v77 = vld [vmem:[%s0 + $0x1f0] sm:$0xff]
  %v78 = vld [vmem:[%s0 + $0x1f8] sm:$0xff]
  %v79 = vld [vmem:[%s0 + $0x200] sm:$0xff]
  %v80 = vld [vmem:[%s0 + $0x208] sm:$0xff]
  %v81 = vld [vmem:[%s0 + $0x210] sm:$0xff]
  %v82 = vld [vmem:[%s0 + $0x218] sm:$0xff]
  %v83 = vld [vmem:[%s0 + $0x220] sm:$0xff]
  %v84 = vld [vmem:[%s0 + $0x228] sm:$0xff]
  %v85 = vld [vmem:[%s0 + $0x230] sm:$0xff]
  %v86 = vld [vmem:[%s0 + $0x238] sm:$0xff]
  %v87 = vld [vmem:[%s0 + $0x240] sm:$0xff]
  %v88 = vld [vmem:[%s0 + $0x248] sm:$0xff]
  %v89 = vld [vmem:[%s0 + $0x250] sm:$0xff]
  %v90 = vld [vmem:[%s0 + $0x258] sm:$0xff]
  %v91 = vld [vmem:[%s0 + $0x260] sm:$0xff]
  %v92 = vld [vmem:[%s0 + $0x268] sm:$0xff]
  %v93 = vld [vmem:[%s0 + $0x270] sm:$0xff]
  %v94 = vld [vmem:[%s0 + $0x278] sm:$0xff]
  %v95 = vld [vmem:[%s0 + $0x280] sm:$0xff]
  %v96 = vld [vmem:[%s0 + $0x288] sm:$0xff]
  %v97 = vld [vmem:[%s0 + $0x290] sm:$0xff]
  %v98 = vld [vmem:[%s0 + $0x298] sm:$0xff]
  %v99 = vld [vmem:[%s0 + $0x2a0] sm:$0xff]
  %v100 = vld [vmem:[%s0 + $0x2a8] sm:$0xff]
  %v101 = vld [vmem:[%s0 + $0x2b0] sm:$0xff]
  %v102 = vld [vmem:[%s0 + $0x2b8] sm:$0xff]
  %v103 = vld [vmem:[%s0 + $0x2c0] sm:$0xff]
  %v104 = vld [vmem:[%s0 + $0x2c8] sm:$0xff]
  %v105 = vld [vmem:[%s0 + $0x2d0] sm:$0xff]
  %v106 = vld [vmem:[%s0 + $0x2d8] sm:$0xff]
  %v107 = vld [vmem:[%s0 + $0x2e0] sm:$0xff]
  %v108 = vld [vmem:[%s0 + $0x2e8] sm:$0xff]
  %v109 = vld [vmem:[%s0 + $0x2f0] sm:$0xff]
  %v110 = vld [vmem:[%s0 + $0x2f8] sm:$0xff]
  %v111 = vld [vmem:[%s0 + $0x300] sm:$0xff]
  %v112 = vld [vmem:[%s0 + $0x308] sm:$0xff]
  %v113 = vld [vmem:[%s0 + $0x310] sm:$0xff]
  %v114 = vld [vmem:[%s0 + $0x318] sm:$0xff]
  %v115 = vld [vmem:[%s0 + $0x320] sm:$0xff]
  %v116 = vld [vmem:[%s0 + $0x328] sm:$0xff]
  %v117 = vld [vmem:[%s0 + $0x330] sm:$0xff]
  %v118 = vld [vmem:[%s0 + $0x338] sm:$0xff]
  %v119 = vld [vmem:[%s0 + $0x340] sm:$0xff]
  %v120 = vld [vmem:[%s0 + $0x348] sm:$0xff]
  %v121 = vld [vmem:[%s0 + $0x350] sm:$0xff]
  %v122 = vld [vmem:[%s0 + $0x358] sm:$0xff]
  %v123 = vld [vmem:[%s0 + $0x360] sm:$0xff]
  %v124 = vld [vmem:[%s0 + $0x368] sm:$0xff]
  %v125 = vld [vmem:[%s0 + $0x370] sm:$0xff]
  %v126 = vld [vmem:[%s0 + $0x378] sm:$0xff]
  %v127 = vld [vmem:[%s0 + $0x380] sm:$0xff]
  %v128 = vld [vmem:[%s0 + $0x388] sm:$0xff]
  %v129 = vld [vmem:[%s0 + $0x390] sm:$0xff]
  %v130 = vld [vmem:[%s0 + $0x398] sm:$0xff]
  %v131 = vld [vmem:[%s0 + $0x3a0] sm:$0xff]
  %v132 = vld [vmem:[%s0 + $0x3a8] sm:$0xff]
  %v133 = vld [vmem:[%s0 + $0x3b0] sm:$0xff]
  %v134 = vld [vmem:[%s0 + $0x3b8] sm:$0xff]
  %v135 = vld [vmem:[%s0 + $0x3c0] sm:$0xff]
  %v136 = vld [vmem:[%s0 + $0x3c8] sm:$0xff]
  %v137 = vld [vmem:[%s0 + $0x3d0] sm:$0xff]
  %v138 = vld [vmem:[%s0 + $0x3d8] sm:$0xff]
  %v139 = vld [vmem:[%s0 + $0x3e0] sm:$0xff]
  %v140 = vld [vmem:[%s0 + $0x3e8] sm:$0xff]
  %v141 = vld [vmem:[%s0 + $0x3f0] sm:$0xff]
  %v142 = vld [vmem:[%s0 + $0x3f8] sm:$0xff]
  %v143 = vld [vmem:[%s1] sm:$0xf]
  %v144 = vld [vmem:[%s1 + $0x4] sm:$0xf]
  %v145 = vld [vmem:[%s1 + $0x8] sm:$0xf]
  %v146 = vld [vmem:[%s1 + $0xc] sm:$0xf]
  %v147 = vld [vmem:[%s1 + $0x10] sm:$0xf]
  %v148 = vld [vmem:[%s1 + $0x14] sm:$0xf]
  %v149 = vld [vmem:[%s1 + $0x18] sm:$0xf]
  %v150 = vld [vmem:[%s1 + $0x1c] sm:$0xf]
  %v151 = vld [vmem:[%s1 + $0x20] sm:$0xf]
  %v152 = vld [vmem:[%s1 + $0x24] sm:$0xf]
  %v153 = vld [vmem:[%s1 + $0x28] sm:$0xf]
  %v154 = vld [vmem:[%s1 + $0x2c] sm:$0xf]
  %v155 = vld [vmem:[%s1 + $0x30] sm:$0xf]
  %v156 = vld [vmem:[%s1 + $0x34] sm:$0xf]
  %v157 = vld [vmem:[%s1 + $0x38] sm:$0xf]
  %v158 = vld [vmem:[%s1 + $0x3c] sm:$0xf]
  %v159 = vld [vmem:[%s1 + $0x40] sm:$0xf]
  %v160 = vld [vmem:[%s1 + $0x44] sm:$0xf]
  %v161 = vld [vmem:[%s1 + $0x48] sm:$0xf]
  %v162 = vld [vmem:[%s1 + $0x4c] sm:$0xf]
  %v163 = vld [vmem:[%s1 + $0x50] sm:$0xf]
  %v164 = vld [vmem:[%s1 + $0x54] sm:$0xf]
  %v165 = vld [vmem:[%s1 + $0x58] sm:$0xf]
  %v166 = vld [vmem:[%s1 + $0x5c] sm:$0xf]
  %v167 = vld [vmem:[%s1 + $0x60] sm:$0xf]
  %v168 = vld [vmem:[%s1 + $0x64] sm:$0xf]
  %v169 = vld [vmem:[%s1 + $0x68] sm:$0xf]
  %v170 = vld [vmem:[%s1 + $0x6c] sm:$0xf]
  %v171 = vld [vmem:[%s1 + $0x70] sm:$0xf]
  %v172 = vld [vmem:[%s1 + $0x74] sm:$0xf]
  %v173 = vld [vmem:[%s1 + $0x78] sm:$0xf]
  %v174 = vld [vmem:[%s1 + $0x7c] sm:$0xf]
  %v175 = vld [vmem:[%s1 + $0x80] sm:$0xf]
  %v176 = vld [vmem:[%s1 + $0x84] sm:$0xf]
  %v177 = vld [vmem:[%s1 + $0x88] sm:$0xf]
  %v178 = vld [vmem:[%s1 + $0x8c] sm:$0xf]
  %v179 = vld [vmem:[%s1 + $0x90] sm:$0xf]
  %v180 = vld [vmem:[%s1 + $0x94] sm:$0xf]
  %v181 = vld [vmem:[%s1 + $0x98] sm:$0xf]
  %v182 = vld [vmem:[%s1 + $0x9c] sm:$0xf]
  %v183 = vld [vmem:[%s1 + $0xa0] sm:$0xf]
  %v184 = vld [vmem:[%s1 + $0xa4] sm:$0xf]
  %v185 = vld [vmem:[%s1 + $0xa8] sm:$0xf]
  %v186 = vld [vmem:[%s1 + $0xac] sm:$0xf]
  %v187 = vld [vmem:[%s1 + $0xb0] sm:$0xf]
  %v188 = vld [vmem:[%s1 + $0xb4] sm:$0xf]
  %v189 = vld [vmem:[%s1 + $0xb8] sm:$0xf]
  %v190 = vld [vmem:[%s1 + $0xbc] sm:$0xf]
  %v191 = vld [vmem:[%s1 + $0xc0] sm:$0xf]
  %v192 = vld [vmem:[%s1 + $0xc4] sm:$0xf]
  %v193 = vld [vmem:[%s1 + $0xc8] sm:$0xf]
  %v194 = vld [vmem:[%s1 + $0xcc] sm:$0xf]
  %v195 = vld [vmem:[%s1 + $0xd0] sm:$0xf]
  %v196 = vld [vmem:[%s1 + $0xd4] sm:$0xf]
  %v197 = vld [vmem:[%s1 + $0xd8] sm:$0xf]
  %v198 = vld [vmem:[%s1 + $0xdc] sm:$0xf]
  %v199 = vld [vmem:[%s1 + $0xe0] sm:$0xf]
  %v200 = vld [vmem:[%s1 + $0xe4] sm:$0xf]
  %v201 = vld [vmem:[%s1 + $0xe8] sm:$0xf]
  %v202 = vld [vmem:[%s1 + $0xec] sm:$0xf]
  %v203 = vld [vmem:[%s1 + $0xf0] sm:$0xf]
  %v204 = vld [vmem:[%s1 + $0xf4] sm:$0xf]
  %v205 = vld [vmem:[%s1 + $0xf8] sm:$0xf]
  %v206 = vld [vmem:[%s1 + $0xfc] sm:$0xf]
  %v335 = vunpack.c.l.b16 %v15
  %v336 = vunpack.c.h.b16 %v15
  %v337 = vunpack.c.l.b16 %v16
  %v338 = vunpack.c.h.b16 %v16
  %v339 = vunpack.c.l.b16 %v17
  %v340 = vunpack.c.h.b16 %v17
  %v341 = vunpack.c.l.b16 %v18
  %v342 = vunpack.c.h.b16 %v18
  %v343 = vunpack.c.l.b16 %v19
  %v344 = vunpack.c.h.b16 %v19
  %v345 = vunpack.c.l.b16 %v20
  %v346 = vunpack.c.h.b16 %v20
  %v347 = vunpack.c.l.b16 %v21
  %v348 = vunpack.c.h.b16 %v21
  %v349 = vunpack.c.l.b16 %v22
  %v350 = vunpack.c.h.b16 %v22
  %v351 = vunpack.c.l.b16 %v23
  %v352 = vunpack.c.h.b16 %v23
  %v353 = vunpack.c.l.b16 %v24
  %v354 = vunpack.c.h.b16 %v24
  %v355 = vunpack.c.l.b16 %v25
  %v356 = vunpack.c.h.b16 %v25
  %v357 = vunpack.c.l.b16 %v26
  %v358 = vunpack.c.h.b16 %v26
  %v359 = vunpack.c.l.b16 %v27
  %v360 = vunpack.c.h.b16 %v27
  %v361 = vunpack.c.l.b16 %v28
  %v362 = vunpack.c.h.b16 %v28
  %v363 = vunpack.c.l.b16 %v29
  %v364 = vunpack.c.h.b16 %v29
  %v365 = vunpack.c.l.b16 %v30
  %v366 = vunpack.c.h.b16 %v30
  %v367 = vunpack.c.l.b16 %v31
  %v368 = vunpack.c.h.b16 %v31
  %v369 = vunpack.c.l.b16 %v32
  %v370 = vunpack.c.h.b16 %v32
  %v371 = vunpack.c.l.b16 %v33
  %v372 = vunpack.c.h.b16 %v33
  %v373 = vunpack.c.l.b16 %v34
  %v374 = vunpack.c.h.b16 %v34
  %v375 = vunpack.c.l.b16 %v35
  %v376 = vunpack.c.h.b16 %v35
  %v377 = vunpack.c.l.b16 %v36
  %v378 = vunpack.c.h.b16 %v36
  %v379 = vunpack.c.l.b16 %v37
  %v380 = vunpack.c.h.b16 %v37
  %v381 = vunpack.c.l.b16 %v38
  %v382 = vunpack.c.h.b16 %v38
  %v383 = vunpack.c.l.b16 %v39
  %v384 = vunpack.c.h.b16 %v39
  %v385 = vunpack.c.l.b16 %v40
  %v386 = vunpack.c.h.b16 %v40
  %v387 = vunpack.c.l.b16 %v41
  %v388 = vunpack.c.h.b16 %v41
  %v389 = vunpack.c.l.b16 %v42
  %v390 = vunpack.c.h.b16 %v42
  %v391 = vunpack.c.l.b16 %v43
  %v392 = vunpack.c.h.b16 %v43
  %v393 = vunpack.c.l.b16 %v44
  %v394 = vunpack.c.h.b16 %v44
  %v395 = vunpack.c.l.b16 %v45
  %v396 = vunpack.c.h.b16 %v45
  %v397 = vunpack.c.l.b16 %v46
  %v398 = vunpack.c.h.b16 %v46
  %v399 = vunpack.c.l.b16 %v47
  %v400 = vunpack.c.h.b16 %v47
  %v401 = vunpack.c.l.b16 %v48
  %v402 = vunpack.c.h.b16 %v48
  %v403 = vunpack.c.l.b16 %v49
  %v404 = vunpack.c.h.b16 %v49
  %v405 = vunpack.c.l.b16 %v50
  %v406 = vunpack.c.h.b16 %v50
  %v407 = vunpack.c.l.b16 %v51
  %v408 = vunpack.c.h.b16 %v51
  %v409 = vunpack.c.l.b16 %v52
  %v410 = vunpack.c.h.b16 %v52
  %v411 = vunpack.c.l.b16 %v53
  %v412 = vunpack.c.h.b16 %v53
  %v413 = vunpack.c.l.b16 %v54
  %v414 = vunpack.c.h.b16 %v54
  %v415 = vunpack.c.l.b16 %v55
  %v416 = vunpack.c.h.b16 %v55
  %v417 = vunpack.c.l.b16 %v56
  %v418 = vunpack.c.h.b16 %v56
  %v419 = vunpack.c.l.b16 %v57
  %v420 = vunpack.c.h.b16 %v57
  %v421 = vunpack.c.l.b16 %v58
  %v422 = vunpack.c.h.b16 %v58
  %v423 = vunpack.c.l.b16 %v59
  %v424 = vunpack.c.h.b16 %v59
  %v425 = vunpack.c.l.b16 %v60
  %v426 = vunpack.c.h.b16 %v60
  %v427 = vunpack.c.l.b16 %v61
  %v428 = vunpack.c.h.b16 %v61
  %v429 = vunpack.c.l.b16 %v62
  %v430 = vunpack.c.h.b16 %v62
  %v431 = vunpack.c.l.b16 %v63
  %v432 = vunpack.c.h.b16 %v63
  %v433 = vunpack.c.l.b16 %v64
  %v434 = vunpack.c.h.b16 %v64
  %v435 = vunpack.c.l.b16 %v65
  %v436 = vunpack.c.h.b16 %v65
  %v437 = vunpack.c.l.b16 %v66
  %v438 = vunpack.c.h.b16 %v66
  %v439 = vunpack.c.l.b16 %v67
  %v440 = vunpack.c.h.b16 %v67
  %v441 = vunpack.c.l.b16 %v68
  %v442 = vunpack.c.h.b16 %v68
  %v443 = vunpack.c.l.b16 %v69
  %v444 = vunpack.c.h.b16 %v69
  %v445 = vunpack.c.l.b16 %v70
  %v446 = vunpack.c.h.b16 %v70
  %v447 = vunpack.c.l.b16 %v71
  %v448 = vunpack.c.h.b16 %v71
  %v449 = vunpack.c.l.b16 %v72
  %v450 = vunpack.c.h.b16 %v72
  %v451 = vunpack.c.l.b16 %v73
  %v452 = vunpack.c.h.b16 %v73
  %v453 = vunpack.c.l.b16 %v74
  %v454 = vunpack.c.h.b16 %v74
  %v455 = vunpack.c.l.b16 %v75
  %v456 = vunpack.c.h.b16 %v75
  %v457 = vunpack.c.l.b16 %v76
  %v458 = vunpack.c.h.b16 %v76
  %v459 = vunpack.c.l.b16 %v77
  %v460 = vunpack.c.h.b16 %v77
  %v461 = vunpack.c.l.b16 %v78
  %v462 = vunpack.c.h.b16 %v78
  %v463 = vunpack.c.l.b16 %v79
  %v464 = vunpack.c.h.b16 %v79
  %v465 = vunpack.c.l.b16 %v80
  %v466 = vunpack.c.h.b16 %v80
  %v467 = vunpack.c.l.b16 %v81
  %v468 = vunpack.c.h.b16 %v81
  %v469 = vunpack.c.l.b16 %v82
  %v470 = vunpack.c.h.b16 %v82
  %v471 = vunpack.c.l.b16 %v83
  %v472 = vunpack.c.h.b16 %v83
  %v473 = vunpack.c.l.b16 %v84
  %v474 = vunpack.c.h.b16 %v84
  %v475 = vunpack.c.l.b16 %v85
  %v476 = vunpack.c.h.b16 %v85
  %v477 = vunpack.c.l.b16 %v86
  %v478 = vunpack.c.h.b16 %v86
  %v479 = vunpack.c.l.b16 %v87
  %v480 = vunpack.c.h.b16 %v87
  %v481 = vunpack.c.l.b16 %v88
  %v482 = vunpack.c.h.b16 %v88
  %v483 = vunpack.c.l.b16 %v89
  %v484 = vunpack.c.h.b16 %v89
  %v485 = vunpack.c.l.b16 %v90
  %v486 = vunpack.c.h.b16 %v90
  %v487 = vunpack.c.l.b16 %v91
  %v488 = vunpack.c.h.b16 %v91
  %v489 = vunpack.c.l.b16 %v92
  %v490 = vunpack.c.h.b16 %v92
  %v491 = vunpack.c.l.b16 %v93
  %v492 = vunpack.c.h.b16 %v93
  %v493 = vunpack.c.l.b16 %v94
  %v494 = vunpack.c.h.b16 %v94
  %v495 = vunpack.c.l.b16 %v95
  %v496 = vunpack.c.h.b16 %v95
  %v497 = vunpack.c.l.b16 %v96
  %v498 = vunpack.c.h.b16 %v96
  %v499 = vunpack.c.l.b16 %v97
  %v500 = vunpack.c.h.b16 %v97
  %v501 = vunpack.c.l.b16 %v98
  %v502 = vunpack.c.h.b16 %v98
  %v503 = vunpack.c.l.b16 %v99
  %v504 = vunpack.c.h.b16 %v99
  %v505 = vunpack.c.l.b16 %v100
  %v506 = vunpack.c.h.b16 %v100
  %v507 = vunpack.c.l.b16 %v101
  %v508 = vunpack.c.h.b16 %v101
  %v509 = vunpack.c.l.b16 %v102
  %v510 = vunpack.c.h.b16 %v102
  %v511 = vunpack.c.l.b16 %v103
  %v512 = vunpack.c.h.b16 %v103
  %v513 = vunpack.c.l.b16 %v104
  %v514 = vunpack.c.h.b16 %v104
  %v515 = vunpack.c.l.b16 %v105
  %v516 = vunpack.c.h.b16 %v105
  %v517 = vunpack.c.l.b16 %v106
  %v518 = vunpack.c.h.b16 %v106
  %v519 = vunpack.c.l.b16 %v107
  %v520 = vunpack.c.h.b16 %v107
  %v521 = vunpack.c.l.b16 %v108
  %v522 = vunpack.c.h.b16 %v108
  %v523 = vunpack.c.l.b16 %v109
  %v524 = vunpack.c.h.b16 %v109
  %v525 = vunpack.c.l.b16 %v110
  %v526 = vunpack.c.h.b16 %v110
  %v527 = vunpack.c.l.b16 %v111
  %v528 = vunpack.c.h.b16 %v111
  %v529 = vunpack.c.l.b16 %v112
  %v530 = vunpack.c.h.b16 %v112
  %v531 = vunpack.c.l.b16 %v113
  %v532 = vunpack.c.h.b16 %v113
  %v533 = vunpack.c.l.b16 %v114
  %v534 = vunpack.c.h.b16 %v114
  %v535 = vunpack.c.l.b16 %v115
  %v536 = vunpack.c.h.b16 %v115
  %v537 = vunpack.c.l.b16 %v116
  %v538 = vunpack.c.h.b16 %v116
  %v539 = vunpack.c.l.b16 %v117
  %v540 = vunpack.c.h.b16 %v117
  %v541 = vunpack.c.l.b16 %v118
  %v542 = vunpack.c.h.b16 %v118
  %v543 = vunpack.c.l.b16 %v119
  %v544 = vunpack.c.h.b16 %v119
  %v545 = vunpack.c.l.b16 %v120
  %v546 = vunpack.c.h.b16 %v120
  %v547 = vunpack.c.l.b16 %v121
  %v548 = vunpack.c.h.b16 %v121
  %v549 = vunpack.c.l.b16 %v122
  %v550 = vunpack.c.h.b16 %v122
  %v551 = vunpack.c.l.b16 %v123
  %v552 = vunpack.c.h.b16 %v123
  %v553 = vunpack.c.l.b16 %v124
  %v554 = vunpack.c.h.b16 %v124
  %v555 = vunpack.c.l.b16 %v125
  %v556 = vunpack.c.h.b16 %v125
  %v557 = vunpack.c.l.b16 %v126
  %v558 = vunpack.c.h.b16 %v126
  %v559 = vunpack.c.l.b16 %v127
  %v560 = vunpack.c.h.b16 %v127
  %v561 = vunpack.c.l.b16 %v128
  %v562 = vunpack.c.h.b16 %v128
  %v563 = vunpack.c.l.b16 %v129
  %v564 = vunpack.c.h.b16 %v129
  %v565 = vunpack.c.l.b16 %v130
  %v566 = vunpack.c.h.b16 %v130
  %v567 = vunpack.c.l.b16 %v131
  %v568 = vunpack.c.h.b16 %v131
  %v569 = vunpack.c.l.b16 %v132
  %v570 = vunpack.c.h.b16 %v132
  %v571 = vunpack.c.l.b16 %v133
  %v572 = vunpack.c.h.b16 %v133
  %v573 = vunpack.c.l.b16 %v134
  %v574 = vunpack.c.h.b16 %v134
  %v575 = vunpack.c.l.b16 %v135
  %v576 = vunpack.c.h.b16 %v135
  %v577 = vunpack.c.l.b16 %v136
  %v578 = vunpack.c.h.b16 %v136
  %v579 = vunpack.c.l.b16 %v137
  %v580 = vunpack.c.h.b16 %v137
  %v581 = vunpack.c.l.b16 %v138
  %v582 = vunpack.c.h.b16 %v138
  %v583 = vunpack.c.l.b16 %v139
  %v584 = vunpack.c.h.b16 %v139
  %v585 = vunpack.c.l.b16 %v140
  %v586 = vunpack.c.h.b16 %v140
  %v587 = vunpack.c.l.b16 %v141
  %v588 = vunpack.c.h.b16 %v141
  %v589 = vunpack.c.l.b16 %v142
  %v590 = vunpack.c.h.b16 %v142
  %v591 = vpack.c.b16 %v339, %v335
  %v592 = vpack.c.b16 %v340, %v336
  %v593 = vpack.c.b16 %v341, %v337
  %v594 = vpack.c.b16 %v342, %v338
  %v595 = vpack.c.b16 %v347, %v343
  %v596 = vpack.c.b16 %v348, %v344
  %v597 = vpack.c.b16 %v349, %v345
  %v598 = vpack.c.b16 %v350, %v346
  %v599 = vpack.c.b16 %v355, %v351
  %v600 = vpack.c.b16 %v356, %v352
  %v601 = vpack.c.b16 %v357, %v353
  %v602 = vpack.c.b16 %v358, %v354
  %v603 = vpack.c.b16 %v363, %v359
  %v604 = vpack.c.b16 %v364, %v360
  %v605 = vpack.c.b16 %v365, %v361
  %v606 = vpack.c.b16 %v366, %v362
  %v607 = vpack.c.b16 %v371, %v367
  %v608 = vpack.c.b16 %v372, %v368
  %v609 = vpack.c.b16 %v373, %v369
  %v610 = vpack.c.b16 %v374, %v370
  %v611 = vpack.c.b16 %v379, %v375
  %v612 = vpack.c.b16 %v380, %v376
  %v613 = vpack.c.b16 %v381, %v377
  %v614 = vpack.c.b16 %v382, %v378
  %v615 = vpack.c.b16 %v387, %v383
  %v616 = vpack.c.b16 %v388, %v384
  %v617 = vpack.c.b16 %v389, %v385
  %v618 = vpack.c.b16 %v390, %v386
  %v619 = vpack.c.b16 %v395, %v391
  %v620 = vpack.c.b16 %v396, %v392
  %v621 = vpack.c.b16 %v397, %v393
  %v622 = vpack.c.b16 %v398, %v394
  %v623 = vpack.c.b16 %v403, %v399
  %v624 = vpack.c.b16 %v404, %v400
  %v625 = vpack.c.b16 %v405, %v401
  %v626 = vpack.c.b16 %v406, %v402
  %v627 = vpack.c.b16 %v411, %v407
  %v628 = vpack.c.b16 %v412, %v408
  %v629 = vpack.c.b16 %v413, %v409
  %v630 = vpack.c.b16 %v414, %v410
  %v631 = vpack.c.b16 %v419, %v415
  %v632 = vpack.c.b16 %v420, %v416
  %v633 = vpack.c.b16 %v421, %v417
  %v634 = vpack.c.b16 %v422, %v418
  %v635 = vpack.c.b16 %v427, %v423
  %v636 = vpack.c.b16 %v428, %v424
  %v637 = vpack.c.b16 %v429, %v425
  %v638 = vpack.c.b16 %v430, %v426
  %v639 = vpack.c.b16 %v435, %v431
  %v640 = vpack.c.b16 %v436, %v432
  %v641 = vpack.c.b16 %v437, %v433
  %v642 = vpack.c.b16 %v438, %v434
  %v643 = vpack.c.b16 %v443, %v439
  %v644 = vpack.c.b16 %v444, %v440
  %v645 = vpack.c.b16 %v445, %v441
  %v646 = vpack.c.b16 %v446, %v442
  %v647 = vpack.c.b16 %v451, %v447
  %v648 = vpack.c.b16 %v452, %v448
  %v649 = vpack.c.b16 %v453, %v449
  %v650 = vpack.c.b16 %v454, %v450
  %v651 = vpack.c.b16 %v459, %v455
  %v652 = vpack.c.b16 %v460, %v456
  %v653 = vpack.c.b16 %v461, %v457
  %v654 = vpack.c.b16 %v462, %v458
  %v655 = vpack.c.b16 %v467, %v463
  %v656 = vpack.c.b16 %v468, %v464
  %v657 = vpack.c.b16 %v469, %v465
  %v658 = vpack.c.b16 %v470, %v466
  %v659 = vpack.c.b16 %v475, %v471
  %v660 = vpack.c.b16 %v476, %v472
  %v661 = vpack.c.b16 %v477, %v473
  %v662 = vpack.c.b16 %v478, %v474
  %v663 = vpack.c.b16 %v483, %v479
  %v664 = vpack.c.b16 %v484, %v480
  %v665 = vpack.c.b16 %v485, %v481
  %v666 = vpack.c.b16 %v486, %v482
  %v667 = vpack.c.b16 %v491, %v487
  %v668 = vpack.c.b16 %v492, %v488
  %v669 = vpack.c.b16 %v493, %v489
  %v670 = vpack.c.b16 %v494, %v490
  %v671 = vpack.c.b16 %v499, %v495
  %v672 = vpack.c.b16 %v500, %v496
  %v673 = vpack.c.b16 %v501, %v497
  %v674 = vpack.c.b16 %v502, %v498
  %v675 = vpack.c.b16 %v507, %v503
  %v676 = vpack.c.b16 %v508, %v504
  %v677 = vpack.c.b16 %v509, %v505
  %v678 = vpack.c.b16 %v510, %v506
  %v679 = vpack.c.b16 %v515, %v511
  %v680 = vpack.c.b16 %v516, %v512
  %v681 = vpack.c.b16 %v517, %v513
  %v682 = vpack.c.b16 %v518, %v514
  %v683 = vpack.c.b16 %v523, %v519
  %v684 = vpack.c.b16 %v524, %v520
  %v685 = vpack.c.b16 %v525, %v521
  %v686 = vpack.c.b16 %v526, %v522
  %v687 = vpack.c.b16 %v531, %v527
  %v688 = vpack.c.b16 %v532, %v528
  %v689 = vpack.c.b16 %v533, %v529
  %v690 = vpack.c.b16 %v534, %v530
  %v691 = vpack.c.b16 %v539, %v535
  %v692 = vpack.c.b16 %v540, %v536
  %v693 = vpack.c.b16 %v541, %v537
  %v694 = vpack.c.b16 %v542, %v538
  %v695 = vpack.c.b16 %v547, %v543
  %v696 = vpack.c.b16 %v548, %v544
  %v697 = vpack.c.b16 %v549, %v545
  %v698 = vpack.c.b16 %v550, %v546
  %v699 = vpack.c.b16 %v555, %v551
  %v700 = vpack.c.b16 %v556, %v552
  %v701 = vpack.c.b16 %v557, %v553
  %v702 = vpack.c.b16 %v558, %v554
  %v703 = vpack.c.b16 %v563, %v559
  %v704 = vpack.c.b16 %v564, %v560
  %v705 = vpack.c.b16 %v565, %v561
  %v706 = vpack.c.b16 %v566, %v562
  %v707 = vpack.c.b16 %v571, %v567
  %v708 = vpack.c.b16 %v572, %v568
  %v709 = vpack.c.b16 %v573, %v569
  %v710 = vpack.c.b16 %v574, %v570
  %v711 = vpack.c.b16 %v579, %v575
  %v712 = vpack.c.b16 %v580, %v576
  %v713 = vpack.c.b16 %v581, %v577
  %v714 = vpack.c.b16 %v582, %v578
  %v715 = vpack.c.b16 %v587, %v583
  %v716 = vpack.c.b16 %v588, %v584
  %v717 = vpack.c.b16 %v589, %v585
  %v718 = vpack.c.b16 %v590, %v586
  %v911 = vunpack.c.l.b16 %v143
  %v912 = vunpack.c.l.b16 %v144
  %v913 = vunpack.c.l.b16 %v145
  %v914 = vunpack.c.l.b16 %v146
  %v915 = vunpack.c.l.b16 %v147
  %v916 = vunpack.c.l.b16 %v148
  %v917 = vunpack.c.l.b16 %v149
  %v918 = vunpack.c.l.b16 %v150
  %v919 = vunpack.c.l.b16 %v151
  %v920 = vunpack.c.l.b16 %v152
  %v921 = vunpack.c.l.b16 %v153
  %v922 = vunpack.c.l.b16 %v154
  %v923 = vunpack.c.l.b16 %v155
  %v924 = vunpack.c.l.b16 %v156
  %v925 = vunpack.c.l.b16 %v157
  %v926 = vunpack.c.l.b16 %v158
  %v927 = vunpack.c.l.b16 %v159
  %v928 = vunpack.c.l.b16 %v160
  %v929 = vunpack.c.l.b16 %v161
  %v930 = vunpack.c.l.b16 %v162
  %v931 = vunpack.c.l.b16 %v163
  %v932 = vunpack.c.l.b16 %v164
  %v933 = vunpack.c.l.b16 %v165
  %v934 = vunpack.c.l.b16 %v166
  %v935 = vunpack.c.l.b16 %v167
  %v936 = vunpack.c.l.b16 %v168
  %v937 = vunpack.c.l.b16 %v169
  %v938 = vunpack.c.l.b16 %v170
  %v939 = vunpack.c.l.b16 %v171
  %v940 = vunpack.c.l.b16 %v172
  %v941 = vunpack.c.l.b16 %v173
  %v942 = vunpack.c.l.b16 %v174
  %v943 = vunpack.c.l.b16 %v175
  %v944 = vunpack.c.l.b16 %v176
  %v945 = vunpack.c.l.b16 %v177
  %v946 = vunpack.c.l.b16 %v178
  %v947 = vunpack.c.l.b16 %v179
  %v948 = vunpack.c.l.b16 %v180
  %v949 = vunpack.c.l.b16 %v181
  %v950 = vunpack.c.l.b16 %v182
  %v951 = vunpack.c.l.b16 %v183
  %v952 = vunpack.c.l.b16 %v184
  %v953 = vunpack.c.l.b16 %v185
  %v954 = vunpack.c.l.b16 %v186
  %v955 = vunpack.c.l.b16 %v187
  %v956 = vunpack.c.l.b16 %v188
  %v957 = vunpack.c.l.b16 %v189
  %v958 = vunpack.c.l.b16 %v190
  %v959 = vunpack.c.l.b16 %v191
  %v960 = vunpack.c.l.b16 %v192
  %v961 = vunpack.c.l.b16 %v193
  %v962 = vunpack.c.l.b16 %v194
  %v963 = vunpack.c.l.b16 %v195
  %v964 = vunpack.c.l.b16 %v196
  %v965 = vunpack.c.l.b16 %v197
  %v966 = vunpack.c.l.b16 %v198
  %v967 = vunpack.c.l.b16 %v199
  %v968 = vunpack.c.l.b16 %v200
  %v969 = vunpack.c.l.b16 %v201
  %v970 = vunpack.c.l.b16 %v202
  %v971 = vunpack.c.l.b16 %v203
  %v972 = vunpack.c.l.b16 %v204
  %v973 = vunpack.c.l.b16 %v205
  %v974 = vunpack.c.l.b16 %v206
  %v975 = vpack.c.b16 %v912, %v911
  %v976 = vpack.c.b16 %v914, %v913
  %v977 = vpack.c.b16 %v916, %v915
  %v978 = vpack.c.b16 %v918, %v917
  %v979 = vpack.c.b16 %v920, %v919
  %v980 = vpack.c.b16 %v922, %v921
  %v981 = vpack.c.b16 %v924, %v923
  %v982 = vpack.c.b16 %v926, %v925
  %v983 = vpack.c.b16 %v928, %v927
  %v984 = vpack.c.b16 %v930, %v929
  %v985 = vpack.c.b16 %v932, %v931
  %v986 = vpack.c.b16 %v934, %v933
  %v987 = vpack.c.b16 %v936, %v935
  %v988 = vpack.c.b16 %v938, %v937
  %v989 = vpack.c.b16 %v940, %v939
  %v990 = vpack.c.b16 %v942, %v941
  %v991 = vpack.c.b16 %v944, %v943
  %v992 = vpack.c.b16 %v946, %v945
  %v993 = vpack.c.b16 %v948, %v947
  %v994 = vpack.c.b16 %v950, %v949
  %v995 = vpack.c.b16 %v952, %v951
  %v996 = vpack.c.b16 %v954, %v953
  %v997 = vpack.c.b16 %v956, %v955
  %v998 = vpack.c.b16 %v958, %v957
  %v999 = vpack.c.b16 %v960, %v959
  %v1000 = vpack.c.b16 %v962, %v961
  %v1001 = vpack.c.b16 %v964, %v963
  %v1002 = vpack.c.b16 %v966, %v965
  %v1003 = vpack.c.b16 %v968, %v967
  %v1004 = vpack.c.b16 %v970, %v969
  %v1005 = vpack.c.b16 %v972, %v971
  %v1006 = vpack.c.b16 %v974, %v973
  %1039 = vmatprep.subr.bf16.mxu0 0
  %1040 = vmatpush1.bf16.msra.mxu0 %v975
  %1041 = vmatprep.subr.bf16.mxu0 0
  %1042 = vmatpush1.bf16.msra.mxu0 %v976
  %1043 = vmatprep.subr.bf16.mxu0 0
  %1044 = vmatpush1.bf16.msra.mxu0 %v977
  %1045 = vmatprep.subr.bf16.mxu0 0
  %1046 = vmatpush1.bf16.msra.mxu0 %v978
  %1047 = vmatprep.subr.bf16.mxu0 0
  %1048 = vmatpush1.bf16.msra.mxu0 %v979
  %1049 = vmatprep.subr.bf16.mxu0 0
  %1050 = vmatpush1.bf16.msra.mxu0 %v980
  %1051 = vmatprep.subr.bf16.mxu0 0
  %1052 = vmatpush1.bf16.msra.mxu0 %v981
  %1053 = vmatprep.subr.bf16.mxu0 0
  %1054 = vmatpush1.bf16.msra.mxu0 %v982
  %1055 = vmatprep.subr.bf16.mxu0 0
  %1056 = vmatpush1.bf16.msra.mxu0 %v983
  %1057 = vmatprep.subr.bf16.mxu0 0
  %1058 = vmatpush1.bf16.msra.mxu0 %v984
  %1059 = vmatprep.subr.bf16.mxu0 0
  %1060 = vmatpush1.bf16.msra.mxu0 %v985
  %1061 = vmatprep.subr.bf16.mxu0 0
  %1062 = vmatpush1.bf16.msra.mxu0 %v986
  %1063 = vmatprep.subr.bf16.mxu0 0
  %1064 = vmatpush1.bf16.msra.mxu0 %v987
  %1065 = vmatprep.subr.bf16.mxu0 0
  %1066 = vmatpush1.bf16.msra.mxu0 %v988
  %1067 = vmatprep.subr.bf16.mxu0 0
  %1068 = vmatpush1.bf16.msra.mxu0 %v989
  %1069 = vmatprep.subr.bf16.mxu0 0
  %1070 = vmatpush1.bf16.msra.mxu0 %v990
  %1071 = vmatprep.mubr.bf16.mxu0 %v592
  %1072 = vmatmul.mubr.bf16.gmra.mrb[0].mxu0 %v591
  %v1073 = vpop.f32.mrb[0].mxu0
  %v1074 = vadd.f32 0.0, %v1073
  %v1075 = vpop.f32.mrb[0].mxu0
  %v1076 = vpop.f32.mrb[0].mxu0
  %v1077 = vadd.f32 0.0, %v1076
  %v1078 = vpop.f32.mrb[0].mxu0
  %1079 = vmatprep.mubr.bf16.mxu0 %v596
  %1080 = vmatmul.mubr.bf16.gmra.mrb[0].mxu0 %v595
  %v1081 = vpop.f32.mrb[0].mxu0
  %v1082 = vadd.f32 0.0, %v1081
  %v1083 = vpop.f32.mrb[0].mxu0
  %v1084 = vpop.f32.mrb[0].mxu0
  %v1085 = vadd.f32 0.0, %v1084
  %v1086 = vpop.f32.mrb[0].mxu0
  %1087 = vmatprep.mubr.bf16.mxu0 %v600
  %1088 = vmatmul.mubr.bf16.gmra.mrb[0].mxu0 %v599
  %v1089 = vpop.f32.mrb[0].mxu0
  %v1090 = vadd.f32 0.0, %v1089
  %v1091 = vpop.f32.mrb[0].mxu0
  %v1092 = vpop.f32.mrb[0].mxu0
  %v1093 = vadd.f32 0.0, %v1092
  %v1094 = vpop.f32.mrb[0].mxu0
  %1095 = vmatprep.mubr.bf16.mxu0 %v604
  %1096 = vmatmul.mubr.bf16.gmra.mrb[0].mxu0 %v603
  %v1097 = vpop.f32.mrb[0].mxu0
  %v1098 = vadd.f32 0.0, %v1097
  %v1099 = vpop.f32.mrb[0].mxu0
  %v1100 = vpop.f32.mrb[0].mxu0
  %v1101 = vadd.f32 0.0, %v1100
  %v1102 = vpop.f32.mrb[0].mxu0
  %1103 = vmatprep.mubr.bf16.mxu0 %v608
  %1104 = vmatmul.mubr.bf16.gmra.mrb[0].mxu0 %v607
  %v1105 = vpop.f32.mrb[0].mxu0
  %v1106 = vadd.f32 0.0, %v1105
  %v1107 = vpop.f32.mrb[0].mxu0
  %v1108 = vpop.f32.mrb[0].mxu0
  %v1109 = vadd.f32 0.0, %v1108
  %v1110 = vpop.f32.mrb[0].mxu0
  %1111 = vmatprep.mubr.bf16.mxu0 %v612
  %1112 = vmatmul.mubr.bf16.gmra.mrb[0].mxu0 %v611
  %v1113 = vpop.f32.mrb[0].mxu0
  %v1114 = vadd.f32 0.0, %v1113
  %v1115 = vpop.f32.mrb[0].mxu0
  %v1116 = vpop.f32.mrb[0].mxu0
  %v1117 = vadd.f32 0.0, %v1116
  %v1118 = vpop.f32.mrb[0].mxu0
  %1119 = vmatprep.mubr.bf16.mxu0 %v616
  %1120 = vmatmul.mubr.bf16.gmra.mrb[0].mxu0 %v615
  %v1121 = vpop.f32.mrb[0].mxu0
  %v1122 = vadd.f32 0.0, %v1121
  %v1123 = vpop.f32.mrb[0].mxu0
  %v1124 = vpop.f32.mrb[0].mxu0
  %v1125 = vadd.f32 0.0, %v1124
  %v1126 = vpop.f32.mrb[0].mxu0
  %1127 = vmatprep.mubr.bf16.mxu0 %v620
  %1128 = vmatmul.mubr.bf16.gmra.mrb[0].mxu0 %v619
  %v1129 = vpop.f32.mrb[0].mxu0
  %v1130 = vadd.f32 0.0, %v1129
  %v1131 = vpop.f32.mrb[0].mxu0
  %v1132 = vpop.f32.mrb[0].mxu0
  %v1133 = vadd.f32 0.0, %v1132
  %v1134 = vpop.f32.mrb[0].mxu0
  %1135 = vmatprep.mubr.bf16.mxu0 %v624
  %1136 = vmatmul.mubr.bf16.gmra.mrb[0].mxu0 %v623
  %v1137 = vpop.f32.mrb[0].mxu0
  %v1138 = vadd.f32 0.0, %v1137
  %v1139 = vpop.f32.mrb[0].mxu0
  %v1140 = vpop.f32.mrb[0].mxu0
  %v1141 = vadd.f32 0.0, %v1140
  %v1142 = vpop.f32.mrb[0].mxu0
  %1143 = vmatprep.mubr.bf16.mxu0 %v628
  %1144 = vmatmul.mubr.bf16.gmra.mrb[0].mxu0 %v627
  %v1145 = vpop.f32.mrb[0].mxu0
  %v1146 = vadd.f32 0.0, %v1145
  %v1147 = vpop.f32.mrb[0].mxu0
  %v1148 = vpop.f32.mrb[0].mxu0
  %v1149 = vadd.f32 0.0, %v1148
  %v1150 = vpop.f32.mrb[0].mxu0
  %1151 = vmatprep.mubr.bf16.mxu0 %v632
  %1152 = vmatmul.mubr.bf16.gmra.mrb[0].mxu0 %v631
  %v1153 = vpop.f32.mrb[0].mxu0
  %v1154 = vadd.f32 0.0, %v1153
  %v1155 = vpop.f32.mrb[0].mxu0
  %v1156 = vpop.f32.mrb[0].mxu0
  %v1157 = vadd.f32 0.0, %v1156
  %v1158 = vpop.f32.mrb[0].mxu0
  %1159 = vmatprep.mubr.bf16.mxu0 %v636
  %1160 = vmatmul.mubr.bf16.gmra.mrb[0].mxu0 %v635
  %v1161 = vpop.f32.mrb[0].mxu0
  %v1162 = vadd.f32 0.0, %v1161
  %v1163 = vpop.f32.mrb[0].mxu0
  %v1164 = vpop.f32.mrb[0].mxu0
  %v1165 = vadd.f32 0.0, %v1164
  %v1166 = vpop.f32.mrb[0].mxu0
  %1167 = vmatprep.mubr.bf16.mxu0 %v640
  %1168 = vmatmul.mubr.bf16.gmra.mrb[0].mxu0 %v639
  %v1169 = vpop.f32.mrb[0].mxu0
  %v1170 = vadd.f32 0.0, %v1169
  %v1171 = vpop.f32.mrb[0].mxu0
  %v1172 = vpop.f32.mrb[0].mxu0
  %v1173 = vadd.f32 0.0, %v1172
  %v1174 = vpop.f32.mrb[0].mxu0
  %1175 = vmatprep.mubr.bf16.mxu0 %v644
  %1176 = vmatmul.mubr.bf16.gmra.mrb[0].mxu0 %v643
  %v1177 = vpop.f32.mrb[0].mxu0
  %v1178 = vadd.f32 0.0, %v1177
  %v1179 = vpop.f32.mrb[0].mxu0
  %v1180 = vpop.f32.mrb[0].mxu0
  %v1181 = vadd.f32 0.0, %v1180
  %v1182 = vpop.f32.mrb[0].mxu0
  %1183 = vmatprep.mubr.bf16.mxu0 %v648
  %1184 = vmatmul.mubr.bf16.gmra.mrb[0].mxu0 %v647
  %v1185 = vpop.f32.mrb[0].mxu0
  %v1186 = vadd.f32 0.0, %v1185
  %v1187 = vpop.f32.mrb[0].mxu0
  %v1188 = vpop.f32.mrb[0].mxu0
  %v1189 = vadd.f32 0.0, %v1188
  %v1190 = vpop.f32.mrb[0].mxu0
  %1191 = vmatprep.mubr.bf16.mxu0 %v652
  %1192 = vmatmul.mubr.bf16.gmra.mrb[0].mxu0 %v651
  %v1193 = vpop.f32.mrb[0].mxu0
  %v1194 = vadd.f32 0.0, %v1193
  %v1195 = vpop.f32.mrb[0].mxu0
  %v1196 = vpop.f32.mrb[0].mxu0
  %v1197 = vadd.f32 0.0, %v1196
  %v1198 = vpop.f32.mrb[0].mxu0
  %1199 = vmatprep.mubr.bf16.mxu0 %v656
  %1200 = vmatmul.mubr.bf16.gmra.mrb[0].mxu0 %v655
  %v1201 = vpop.f32.mrb[0].mxu0
  %v1202 = vadd.f32 0.0, %v1201
  %v1203 = vpop.f32.mrb[0].mxu0
  %v1204 = vpop.f32.mrb[0].mxu0
  %v1205 = vadd.f32 0.0, %v1204
  %v1206 = vpop.f32.mrb[0].mxu0
  %1207 = vmatprep.mubr.bf16.mxu0 %v660
  %1208 = vmatmul.mubr.bf16.gmra.mrb[0].mxu0 %v659
  %v1209 = vpop.f32.mrb[0].mxu0
  %v1210 = vadd.f32 0.0, %v1209
  %v1211 = vpop.f32.mrb[0].mxu0
  %v1212 = vpop.f32.mrb[0].mxu0
  %v1213 = vadd.f32 0.0, %v1212
  %v1214 = vpop.f32.mrb[0].mxu0
  %1215 = vmatprep.mubr.bf16.mxu0 %v664
  %1216 = vmatmul.mubr.bf16.gmra.mrb[0].mxu0 %v663
  %v1217 = vpop.f32.mrb[0].mxu0
  %v1218 = vadd.f32 0.0, %v1217
  %v1219 = vpop.f32.mrb[0].mxu0
  %v1220 = vpop.f32.mrb[0].mxu0
  %v1221 = vadd.f32 0.0, %v1220
  %v1222 = vpop.f32.mrb[0].mxu0
  %1223 = vmatprep.mubr.bf16.mxu0 %v668
  %1224 = vmatmul.mubr.bf16.gmra.mrb[0].mxu0 %v667
  %v1225 = vpop.f32.mrb[0].mxu0
  %v1226 = vadd.f32 0.0, %v1225
  %v1227 = vpop.f32.mrb[0].mxu0
  %v1228 = vpop.f32.mrb[0].mxu0
  %v1229 = vadd.f32 0.0, %v1228
  %v1230 = vpop.f32.mrb[0].mxu0
  %1231 = vmatprep.mubr.bf16.mxu0 %v672
  %1232 = vmatmul.mubr.bf16.gmra.mrb[0].mxu0 %v671
  %v1233 = vpop.f32.mrb[0].mxu0
  %v1234 = vadd.f32 0.0, %v1233
  %v1235 = vpop.f32.mrb[0].mxu0
  %v1236 = vpop.f32.mrb[0].mxu0
  %v1237 = vadd.f32 0.0, %v1236
  %v1238 = vpop.f32.mrb[0].mxu0
  %1239 = vmatprep.mubr.bf16.mxu0 %v676
  %1240 = vmatmul.mubr.bf16.gmra.mrb[0].mxu0 %v675
  %v1241 = vpop.f32.mrb[0].mxu0
  %v1242 = vadd.f32 0.0, %v1241
  %v1243 = vpop.f32.mrb[0].mxu0
  %v1244 = vpop.f32.mrb[0].mxu0
  %v1245 = vadd.f32 0.0, %v1244
  %v1246 = vpop.f32.mrb[0].mxu0
  %1247 = vmatprep.mubr.bf16.mxu0 %v680
  %1248 = vmatmul.mubr.bf16.gmra.mrb[0].mxu0 %v679
  %v1249 = vpop.f32.mrb[0].mxu0
  %v1250 = vadd.f32 0.0, %v1249
  %v1251 = vpop.f32.mrb[0].mxu0
  %v1252 = vpop.f32.mrb[0].mxu0
  %v1253 = vadd.f32 0.0, %v1252
  %v1254 = vpop.f32.mrb[0].mxu0
  %1255 = vmatprep.mubr.bf16.mxu0 %v684
  %1256 = vmatmul.mubr.bf16.gmra.mrb[0].mxu0 %v683
  %v1257 = vpop.f32.mrb[0].mxu0
  %v1258 = vadd.f32 0.0, %v1257
  %v1259 = vpop.f32.mrb[0].mxu0
  %v1260 = vpop.f32.mrb[0].mxu0
  %v1261 = vadd.f32 0.0, %v1260
  %v1262 = vpop.f32.mrb[0].mxu0
  %1263 = vmatprep.mubr.bf16.mxu0 %v688
  %1264 = vmatmul.mubr.bf16.gmra.mrb[0].mxu0 %v687
  %v1265 = vpop.f32.mrb[0].mxu0
  %v1266 = vadd.f32 0.0, %v1265
  %v1267 = vpop.f32.mrb[0].mxu0
  %v1268 = vpop.f32.mrb[0].mxu0
  %v1269 = vadd.f32 0.0, %v1268
  %v1270 = vpop.f32.mrb[0].mxu0
  %1271 = vmatprep.mubr.bf16.mxu0 %v692
  %1272 = vmatmul.mubr.bf16.gmra.mrb[0].mxu0 %v691
  %v1273 = vpop.f32.mrb[0].mxu0
  %v1274 = vadd.f32 0.0, %v1273
  %v1275 = vpop.f32.mrb[0].mxu0
  %v1276 = vpop.f32.mrb[0].mxu0
  %v1277 = vadd.f32 0.0, %v1276
  %v1278 = vpop.f32.mrb[0].mxu0
  %1279 = vmatprep.mubr.bf16.mxu0 %v696
  %1280 = vmatmul.mubr.bf16.gmra.mrb[0].mxu0 %v695
  %v1281 = vpop.f32.mrb[0].mxu0
  %v1282 = vadd.f32 0.0, %v1281
  %v1283 = vpop.f32.mrb[0].mxu0
  %v1284 = vpop.f32.mrb[0].mxu0
  %v1285 = vadd.f32 0.0, %v1284
  %v1286 = vpop.f32.mrb[0].mxu0
  %1287 = vmatprep.mubr.bf16.mxu0 %v700
  %1288 = vmatmul.mubr.bf16.gmra.mrb[0].mxu0 %v699
  %v1289 = vpop.f32.mrb[0].mxu0
  %v1290 = vadd.f32 0.0, %v1289
  %v1291 = vpop.f32.mrb[0].mxu0
  %v1292 = vpop.f32.mrb[0].mxu0
  %v1293 = vadd.f32 0.0, %v1292
  %v1294 = vpop.f32.mrb[0].mxu0
  %1295 = vmatprep.mubr.bf16.mxu0 %v704
  %1296 = vmatmul.mubr.bf16.gmra.mrb[0].mxu0 %v703
  %v1297 = vpop.f32.mrb[0].mxu0
  %v1298 = vadd.f32 0.0, %v1297
  %v1299 = vpop.f32.mrb[0].mxu0
  %v1300 = vpop.f32.mrb[0].mxu0
  %v1301 = vadd.f32 0.0, %v1300
  %v1302 = vpop.f32.mrb[0].mxu0
  %1303 = vmatprep.mubr.bf16.mxu0 %v708
  %1304 = vmatmul.mubr.bf16.gmra.mrb[0].mxu0 %v707
  %v1305 = vpop.f32.mrb[0].mxu0
  %v1306 = vadd.f32 0.0, %v1305
  %v1307 = vpop.f32.mrb[0].mxu0
  %v1308 = vpop.f32.mrb[0].mxu0
  %v1309 = vadd.f32 0.0, %v1308
  %v1310 = vpop.f32.mrb[0].mxu0
  %1311 = vmatprep.mubr.bf16.mxu0 %v712
  %1312 = vmatmul.mubr.bf16.gmra.mrb[0].mxu0 %v711
  %v1313 = vpop.f32.mrb[0].mxu0
  %v1314 = vadd.f32 0.0, %v1313
  %v1315 = vpop.f32.mrb[0].mxu0
  %v1316 = vpop.f32.mrb[0].mxu0
  %v1317 = vadd.f32 0.0, %v1316
  %v1318 = vpop.f32.mrb[0].mxu0
  %1319 = vmatprep.mubr.bf16.mxu0 %v716
  %1320 = vmatmul.mubr.bf16.gmra.mrb[0].mxu0 %v715
  %v1321 = vpop.f32.mrb[0].mxu0
  %v1322 = vadd.f32 0.0, %v1321
  %v1323 = vpop.f32.mrb[0].mxu0
  %v1324 = vpop.f32.mrb[0].mxu0
  %v1325 = vadd.f32 0.0, %v1324
  %v1326 = vpop.f32.mrb[0].mxu0
  %1327 = vdwg.mxu0
  %1328 = vmatprep.subr.bf16.mxu0 0
  %1329 = vmatpush1.bf16.msra.mxu0 %v991
  %1330 = vmatprep.subr.bf16.mxu0 0
  %1331 = vmatpush1.bf16.msra.mxu0 %v992
  %1332 = vmatprep.subr.bf16.mxu0 0
  %1333 = vmatpush1.bf16.msra.mxu0 %v993
  %1334 = vmatprep.subr.bf16.mxu0 0
  %1335 = vmatpush1.bf16.msra.mxu0 %v994
  %1336 = vmatprep.subr.bf16.mxu0 0
  %1337 = vmatpush1.bf16.msra.mxu0 %v995
  %1338 = vmatprep.subr.bf16.mxu0 0
  %1339 = vmatpush1.bf16.msra.mxu0 %v996
  %1340 = vmatprep.subr.bf16.mxu0 0
  %1341 = vmatpush1.bf16.msra.mxu0 %v997
  %1342 = vmatprep.subr.bf16.mxu0 0
  %1343 = vmatpush1.bf16.msra.mxu0 %v998
  %1344 = vmatprep.subr.bf16.mxu0 0
  %1345 = vmatpush1.bf16.msra.mxu0 %v999
  %1346 = vmatprep.subr.bf16.mxu0 0
  %1347 = vmatpush1.bf16.msra.mxu0 %v1000
  %1348 = vmatprep.subr.bf16.mxu0 0
  %1349 = vmatpush1.bf16.msra.mxu0 %v1001
  %1350 = vmatprep.subr.bf16.mxu0 0
  %1351 = vmatpush1.bf16.msra.mxu0 %v1002
  %1352 = vmatprep.subr.bf16.mxu0 0
  %1353 = vmatpush1.bf16.msra.mxu0 %v1003
  %1354 = vmatprep.subr.bf16.mxu0 0
  %1355 = vmatpush1.bf16.msra.mxu0 %v1004
  %1356 = vmatprep.subr.bf16.mxu0 0
  %1357 = vmatpush1.bf16.msra.mxu0 %v1005
  %1358 = vmatprep.subr.bf16.mxu0 0
  %1359 = vmatpush1.bf16.msra.mxu0 %v1006
  %1360 = vmatprep.mubr.bf16.mxu0 %v594
  %1361 = vmatmul.mubr.bf16.gmra.mrb[0].mxu0 %v593
  %v1362 = vpop.f32.mrb[0].mxu0
  %v1363 = vadd.f32 %v1074, %v1362
  %v1364 = vpop.f32.mrb[0].mxu0
  %v1365 = vpop.f32.mrb[0].mxu0
  %v1366 = vadd.f32 %v1077, %v1365
  %v1367 = vpop.f32.mrb[0].mxu0
  %1368 = vmatprep.mubr.bf16.mxu0 %v598
  %1369 = vmatmul.mubr.bf16.gmra.mrb[0].mxu0 %v597
  %v1370 = vpop.f32.mrb[0].mxu0
  %v1371 = vadd.f32 %v1082, %v1370
  %v1372 = vpop.f32.mrb[0].mxu0
  %v1373 = vpop.f32.mrb[0].mxu0
  %v1374 = vadd.f32 %v1085, %v1373
  %v1375 = vpop.f32.mrb[0].mxu0
  %1376 = vmatprep.mubr.bf16.mxu0 %v602
  %1377 = vmatmul.mubr.bf16.gmra.mrb[0].mxu0 %v601
  %v1378 = vpop.f32.mrb[0].mxu0
  %v1379 = vadd.f32 %v1090, %v1378
  %v1380 = vpop.f32.mrb[0].mxu0
  %v1381 = vpop.f32.mrb[0].mxu0
  %v1382 = vadd.f32 %v1093, %v1381
  %v1383 = vpop.f32.mrb[0].mxu0
  %1384 = vmatprep.mubr.bf16.mxu0 %v606
  %1385 = vmatmul.mubr.bf16.gmra.mrb[0].mxu0 %v605
  %v1386 = vpop.f32.mrb[0].mxu0
  %v1387 = vadd.f32 %v1098, %v1386
  %v1388 = vpop.f32.mrb[0].mxu0
  %v1389 = vpop.f32.mrb[0].mxu0
  %v1390 = vadd.f32 %v1101, %v1389
  %v1391 = vpop.f32.mrb[0].mxu0
  %1392 = vmatprep.mubr.bf16.mxu0 %v610
  %1393 = vmatmul.mubr.bf16.gmra.mrb[0].mxu0 %v609
  %v1394 = vpop.f32.mrb[0].mxu0
  %v1395 = vadd.f32 %v1106, %v1394
  %v1396 = vpop.f32.mrb[0].mxu0
  %v1397 = vpop.f32.mrb[0].mxu0
  %v1398 = vadd.f32 %v1109, %v1397
  %v1399 = vpop.f32.mrb[0].mxu0
  %1400 = vmatprep.mubr.bf16.mxu0 %v614
  %1401 = vmatmul.mubr.bf16.gmra.mrb[0].mxu0 %v613
  %v1402 = vpop.f32.mrb[0].mxu0
  %v1403 = vadd.f32 %v1114, %v1402
  %v1404 = vpop.f32.mrb[0].mxu0
  %v1405 = vpop.f32.mrb[0].mxu0
  %v1406 = vadd.f32 %v1117, %v1405
  %v1407 = vpop.f32.mrb[0].mxu0
  %1408 = vmatprep.mubr.bf16.mxu0 %v618
  %1409 = vmatmul.mubr.bf16.gmra.mrb[0].mxu0 %v617
  %v1410 = vpop.f32.mrb[0].mxu0
  %v1411 = vadd.f32 %v1122, %v1410
  %v1412 = vpop.f32.mrb[0].mxu0
  %v1413 = vpop.f32.mrb[0].mxu0
  %v1414 = vadd.f32 %v1125, %v1413
  %v1415 = vpop.f32.mrb[0].mxu0
  %1416 = vmatprep.mubr.bf16.mxu0 %v622
  %1417 = vmatmul.mubr.bf16.gmra.mrb[0].mxu0 %v621
  %v1418 = vpop.f32.mrb[0].mxu0
  %v1419 = vadd.f32 %v1130, %v1418
  %v1420 = vpop.f32.mrb[0].mxu0
  %v1421 = vpop.f32.mrb[0].mxu0
  %v1422 = vadd.f32 %v1133, %v1421
  %v1423 = vpop.f32.mrb[0].mxu0
  %1424 = vmatprep.mubr.bf16.mxu0 %v626
  %1425 = vmatmul.mubr.bf16.gmra.mrb[0].mxu0 %v625
  %v1426 = vpop.f32.mrb[0].mxu0
  %v1427 = vadd.f32 %v1138, %v1426
  %v1428 = vpop.f32.mrb[0].mxu0
  %v1429 = vpop.f32.mrb[0].mxu0
  %v1430 = vadd.f32 %v1141, %v1429
  %v1431 = vpop.f32.mrb[0].mxu0
  %1432 = vmatprep.mubr.bf16.mxu0 %v630
  %1433 = vmatmul.mubr.bf16.gmra.mrb[0].mxu0 %v629
  %v1434 = vpop.f32.mrb[0].mxu0
  %v1435 = vadd.f32 %v1146, %v1434
  %v1436 = vpop.f32.mrb[0].mxu0
  %v1437 = vpop.f32.mrb[0].mxu0
  %v1438 = vadd.f32 %v1149, %v1437
  %v1439 = vpop.f32.mrb[0].mxu0
  %1440 = vmatprep.mubr.bf16.mxu0 %v634
  %1441 = vmatmul.mubr.bf16.gmra.mrb[0].mxu0 %v633
  %v1442 = vpop.f32.mrb[0].mxu0
  %v1443 = vadd.f32 %v1154, %v1442
  %v1444 = vpop.f32.mrb[0].mxu0
  %v1445 = vpop.f32.mrb[0].mxu0
  %v1446 = vadd.f32 %v1157, %v1445
  %v1447 = vpop.f32.mrb[0].mxu0
  %1448 = vmatprep.mubr.bf16.mxu0 %v638
  %1449 = vmatmul.mubr.bf16.gmra.mrb[0].mxu0 %v637
  %v1450 = vpop.f32.mrb[0].mxu0
  %v1451 = vadd.f32 %v1162, %v1450
  %v1452 = vpop.f32.mrb[0].mxu0
  %v1453 = vpop.f32.mrb[0].mxu0
  %v1454 = vadd.f32 %v1165, %v1453
  %v1455 = vpop.f32.mrb[0].mxu0
  %1456 = vmatprep.mubr.bf16.mxu0 %v642
  %1457 = vmatmul.mubr.bf16.gmra.mrb[0].mxu0 %v641
  %v1458 = vpop.f32.mrb[0].mxu0
  %v1459 = vadd.f32 %v1170, %v1458
  %v1460 = vpop.f32.mrb[0].mxu0
  %v1461 = vpop.f32.mrb[0].mxu0
  %v1462 = vadd.f32 %v1173, %v1461
  %v1463 = vpop.f32.mrb[0].mxu0
  %1464 = vmatprep.mubr.bf16.mxu0 %v646
  %1465 = vmatmul.mubr.bf16.gmra.mrb[0].mxu0 %v645
  %v1466 = vpop.f32.mrb[0].mxu0
  %v1467 = vadd.f32 %v1178, %v1466
  %v1468 = vpop.f32.mrb[0].mxu0
  %v1469 = vpop.f32.mrb[0].mxu0
  %v1470 = vadd.f32 %v1181, %v1469
  %v1471 = vpop.f32.mrb[0].mxu0
  %1472 = vmatprep.mubr.bf16.mxu0 %v650
  %1473 = vmatmul.mubr.bf16.gmra.mrb[0].mxu0 %v649
  %v1474 = vpop.f32.mrb[0].mxu0
  %v1475 = vadd.f32 %v1186, %v1474
  %v1476 = vpop.f32.mrb[0].mxu0
  %v1477 = vpop.f32.mrb[0].mxu0
  %v1478 = vadd.f32 %v1189, %v1477
  %v1479 = vpop.f32.mrb[0].mxu0
  %1480 = vmatprep.mubr.bf16.mxu0 %v654
  %1481 = vmatmul.mubr.bf16.gmra.mrb[0].mxu0 %v653
  %v1482 = vpop.f32.mrb[0].mxu0
  %v1483 = vadd.f32 %v1194, %v1482
  %v1484 = vpop.f32.mrb[0].mxu0
  %v1485 = vpop.f32.mrb[0].mxu0
  %v1486 = vadd.f32 %v1197, %v1485
  %v1487 = vpop.f32.mrb[0].mxu0
  %1488 = vmatprep.mubr.bf16.mxu0 %v658
  %1489 = vmatmul.mubr.bf16.gmra.mrb[0].mxu0 %v657
  %v1490 = vpop.f32.mrb[0].mxu0
  %v1491 = vadd.f32 %v1202, %v1490
  %v1492 = vpop.f32.mrb[0].mxu0
  %v1493 = vpop.f32.mrb[0].mxu0
  %v1494 = vadd.f32 %v1205, %v1493
  %v1495 = vpop.f32.mrb[0].mxu0
  %1496 = vmatprep.mubr.bf16.mxu0 %v662
  %1497 = vmatmul.mubr.bf16.gmra.mrb[0].mxu0 %v661
  %v1498 = vpop.f32.mrb[0].mxu0
  %v1499 = vadd.f32 %v1210, %v1498
  %v1500 = vpop.f32.mrb[0].mxu0
  %v1501 = vpop.f32.mrb[0].mxu0
  %v1502 = vadd.f32 %v1213, %v1501
  %v1503 = vpop.f32.mrb[0].mxu0
  %1504 = vmatprep.mubr.bf16.mxu0 %v666
  %1505 = vmatmul.mubr.bf16.gmra.mrb[0].mxu0 %v665
  %v1506 = vpop.f32.mrb[0].mxu0
  %v1507 = vadd.f32 %v1218, %v1506
  %v1508 = vpop.f32.mrb[0].mxu0
  %v1509 = vpop.f32.mrb[0].mxu0
  %v1510 = vadd.f32 %v1221, %v1509
  %v1511 = vpop.f32.mrb[0].mxu0
  %1512 = vmatprep.mubr.bf16.mxu0 %v670
  %1513 = vmatmul.mubr.bf16.gmra.mrb[0].mxu0 %v669
  %v1514 = vpop.f32.mrb[0].mxu0
  %v1515 = vadd.f32 %v1226, %v1514
  %v1516 = vpop.f32.mrb[0].mxu0
  %v1517 = vpop.f32.mrb[0].mxu0
  %v1518 = vadd.f32 %v1229, %v1517
  %v1519 = vpop.f32.mrb[0].mxu0
  %1520 = vmatprep.mubr.bf16.mxu0 %v674
  %1521 = vmatmul.mubr.bf16.gmra.mrb[0].mxu0 %v673
  %v1522 = vpop.f32.mrb[0].mxu0
  %v1523 = vadd.f32 %v1234, %v1522
  %v1524 = vpop.f32.mrb[0].mxu0
  %v1525 = vpop.f32.mrb[0].mxu0
  %v1526 = vadd.f32 %v1237, %v1525
  %v1527 = vpop.f32.mrb[0].mxu0
  %1528 = vmatprep.mubr.bf16.mxu0 %v678
  %1529 = vmatmul.mubr.bf16.gmra.mrb[0].mxu0 %v677
  %v1530 = vpop.f32.mrb[0].mxu0
  %v1531 = vadd.f32 %v1242, %v1530
  %v1532 = vpop.f32.mrb[0].mxu0
  %v1533 = vpop.f32.mrb[0].mxu0
  %v1534 = vadd.f32 %v1245, %v1533
  %v1535 = vpop.f32.mrb[0].mxu0
  %1536 = vmatprep.mubr.bf16.mxu0 %v682
  %1537 = vmatmul.mubr.bf16.gmra.mrb[0].mxu0 %v681
  %v1538 = vpop.f32.mrb[0].mxu0
  %v1539 = vadd.f32 %v1250, %v1538
  %v1540 = vpop.f32.mrb[0].mxu0
  %v1541 = vpop.f32.mrb[0].mxu0
  %v1542 = vadd.f32 %v1253, %v1541
  %v1543 = vpop.f32.mrb[0].mxu0
  %1544 = vmatprep.mubr.bf16.mxu0 %v686
  %1545 = vmatmul.mubr.bf16.gmra.mrb[0].mxu0 %v685
  %v1546 = vpop.f32.mrb[0].mxu0
  %v1547 = vadd.f32 %v1258, %v1546
  %v1548 = vpop.f32.mrb[0].mxu0
  %v1549 = vpop.f32.mrb[0].mxu0
  %v1550 = vadd.f32 %v1261, %v1549
  %v1551 = vpop.f32.mrb[0].mxu0
  %1552 = vmatprep.mubr.bf16.mxu0 %v690
  %1553 = vmatmul.mubr.bf16.gmra.mrb[0].mxu0 %v689
  %v1554 = vpop.f32.mrb[0].mxu0
  %v1555 = vadd.f32 %v1266, %v1554
  %v1556 = vpop.f32.mrb[0].mxu0
  %v1557 = vpop.f32.mrb[0].mxu0
  %v1558 = vadd.f32 %v1269, %v1557
  %v1559 = vpop.f32.mrb[0].mxu0
  %1560 = vmatprep.mubr.bf16.mxu0 %v694
  %1561 = vmatmul.mubr.bf16.gmra.mrb[0].mxu0 %v693
  %v1562 = vpop.f32.mrb[0].mxu0
  %v1563 = vadd.f32 %v1274, %v1562
  %v1564 = vpop.f32.mrb[0].mxu0
  %v1565 = vpop.f32.mrb[0].mxu0
  %v1566 = vadd.f32 %v1277, %v1565
  %v1567 = vpop.f32.mrb[0].mxu0
  %1568 = vmatprep.mubr.bf16.mxu0 %v698
  %1569 = vmatmul.mubr.bf16.gmra.mrb[0].mxu0 %v697
  %v1570 = vpop.f32.mrb[0].mxu0
  %v1571 = vadd.f32 %v1282, %v1570
  %v1572 = vpop.f32.mrb[0].mxu0
  %v1573 = vpop.f32.mrb[0].mxu0
  %v1574 = vadd.f32 %v1285, %v1573
  %v1575 = vpop.f32.mrb[0].mxu0
  %1576 = vmatprep.mubr.bf16.mxu0 %v702
  %1577 = vmatmul.mubr.bf16.gmra.mrb[0].mxu0 %v701
  %v1578 = vpop.f32.mrb[0].mxu0
  %v1579 = vadd.f32 %v1290, %v1578
  %v1580 = vpop.f32.mrb[0].mxu0
  %v1581 = vpop.f32.mrb[0].mxu0
  %v1582 = vadd.f32 %v1293, %v1581
  %v1583 = vpop.f32.mrb[0].mxu0
  %1584 = vmatprep.mubr.bf16.mxu0 %v706
  %1585 = vmatmul.mubr.bf16.gmra.mrb[0].mxu0 %v705
  %v1586 = vpop.f32.mrb[0].mxu0
  %v1587 = vadd.f32 %v1298, %v1586
  %v1588 = vpop.f32.mrb[0].mxu0
  %v1589 = vpop.f32.mrb[0].mxu0
  %v1590 = vadd.f32 %v1301, %v1589
  %v1591 = vpop.f32.mrb[0].mxu0
  %1592 = vmatprep.mubr.bf16.mxu0 %v710
  %1593 = vmatmul.mubr.bf16.gmra.mrb[0].mxu0 %v709
  %v1594 = vpop.f32.mrb[0].mxu0
  %v1595 = vadd.f32 %v1306, %v1594
  %v1596 = vpop.f32.mrb[0].mxu0
  %v1597 = vpop.f32.mrb[0].mxu0
  %v1598 = vadd.f32 %v1309, %v1597
  %v1599 = vpop.f32.mrb[0].mxu0
  %1600 = vmatprep.mubr.bf16.mxu0 %v714
  %1601 = vmatmul.mubr.bf16.gmra.mrb[0].mxu0 %v713
  %v1602 = vpop.f32.mrb[0].mxu0
  %v1603 = vadd.f32 %v1314, %v1602
  %v1604 = vpop.f32.mrb[0].mxu0
  %v1605 = vpop.f32.mrb[0].mxu0
  %v1606 = vadd.f32 %v1317, %v1605
  %v1607 = vpop.f32.mrb[0].mxu0
  %1608 = vmatprep.mubr.bf16.mxu0 %v718
  %1609 = vmatmul.mubr.bf16.gmra.mrb[0].mxu0 %v717
  %v1610 = vpop.f32.mrb[0].mxu0
  %v1611 = vadd.f32 %v1322, %v1610
  %v1612 = vpop.f32.mrb[0].mxu0
  %v1613 = vpop.f32.mrb[0].mxu0
  %v1614 = vadd.f32 %v1325, %v1613
  %v1615 = vpop.f32.mrb[0].mxu0
  %1616 = vdwg.mxu0
  %1617 = vst [vmem:[%s2] sm:$0xff] %v1363
  %1618 = vst [vmem:[%s2 + $0x8] sm:$0xff] %v1366
  %1619 = vst [vmem:[%s2 + $0x10] sm:$0xff] %v1371
  %1620 = vst [vmem:[%s2 + $0x18] sm:$0xff] %v1374
  %1621 = vst [vmem:[%s2 + $0x20] sm:$0xff] %v1379
  %1622 = vst [vmem:[%s2 + $0x28] sm:$0xff] %v1382
  %1623 = vst [vmem:[%s2 + $0x30] sm:$0xff] %v1387
  %1624 = vst [vmem:[%s2 + $0x38] sm:$0xff] %v1390
  %1625 = vst [vmem:[%s2 + $0x40] sm:$0xff] %v1395
  %1626 = vst [vmem:[%s2 + $0x48] sm:$0xff] %v1398
  %1627 = vst [vmem:[%s2 + $0x50] sm:$0xff] %v1403
  %1628 = vst [vmem:[%s2 + $0x58] sm:$0xff] %v1406
  %1629 = vst [vmem:[%s2 + $0x60] sm:$0xff] %v1411
  %1630 = vst [vmem:[%s2 + $0x68] sm:$0xff] %v1414
  %1631 = vst [vmem:[%s2 + $0x70] sm:$0xff] %v1419
  %1632 = vst [vmem:[%s2 + $0x78] sm:$0xff] %v1422
  %1633 = vst [vmem:[%s2 + $0x80] sm:$0xff] %v1427
  %1634 = vst [vmem:[%s2 + $0x88] sm:$0xff] %v1430
  %1635 = vst [vmem:[%s2 + $0x90] sm:$0xff] %v1435
  %1636 = vst [vmem:[%s2 + $0x98] sm:$0xff] %v1438
  %1637 = vst [vmem:[%s2 + $0xa0] sm:$0xff] %v1443
  %1638 = vst [vmem:[%s2 + $0xa8] sm:$0xff] %v1446
  %1639 = vst [vmem:[%s2 + $0xb0] sm:$0xff] %v1451
  %1640 = vst [vmem:[%s2 + $0xb8] sm:$0xff] %v1454
  %1641 = vst [vmem:[%s2 + $0xc0] sm:$0xff] %v1459
  %1642 = vst [vmem:[%s2 + $0xc8] sm:$0xff] %v1462
  %1643 = vst [vmem:[%s2 + $0xd0] sm:$0xff] %v1467
  %1644 = vst [vmem:[%s2 + $0xd8] sm:$0xff] %v1470
  %1645 = vst [vmem:[%s2 + $0xe0] sm:$0xff] %v1475
  %1646 = vst [vmem:[%s2 + $0xe8] sm:$0xff] %v1478
  %1647 = vst [vmem:[%s2 + $0xf0] sm:$0xff] %v1483
  %1648 = vst [vmem:[%s2 + $0xf8] sm:$0xff] %v1486
  %1649 = vst [vmem:[%s2 + $0x100] sm:$0xff] %v1491
  %1650 = vst [vmem:[%s2 + $0x108] sm:$0xff] %v1494
  %1651 = vst [vmem:[%s2 + $0x110] sm:$0xff] %v1499
  %1652 = vst [vmem:[%s2 + $0x118] sm:$0xff] %v1502
  %1653 = vst [vmem:[%s2 + $0x120] sm:$0xff] %v1507
  %1654 = vst [vmem:[%s2 + $0x128] sm:$0xff] %v1510
  %1655 = vst [vmem:[%s2 + $0x130] sm:$0xff] %v1515
  %1656 = vst [vmem:[%s2 + $0x138] sm:$0xff] %v1518
  %1657 = vst [vmem:[%s2 + $0x140] sm:$0xff] %v1523
  %1658 = vst [vmem:[%s2 + $0x148] sm:$0xff] %v1526
  %1659 = vst [vmem:[%s2 + $0x150] sm:$0xff] %v1531
  %1660 = vst [vmem:[%s2 + $0x158] sm:$0xff] %v1534
  %1661 = vst [vmem:[%s2 + $0x160] sm:$0xff] %v1539
  %1662 = vst [vmem:[%s2 + $0x168] sm:$0xff] %v1542
  %1663 = vst [vmem:[%s2 + $0x170] sm:$0xff] %v1547
  %1664 = vst [vmem:[%s2 + $0x178] sm:$0xff] %v1550
  %1665 = vst [vmem:[%s2 + $0x180] sm:$0xff] %v1555
  %1666 = vst [vmem:[%s2 + $0x188] sm:$0xff] %v1558
  %1667 = vst [vmem:[%s2 + $0x190] sm:$0xff] %v1563
  %1668 = vst [vmem:[%s2 + $0x198] sm:$0xff] %v1566
  %1669 = vst [vmem:[%s2 + $0x1a0] sm:$0xff] %v1571
  %1670 = vst [vmem:[%s2 + $0x1a8] sm:$0xff] %v1574
  %1671 = vst [vmem:[%s2 + $0x1b0] sm:$0xff] %v1579
  %1672 = vst [vmem:[%s2 + $0x1b8] sm:$0xff] %v1582
  %1673 = vst [vmem:[%s2 + $0x1c0] sm:$0xff] %v1587
  %1674 = vst [vmem:[%s2 + $0x1c8] sm:$0xff] %v1590
  %1675 = vst [vmem:[%s2 + $0x1d0] sm:$0xff] %v1595
  %1676 = vst [vmem:[%s2 + $0x1d8] sm:$0xff] %v1598
  %1677 = vst [vmem:[%s2 + $0x1e0] sm:$0xff] %v1603
  %1678 = vst [vmem:[%s2 + $0x1e8] sm:$0xff] %v1606
  %1679 = vst [vmem:[%s2 + $0x1f0] sm:$0xff] %v1611
  %1680 = vst [vmem:[%s2 + $0x1f8] sm:$0xff] %v1614
  %v1681 = vadd.f32 %v1363, %v1366
  %v1682 = vadd.f32 %v1681, %v1371
  %v1683 = vadd.f32 %v1682, %v1374
  %v1684 = vadd.f32 %v1683, %v1379
  %v1685 = vadd.f32 %v1684, %v1382
  %v1686 = vadd.f32 %v1685, %v1387
  %v1687 = vadd.f32 %v1686, %v1390
  %v1688 = vadd.f32 %v1687, %v1395
  %v1689 = vadd.f32 %v1688, %v1398
  %v1690 = vadd.f32 %v1689, %v1403
  %v1691 = vadd.f32 %v1690, %v1406
  %v1692 = vadd.f32 %v1691, %v1411
  %v1693 = vadd.f32 %v1692, %v1414
  %v1694 = vadd.f32 %v1693, %v1419
  %v1695 = vadd.f32 %v1694, %v1422
  %v1696 = vadd.f32 %v1695, %v1427
  %v1697 = vadd.f32 %v1696, %v1430
  %v1698 = vadd.f32 %v1697, %v1435
  %v1699 = vadd.f32 %v1698, %v1438
  %v1700 = vadd.f32 %v1699, %v1443
  %v1701 = vadd.f32 %v1700, %v1446
  %v1702 = vadd.f32 %v1701, %v1451
  %v1703 = vadd.f32 %v1702, %v1454
  %v1704 = vadd.f32 %v1703, %v1459
  %v1705 = vadd.f32 %v1704, %v1462
  %v1706 = vadd.f32 %v1705, %v1467
  %v1707 = vadd.f32 %v1706, %v1470
  %v1708 = vadd.f32 %v1707, %v1475
  %v1709 = vadd.f32 %v1708, %v1478
  %v1710 = vadd.f32 %v1709, %v1483
  %v1711 = vadd.f32 %v1710, %v1486
  %v1712 = vadd.f32 %v1711, %v1491
  %v1713 = vadd.f32 %v1712, %v1494
  %v1714 = vadd.f32 %v1713, %v1499
  %v1715 = vadd.f32 %v1714, %v1502
  %v1716 = vadd.f32 %v1715, %v1507
  %v1717 = vadd.f32 %v1716, %v1510
  %v1718 = vadd.f32 %v1717, %v1515
  %v1719 = vadd.f32 %v1718, %v1518
  %v1720 = vadd.f32 %v1719, %v1523
  %v1721 = vadd.f32 %v1720, %v1526
  %v1722 = vadd.f32 %v1721, %v1531
  %v1723 = vadd.f32 %v1722, %v1534
  %v1724 = vadd.f32 %v1723, %v1539
  %v1725 = vadd.f32 %v1724, %v1542
  %v1726 = vadd.f32 %v1725, %v1547
  %v1727 = vadd.f32 %v1726, %v1550
  %v1728 = vadd.f32 %v1727, %v1555
  %v1729 = vadd.f32 %v1728, %v1558
  %v1730 = vadd.f32 %v1729, %v1563
  %v1731 = vadd.f32 %v1730, %v1566
  %v1732 = vadd.f32 %v1731, %v1571
  %v1733 = vadd.f32 %v1732, %v1574
  %v1734 = vadd.f32 %v1733, %v1579
  %v1735 = vadd.f32 %v1734, %v1582
  %v1736 = vadd.f32 %v1735, %v1587
  %v1737 = vadd.f32 %v1736, %v1590
  %v1738 = vadd.f32 %v1737, %v1595
  %v1739 = vadd.f32 %v1738, %v1598
  %v1740 = vadd.f32 %v1739, %v1603
  %v1741 = vadd.f32 %v1740, %v1606
  %v1742 = vadd.f32 %v1741, %v1611
  %v1743 = vadd.f32 %v1742, %v1614
  %v1744 = vrot.slane %v1743, 4
  %v1745 = vadd.f32 %v1743, %v1744
  %v1746 = vrot.slane %v1745, 2
  %v1747 = vadd.f32 %v1745, %v1746
  %v1748 = vrot.slane %v1747, 1
  %v1749 = vadd.f32 %v1747, %v1748
  %1750 = vst [vmem:[%s3] sm:$0x1] %v1749
  %v1751 = vmul.f32 %v1363, %v1363
  %v1752 = vmul.f32 %v1366, %v1366
  %v1753 = vmul.f32 %v1371, %v1371
  %v1754 = vmul.f32 %v1374, %v1374
  %v1755 = vmul.f32 %v1379, %v1379
  %v1756 = vmul.f32 %v1382, %v1382
  %v1757 = vmul.f32 %v1387, %v1387
  %v1758 = vmul.f32 %v1390, %v1390
  %v1759 = vmul.f32 %v1395, %v1395
  %v1760 = vmul.f32 %v1398, %v1398
  %v1761 = vmul.f32 %v1403, %v1403
  %v1762 = vmul.f32 %v1406, %v1406
  %v1763 = vmul.f32 %v1411, %v1411
  %v1764 = vmul.f32 %v1414, %v1414
  %v1765 = vmul.f32 %v1419, %v1419
  %v1766 = vmul.f32 %v1422, %v1422
  %v1767 = vmul.f32 %v1427, %v1427
  %v1768 = vmul.f32 %v1430, %v1430
  %v1769 = vmul.f32 %v1435, %v1435
  %v1770 = vmul.f32 %v1438, %v1438
  %v1771 = vmul.f32 %v1443, %v1443
  %v1772 = vmul.f32 %v1446, %v1446
  %v1773 = vmul.f32 %v1451, %v1451
  %v1774 = vmul.f32 %v1454, %v1454
  %v1775 = vmul.f32 %v1459, %v1459
  %v1776 = vmul.f32 %v1462, %v1462
  %v1777 = vmul.f32 %v1467, %v1467
  %v1778 = vmul.f32 %v1470, %v1470
  %v1779 = vmul.f32 %v1475, %v1475
  %v1780 = vmul.f32 %v1478, %v1478
  %v1781 = vmul.f32 %v1483, %v1483
  %v1782 = vmul.f32 %v1486, %v1486
  %v1783 = vmul.f32 %v1491, %v1491
  %v1784 = vmul.f32 %v1494, %v1494
  %v1785 = vmul.f32 %v1499, %v1499
  %v1786 = vmul.f32 %v1502, %v1502
  %v1787 = vmul.f32 %v1507, %v1507
  %v1788 = vmul.f32 %v1510, %v1510
  %v1789 = vmul.f32 %v1515, %v1515
  %v1790 = vmul.f32 %v1518, %v1518
  %v1791 = vmul.f32 %v1523, %v1523
  %v1792 = vmul.f32 %v1526, %v1526
  %v1793 = vmul.f32 %v1531, %v1531
  %v1794 = vmul.f32 %v1534, %v1534
  %v1795 = vmul.f32 %v1539, %v1539
  %v1796 = vmul.f32 %v1542, %v1542
  %v1797 = vmul.f32 %v1547, %v1547
  %v1798 = vmul.f32 %v1550, %v1550
  %v1799 = vmul.f32 %v1555, %v1555
  %v1800 = vmul.f32 %v1558, %v1558
  %v1801 = vmul.f32 %v1563, %v1563
  %v1802 = vmul.f32 %v1566, %v1566
  %v1803 = vmul.f32 %v1571, %v1571
  %v1804 = vmul.f32 %v1574, %v1574
  %v1805 = vmul.f32 %v1579, %v1579
  %v1806 = vmul.f32 %v1582, %v1582
  %v1807 = vmul.f32 %v1587, %v1587
  %v1808 = vmul.f32 %v1590, %v1590
  %v1809 = vmul.f32 %v1595, %v1595
  %v1810 = vmul.f32 %v1598, %v1598
  %v1811 = vmul.f32 %v1603, %v1603
  %v1812 = vmul.f32 %v1606, %v1606
  %v1813 = vmul.f32 %v1611, %v1611
  %v1814 = vmul.f32 %v1614, %v1614
  %v1815 = vadd.f32 %v1751, %v1752
  %v1816 = vadd.f32 %v1815, %v1753
  %v1817 = vadd.f32 %v1816, %v1754
  %v1818 = vadd.f32 %v1817, %v1755
  %v1819 = vadd.f32 %v1818, %v1756
  %v1820 = vadd.f32 %v1819, %v1757
  %v1821 = vadd.f32 %v1820, %v1758
  %v1822 = vadd.f32 %v1821, %v1759
  %v1823 = vadd.f32 %v1822, %v1760
  %v1824 = vadd.f32 %v1823, %v1761
  %v1825 = vadd.f32 %v1824, %v1762
  %v1826 = vadd.f32 %v1825, %v1763
  %v1827 = vadd.f32 %v1826, %v1764
  %v1828 = vadd.f32 %v1827, %v1765
  %v1829 = vadd.f32 %v1828, %v1766
  %v1830 = vadd.f32 %v1829, %v1767
  %v1831 = vadd.f32 %v1830, %v1768
  %v1832 = vadd.f32 %v1831, %v1769
  %v1833 = vadd.f32 %v1832, %v1770
  %v1834 = vadd.f32 %v1833, %v1771
  %v1835 = vadd.f32 %v1834, %v1772
  %v1836 = vadd.f32 %v1835, %v1773
  %v1837 = vadd.f32 %v1836, %v1774
  %v1838 = vadd.f32 %v1837, %v1775
  %v1839 = vadd.f32 %v1838, %v1776
  %v1840 = vadd.f32 %v1839, %v1777
  %v1841 = vadd.f32 %v1840, %v1778
  %v1842 = vadd.f32 %v1841, %v1779
  %v1843 = vadd.f32 %v1842, %v1780
  %v1844 = vadd.f32 %v1843, %v1781
  %v1845 = vadd.f32 %v1844, %v1782
  %v1846 = vadd.f32 %v1845, %v1783
  %v1847 = vadd.f32 %v1846, %v1784
  %v1848 = vadd.f32 %v1847, %v1785
  %v1849 = vadd.f32 %v1848, %v1786
  %v1850 = vadd.f32 %v1849, %v1787
  %v1851 = vadd.f32 %v1850, %v1788
  %v1852 = vadd.f32 %v1851, %v1789
  %v1853 = vadd.f32 %v1852, %v1790
  %v1854 = vadd.f32 %v1853, %v1791
  %v1855 = vadd.f32 %v1854, %v1792
  %v1856 = vadd.f32 %v1855, %v1793
  %v1857 = vadd.f32 %v1856, %v1794
  %v1858 = vadd.f32 %v1857, %v1795
  %v1859 = vadd.f32 %v1858, %v1796
  %v1860 = vadd.f32 %v1859, %v1797
  %v1861 = vadd.f32 %v1860, %v1798
  %v1862 = vadd.f32 %v1861, %v1799
  %v1863 = vadd.f32 %v1862, %v1800
  %v1864 = vadd.f32 %v1863, %v1801
  %v1865 = vadd.f32 %v1864, %v1802
  %v1866 = vadd.f32 %v1865, %v1803
  %v1867 = vadd.f32 %v1866, %v1804
  %v1868 = vadd.f32 %v1867, %v1805
  %v1869 = vadd.f32 %v1868, %v1806
  %v1870 = vadd.f32 %v1869, %v1807
  %v1871 = vadd.f32 %v1870, %v1808
  %v1872 = vadd.f32 %v1871, %v1809
  %v1873 = vadd.f32 %v1872, %v1810
  %v1874 = vadd.f32 %v1873, %v1811
  %v1875 = vadd.f32 %v1874, %v1812
  %v1876 = vadd.f32 %v1875, %v1813
  %v1877 = vadd.f32 %v1876, %v1814
  %v1878 = vrot.slane %v1877, 4
  %v1879 = vadd.f32 %v1877, %v1878
  %v1880 = vrot.slane %v1879, 2
  %v1881 = vadd.f32 %v1879, %v1880
  %v1882 = vrot.slane %v1881, 1
  %v1883 = vadd.f32 %v1881, %v1882
  %1884 = vst [vmem:[%s4] sm:$0x1] %v1883
  // Predicated region
  $region10: #{_lambda_.13} parent=0 // pred_check
    _
  $region11: #{_lambda_.13} parent=0 // pred_check_branch
    %1886 = sbr.rel (0) target = $region13
  $region12: #{_lambda_.13} parent=0 // pred_region
    _
  $region13: #{_lambda_.13} parent=0 // pred_fallthru
    _
  // Predicated region
  $region14: #{_lambda_.13} parent=0 // pred_check
    _
  $region15: #{_lambda_.13} parent=0 // pred_check_branch
    %1888 = sbr.rel (0) target = $region17
  $region16: #{_lambda_.13} parent=0 // pred_region
    _
  $region17: #{_lambda_.13} parent=0 // pred_fallthru
    _
  // Predicated region
  $region18: #{_lambda_.13} parent=0 // pred_check
    _
  $region19: #{_lambda_.13} parent=0 // pred_check_branch
    %1890 = sbr.rel (0) target = $region21
  $region20: #{_lambda_.13} parent=0 // pred_region
    _
  $region21: #{_lambda_.13} parent=0 // pred_fallthru
    _
  // Predicated region
  $region22: #{_lambda_.13} parent=0 // pred_check
    _
  $region23: #{_lambda_.13} parent=0 // pred_check_branch
    %1892 = sbr.rel (0) target = $region25
  $region24: #{_lambda_.13} parent=0 // pred_region
    _
  $region25: #{_lambda_.13} parent=0 // pred_fallthru
    _
  // Predicated region
  $region26: #{_lambda_.13} parent=0 // pred_check
    _
  $region27: #{_lambda_.13} parent=0 // pred_check_branch
    %1894 = sbr.rel (0) target = $region29
  $region28: #{_lambda_.13} parent=0 // pred_region
    _
  $region29: #{_lambda_.13} parent=0 // pred_fallthru
    _
  // Predicated region
  $region30: #{_lambda_.13} parent=0 // pred_check
    _
  $region31: #{_lambda_.13} parent=0 // pred_check_branch
    %1896 = sbr.rel (0) target = $region33
  $region32: #{_lambda_.13} parent=0 // pred_region
    _
  $region33: #{_lambda_.13} parent=0 // pred_fallthru
    _

// kernel: _lambda_.15
$region0: #{_lambda_.15}
  #allocation0 [shape = 'u32[]', space=smem, size = 0x4, offset = 0x4, fixed_abs, tag = 'smem constant byte address 0x4 - core index']
  #allocation1 [shape = 'u32[144,128]{1,0:T(1,128)}', space=vmem, size = 0x12000, scoped, tag = 'internal scratch']
  %s0 = inlined_call_operand.vmem [shape: bf16[2048,256], index: 0, kind: input, shape index: {}]
  %s1 = inlined_call_operand.vmem [shape: bf16[256,128], index: 1, kind: input, shape index: {}]
  %s2 = inlined_call_operand.vmem [shape: f32[2048,128], index: 2, kind: output, shape index: {0}]
  %s3 = inlined_call_operand.vmem [shape: f32[1,128], index: 3, kind: output, shape index: {1}]
  %s4 = inlined_call_operand.vmem [shape: f32[1,128], index: 4, kind: output, shape index: {2}]
  %5 = xla_tuple %s2, %s3, %s4
  %s6 = sld [smem:[#allocation0]]
  $region34: #{_lambda_.15} parent=0
    _
  %s8 = ssub.s32 1, %s6
  %s9 = scalar_select 0, %s8, %s6
  // Predicated region
  $region2: #{_lambda_.15} parent=0 // pred_check
    _
  $region3: #{_lambda_.15} parent=0 // pred_check_branch
    %11 = sbr.rel (0) target = $region5
  $region4: #{_lambda_.15} parent=0 // pred_region
    _
  $region5: #{_lambda_.15} parent=0 // pred_fallthru
    _
  // Predicated region
  $region6: #{_lambda_.15} parent=0 // pred_check
    _
  $region7: #{_lambda_.15} parent=0 // pred_check_branch
    %13 = sbr.rel (0) target = $region9
  $region8: #{_lambda_.15} parent=0 // pred_region
    _
  $region9: #{_lambda_.15} parent=0 // pred_fallthru
    _
  %v15 = vld [vmem:[%s0] sm:$0xff]
  %v16 = vld [vmem:[%s0 + $0x8] sm:$0xff]
  %v17 = vld [vmem:[%s0 + $0x10] sm:$0xff]
  %v18 = vld [vmem:[%s0 + $0x18] sm:$0xff]
  %v19 = vld [vmem:[%s0 + $0x20] sm:$0xff]
  %v20 = vld [vmem:[%s0 + $0x28] sm:$0xff]
  %v21 = vld [vmem:[%s0 + $0x30] sm:$0xff]
  %v22 = vld [vmem:[%s0 + $0x38] sm:$0xff]
  %v23 = vld [vmem:[%s0 + $0x40] sm:$0xff]
  %v24 = vld [vmem:[%s0 + $0x48] sm:$0xff]
  %v25 = vld [vmem:[%s0 + $0x50] sm:$0xff]
  %v26 = vld [vmem:[%s0 + $0x58] sm:$0xff]
  %v27 = vld [vmem:[%s0 + $0x60] sm:$0xff]
  %v28 = vld [vmem:[%s0 + $0x68] sm:$0xff]
  %v29 = vld [vmem:[%s0 + $0x70] sm:$0xff]
  %v30 = vld [vmem:[%s0 + $0x78] sm:$0xff]
  %v31 = vld [vmem:[%s0 + $0x80] sm:$0xff]
  %v32 = vld [vmem:[%s0 + $0x88] sm:$0xff]
  %v33 = vld [vmem:[%s0 + $0x90] sm:$0xff]
  %v34 = vld [vmem:[%s0 + $0x98] sm:$0xff]
  %v35 = vld [vmem:[%s0 + $0xa0] sm:$0xff]
  %v36 = vld [vmem:[%s0 + $0xa8] sm:$0xff]
  %v37 = vld [vmem:[%s0 + $0xb0] sm:$0xff]
  %v38 = vld [vmem:[%s0 + $0xb8] sm:$0xff]
  %v39 = vld [vmem:[%s0 + $0xc0] sm:$0xff]
  %v40 = vld [vmem:[%s0 + $0xc8] sm:$0xff]
  %v41 = vld [vmem:[%s0 + $0xd0] sm:$0xff]
  %v42 = vld [vmem:[%s0 + $0xd8] sm:$0xff]
  %v43 = vld [vmem:[%s0 + $0xe0] sm:$0xff]
  %v44 = vld [vmem:[%s0 + $0xe8] sm:$0xff]
  %v45 = vld [vmem:[%s0 + $0xf0] sm:$0xff]
  %v46 = vld [vmem:[%s0 + $0xf8] sm:$0xff]
  %v47 = vld [vmem:[%s0 + $0x100] sm:$0xff]
  %v48 = vld [vmem:[%s0 + $0x108] sm:$0xff]
  %v49 = vld [vmem:[%s0 + $0x110] sm:$0xff]
  %v50 = vld [vmem:[%s0 + $0x118] sm:$0xff]
  %v51 = vld [vmem:[%s0 + $0x120] sm:$0xff]
  %v52 = vld [vmem:[%s0 + $0x128] sm:$0xff]
  %v53 = vld [vmem:[%s0 + $0x130] sm:$0xff]
  %v54 = vld [vmem:[%s0 + $0x138] sm:$0xff]
  %v55 = vld [vmem:[%s0 + $0x140] sm:$0xff]
  %v56 = vld [vmem:[%s0 + $0x148] sm:$0xff]
  %v57 = vld [vmem:[%s0 + $0x150] sm:$0xff]
  %v58 = vld [vmem:[%s0 + $0x158] sm:$0xff]
  %v59 = vld [vmem:[%s0 + $0x160] sm:$0xff]
  %v60 = vld [vmem:[%s0 + $0x168] sm:$0xff]
  %v61 = vld [vmem:[%s0 + $0x170] sm:$0xff]
  %v62 = vld [vmem:[%s0 + $0x178] sm:$0xff]
  %v63 = vld [vmem:[%s0 + $0x180] sm:$0xff]
  %v64 = vld [vmem:[%s0 + $0x188] sm:$0xff]
  %v65 = vld [vmem:[%s0 + $0x190] sm:$0xff]
  %v66 = vld [vmem:[%s0 + $0x198] sm:$0xff]
  %v67 = vld [vmem:[%s0 + $0x1a0] sm:$0xff]
  %v68 = vld [vmem:[%s0 + $0x1a8] sm:$0xff]
  %v69 = vld [vmem:[%s0 + $0x1b0] sm:$0xff]
  %v70 = vld [vmem:[%s0 + $0x1b8] sm:$0xff]
  %v71 = vld [vmem:[%s0 + $0x1c0] sm:$0xff]
  %v72 = vld [vmem:[%s0 + $0x1c8] sm:$0xff]
  %v73 = vld [vmem:[%s0 + $0x1d0] sm:$0xff]
  %v74 = vld [vmem:[%s0 + $0x1d8] sm:$0xff]
  %v75 = vld [vmem:[%s0 + $0x1e0] sm:$0xff]
  %v76 = vld [vmem:[%s0 + $0x1e8] sm:$0xff]
  %v77 = vld [vmem:[%s0 + $0x1f0] sm:$0xff]
  %v78 = vld [vmem:[%s0 + $0x1f8] sm:$0xff]
  %v79 = vld [vmem:[%s0 + $0x200] sm:$0xff]
  %v80 = vld [vmem:[%s0 + $0x208] sm:$0xff]
  %v81 = vld [vmem:[%s0 + $0x210] sm:$0xff]
  %v82 = vld [vmem:[%s0 + $0x218] sm:$0xff]
  %v83 = vld [vmem:[%s0 + $0x220] sm:$0xff]
  %v84 = vld [vmem:[%s0 + $0x228] sm:$0xff]
  %v85 = vld [vmem:[%s0 + $0x230] sm:$0xff]
  %v86 = vld [vmem:[%s0 + $0x238] sm:$0xff]
  %v87 = vld [vmem:[%s0 + $0x240] sm:$0xff]
  %v88 = vld [vmem:[%s0 + $0x248] sm:$0xff]
  %v89 = vld [vmem:[%s0 + $0x250] sm:$0xff]
  %v90 = vld [vmem:[%s0 + $0x258] sm:$0xff]
  %v91 = vld [vmem:[%s0 + $0x260] sm:$0xff]
  %v92 = vld [vmem:[%s0 + $0x268] sm:$0xff]
  %v93 = vld [vmem:[%s0 + $0x270] sm:$0xff]
  %v94 = vld [vmem:[%s0 + $0x278] sm:$0xff]
  %v95 = vld [vmem:[%s0 + $0x280] sm:$0xff]
  %v96 = vld [vmem:[%s0 + $0x288] sm:$0xff]
  %v97 = vld [vmem:[%s0 + $0x290] sm:$0xff]
  %v98 = vld [vmem:[%s0 + $0x298] sm:$0xff]
  %v99 = vld [vmem:[%s0 + $0x2a0] sm:$0xff]
  %v100 = vld [vmem:[%s0 + $0x2a8] sm:$0xff]
  %v101 = vld [vmem:[%s0 + $0x2b0] sm:$0xff]
  %v102 = vld [vmem:[%s0 + $0x2b8] sm:$0xff]
  %v103 = vld [vmem:[%s0 + $0x2c0] sm:$0xff]
  %v104 = vld [vmem:[%s0 + $0x2c8] sm:$0xff]
  %v105 = vld [vmem:[%s0 + $0x2d0] sm:$0xff]
  %v106 = vld [vmem:[%s0 + $0x2d8] sm:$0xff]
  %v107 = vld [vmem:[%s0 + $0x2e0] sm:$0xff]
  %v108 = vld [vmem:[%s0 + $0x2e8] sm:$0xff]
  %v109 = vld [vmem:[%s0 + $0x2f0] sm:$0xff]
  %v110 = vld [vmem:[%s0 + $0x2f8] sm:$0xff]
  %v111 = vld [vmem:[%s0 + $0x300] sm:$0xff]
  %v112 = vld [vmem:[%s0 + $0x308] sm:$0xff]
  %v113 = vld [vmem:[%s0 + $0x310] sm:$0xff]
  %v114 = vld [vmem:[%s0 + $0x318] sm:$0xff]
  %v115 = vld [vmem:[%s0 + $0x320] sm:$0xff]
  %v116 = vld [vmem:[%s0 + $0x328] sm:$0xff]
  %v117 = vld [vmem:[%s0 + $0x330] sm:$0xff]
  %v118 = vld [vmem:[%s0 + $0x338] sm:$0xff]
  %v119 = vld [vmem:[%s0 + $0x340] sm:$0xff]
  %v120 = vld [vmem:[%s0 + $0x348] sm:$0xff]
  %v121 = vld [vmem:[%s0 + $0x350] sm:$0xff]
  %v122 = vld [vmem:[%s0 + $0x358] sm:$0xff]
  %v123 = vld [vmem:[%s0 + $0x360] sm:$0xff]
  %v124 = vld [vmem:[%s0 + $0x368] sm:$0xff]
  %v125 = vld [vmem:[%s0 + $0x370] sm:$0xff]
  %v126 = vld [vmem:[%s0 + $0x378] sm:$0xff]
  %v127 = vld [vmem:[%s0 + $0x380] sm:$0xff]
  %v128 = vld [vmem:[%s0 + $0x388] sm:$0xff]
  %v129 = vld [vmem:[%s0 + $0x390] sm:$0xff]
  %v130 = vld [vmem:[%s0 + $0x398] sm:$0xff]
  %v131 = vld [vmem:[%s0 + $0x3a0] sm:$0xff]
  %v132 = vld [vmem:[%s0 + $0x3a8] sm:$0xff]
  %v133 = vld [vmem:[%s0 + $0x3b0] sm:$0xff]
  %v134 = vld [vmem:[%s0 + $0x3b8] sm:$0xff]
  %v135 = vld [vmem:[%s0 + $0x3c0] sm:$0xff]
  %v136 = vld [vmem:[%s0 + $0x3c8] sm:$0xff]
  %v137 = vld [vmem:[%s0 + $0x3d0] sm:$0xff]
  %v138 = vld [vmem:[%s0 + $0x3d8] sm:$0xff]
  %v139 = vld [vmem:[%s0 + $0x3e0] sm:$0xff]
  %v140 = vld [vmem:[%s0 + $0x3e8] sm:$0xff]
  %v141 = vld [vmem:[%s0 + $0x3f0] sm:$0xff]
  %v142 = vld [vmem:[%s0 + $0x3f8] sm:$0xff]
  %v143 = vld [vmem:[%s0 + $0x400] sm:$0xff]
  %v144 = vld [vmem:[%s0 + $0x408] sm:$0xff]
  %v145 = vld [vmem:[%s0 + $0x410] sm:$0xff]
  %v146 = vld [vmem:[%s0 + $0x418] sm:$0xff]
  %v147 = vld [vmem:[%s0 + $0x420] sm:$0xff]
  %v148 = vld [vmem:[%s0 + $0x428] sm:$0xff]
  %v149 = vld [vmem:[%s0 + $0x430] sm:$0xff]
  %v150 = vld [vmem:[%s0 + $0x438] sm:$0xff]
  %v151 = vld [vmem:[%s0 + $0x440] sm:$0xff]
  %v152 = vld [vmem:[%s0 + $0x448] sm:$0xff]
  %v153 = vld [vmem:[%s0 + $0x450] sm:$0xff]
  %v154 = vld [vmem:[%s0 + $0x458] sm:$0xff]
  %v155 = vld [vmem:[%s0 + $0x460] sm:$0xff]
  %v156 = vld [vmem:[%s0 + $0x468] sm:$0xff]
  %v157 = vld [vmem:[%s0 + $0x470] sm:$0xff]
  %v158 = vld [vmem:[%s0 + $0x478] sm:$0xff]
  %v159 = vld [vmem:[%s0 + $0x480] sm:$0xff]
  %v160 = vld [vmem:[%s0 + $0x488] sm:$0xff]
  %v161 = vld [vmem:[%s0 + $0x490] sm:$0xff]
  %v162 = vld [vmem:[%s0 + $0x498] sm:$0xff]
  %v163 = vld [vmem:[%s0 + $0x4a0] sm:$0xff]
  %v164 = vld [vmem:[%s0 + $0x4a8] sm:$0xff]
  %v165 = vld [vmem:[%s0 + $0x4b0] sm:$0xff]
  %v166 = vld [vmem:[%s0 + $0x4b8] sm:$0xff]
  %v167 = vld [vmem:[%s0 + $0x4c0] sm:$0xff]
  %v168 = vld [vmem:[%s0 + $0x4c8] sm:$0xff]
  %v169 = vld [vmem:[%s0 + $0x4d0] sm:$0xff]
  %v170 = vld [vmem:[%s0 + $0x4d8] sm:$0xff]
  %v171 = vld [vmem:[%s0 + $0x4e0] sm:$0xff]
  %v172 = vld [vmem:[%s0 + $0x4e8] sm:$0xff]
  %v173 = vld [vmem:[%s0 + $0x4f0] sm:$0xff]
  %v174 = vld [vmem:[%s0 + $0x4f8] sm:$0xff]
  %v175 = vld [vmem:[%s0 + $0x500] sm:$0xff]
  %v176 = vld [vmem:[%s0 + $0x508] sm:$0xff]
  %v177 = vld [vmem:[%s0 + $0x510] sm:$0xff]
  %v178 = vld [vmem:[%s0 + $0x518] sm:$0xff]
  %v179 = vld [vmem:[%s0 + $0x520] sm:$0xff]
  %v180 = vld [vmem:[%s0 + $0x528] sm:$0xff]
  %v181 = vld [vmem:[%s0 + $0x530] sm:$0xff]
  %v182 = vld [vmem:[%s0 + $0x538] sm:$0xff]
  %v183 = vld [vmem:[%s0 + $0x540] sm:$0xff]
  %v184 = vld [vmem:[%s0 + $0x548] sm:$0xff]
  %v185 = vld [vmem:[%s0 + $0x550] sm:$0xff]
  %v186 = vld [vmem:[%s0 + $0x558] sm:$0xff]
  %v187 = vld [vmem:[%s0 + $0x560] sm:$0xff]
  %v188 = vld [vmem:[%s0 + $0x568] sm:$0xff]
  %v189 = vld [vmem:[%s0 + $0x570] sm:$0xff]
  %v190 = vld [vmem:[%s0 + $0x578] sm:$0xff]
  %v191 = vld [vmem:[%s0 + $0x580] sm:$0xff]
  %v192 = vld [vmem:[%s0 + $0x588] sm:$0xff]
  %v193 = vld [vmem:[%s0 + $0x590] sm:$0xff]
  %v194 = vld [vmem:[%s0 + $0x598] sm:$0xff]
  %v195 = vld [vmem:[%s0 + $0x5a0] sm:$0xff]
  %v196 = vld [vmem:[%s0 + $0x5a8] sm:$0xff]
  %v197 = vld [vmem:[%s0 + $0x5b0] sm:$0xff]
  %v198 = vld [vmem:[%s0 + $0x5b8] sm:$0xff]
  %v199 = vld [vmem:[%s0 + $0x5c0] sm:$0xff]
  %v200 = vld [vmem:[%s0 + $0x5c8] sm:$0xff]
  %v201 = vld [vmem:[%s0 + $0x5d0] sm:$0xff]
  %v202 = vld [vmem:[%s0 + $0x5d8] sm:$0xff]
  %v203 = vld [vmem:[%s0 + $0x5e0] sm:$0xff]
  %v204 = vld [vmem:[%s0 + $0x5e8] sm:$0xff]
  %v205 = vld [vmem:[%s0 + $0x5f0] sm:$0xff]
  %v206 = vld [vmem:[%s0 + $0x5f8] sm:$0xff]
  %v207 = vld [vmem:[%s0 + $0x600] sm:$0xff]
  %v208 = vld [vmem:[%s0 + $0x608] sm:$0xff]
  %v209 = vld [vmem:[%s0 + $0x610] sm:$0xff]
  %v210 = vld [vmem:[%s0 + $0x618] sm:$0xff]
  %v211 = vld [vmem:[%s0 + $0x620] sm:$0xff]
  %v212 = vld [vmem:[%s0 + $0x628] sm:$0xff]
  %v213 = vld [vmem:[%s0 + $0x630] sm:$0xff]
  %v214 = vld [vmem:[%s0 + $0x638] sm:$0xff]
  %v215 = vld [vmem:[%s0 + $0x640] sm:$0xff]
  %v216 = vld [vmem:[%s0 + $0x648] sm:$0xff]
  %v217 = vld [vmem:[%s0 + $0x650] sm:$0xff]
  %v218 = vld [vmem:[%s0 + $0x658] sm:$0xff]
  %v219 = vld [vmem:[%s0 + $0x660] sm:$0xff]
  %v220 = vld [vmem:[%s0 + $0x668] sm:$0xff]
  %v221 = vld [vmem:[%s0 + $0x670] sm:$0xff]
  %v222 = vld [vmem:[%s0 + $0x678] sm:$0xff]
  %v223 = vld [vmem:[%s0 + $0x680] sm:$0xff]
  %v224 = vld [vmem:[%s0 + $0x688] sm:$0xff]
  %v225 = vld [vmem:[%s0 + $0x690] sm:$0xff]
  %v226 = vld [vmem:[%s0 + $0x698] sm:$0xff]
  %v227 = vld [vmem:[%s0 + $0x6a0] sm:$0xff]
  %v228 = vld [vmem:[%s0 + $0x6a8] sm:$0xff]
  %v229 = vld [vmem:[%s0 + $0x6b0] sm:$0xff]
  %v230 = vld [vmem:[%s0 + $0x6b8] sm:$0xff]
  %v231 = vld [vmem:[%s0 + $0x6c0] sm:$0xff]
  %v232 = vld [vmem:[%s0 + $0x6c8] sm:$0xff]
  %v233 = vld [vmem:[%s0 + $0x6d0] sm:$0xff]
  %v234 = vld [vmem:[%s0 + $0x6d8] sm:$0xff]
  %v235 = vld [vmem:[%s0 + $0x6e0] sm:$0xff]
  %v236 = vld [vmem:[%s0 + $0x6e8] sm:$0xff]
  %v237 = vld [vmem:[%s0 + $0x6f0] sm:$0xff]
  %v238 = vld [vmem:[%s0 + $0x6f8] sm:$0xff]
  %v239 = vld [vmem:[%s0 + $0x700] sm:$0xff]
  %v240 = vld [vmem:[%s0 + $0x708] sm:$0xff]
  %v241 = vld [vmem:[%s0 + $0x710] sm:$0xff]
  %v242 = vld [vmem:[%s0 + $0x718] sm:$0xff]
  %v243 = vld [vmem:[%s0 + $0x720] sm:$0xff]
  %v244 = vld [vmem:[%s0 + $0x728] sm:$0xff]
  %v245 = vld [vmem:[%s0 + $0x730] sm:$0xff]
  %v246 = vld [vmem:[%s0 + $0x738] sm:$0xff]
  %v247 = vld [vmem:[%s0 + $0x740] sm:$0xff]
  %v248 = vld [vmem:[%s0 + $0x748] sm:$0xff]
  %v249 = vld [vmem:[%s0 + $0x750] sm:$0xff]
  %v250 = vld [vmem:[%s0 + $0x758] sm:$0xff]
  %v251 = vld [vmem:[%s0 + $0x760] sm:$0xff]
  %v252 = vld [vmem:[%s0 + $0x768] sm:$0xff]
  %v253 = vld [vmem:[%s0 + $0x770] sm:$0xff]
  %v254 = vld [vmem:[%s0 + $0x778] sm:$0xff]
  %v255 = vld [vmem:[%s0 + $0x780] sm:$0xff]
  %v256 = vld [vmem:[%s0 + $0x788] sm:$0xff]
  %v257 = vld [vmem:[%s0 + $0x790] sm:$0xff]
  %v258 = vld [vmem:[%s0 + $0x798] sm:$0xff]
  %v259 = vld [vmem:[%s0 + $0x7a0] sm:$0xff]
  %v260 = vld [vmem:[%s0 + $0x7a8] sm:$0xff]
  %v261 = vld [vmem:[%s0 + $0x7b0] sm:$0xff]
  %v262 = vld [vmem:[%s0 + $0x7b8] sm:$0xff]
  %v263 = vld [vmem:[%s0 + $0x7c0] sm:$0xff]
  %v264 = vld [vmem:[%s0 + $0x7c8] sm:$0xff]
  %v265 = vld [vmem:[%s0 + $0x7d0] sm:$0xff]
  %v266 = vld [vmem:[%s0 + $0x7d8] sm:$0xff]
  %v267 = vld [vmem:[%s0 + $0x7e0] sm:$0xff]
  %v268 = vld [vmem:[%s0 + $0x7e8] sm:$0xff]
  %v269 = vld [vmem:[%s0 + $0x7f0] sm:$0xff]
  %v270 = vld [vmem:[%s0 + $0x7f8] sm:$0xff]
  %v271 = vld [vmem:[%s1] sm:$0xf]
  %v272 = vld [vmem:[%s1 + $0x4] sm:$0xf]
  %v273 = vld [vmem:[%s1 + $0x8] sm:$0xf]
  %v274 = vld [vmem:[%s1 + $0xc] sm:$0xf]
  %v275 = vld [vmem:[%s1 + $0x10] sm:$0xf]
  %v276 = vld [vmem:[%s1 + $0x14] sm:$0xf]
  %v277 = vld [vmem:[%s1 + $0x18] sm:$0xf]
  %v278 = vld [vmem:[%s1 + $0x1c] sm:$0xf]
  %v279 = vld [vmem:[%s1 + $0x20] sm:$0xf]
  %v280 = vld [vmem:[%s1 + $0x24] sm:$0xf]
  %v281 = vld [vmem:[%s1 + $0x28] sm:$0xf]
  %v282 = vld [vmem:[%s1 + $0x2c] sm:$0xf]
  %v283 = vld [vmem:[%s1 + $0x30] sm:$0xf]
  %v284 = vld [vmem:[%s1 + $0x34] sm:$0xf]
  %v285 = vld [vmem:[%s1 + $0x38] sm:$0xf]
  %v286 = vld [vmem:[%s1 + $0x3c] sm:$0xf]
  %v287 = vld [vmem:[%s1 + $0x40] sm:$0xf]
  %v288 = vld [vmem:[%s1 + $0x44] sm:$0xf]
  %v289 = vld [vmem:[%s1 + $0x48] sm:$0xf]
  %v290 = vld [vmem:[%s1 + $0x4c] sm:$0xf]
  %v291 = vld [vmem:[%s1 + $0x50] sm:$0xf]
  %v292 = vld [vmem:[%s1 + $0x54] sm:$0xf]
  %v293 = vld [vmem:[%s1 + $0x58] sm:$0xf]
  %v294 = vld [vmem:[%s1 + $0x5c] sm:$0xf]
  %v295 = vld [vmem:[%s1 + $0x60] sm:$0xf]
  %v296 = vld [vmem:[%s1 + $0x64] sm:$0xf]
  %v297 = vld [vmem:[%s1 + $0x68] sm:$0xf]
  %v298 = vld [vmem:[%s1 + $0x6c] sm:$0xf]
  %v299 = vld [vmem:[%s1 + $0x70] sm:$0xf]
  %v300 = vld [vmem:[%s1 + $0x74] sm:$0xf]
  %v301 = vld [vmem:[%s1 + $0x78] sm:$0xf]
  %v302 = vld [vmem:[%s1 + $0x7c] sm:$0xf]
  %v559 = vunpack.c.l.b16 %v15
  %v560 = vunpack.c.h.b16 %v15
  %v561 = vunpack.c.l.b16 %v16
  %v562 = vunpack.c.h.b16 %v16
  %v563 = vunpack.c.l.b16 %v17
  %v564 = vunpack.c.h.b16 %v17
  %v565 = vunpack.c.l.b16 %v18
  %v566 = vunpack.c.h.b16 %v18
  %v567 = vunpack.c.l.b16 %v19
  %v568 = vunpack.c.h.b16 %v19
  %v569 = vunpack.c.l.b16 %v20
  %v570 = vunpack.c.h.b16 %v20
  %v571 = vunpack.c.l.b16 %v21
  %v572 = vunpack.c.h.b16 %v21
  %v573 = vunpack.c.l.b16 %v22
  %v574 = vunpack.c.h.b16 %v22
  %v575 = vunpack.c.l.b16 %v23
  %v576 = vunpack.c.h.b16 %v23
  %v577 = vunpack.c.l.b16 %v24
  %v578 = vunpack.c.h.b16 %v24
  %v579 = vunpack.c.l.b16 %v25
  %v580 = vunpack.c.h.b16 %v25
  %v581 = vunpack.c.l.b16 %v26
  %v582 = vunpack.c.h.b16 %v26
  %v583 = vunpack.c.l.b16 %v27
  %v584 = vunpack.c.h.b16 %v27
  %v585 = vunpack.c.l.b16 %v28
  %v586 = vunpack.c.h.b16 %v28
  %v587 = vunpack.c.l.b16 %v29
  %v588 = vunpack.c.h.b16 %v29
  %v589 = vunpack.c.l.b16 %v30
  %v590 = vunpack.c.h.b16 %v30
  %v591 = vunpack.c.l.b16 %v31
  %v592 = vunpack.c.h.b16 %v31
  %v593 = vunpack.c.l.b16 %v32
  %v594 = vunpack.c.h.b16 %v32
  %v595 = vunpack.c.l.b16 %v33
  %v596 = vunpack.c.h.b16 %v33
  %v597 = vunpack.c.l.b16 %v34
  %v598 = vunpack.c.h.b16 %v34
  %v599 = vunpack.c.l.b16 %v35
  %v600 = vunpack.c.h.b16 %v35
  %v601 = vunpack.c.l.b16 %v36
  %v602 = vunpack.c.h.b16 %v36
  %v603 = vunpack.c.l.b16 %v37
  %v604 = vunpack.c.h.b16 %v37
  %v605 = vunpack.c.l.b16 %v38
  %v606 = vunpack.c.h.b16 %v38
  %v607 = vunpack.c.l.b16 %v39
  %v608 = vunpack.c.h.b16 %v39
  %v609 = vunpack.c.l.b16 %v40
  %v610 = vunpack.c.h.b16 %v40
  %v611 = vunpack.c.l.b16 %v41
  %v612 = vunpack.c.h.b16 %v41
  %v613 = vunpack.c.l.b16 %v42
  %v614 = vunpack.c.h.b16 %v42
  %v615 = vunpack.c.l.b16 %v43
  %v616 = vunpack.c.h.b16 %v43
  %v617 = vunpack.c.l.b16 %v44
  %v618 = vunpack.c.h.b16 %v44
  %v619 = vunpack.c.l.b16 %v45
  %v620 = vunpack.c.h.b16 %v45
  %v621 = vunpack.c.l.b16 %v46
  %v622 = vunpack.c.h.b16 %v46
  %v623 = vunpack.c.l.b16 %v47
  %v624 = vunpack.c.h.b16 %v47
  %v625 = vunpack.c.l.b16 %v48
  %v626 = vunpack.c.h.b16 %v48
  %v627 = vunpack.c.l.b16 %v49
  %v628 = vunpack.c.h.b16 %v49
  %v629 = vunpack.c.l.b16 %v50
  %v630 = vunpack.c.h.b16 %v50
  %v631 = vunpack.c.l.b16 %v51
  %v632 = vunpack.c.h.b16 %v51
  %v633 = vunpack.c.l.b16 %v52
  %v634 = vunpack.c.h.b16 %v52
  %v635 = vunpack.c.l.b16 %v53
  %v636 = vunpack.c.h.b16 %v53
  %v637 = vunpack.c.l.b16 %v54
  %v638 = vunpack.c.h.b16 %v54
  %v639 = vunpack.c.l.b16 %v55
  %v640 = vunpack.c.h.b16 %v55
  %v641 = vunpack.c.l.b16 %v56
  %v642 = vunpack.c.h.b16 %v56
  %v643 = vunpack.c.l.b16 %v57
  %v644 = vunpack.c.h.b16 %v57
  %v645 = vunpack.c.l.b16 %v58
  %v646 = vunpack.c.h.b16 %v58
  %v647 = vunpack.c.l.b16 %v59
  %v648 = vunpack.c.h.b16 %v59
  %v649 = vunpack.c.l.b16 %v60
  %v650 = vunpack.c.h.b16 %v60
  %v651 = vunpack.c.l.b16 %v61
  %v652 = vunpack.c.h.b16 %v61
  %v653 = vunpack.c.l.b16 %v62
  %v654 = vunpack.c.h.b16 %v62
  %v655 = vunpack.c.l.b16 %v63
  %v656 = vunpack.c.h.b16 %v63
  %v657 = vunpack.c.l.b16 %v64
  %v658 = vunpack.c.h.b16 %v64
  %v659 = vunpack.c.l.b16 %v65
  %v660 = vunpack.c.h.b16 %v65
  %v661 = vunpack.c.l.b16 %v66
  %v662 = vunpack.c.h.b16 %v66
  %v663 = vunpack.c.l.b16 %v67
  %v664 = vunpack.c.h.b16 %v67
  %v665 = vunpack.c.l.b16 %v68
  %v666 = vunpack.c.h.b16 %v68
  %v667 = vunpack.c.l.b16 %v69
  %v668 = vunpack.c.h.b16 %v69
  %v669 = vunpack.c.l.b16 %v70
  %v670 = vunpack.c.h.b16 %v70
  %v671 = vunpack.c.l.b16 %v71
  %v672 = vunpack.c.h.b16 %v71
  %v673 = vunpack.c.l.b16 %v72
  %v674 = vunpack.c.h.b16 %v72
  %v675 = vunpack.c.l.b16 %v73
  %v676 = vunpack.c.h.b16 %v73
  %v677 = vunpack.c.l.b16 %v74
  %v678 = vunpack.c.h.b16 %v74
  %v679 = vunpack.c.l.b16 %v75
  %v680 = vunpack.c.h.b16 %v75
  %v681 = vunpack.c.l.b16 %v76
  %v682 = vunpack.c.h.b16 %v76
  %v683 = vunpack.c.l.b16 %v77
  %v684 = vunpack.c.h.b16 %v77
  %v685 = vunpack.c.l.b16 %v78
  %v686 = vunpack.c.h.b16 %v78
  %v687 = vunpack.c.l.b16 %v79
  %v688 = vunpack.c.h.b16 %v79
  %v689 = vunpack.c.l.b16 %v80
  %v690 = vunpack.c.h.b16 %v80
  %v691 = vunpack.c.l.b16 %v81
  %v692 = vunpack.c.h.b16 %v81
  %v693 = vunpack.c.l.b16 %v82
  %v694 = vunpack.c.h.b16 %v82
  %v695 = vunpack.c.l.b16 %v83
  %v696 = vunpack.c.h.b16 %v83
  %v697 = vunpack.c.l.b16 %v84
  %v698 = vunpack.c.h.b16 %v84
  %v699 = vunpack.c.l.b16 %v85
  %v700 = vunpack.c.h.b16 %v85
  %v701 = vunpack.c.l.b16 %v86
  %v702 = vunpack.c.h.b16 %v86
  %v703 = vunpack.c.l.b16 %v87
  %v704 = vunpack.c.h.b16 %v87
  %v705 = vunpack.c.l.b16 %v88
  %v706 = vunpack.c.h.b16 %v88
  %v707 = vunpack.c.l.b16 %v89
  %v708 = vunpack.c.h.b16 %v89
  %v709 = vunpack.c.l.b16 %v90
  %v710 = vunpack.c.h.b16 %v90
  %v711 = vunpack.c.l.b16 %v91
  %v712 = vunpack.c.h.b16 %v91
  %v713 = vunpack.c.l.b16 %v92
  %v714 = vunpack.c.h.b16 %v92
  %v715 = vunpack.c.l.b16 %v93
  %v716 = vunpack.c.h.b16 %v93
  %v717 = vunpack.c.l.b16 %v94
  %v718 = vunpack.c.h.b16 %v94
  %v719 = vunpack.c.l.b16 %v95
  %v720 = vunpack.c.h.b16 %v95
  %v721 = vunpack.c.l.b16 %v96
  %v722 = vunpack.c.h.b16 %v96
  %v723 = vunpack.c.l.b16 %v97
  %v724 = vunpack.c.h.b16 %v97
  %v725 = vunpack.c.l.b16 %v98
  %v726 = vunpack.c.h.b16 %v98
  %v727 = vunpack.c.l.b16 %v99
  %v728 = vunpack.c.h.b16 %v99
  %v729 = vunpack.c.l.b16 %v100
  %v730 = vunpack.c.h.b16 %v100
  %v731 = vunpack.c.l.b16 %v101
  %v732 = vunpack.c.h.b16 %v101
  %v733 = vunpack.c.l.b16 %v102
  %v734 = vunpack.c.h.b16 %v102
  %v735 = vunpack.c.l.b16 %v103
  %v736 = vunpack.c.h.b16 %v103
  %v737 = vunpack.c.l.b16 %v104
  %v738 = vunpack.c.h.b16 %v104
  %v739 = vunpack.c.l.b16 %v105
  %v740 = vunpack.c.h.b16 %v105
  %v741 = vunpack.c.l.b16 %v106
  %v742 = vunpack.c.h.b16 %v106
  %v743 = vunpack.c.l.b16 %v107
  %v744 = vunpack.c.h.b16 %v107
  %v745 = vunpack.c.l.b16 %v108
  %v746 = vunpack.c.h.b16 %v108
  %v747 = vunpack.c.l.b16 %v109
  %v748 = vunpack.c.h.b16 %v109
  %v749 = vunpack.c.l.b16 %v110
  %v750 = vunpack.c.h.b16 %v110
  %v751 = vunpack.c.l.b16 %v111
  %v752 = vunpack.c.h.b16 %v111
  %v753 = vunpack.c.l.b16 %v112
  %v754 = vunpack.c.h.b16 %v112
  %v755 = vunpack.c.l.b16 %v113
  %v756 = vunpack.c.h.b16 %v113
  %v757 = vunpack.c.l.b16 %v114
  %v758 = vunpack.c.h.b16 %v114
  %v759 = vunpack.c.l.b16 %v115
  %v760 = vunpack.c.h.b16 %v115
  %v761 = vunpack.c.l.b16 %v116
  %v762 = vunpack.c.h.b16 %v116
  %v763 = vunpack.c.l.b16 %v117
  %v764 = vunpack.c.h.b16 %v117
  %v765 = vunpack.c.l.b16 %v118
  %v766 = vunpack.c.h.b16 %v118
  %v767 = vunpack.c.l.b16 %v119
  %v768 = vunpack.c.h.b16 %v119
  %v769 = vunpack.c.l.b16 %v120
  %v770 = vunpack.c.h.b16 %v120
  %v771 = vunpack.c.l.b16 %v121
  %v772 = vunpack.c.h.b16 %v121
  %v773 = vunpack.c.l.b16 %v122
  %v774 = vunpack.c.h.b16 %v122
  %v775 = vunpack.c.l.b16 %v123
  %v776 = vunpack.c.h.b16 %v123
  %v777 = vunpack.c.l.b16 %v124
  %v778 = vunpack.c.h.b16 %v124
  %v779 = vunpack.c.l.b16 %v125
  %v780 = vunpack.c.h.b16 %v125
  %v781 = vunpack.c.l.b16 %v126
  %v782 = vunpack.c.h.b16 %v126
  %v783 = vunpack.c.l.b16 %v127
  %v784 = vunpack.c.h.b16 %v127
  %v785 = vunpack.c.l.b16 %v128
  %v786 = vunpack.c.h.b16 %v128
  %v787 = vunpack.c.l.b16 %v129
  %v788 = vunpack.c.h.b16 %v129
  %v789 = vunpack.c.l.b16 %v130
  %v790 = vunpack.c.h.b16 %v130
  %v791 = vunpack.c.l.b16 %v131
  %v792 = vunpack.c.h.b16 %v131
  %v793 = vunpack.c.l.b16 %v132
  %v794 = vunpack.c.h.b16 %v132
  %v795 = vunpack.c.l.b16 %v133
  %v796 = vunpack.c.h.b16 %v133
  %v797 = vunpack.c.l.b16 %v134
  %v798 = vunpack.c.h.b16 %v134
  %v799 = vunpack.c.l.b16 %v135
  %v800 = vunpack.c.h.b16 %v135
  %v801 = vunpack.c.l.b16 %v136
  %v802 = vunpack.c.h.b16 %v136
  %v803 = vunpack.c.l.b16 %v137
  %v804 = vunpack.c.h.b16 %v137
  %v805 = vunpack.c.l.b16 %v138
  %v806 = vunpack.c.h.b16 %v138
  %v807 = vunpack.c.l.b16 %v139
  %v808 = vunpack.c.h.b16 %v139
  %v809 = vunpack.c.l.b16 %v140
  %v810 = vunpack.c.h.b16 %v140
  %v811 = vunpack.c.l.b16 %v141
  %v812 = vunpack.c.h.b16 %v141
  %v813 = vunpack.c.l.b16 %v142
  %v814 = vunpack.c.h.b16 %v142
  %v815 = vunpack.c.l.b16 %v143
  %v816 = vunpack.c.h.b16 %v143
  %v817 = vunpack.c.l.b16 %v144
  %v818 = vunpack.c.h.b16 %v144
  %v819 = vunpack.c.l.b16 %v145
  %v820 = vunpack.c.h.b16 %v145
  %v821 = vunpack.c.l.b16 %v146
  %v822 = vunpack.c.h.b16 %v146
  %v823 = vunpack.c.l.b16 %v147
  %v824 = vunpack.c.h.b16 %v147
  %v825 = vunpack.c.l.b16 %v148
  %v826 = vunpack.c.h.b16 %v148
  %v827 = vunpack.c.l.b16 %v149
  %v828 = vunpack.c.h.b16 %v149
  %v829 = vunpack.c.l.b16 %v150
  %v830 = vunpack.c.h.b16 %v150
  %v831 = vunpack.c.l.b16 %v151
  %v832 = vunpack.c.h.b16 %v151
  %v833 = vunpack.c.l.b16 %v152
  %v834 = vunpack.c.h.b16 %v152
  %v835 = vunpack.c.l.b16 %v153
  %v836 = vunpack.c.h.b16 %v153
  %v837 = vunpack.c.l.b16 %v154
  %v838 = vunpack.c.h.b16 %v154
  %v839 = vunpack.c.l.b16 %v155
  %v840 = vunpack.c.h.b16 %v155
  %v841 = vunpack.c.l.b16 %v156
  %v842 = vunpack.c.h.b16 %v156
  %v843 = vunpack.c.l.b16 %v157
  %v844 = vunpack.c.h.b16 %v157
  %v845 = vunpack.c.l.b16 %v158
  %v846 = vunpack.c.h.b16 %v158
  %v847 = vunpack.c.l.b16 %v159
  %v848 = vunpack.c.h.b16 %v159
  %v849 = vunpack.c.l.b16 %v160
  %v850 = vunpack.c.h.b16 %v160
  %v851 = vunpack.c.l.b16 %v161
  %v852 = vunpack.c.h.b16 %v161
  %v853 = vunpack.c.l.b16 %v162
  %v854 = vunpack.c.h.b16 %v162
  %v855 = vunpack.c.l.b16 %v163
  %v856 = vunpack.c.h.b16 %v163
  %v857 = vunpack.c.l.b16 %v164
  %v858 = vunpack.c.h.b16 %v164
  %v859 = vunpack.c.l.b16 %v165
  %v860 = vunpack.c.h.b16 %v165
  %v861 = vunpack.c.l.b16 %v166
  %v862 = vunpack.c.h.b16 %v166
  %v863 = vunpack.c.l.b16 %v167
  %v864 = vunpack.c.h.b16 %v167
  %v865 = vunpack.c.l.b16 %v168
  %v866 = vunpack.c.h.b16 %v168
  %v867 = vunpack.c.l.b16 %v169
  %v868 = vunpack.c.h.b16 %v169
  %v869 = vunpack.c.l.b16 %v170
  %v870 = vunpack.c.h.b16 %v170
  %v871 = vunpack.c.l.b16 %v171
  %v872 = vunpack.c.h.b16 %v171
  %v873 = vunpack.c.l.b16 %v172
  %v874 = vunpack.c.h.b16 %v172
  %v875 = vunpack.c.l.b16 %v173
  %v876 = vunpack.c.h.b16 %v173
  %v877 = vunpack.c.l.b16 %v174
  %v878 = vunpack.c.h.b16 %v174
  %v879 = vunpack.c.l.b16 %v175
  %v880 = vunpack.c.h.b16 %v175
  %v881 = vunpack.c.l.b16 %v176
  %v882 = vunpack.c.h.b16 %v176
  %v883 = vunpack.c.l.b16 %v177
  %v884 = vunpack.c.h.b16 %v177
  %v885 = vunpack.c.l.b16 %v178
  %v886 = vunpack.c.h.b16 %v178
  %v887 = vunpack.c.l.b16 %v179
  %v888 = vunpack.c.h.b16 %v179
  %v889 = vunpack.c.l.b16 %v180
  %v890 = vunpack.c.h.b16 %v180
  %v891 = vunpack.c.l.b16 %v181
  %v892 = vunpack.c.h.b16 %v181
  %v893 = vunpack.c.l.b16 %v182
  %v894 = vunpack.c.h.b16 %v182
  %v895 = vunpack.c.l.b16 %v183
  %v896 = vunpack.c.h.b16 %v183
  %v897 = vunpack.c.l.b16 %v184
  %v898 = vunpack.c.h.b16 %v184
  %v899 = vunpack.c.l.b16 %v185
  %v900 = vunpack.c.h.b16 %v185
  %v901 = vunpack.c.l.b16 %v186
  %v902 = vunpack.c.h.b16 %v186
  %v903 = vunpack.c.l.b16 %v187
  %v904 = vunpack.c.h.b16 %v187
  %v905 = vunpack.c.l.b16 %v188
  %v906 = vunpack.c.h.b16 %v188
  %v907 = vunpack.c.l.b16 %v189
  %v908 = vunpack.c.h.b16 %v189
  %v909 = vunpack.c.l.b16 %v190
  %v910 = vunpack.c.h.b16 %v190
  %v911 = vunpack.c.l.b16 %v191
  %v912 = vunpack.c.h.b16 %v191
  %v913 = vunpack.c.l.b16 %v192
  %v914 = vunpack.c.h.b16 %v192
  %v915 = vunpack.c.l.b16 %v193
  %v916 = vunpack.c.h.b16 %v193
  %v917 = vunpack.c.l.b16 %v194
  %v918 = vunpack.c.h.b16 %v194
  %v919 = vunpack.c.l.b16 %v195
  %v920 = vunpack.c.h.b16 %v195
  %v921 = vunpack.c.l.b16 %v196
  %v922 = vunpack.c.h.b16 %v196
  %v923 = vunpack.c.l.b16 %v197
  %v924 = vunpack.c.h.b16 %v197
  %v925 = vunpack.c.l.b16 %v198
  %v926 = vunpack.c.h.b16 %v198
  %v927 = vunpack.c.l.b16 %v199
  %v928 = vunpack.c.h.b16 %v199
  %v929 = vunpack.c.l.b16 %v200
  %v930 = vunpack.c.h.b16 %v200
  %v931 = vunpack.c.l.b16 %v201
  %v932 = vunpack.c.h.b16 %v201
  %v933 = vunpack.c.l.b16 %v202
  %v934 = vunpack.c.h.b16 %v202
  %v935 = vunpack.c.l.b16 %v203
  %v936 = vunpack.c.h.b16 %v203
  %v937 = vunpack.c.l.b16 %v204
  %v938 = vunpack.c.h.b16 %v204
  %v939 = vunpack.c.l.b16 %v205
  %v940 = vunpack.c.h.b16 %v205
  %v941 = vunpack.c.l.b16 %v206
  %v942 = vunpack.c.h.b16 %v206
  %v943 = vunpack.c.l.b16 %v207
  %v944 = vunpack.c.h.b16 %v207
  %v945 = vunpack.c.l.b16 %v208
  %v946 = vunpack.c.h.b16 %v208
  %v947 = vunpack.c.l.b16 %v209
  %v948 = vunpack.c.h.b16 %v209
  %v949 = vunpack.c.l.b16 %v210
  %v950 = vunpack.c.h.b16 %v210
  %v951 = vunpack.c.l.b16 %v211
  %v952 = vunpack.c.h.b16 %v211
  %v953 = vunpack.c.l.b16 %v212
  %v954 = vunpack.c.h.b16 %v212
  %v955 = vunpack.c.l.b16 %v213
  %v956 = vunpack.c.h.b16 %v213
  %v957 = vunpack.c.l.b16 %v214
  %v958 = vunpack.c.h.b16 %v214
  %v959 = vunpack.c.l.b16 %v215
  %v960 = vunpack.c.h.b16 %v215
  %v961 = vunpack.c.l.b16 %v216
  %v962 = vunpack.c.h.b16 %v216
  %v963 = vunpack.c.l.b16 %v217
  %v964 = vunpack.c.h.b16 %v217
  %v965 = vunpack.c.l.b16 %v218
  %v966 = vunpack.c.h.b16 %v218
  %v967 = vunpack.c.l.b16 %v219
  %v968 = vunpack.c.h.b16 %v219
  %v969 = vunpack.c.l.b16 %v220
  %v970 = vunpack.c.h.b16 %v220
  %v971 = vunpack.c.l.b16 %v221
  %v972 = vunpack.c.h.b16 %v221
  %v973 = vunpack.c.l.b16 %v222
  %v974 = vunpack.c.h.b16 %v222
  %v975 = vunpack.c.l.b16 %v223
  %v976 = vunpack.c.h.b16 %v223
  %v977 = vunpack.c.l.b16 %v224
  %v978 = vunpack.c.h.b16 %v224
  %v979 = vunpack.c.l.b16 %v225
  %v980 = vunpack.c.h.b16 %v225
  %v981 = vunpack.c.l.b16 %v226
  %v982 = vunpack.c.h.b16 %v226
  %v983 = vunpack.c.l.b16 %v227
  %v984 = vunpack.c.h.b16 %v227
  %v985 = vunpack.c.l.b16 %v228
  %v986 = vunpack.c.h.b16 %v228
  %v987 = vunpack.c.l.b16 %v229
  %v988 = vunpack.c.h.b16 %v229
  %v989 = vunpack.c.l.b16 %v230
  %v990 = vunpack.c.h.b16 %v230
  %v991 = vunpack.c.l.b16 %v231
  %v992 = vunpack.c.h.b16 %v231
  %v993 = vunpack.c.l.b16 %v232
  %v994 = vunpack.c.h.b16 %v232
  %v995 = vunpack.c.l.b16 %v233
  %v996 = vunpack.c.h.b16 %v233
  %v997 = vunpack.c.l.b16 %v234
  %v998 = vunpack.c.h.b16 %v234
  %v999 = vunpack.c.l.b16 %v235
  %v1000 = vunpack.c.h.b16 %v235
  %v1001 = vunpack.c.l.b16 %v236
  %v1002 = vunpack.c.h.b16 %v236
  %v1003 = vunpack.c.l.b16 %v237
  %v1004 = vunpack.c.h.b16 %v237
  %v1005 = vunpack.c.l.b16 %v238
  %v1006 = vunpack.c.h.b16 %v238
  %v1007 = vunpack.c.l.b16 %v239
  %v1008 = vunpack.c.h.b16 %v239
  %v1009 = vunpack.c.l.b16 %v240
  %v1010 = vunpack.c.h.b16 %v240
  %v1011 = vunpack.c.l.b16 %v241
  %v1012 = vunpack.c.h.b16 %v241
  %v1013 = vunpack.c.l.b16 %v242
  %v1014 = vunpack.c.h.b16 %v242
  %v1015 = vunpack.c.l.b16 %v243
  %v1016 = vunpack.c.h.b16 %v243
  %v1017 = vunpack.c.l.b16 %v244
  %v1018 = vunpack.c.h.b16 %v244
  %v1019 = vunpack.c.l.b16 %v245
  %v1020 = vunpack.c.h.b16 %v245
  %v1021 = vunpack.c.l.b16 %v246
  %v1022 = vunpack.c.h.b16 %v246
  %v1023 = vunpack.c.l.b16 %v247
  %v1024 = vunpack.c.h.b16 %v247
  %v1025 = vunpack.c.l.b16 %v248
  %v1026 = vunpack.c.h.b16 %v248
  %v1027 = vunpack.c.l.b16 %v249
  %v1028 = vunpack.c.h.b16 %v249
  %v1029 = vunpack.c.l.b16 %v250
  %v1030 = vunpack.c.h.b16 %v250
  %v1031 = vunpack.c.l.b16 %v251
  %v1032 = vunpack.c.h.b16 %v251
  %v1033 = vunpack.c.l.b16 %v252
  %v1034 = vunpack.c.h.b16 %v252
  %v1035 = vunpack.c.l.b16 %v253
  %v1036 = vunpack.c.h.b16 %v253
  %v1037 = vunpack.c.l.b16 %v254
  %v1038 = vunpack.c.h.b16 %v254
  %v1039 = vunpack.c.l.b16 %v255
  %v1040 = vunpack.c.h.b16 %v255
  %v1041 = vunpack.c.l.b16 %v256
  %v1042 = vunpack.c.h.b16 %v256
  %v1043 = vunpack.c.l.b16 %v257
  %v1044 = vunpack.c.h.b16 %v257
  %v1045 = vunpack.c.l.b16 %v258
  %v1046 = vunpack.c.h.b16 %v258
  %v1047 = vunpack.c.l.b16 %v259
  %v1048 = vunpack.c.h.b16 %v259
  %v1049 = vunpack.c.l.b16 %v260
  %v1050 = vunpack.c.h.b16 %v260
  %v1051 = vunpack.c.l.b16 %v261
  %v1052 = vunpack.c.h.b16 %v261
  %v1053 = vunpack.c.l.b16 %v262
  %v1054 = vunpack.c.h.b16 %v262
  %v1055 = vunpack.c.l.b16 %v263
  %v1056 = vunpack.c.h.b16 %v263
  %v1057 = vunpack.c.l.b16 %v264
  %v1058 = vunpack.c.h.b16 %v264
  %v1059 = vunpack.c.l.b16 %v265
  %v1060 = vunpack.c.h.b16 %v265
  %v1061 = vunpack.c.l.b16 %v266
  %v1062 = vunpack.c.h.b16 %v266
  %v1063 = vunpack.c.l.b16 %v267
  %v1064 = vunpack.c.h.b16 %v267
  %v1065 = vunpack.c.l.b16 %v268
  %v1066 = vunpack.c.h.b16 %v268
  %v1067 = vunpack.c.l.b16 %v269
  %v1068 = vunpack.c.h.b16 %v269
  %v1069 = vunpack.c.l.b16 %v270
  %v1070 = vunpack.c.h.b16 %v270
  %v1071 = vpack.c.b16 %v561, %v559
  %v1072 = vpack.c.b16 %v562, %v560
  %v1073 = vpack.c.b16 %v565, %v563
  %v1074 = vpack.c.b16 %v566, %v564
  %v1075 = vpack.c.b16 %v569, %v567
  %v1076 = vpack.c.b16 %v570, %v568
  %v1077 = vpack.c.b16 %v573, %v571
  %v1078 = vpack.c.b16 %v574, %v572
  %v1079 = vpack.c.b16 %v577, %v575
  %v1080 = vpack.c.b16 %v578, %v576
  %v1081 = vpack.c.b16 %v581, %v579
  %v1082 = vpack.c.b16 %v582, %v580
  %v1083 = vpack.c.b16 %v585, %v583
  %v1084 = vpack.c.b16 %v586, %v584
  %v1085 = vpack.c.b16 %v589, %v587
  %v1086 = vpack.c.b16 %v590, %v588
  %v1087 = vpack.c.b16 %v593, %v591
  %v1088 = vpack.c.b16 %v594, %v592
  %v1089 = vpack.c.b16 %v597, %v595
  %v1090 = vpack.c.b16 %v598, %v596
  %v1091 = vpack.c.b16 %v601, %v599
  %v1092 = vpack.c.b16 %v602, %v600
  %v1093 = vpack.c.b16 %v605, %v603
  %v1094 = vpack.c.b16 %v606, %v604
  %v1095 = vpack.c.b16 %v609, %v607
  %v1096 = vpack.c.b16 %v610, %v608
  %v1097 = vpack.c.b16 %v613, %v611
  %v1098 = vpack.c.b16 %v614, %v612
  %v1099 = vpack.c.b16 %v617, %v615
  %v1100 = vpack.c.b16 %v618, %v616
  %v1101 = vpack.c.b16 %v621, %v619
  %v1102 = vpack.c.b16 %v622, %v620
  %v1103 = vpack.c.b16 %v625, %v623
  %v1104 = vpack.c.b16 %v626, %v624
  %v1105 = vpack.c.b16 %v629, %v627
  %v1106 = vpack.c.b16 %v630, %v628
  %v1107 = vpack.c.b16 %v633, %v631
  %v1108 = vpack.c.b16 %v634, %v632
  %v1109 = vpack.c.b16 %v637, %v635
  %v1110 = vpack.c.b16 %v638, %v636
  %v1111 = vpack.c.b16 %v641, %v639
  %v1112 = vpack.c.b16 %v642, %v640
  %v1113 = vpack.c.b16 %v645, %v643
  %v1114 = vpack.c.b16 %v646, %v644
  %v1115 = vpack.c.b16 %v649, %v647
  %v1116 = vpack.c.b16 %v650, %v648
  %v1117 = vpack.c.b16 %v653, %v651
  %v1118 = vpack.c.b16 %v654, %v652
  %v1119 = vpack.c.b16 %v657, %v655
  %v1120 = vpack.c.b16 %v658, %v656
  %v1121 = vpack.c.b16 %v661, %v659
  %v1122 = vpack.c.b16 %v662, %v660
  %v1123 = vpack.c.b16 %v665, %v663
  %v1124 = vpack.c.b16 %v666, %v664
  %v1125 = vpack.c.b16 %v669, %v667
  %v1126 = vpack.c.b16 %v670, %v668
  %v1127 = vpack.c.b16 %v673, %v671
  %v1128 = vpack.c.b16 %v674, %v672
  %v1129 = vpack.c.b16 %v677, %v675
  %v1130 = vpack.c.b16 %v678, %v676
  %v1131 = vpack.c.b16 %v681, %v679
  %v1132 = vpack.c.b16 %v682, %v680
  %v1133 = vpack.c.b16 %v685, %v683
  %v1134 = vpack.c.b16 %v686, %v684
  %v1135 = vpack.c.b16 %v689, %v687
  %v1136 = vpack.c.b16 %v690, %v688
  %v1137 = vpack.c.b16 %v693, %v691
  %v1138 = vpack.c.b16 %v694, %v692
  %v1139 = vpack.c.b16 %v697, %v695
  %v1140 = vpack.c.b16 %v698, %v696
  %v1141 = vpack.c.b16 %v701, %v699
  %v1142 = vpack.c.b16 %v702, %v700
  %v1143 = vpack.c.b16 %v705, %v703
  %v1144 = vpack.c.b16 %v706, %v704
  %v1145 = vpack.c.b16 %v709, %v707
  %v1146 = vpack.c.b16 %v710, %v708
  %v1147 = vpack.c.b16 %v713, %v711
  %v1148 = vpack.c.b16 %v714, %v712
  %v1149 = vpack.c.b16 %v717, %v715
  %v1150 = vpack.c.b16 %v718, %v716
  %v1151 = vpack.c.b16 %v721, %v719
  %v1152 = vpack.c.b16 %v722, %v720
  %v1153 = vpack.c.b16 %v725, %v723
  %v1154 = vpack.c.b16 %v726, %v724
  %v1155 = vpack.c.b16 %v729, %v727
  %v1156 = vpack.c.b16 %v730, %v728
  %v1157 = vpack.c.b16 %v733, %v731
  %v1158 = vpack.c.b16 %v734, %v732
  %v1159 = vpack.c.b16 %v737, %v735
  %v1160 = vpack.c.b16 %v738, %v736
  %v1161 = vpack.c.b16 %v741, %v739
  %v1162 = vpack.c.b16 %v742, %v740
  %v1163 = vpack.c.b16 %v745, %v743
  %v1164 = vpack.c.b16 %v746, %v744
  %v1165 = vpack.c.b16 %v749, %v747
  %v1166 = vpack.c.b16 %v750, %v748
  %v1167 = vpack.c.b16 %v753, %v751
  %v1168 = vpack.c.b16 %v754, %v752
  %v1169 = vpack.c.b16 %v757, %v755
  %v1170 = vpack.c.b16 %v758, %v756
  %v1171 = vpack.c.b16 %v761, %v759
  %v1172 = vpack.c.b16 %v762, %v760
  %v1173 = vpack.c.b16 %v765, %v763
  %v1174 = vpack.c.b16 %v766, %v764
  %v1175 = vpack.c.b16 %v769, %v767
  %v1176 = vpack.c.b16 %v770, %v768
  %v1177 = vpack.c.b16 %v773, %v771
  %v1178 = vpack.c.b16 %v774, %v772
  %v1179 = vpack.c.b16 %v777, %v775
  %v1180 = vpack.c.b16 %v778, %v776
  %v1181 = vpack.c.b16 %v781, %v779
  %v1182 = vpack.c.b16 %v782, %v780
  %v1183 = vpack.c.b16 %v785, %v783
  %v1184 = vpack.c.b16 %v786, %v784
  %v1185 = vpack.c.b16 %v789, %v787
  %v1186 = vpack.c.b16 %v790, %v788
  %v1187 = vpack.c.b16 %v793, %v791
  %v1188 = vpack.c.b16 %v794, %v792
  %v1189 = vpack.c.b16 %v797, %v795
  %v1190 = vpack.c.b16 %v798, %v796
  %v1191 = vpack.c.b16 %v801, %v799
  %v1192 = vpack.c.b16 %v802, %v800
  %v1193 = vpack.c.b16 %v805, %v803
  %v1194 = vpack.c.b16 %v806, %v804
  %v1195 = vpack.c.b16 %v809, %v807
  %v1196 = vpack.c.b16 %v810, %v808
  %v1197 = vpack.c.b16 %v813, %v811
  %v1198 = vpack.c.b16 %v814, %v812
  %v1199 = vpack.c.b16 %v817, %v815
  %v1200 = vpack.c.b16 %v818, %v816
  %v1201 = vpack.c.b16 %v821, %v819
  %v1202 = vpack.c.b16 %v822, %v820
  %v1203 = vpack.c.b16 %v825, %v823
  %v1204 = vpack.c.b16 %v826, %v824
  %v1205 = vpack.c.b16 %v829, %v827
  %v1206 = vpack.c.b16 %v830, %v828
  %v1207 = vpack.c.b16 %v833, %v831
  %v1208 = vpack.c.b16 %v834, %v832
  %v1209 = vpack.c.b16 %v837, %v835
  %v1210 = vpack.c.b16 %v838, %v836
  %v1211 = vpack.c.b16 %v841, %v839
  %v1212 = vpack.c.b16 %v842, %v840
  %v1213 = vpack.c.b16 %v845, %v843
  %v1214 = vpack.c.b16 %v846, %v844
  %v1215 = vpack.c.b16 %v849, %v847
  %v1216 = vpack.c.b16 %v850, %v848
  %v1217 = vpack.c.b16 %v853, %v851
  %v1218 = vpack.c.b16 %v854, %v852
  %v1219 = vpack.c.b16 %v857, %v855
  %v1220 = vpack.c.b16 %v858, %v856
  %v1221 = vpack.c.b16 %v861, %v859
  %v1222 = vpack.c.b16 %v862, %v860
  %v1223 = vpack.c.b16 %v865, %v863
  %v1224 = vpack.c.b16 %v866, %v864
  %v1225 = vpack.c.b16 %v869, %v867
  %v1226 = vpack.c.b16 %v870, %v868
  %v1227 = vpack.c.b16 %v873, %v871
  %v1228 = vpack.c.b16 %v874, %v872
  %v1229 = vpack.c.b16 %v877, %v875
  %v1230 = vpack.c.b16 %v878, %v876
  %v1231 = vpack.c.b16 %v881, %v879
  %v1232 = vpack.c.b16 %v882, %v880
  %v1233 = vpack.c.b16 %v885, %v883
  %v1234 = vpack.c.b16 %v886, %v884
  %v1235 = vpack.c.b16 %v889, %v887
  %v1236 = vpack.c.b16 %v890, %v888
  %v1237 = vpack.c.b16 %v893, %v891
  %v1238 = vpack.c.b16 %v894, %v892
  %v1239 = vpack.c.b16 %v897, %v895
  %v1240 = vpack.c.b16 %v898, %v896
  %v1241 = vpack.c.b16 %v901, %v899
  %v1242 = vpack.c.b16 %v902, %v900
  %v1243 = vpack.c.b16 %v905, %v903
  %v1244 = vpack.c.b16 %v906, %v904
  %v1245 = vpack.c.b16 %v909, %v907
  %v1246 = vpack.c.b16 %v910, %v908
  %v1247 = vpack.c.b16 %v913, %v911
  %v1248 = vpack.c.b16 %v914, %v912
  %v1249 = vpack.c.b16 %v917, %v915
  %v1250 = vpack.c.b16 %v918, %v916
  %v1251 = vpack.c.b16 %v921, %v919
  %v1252 = vpack.c.b16 %v922, %v920
  %v1253 = vpack.c.b16 %v925, %v923
  %v1254 = vpack.c.b16 %v926, %v924
  %v1255 = vpack.c.b16 %v929, %v927
  %v1256 = vpack.c.b16 %v930, %v928
  %v1257 = vpack.c.b16 %v933, %v931
  %v1258 = vpack.c.b16 %v934, %v932
  %v1259 = vpack.c.b16 %v937, %v935
  %v1260 = vpack.c.b16 %v938, %v936
  %v1261 = vpack.c.b16 %v941, %v939
  %v1262 = vpack.c.b16 %v942, %v940
  %v1263 = vpack.c.b16 %v945, %v943
  %v1264 = vpack.c.b16 %v946, %v944
  %v1265 = vpack.c.b16 %v949, %v947
  %v1266 = vpack.c.b16 %v950, %v948
  %v1267 = vpack.c.b16 %v953, %v951
  %v1268 = vpack.c.b16 %v954, %v952
  %v1269 = vpack.c.b16 %v957, %v955
  %v1270 = vpack.c.b16 %v958, %v956
  %v1271 = vpack.c.b16 %v961, %v959
  %v1272 = vpack.c.b16 %v962, %v960
  %v1273 = vpack.c.b16 %v965, %v963
  %v1274 = vpack.c.b16 %v966, %v964
  %v1275 = vpack.c.b16 %v969, %v967
  %v1276 = vpack.c.b16 %v970, %v968
  %v1277 = vpack.c.b16 %v973, %v971
  %v1278 = vpack.c.b16 %v974, %v972
  %v1279 = vpack.c.b16 %v977, %v975
  %v1280 = vpack.c.b16 %v978, %v976
  %v1281 = vpack.c.b16 %v981, %v979
  %v1282 = vpack.c.b16 %v982, %v980
  %v1283 = vpack.c.b16 %v985, %v983
  %v1284 = vpack.c.b16 %v986, %v984
  %v1285 = vpack.c.b16 %v989, %v987
  %v1286 = vpack.c.b16 %v990, %v988
  %v1287 = vpack.c.b16 %v993, %v991
  %v1288 = vpack.c.b16 %v994, %v992
  %v1289 = vpack.c.b16 %v997, %v995
  %v1290 = vpack.c.b16 %v998, %v996
  %v1291 = vpack.c.b16 %v1001, %v999
  %v1292 = vpack.c.b16 %v1002, %v1000
  %v1293 = vpack.c.b16 %v1005, %v1003
  %v1294 = vpack.c.b16 %v1006, %v1004
  %v1295 = vpack.c.b16 %v1009, %v1007
  %v1296 = vpack.c.b16 %v1010, %v1008
  %v1297 = vpack.c.b16 %v1013, %v1011
  %v1298 = vpack.c.b16 %v1014, %v1012
  %v1299 = vpack.c.b16 %v1017, %v1015
  %v1300 = vpack.c.b16 %v1018, %v1016
  %v1301 = vpack.c.b16 %v1021, %v1019
  %v1302 = vpack.c.b16 %v1022, %v1020
  %v1303 = vpack.c.b16 %v1025, %v1023
  %v1304 = vpack.c.b16 %v1026, %v1024
  %v1305 = vpack.c.b16 %v1029, %v1027
  %v1306 = vpack.c.b16 %v1030, %v1028
  %v1307 = vpack.c.b16 %v1033, %v1031
  %v1308 = vpack.c.b16 %v1034, %v1032
  %v1309 = vpack.c.b16 %v1037, %v1035
  %v1310 = vpack.c.b16 %v1038, %v1036
  %v1311 = vpack.c.b16 %v1041, %v1039
  %v1312 = vpack.c.b16 %v1042, %v1040
  %v1313 = vpack.c.b16 %v1045, %v1043
  %v1314 = vpack.c.b16 %v1046, %v1044
  %v1315 = vpack.c.b16 %v1049, %v1047
  %v1316 = vpack.c.b16 %v1050, %v1048
  %v1317 = vpack.c.b16 %v1053, %v1051
  %v1318 = vpack.c.b16 %v1054, %v1052
  %v1319 = vpack.c.b16 %v1057, %v1055
  %v1320 = vpack.c.b16 %v1058, %v1056
  %v1321 = vpack.c.b16 %v1061, %v1059
  %v1322 = vpack.c.b16 %v1062, %v1060
  %v1323 = vpack.c.b16 %v1065, %v1063
  %v1324 = vpack.c.b16 %v1066, %v1064
  %v1325 = vpack.c.b16 %v1069, %v1067
  %v1326 = vpack.c.b16 %v1070, %v1068
  %v1615 = vunpack.c.l.b16 %v271
  %v1616 = vunpack.c.l.b16 %v272
  %v1617 = vunpack.c.l.b16 %v273
  %v1618 = vunpack.c.l.b16 %v274
  %v1619 = vunpack.c.l.b16 %v275
  %v1620 = vunpack.c.l.b16 %v276
  %v1621 = vunpack.c.l.b16 %v277
  %v1622 = vunpack.c.l.b16 %v278
  %v1623 = vunpack.c.l.b16 %v279
  %v1624 = vunpack.c.l.b16 %v280
  %v1625 = vunpack.c.l.b16 %v281
  %v1626 = vunpack.c.l.b16 %v282
  %v1627 = vunpack.c.l.b16 %v283
  %v1628 = vunpack.c.l.b16 %v284
  %v1629 = vunpack.c.l.b16 %v285
  %v1630 = vunpack.c.l.b16 %v286
  %v1631 = vunpack.c.l.b16 %v287
  %v1632 = vunpack.c.l.b16 %v288
  %v1633 = vunpack.c.l.b16 %v289
  %v1634 = vunpack.c.l.b16 %v290
  %v1635 = vunpack.c.l.b16 %v291
  %v1636 = vunpack.c.l.b16 %v292
  %v1637 = vunpack.c.l.b16 %v293
  %v1638 = vunpack.c.l.b16 %v294
  %v1639 = vunpack.c.l.b16 %v295
  %v1640 = vunpack.c.l.b16 %v296
  %v1641 = vunpack.c.l.b16 %v297
  %v1642 = vunpack.c.l.b16 %v298
  %v1643 = vunpack.c.l.b16 %v299
  %v1644 = vunpack.c.l.b16 %v300
  %v1645 = vunpack.c.l.b16 %v301
  %v1646 = vunpack.c.l.b16 %v302
  %v1647 = vpack.c.b16 %v1616, %v1615
  %v1648 = vpack.c.b16 %v1618, %v1617
  %v1649 = vpack.c.b16 %v1620, %v1619
  %v1650 = vpack.c.b16 %v1622, %v1621
  %v1651 = vpack.c.b16 %v1624, %v1623
  %v1652 = vpack.c.b16 %v1626, %v1625
  %v1653 = vpack.c.b16 %v1628, %v1627
  %v1654 = vpack.c.b16 %v1630, %v1629
  %v1655 = vpack.c.b16 %v1632, %v1631
  %v1656 = vpack.c.b16 %v1634, %v1633
  %v1657 = vpack.c.b16 %v1636, %v1635
  %v1658 = vpack.c.b16 %v1638, %v1637
  %v1659 = vpack.c.b16 %v1640, %v1639
  %v1660 = vpack.c.b16 %v1642, %v1641
  %v1661 = vpack.c.b16 %v1644, %v1643
  %v1662 = vpack.c.b16 %v1646, %v1645
  %1679 = vmatprep.subr.bf16.mxu0 0
  %1680 = vmatpush1.bf16.msra.mxu0 %v1647
  %1681 = vmatprep.subr.bf16.mxu0 0
  %1682 = vmatpush1.bf16.msra.mxu0 %v1648
  %1683 = vmatprep.subr.bf16.mxu0 0
  %1684 = vmatpush1.bf16.msra.mxu0 %v1649
  %1685 = vmatprep.subr.bf16.mxu0 0
  %1686 = vmatpush1.bf16.msra.mxu0 %v1650
  %1687 = vmatprep.subr.bf16.mxu0 0
  %1688 = vmatpush1.bf16.msra.mxu0 %v1651
  %1689 = vmatprep.subr.bf16.mxu0 0
  %1690 = vmatpush1.bf16.msra.mxu0 %v1652
  %1691 = vmatprep.subr.bf16.mxu0 0
  %1692 = vmatpush1.bf16.msra.mxu0 %v1653
  %1693 = vmatprep.subr.bf16.mxu0 0
  %1694 = vmatpush1.bf16.msra.mxu0 %v1654
  %1695 = vmatprep.subr.bf16.mxu0 0
  %1696 = vmatpush1.bf16.msra.mxu0 %v1655
  %1697 = vmatprep.subr.bf16.mxu0 0
  %1698 = vmatpush1.bf16.msra.mxu0 %v1656
  %1699 = vmatprep.subr.bf16.mxu0 0
  %1700 = vmatpush1.bf16.msra.mxu0 %v1657
  %1701 = vmatprep.subr.bf16.mxu0 0
  %1702 = vmatpush1.bf16.msra.mxu0 %v1658
  %1703 = vmatprep.subr.bf16.mxu0 0
  %1704 = vmatpush1.bf16.msra.mxu0 %v1659
  %1705 = vmatprep.subr.bf16.mxu0 0
  %1706 = vmatpush1.bf16.msra.mxu0 %v1660
  %1707 = vmatprep.subr.bf16.mxu0 0
  %1708 = vmatpush1.bf16.msra.mxu0 %v1661
  %1709 = vmatprep.subr.bf16.mxu0 0
  %1710 = vmatpush1.bf16.msra.mxu0 %v1662
  %1711 = vmatprep.mubr.bf16.mxu0 %v1072
  %1712 = vmatmul.mubr.bf16.gmra.mrb[0].mxu0 %v1071
  %v1713 = vpop.f32.mrb[0].mxu0
  %v1714 = vadd.f32 0.0, %v1713
  %v1715 = vpop.f32.mrb[0].mxu0
  %v1716 = vpop.f32.mrb[0].mxu0
  %v1717 = vadd.f32 0.0, %v1716
  %v1718 = vpop.f32.mrb[0].mxu0
  %1719 = vmatprep.mubr.bf16.mxu0 %v1074
  %1720 = vmatmul.mubr.bf16.gmra.mrb[0].mxu0 %v1073
  %v1721 = vpop.f32.mrb[0].mxu0
  %v1722 = vadd.f32 0.0, %v1721
  %v1723 = vpop.f32.mrb[0].mxu0
  %v1724 = vpop.f32.mrb[0].mxu0
  %v1725 = vadd.f32 0.0, %v1724
  %v1726 = vpop.f32.mrb[0].mxu0
  %1727 = vmatprep.mubr.bf16.mxu0 %v1076
  %1728 = vmatmul.mubr.bf16.gmra.mrb[0].mxu0 %v1075
  %v1729 = vpop.f32.mrb[0].mxu0
  %v1730 = vadd.f32 0.0, %v1729
  %v1731 = vpop.f32.mrb[0].mxu0
  %v1732 = vpop.f32.mrb[0].mxu0
  %v1733 = vadd.f32 0.0, %v1732
  %v1734 = vpop.f32.mrb[0].mxu0
  %1735 = vmatprep.mubr.bf16.mxu0 %v1078
  %1736 = vmatmul.mubr.bf16.gmra.mrb[0].mxu0 %v1077
  %v1737 = vpop.f32.mrb[0].mxu0
  %v1738 = vadd.f32 0.0, %v1737
  %v1739 = vpop.f32.mrb[0].mxu0
  %v1740 = vpop.f32.mrb[0].mxu0
  %v1741 = vadd.f32 0.0, %v1740
  %v1742 = vpop.f32.mrb[0].mxu0
  %1743 = vmatprep.mubr.bf16.mxu0 %v1080
  %1744 = vmatmul.mubr.bf16.gmra.mrb[0].mxu0 %v1079
  %v1745 = vpop.f32.mrb[0].mxu0
  %v1746 = vadd.f32 0.0, %v1745
  %v1747 = vpop.f32.mrb[0].mxu0
  %v1748 = vpop.f32.mrb[0].mxu0
  %v1749 = vadd.f32 0.0, %v1748
  %v1750 = vpop.f32.mrb[0].mxu0
  %1751 = vmatprep.mubr.bf16.mxu0 %v1082
  %1752 = vmatmul.mubr.bf16.gmra.mrb[0].mxu0 %v1081
  %v1753 = vpop.f32.mrb[0].mxu0
  %v1754 = vadd.f32 0.0, %v1753
  %v1755 = vpop.f32.mrb[0].mxu0
  %v1756 = vpop.f32.mrb[0].mxu0
  %v1757 = vadd.f32 0.0, %v1756
  %v1758 = vpop.f32.mrb[0].mxu0
  %1759 = vmatprep.mubr.bf16.mxu0 %v1084
  %1760 = vmatmul.mubr.bf16.gmra.mrb[0].mxu0 %v1083
  %v1761 = vpop.f32.mrb[0].mxu0
  %v1762 = vadd.f32 0.0, %v1761
  %v1763 = vpop.f32.mrb[0].mxu0
  %v1764 = vpop.f32.mrb[0].mxu0
  %v1765 = vadd.f32 0.0, %v1764
  %v1766 = vpop.f32.mrb[0].mxu0
  %1767 = vmatprep.mubr.bf16.mxu0 %v1086
  %1768 = vmatmul.mubr.bf16.gmra.mrb[0].mxu0 %v1085
  %v1769 = vpop.f32.mrb[0].mxu0
  %v1770 = vadd.f32 0.0, %v1769
  %v1771 = vpop.f32.mrb[0].mxu0
  %v1772 = vpop.f32.mrb[0].mxu0
  %v1773 = vadd.f32 0.0, %v1772
  %v1774 = vpop.f32.mrb[0].mxu0
  %1775 = vmatprep.mubr.bf16.mxu0 %v1088
  %1776 = vmatmul.mubr.bf16.gmra.mrb[0].mxu0 %v1087
  %v1777 = vpop.f32.mrb[0].mxu0
  %v1778 = vadd.f32 0.0, %v1777
  %v1779 = vpop.f32.mrb[0].mxu0
  %v1780 = vpop.f32.mrb[0].mxu0
  %v1781 = vadd.f32 0.0, %v1780
  %v1782 = vpop.f32.mrb[0].mxu0
  %1783 = vmatprep.mubr.bf16.mxu0 %v1090
  %1784 = vmatmul.mubr.bf16.gmra.mrb[0].mxu0 %v1089
  %v1785 = vpop.f32.mrb[0].mxu0
  %v1786 = vadd.f32 0.0, %v1785
  %v1787 = vpop.f32.mrb[0].mxu0
  %v1788 = vpop.f32.mrb[0].mxu0
  %v1789 = vadd.f32 0.0, %v1788
  %v1790 = vpop.f32.mrb[0].mxu0
  %1791 = vmatprep.mubr.bf16.mxu0 %v1092
  %1792 = vmatmul.mubr.bf16.gmra.mrb[0].mxu0 %v1091
  %v1793 = vpop.f32.mrb[0].mxu0
  %v1794 = vadd.f32 0.0, %v1793
  %v1795 = vpop.f32.mrb[0].mxu0
  %v1796 = vpop.f32.mrb[0].mxu0
  %v1797 = vadd.f32 0.0, %v1796
  %v1798 = vpop.f32.mrb[0].mxu0
  %1799 = vmatprep.mubr.bf16.mxu0 %v1094
  %1800 = vmatmul.mubr.bf16.gmra.mrb[0].mxu0 %v1093
  %v1801 = vpop.f32.mrb[0].mxu0
  %v1802 = vadd.f32 0.0, %v1801
  %v1803 = vpop.f32.mrb[0].mxu0
  %v1804 = vpop.f32.mrb[0].mxu0
  %v1805 = vadd.f32 0.0, %v1804
  %v1806 = vpop.f32.mrb[0].mxu0
  %1807 = vmatprep.mubr.bf16.mxu0 %v1096
  %1808 = vmatmul.mubr.bf16.gmra.mrb[0].mxu0 %v1095
  %v1809 = vpop.f32.mrb[0].mxu0
  %v1810 = vadd.f32 0.0, %v1809
  %v1811 = vpop.f32.mrb[0].mxu0
  %v1812 = vpop.f32.mrb[0].mxu0
  %v1813 = vadd.f32 0.0, %v1812
  %v1814 = vpop.f32.mrb[0].mxu0
  %1815 = vmatprep.mubr.bf16.mxu0 %v1098
  %1816 = vmatmul.mubr.bf16.gmra.mrb[0].mxu0 %v1097
  %v1817 = vpop.f32.mrb[0].mxu0
  %v1818 = vadd.f32 0.0, %v1817
  %v1819 = vpop.f32.mrb[0].mxu0
  %v1820 = vpop.f32.mrb[0].mxu0
  %v1821 = vadd.f32 0.0, %v1820
  %v1822 = vpop.f32.mrb[0].mxu0
  %1823 = vmatprep.mubr.bf16.mxu0 %v1100
  %1824 = vmatmul.mubr.bf16.gmra.mrb[0].mxu0 %v1099
  %v1825 = vpop.f32.mrb[0].mxu0
  %v1826 = vadd.f32 0.0, %v1825
  %v1827 = vpop.f32.mrb[0].mxu0
  %v1828 = vpop.f32.mrb[0].mxu0
  %v1829 = vadd.f32 0.0, %v1828
  %v1830 = vpop.f32.mrb[0].mxu0
  %1831 = vmatprep.mubr.bf16.mxu0 %v1102
  %1832 = vmatmul.mubr.bf16.gmra.mrb[0].mxu0 %v1101
  %v1833 = vpop.f32.mrb[0].mxu0
  %v1834 = vadd.f32 0.0, %v1833
  %v1835 = vpop.f32.mrb[0].mxu0
  %v1836 = vpop.f32.mrb[0].mxu0
  %v1837 = vadd.f32 0.0, %v1836
  %v1838 = vpop.f32.mrb[0].mxu0
  %1839 = vmatprep.mubr.bf16.mxu0 %v1104
  %1840 = vmatmul.mubr.bf16.gmra.mrb[0].mxu0 %v1103
  %v1841 = vpop.f32.mrb[0].mxu0
  %v1842 = vadd.f32 0.0, %v1841
  %v1843 = vpop.f32.mrb[0].mxu0
  %v1844 = vpop.f32.mrb[0].mxu0
  %v1845 = vadd.f32 0.0, %v1844
  %v1846 = vpop.f32.mrb[0].mxu0
  %1847 = vmatprep.mubr.bf16.mxu0 %v1106
  %1848 = vmatmul.mubr.bf16.gmra.mrb[0].mxu0 %v1105
  %v1849 = vpop.f32.mrb[0].mxu0
  %v1850 = vadd.f32 0.0, %v1849
  %v1851 = vpop.f32.mrb[0].mxu0
  %v1852 = vpop.f32.mrb[0].mxu0
  %v1853 = vadd.f32 0.0, %v1852
  %v1854 = vpop.f32.mrb[0].mxu0
  %1855 = vmatprep.mubr.bf16.mxu0 %v1108
  %1856 = vmatmul.mubr.bf16.gmra.mrb[0].mxu0 %v1107
  %v1857 = vpop.f32.mrb[0].mxu0
  %v1858 = vadd.f32 0.0, %v1857
  %v1859 = vpop.f32.mrb[0].mxu0
  %v1860 = vpop.f32.mrb[0].mxu0
  %v1861 = vadd.f32 0.0, %v1860
  %v1862 = vpop.f32.mrb[0].mxu0
  %1863 = vmatprep.mubr.bf16.mxu0 %v1110
  %1864 = vmatmul.mubr.bf16.gmra.mrb[0].mxu0 %v1109
  %v1865 = vpop.f32.mrb[0].mxu0
  %v1866 = vadd.f32 0.0, %v1865
  %v1867 = vpop.f32.mrb[0].mxu0
  %v1868 = vpop.f32.mrb[0].mxu0
  %v1869 = vadd.f32 0.0, %v1868
  %v1870 = vpop.f32.mrb[0].mxu0
  %1871 = vmatprep.mubr.bf16.mxu0 %v1112
  %1872 = vmatmul.mubr.bf16.gmra.mrb[0].mxu0 %v1111
  %v1873 = vpop.f32.mrb[0].mxu0
  %v1874 = vadd.f32 0.0, %v1873
  %v1875 = vpop.f32.mrb[0].mxu0
  %v1876 = vpop.f32.mrb[0].mxu0
  %v1877 = vadd.f32 0.0, %v1876
  %v1878 = vpop.f32.mrb[0].mxu0
  %1879 = vmatprep.mubr.bf16.mxu0 %v1114
  %1880 = vmatmul.mubr.bf16.gmra.mrb[0].mxu0 %v1113
  %v1881 = vpop.f32.mrb[0].mxu0
  %v1882 = vadd.f32 0.0, %v1881
  %v1883 = vpop.f32.mrb[0].mxu0
  %v1884 = vpop.f32.mrb[0].mxu0
  %v1885 = vadd.f32 0.0, %v1884
  %v1886 = vpop.f32.mrb[0].mxu0
  %1887 = vmatprep.mubr.bf16.mxu0 %v1116
  %1888 = vmatmul.mubr.bf16.gmra.mrb[0].mxu0 %v1115
  %v1889 = vpop.f32.mrb[0].mxu0
  %v1890 = vadd.f32 0.0, %v1889
  %v1891 = vpop.f32.mrb[0].mxu0
  %v1892 = vpop.f32.mrb[0].mxu0
  %v1893 = vadd.f32 0.0, %v1892
  %v1894 = vpop.f32.mrb[0].mxu0
  %1895 = vmatprep.mubr.bf16.mxu0 %v1118
  %1896 = vmatmul.mubr.bf16.gmra.mrb[0].mxu0 %v1117
  %v1897 = vpop.f32.mrb[0].mxu0
  %v1898 = vadd.f32 0.0, %v1897
  %v1899 = vpop.f32.mrb[0].mxu0
  %v1900 = vpop.f32.mrb[0].mxu0
  %v1901 = vadd.f32 0.0, %v1900
  %v1902 = vpop.f32.mrb[0].mxu0
  %1903 = vmatprep.mubr.bf16.mxu0 %v1120
  %1904 = vmatmul.mubr.bf16.gmra.mrb[0].mxu0 %v1119
  %v1905 = vpop.f32.mrb[0].mxu0
  %v1906 = vadd.f32 0.0, %v1905
  %v1907 = vpop.f32.mrb[0].mxu0
  %v1908 = vpop.f32.mrb[0].mxu0
  %v1909 = vadd.f32 0.0, %v1908
  %v1910 = vpop.f32.mrb[0].mxu0
  %1911 = vmatprep.mubr.bf16.mxu0 %v1122
  %1912 = vmatmul.mubr.bf16.gmra.mrb[0].mxu0 %v1121
  %v1913 = vpop.f32.mrb[0].mxu0
  %v1914 = vadd.f32 0.0, %v1913
  %v1915 = vpop.f32.mrb[0].mxu0
  %v1916 = vpop.f32.mrb[0].mxu0
  %v1917 = vadd.f32 0.0, %v1916
  %v1918 = vpop.f32.mrb[0].mxu0
  %1919 = vmatprep.mubr.bf16.mxu0 %v1124
  %1920 = vmatmul.mubr.bf16.gmra.mrb[0].mxu0 %v1123
  %v1921 = vpop.f32.mrb[0].mxu0
  %v1922 = vadd.f32 0.0, %v1921
  %v1923 = vpop.f32.mrb[0].mxu0
  %v1924 = vpop.f32.mrb[0].mxu0
  %v1925 = vadd.f32 0.0, %v1924
  %v1926 = vpop.f32.mrb[0].mxu0
  %1927 = vmatprep.mubr.bf16.mxu0 %v1126
  %1928 = vmatmul.mubr.bf16.gmra.mrb[0].mxu0 %v1125
  %v1929 = vpop.f32.mrb[0].mxu0
  %v1930 = vadd.f32 0.0, %v1929
  %v1931 = vpop.f32.mrb[0].mxu0
  %v1932 = vpop.f32.mrb[0].mxu0
  %v1933 = vadd.f32 0.0, %v1932
  %v1934 = vpop.f32.mrb[0].mxu0
  %1935 = vmatprep.mubr.bf16.mxu0 %v1128
  %1936 = vmatmul.mubr.bf16.gmra.mrb[0].mxu0 %v1127
  %v1937 = vpop.f32.mrb[0].mxu0
  %v1938 = vadd.f32 0.0, %v1937
  %v1939 = vpop.f32.mrb[0].mxu0
  %v1940 = vpop.f32.mrb[0].mxu0
  %v1941 = vadd.f32 0.0, %v1940
  %v1942 = vpop.f32.mrb[0].mxu0
  %1943 = vmatprep.mubr.bf16.mxu0 %v1130
  %1944 = vmatmul.mubr.bf16.gmra.mrb[0].mxu0 %v1129
  %v1945 = vpop.f32.mrb[0].mxu0
  %v1946 = vadd.f32 0.0, %v1945
  %v1947 = vpop.f32.mrb[0].mxu0
  %v1948 = vpop.f32.mrb[0].mxu0
  %v1949 = vadd.f32 0.0, %v1948
  %v1950 = vpop.f32.mrb[0].mxu0
  %1951 = vmatprep.mubr.bf16.mxu0 %v1132
  %1952 = vmatmul.mubr.bf16.gmra.mrb[0].mxu0 %v1131
  %v1953 = vpop.f32.mrb[0].mxu0
  %v1954 = vadd.f32 0.0, %v1953
  %v1955 = vpop.f32.mrb[0].mxu0
  %v1956 = vpop.f32.mrb[0].mxu0
  %v1957 = vadd.f32 0.0, %v1956
  %v1958 = vpop.f32.mrb[0].mxu0
  %1959 = vmatprep.mubr.bf16.mxu0 %v1134
  %1960 = vmatmul.mubr.bf16.gmra.mrb[0].mxu0 %v1133
  %v1961 = vpop.f32.mrb[0].mxu0
  %v1962 = vadd.f32 0.0, %v1961
  %v1963 = vpop.f32.mrb[0].mxu0
  %v1964 = vpop.f32.mrb[0].mxu0
  %v1965 = vadd.f32 0.0, %v1964
  %v1966 = vpop.f32.mrb[0].mxu0
  %1967 = vmatprep.mubr.bf16.mxu0 %v1136
  %1968 = vmatmul.mubr.bf16.gmra.mrb[0].mxu0 %v1135
  %v1969 = vpop.f32.mrb[0].mxu0
  %v1970 = vadd.f32 0.0, %v1969
  %v1971 = vpop.f32.mrb[0].mxu0
  %v1972 = vpop.f32.mrb[0].mxu0
  %v1973 = vadd.f32 0.0, %v1972
  %v1974 = vpop.f32.mrb[0].mxu0
  %1975 = vmatprep.mubr.bf16.mxu0 %v1138
  %1976 = vmatmul.mubr.bf16.gmra.mrb[0].mxu0 %v1137
  %v1977 = vpop.f32.mrb[0].mxu0
  %v1978 = vadd.f32 0.0, %v1977
  %v1979 = vpop.f32.mrb[0].mxu0
  %v1980 = vpop.f32.mrb[0].mxu0
  %v1981 = vadd.f32 0.0, %v1980
  %v1982 = vpop.f32.mrb[0].mxu0
  %1983 = vmatprep.mubr.bf16.mxu0 %v1140
  %1984 = vmatmul.mubr.bf16.gmra.mrb[0].mxu0 %v1139
  %v1985 = vpop.f32.mrb[0].mxu0
  %v1986 = vadd.f32 0.0, %v1985
  %v1987 = vpop.f32.mrb[0].mxu0
  %v1988 = vpop.f32.mrb[0].mxu0
  %v1989 = vadd.f32 0.0, %v1988
  %v1990 = vpop.f32.mrb[0].mxu0
  %1991 = vmatprep.mubr.bf16.mxu0 %v1142
  %1992 = vmatmul.mubr.bf16.gmra.mrb[0].mxu0 %v1141
  %v1993 = vpop.f32.mrb[0].mxu0
  %v1994 = vadd.f32 0.0, %v1993
  %v1995 = vpop.f32.mrb[0].mxu0
  %v1996 = vpop.f32.mrb[0].mxu0
  %v1997 = vadd.f32 0.0, %v1996
  %v1998 = vpop.f32.mrb[0].mxu0
  %1999 = vmatprep.mubr.bf16.mxu0 %v1144
  %2000 = vmatmul.mubr.bf16.gmra.mrb[0].mxu0 %v1143
  %v2001 = vpop.f32.mrb[0].mxu0
  %v2002 = vadd.f32 0.0, %v2001
  %v2003 = vpop.f32.mrb[0].mxu0
  %v2004 = vpop.f32.mrb[0].mxu0
  %v2005 = vadd.f32 0.0, %v2004
  %v2006 = vpop.f32.mrb[0].mxu0
  %2007 = vmatprep.mubr.bf16.mxu0 %v1146
  %2008 = vmatmul.mubr.bf16.gmra.mrb[0].mxu0 %v1145
  %v2009 = vpop.f32.mrb[0].mxu0
  %v2010 = vadd.f32 0.0, %v2009
  %v2011 = vpop.f32.mrb[0].mxu0
  %v2012 = vpop.f32.mrb[0].mxu0
  %v2013 = vadd.f32 0.0, %v2012
  %v2014 = vpop.f32.mrb[0].mxu0
  %2015 = vmatprep.mubr.bf16.mxu0 %v1148
  %2016 = vmatmul.mubr.bf16.gmra.mrb[0].mxu0 %v1147
  %v2017 = vpop.f32.mrb[0].mxu0
  %v2018 = vadd.f32 0.0, %v2017
  %v2019 = vpop.f32.mrb[0].mxu0
  %v2020 = vpop.f32.mrb[0].mxu0
  %v2021 = vadd.f32 0.0, %v2020
  %v2022 = vpop.f32.mrb[0].mxu0
  %2023 = vmatprep.mubr.bf16.mxu0 %v1150
  %2024 = vmatmul.mubr.bf16.gmra.mrb[0].mxu0 %v1149
  %v2025 = vpop.f32.mrb[0].mxu0
  %v2026 = vadd.f32 0.0, %v2025
  %v2027 = vpop.f32.mrb[0].mxu0
  %v2028 = vpop.f32.mrb[0].mxu0
  %v2029 = vadd.f32 0.0, %v2028
  %v2030 = vpop.f32.mrb[0].mxu0
  %2031 = vmatprep.mubr.bf16.mxu0 %v1152
  %2032 = vmatmul.mubr.bf16.gmra.mrb[0].mxu0 %v1151
  %v2033 = vpop.f32.mrb[0].mxu0
  %v2034 = vadd.f32 0.0, %v2033
  %v2035 = vpop.f32.mrb[0].mxu0
  %v2036 = vpop.f32.mrb[0].mxu0
  %v2037 = vadd.f32 0.0, %v2036
  %v2038 = vpop.f32.mrb[0].mxu0
  %2039 = vmatprep.mubr.bf16.mxu0 %v1154
  %2040 = vmatmul.mubr.bf16.gmra.mrb[0].mxu0 %v1153
  %v2041 = vpop.f32.mrb[0].mxu0
  %v2042 = vadd.f32 0.0, %v2041
  %v2043 = vpop.f32.mrb[0].mxu0
  %v2044 = vpop.f32.mrb[0].mxu0
  %v2045 = vadd.f32 0.0, %v2044
  %v2046 = vpop.f32.mrb[0].mxu0
  %2047 = vmatprep.mubr.bf16.mxu0 %v1156
  %2048 = vmatmul.mubr.bf16.gmra.mrb[0].mxu0 %v1155
  %v2049 = vpop.f32.mrb[0].mxu0
  %v2050 = vadd.f32 0.0, %v2049
  %v2051 = vpop.f32.mrb[0].mxu0
  %v2052 = vpop.f32.mrb[0].mxu0
  %v2053 = vadd.f32 0.0, %v2052
  %v2054 = vpop.f32.mrb[0].mxu0
  %2055 = vmatprep.mubr.bf16.mxu0 %v1158
  %2056 = vmatmul.mubr.bf16.gmra.mrb[0].mxu0 %v1157
  %v2057 = vpop.f32.mrb[0].mxu0
  %v2058 = vadd.f32 0.0, %v2057
  %v2059 = vpop.f32.mrb[0].mxu0
  %v2060 = vpop.f32.mrb[0].mxu0
  %v2061 = vadd.f32 0.0, %v2060
  %v2062 = vpop.f32.mrb[0].mxu0
  %2063 = vmatprep.mubr.bf16.mxu0 %v1160
  %2064 = vmatmul.mubr.bf16.gmra.mrb[0].mxu0 %v1159
  %v2065 = vpop.f32.mrb[0].mxu0
  %v2066 = vadd.f32 0.0, %v2065
  %v2067 = vpop.f32.mrb[0].mxu0
  %v2068 = vpop.f32.mrb[0].mxu0
  %v2069 = vadd.f32 0.0, %v2068
  %v2070 = vpop.f32.mrb[0].mxu0
  %2071 = vmatprep.mubr.bf16.mxu0 %v1162
  %2072 = vmatmul.mubr.bf16.gmra.mrb[0].mxu0 %v1161
  %v2073 = vpop.f32.mrb[0].mxu0
  %v2074 = vadd.f32 0.0, %v2073
  %v2075 = vpop.f32.mrb[0].mxu0
  %v2076 = vpop.f32.mrb[0].mxu0
  %v2077 = vadd.f32 0.0, %v2076
  %v2078 = vpop.f32.mrb[0].mxu0
  %2079 = vmatprep.mubr.bf16.mxu0 %v1164
  %2080 = vmatmul.mubr.bf16.gmra.mrb[0].mxu0 %v1163
  %v2081 = vpop.f32.mrb[0].mxu0
  %v2082 = vadd.f32 0.0, %v2081
  %v2083 = vpop.f32.mrb[0].mxu0
  %v2084 = vpop.f32.mrb[0].mxu0
  %v2085 = vadd.f32 0.0, %v2084
  %v2086 = vpop.f32.mrb[0].mxu0
  %2087 = vmatprep.mubr.bf16.mxu0 %v1166
  %2088 = vmatmul.mubr.bf16.gmra.mrb[0].mxu0 %v1165
  %v2089 = vpop.f32.mrb[0].mxu0
  %v2090 = vadd.f32 0.0, %v2089
  %v2091 = vpop.f32.mrb[0].mxu0
  %v2092 = vpop.f32.mrb[0].mxu0
  %v2093 = vadd.f32 0.0, %v2092
  %v2094 = vpop.f32.mrb[0].mxu0
  %2095 = vmatprep.mubr.bf16.mxu0 %v1168
  %2096 = vmatmul.mubr.bf16.gmra.mrb[0].mxu0 %v1167
  %v2097 = vpop.f32.mrb[0].mxu0
  %v2098 = vadd.f32 0.0, %v2097
  %v2099 = vpop.f32.mrb[0].mxu0
  %v2100 = vpop.f32.mrb[0].mxu0
  %v2101 = vadd.f32 0.0, %v2100
  %v2102 = vpop.f32.mrb[0].mxu0
  %2103 = vmatprep.mubr.bf16.mxu0 %v1170
  %2104 = vmatmul.mubr.bf16.gmra.mrb[0].mxu0 %v1169
  %v2105 = vpop.f32.mrb[0].mxu0
  %v2106 = vadd.f32 0.0, %v2105
  %v2107 = vpop.f32.mrb[0].mxu0
  %v2108 = vpop.f32.mrb[0].mxu0
  %v2109 = vadd.f32 0.0, %v2108
  %v2110 = vpop.f32.mrb[0].mxu0
  %2111 = vmatprep.mubr.bf16.mxu0 %v1172
  %2112 = vmatmul.mubr.bf16.gmra.mrb[0].mxu0 %v1171
  %v2113 = vpop.f32.mrb[0].mxu0
  %v2114 = vadd.f32 0.0, %v2113
  %v2115 = vpop.f32.mrb[0].mxu0
  %v2116 = vpop.f32.mrb[0].mxu0
  %v2117 = vadd.f32 0.0, %v2116
  %v2118 = vpop.f32.mrb[0].mxu0
  %2119 = vmatprep.mubr.bf16.mxu0 %v1174
  %2120 = vmatmul.mubr.bf16.gmra.mrb[0].mxu0 %v1173
  %v2121 = vpop.f32.mrb[0].mxu0
  %v2122 = vadd.f32 0.0, %v2121
  %v2123 = vpop.f32.mrb[0].mxu0
  %v2124 = vpop.f32.mrb[0].mxu0
  %v2125 = vadd.f32 0.0, %v2124
  %v2126 = vpop.f32.mrb[0].mxu0
  %2127 = vmatprep.mubr.bf16.mxu0 %v1176
  %2128 = vmatmul.mubr.bf16.gmra.mrb[0].mxu0 %v1175
  %v2129 = vpop.f32.mrb[0].mxu0
  %v2130 = vadd.f32 0.0, %v2129
  %v2131 = vpop.f32.mrb[0].mxu0
  %v2132 = vpop.f32.mrb[0].mxu0
  %v2133 = vadd.f32 0.0, %v2132
  %v2134 = vpop.f32.mrb[0].mxu0
  %2135 = vmatprep.mubr.bf16.mxu0 %v1178
  %2136 = vmatmul.mubr.bf16.gmra.mrb[0].mxu0 %v1177
  %v2137 = vpop.f32.mrb[0].mxu0
  %v2138 = vadd.f32 0.0, %v2137
  %v2139 = vpop.f32.mrb[0].mxu0
  %v2140 = vpop.f32.mrb[0].mxu0
  %v2141 = vadd.f32 0.0, %v2140
  %v2142 = vpop.f32.mrb[0].mxu0
  %2143 = vmatprep.mubr.bf16.mxu0 %v1180
  %2144 = vmatmul.mubr.bf16.gmra.mrb[0].mxu0 %v1179
  %v2145 = vpop.f32.mrb[0].mxu0
  %v2146 = vadd.f32 0.0, %v2145
  %v2147 = vpop.f32.mrb[0].mxu0
  %v2148 = vpop.f32.mrb[0].mxu0
  %v2149 = vadd.f32 0.0, %v2148
  %v2150 = vpop.f32.mrb[0].mxu0
  %2151 = vmatprep.mubr.bf16.mxu0 %v1182
  %2152 = vmatmul.mubr.bf16.gmra.mrb[0].mxu0 %v1181
  %v2153 = vpop.f32.mrb[0].mxu0
  %v2154 = vadd.f32 0.0, %v2153
  %v2155 = vpop.f32.mrb[0].mxu0
  %v2156 = vpop.f32.mrb[0].mxu0
  %v2157 = vadd.f32 0.0, %v2156
  %v2158 = vpop.f32.mrb[0].mxu0
  %2159 = vmatprep.mubr.bf16.mxu0 %v1184
  %2160 = vmatmul.mubr.bf16.gmra.mrb[0].mxu0 %v1183
  %v2161 = vpop.f32.mrb[0].mxu0
  %v2162 = vadd.f32 0.0, %v2161
  %v2163 = vpop.f32.mrb[0].mxu0
  %v2164 = vpop.f32.mrb[0].mxu0
  %v2165 = vadd.f32 0.0, %v2164
  %v2166 = vpop.f32.mrb[0].mxu0
  %2167 = vmatprep.mubr.bf16.mxu0 %v1186
  %2168 = vmatmul.mubr.bf16.gmra.mrb[0].mxu0 %v1185
  %v2169 = vpop.f32.mrb[0].mxu0
  %v2170 = vadd.f32 0.0, %v2169
  %v2171 = vpop.f32.mrb[0].mxu0
  %v2172 = vpop.f32.mrb[0].mxu0
  %v2173 = vadd.f32 0.0, %v2172
  %v2174 = vpop.f32.mrb[0].mxu0
  %2175 = vmatprep.mubr.bf16.mxu0 %v1188
  %2176 = vmatmul.mubr.bf16.gmra.mrb[0].mxu0 %v1187
  %v2177 = vpop.f32.mrb[0].mxu0
  %v2178 = vadd.f32 0.0, %v2177
  %v2179 = vpop.f32.mrb[0].mxu0
  %v2180 = vpop.f32.mrb[0].mxu0
  %v2181 = vadd.f32 0.0, %v2180
  %v2182 = vpop.f32.mrb[0].mxu0
  %2183 = vmatprep.mubr.bf16.mxu0 %v1190
  %2184 = vmatmul.mubr.bf16.gmra.mrb[0].mxu0 %v1189
  %v2185 = vpop.f32.mrb[0].mxu0
  %v2186 = vadd.f32 0.0, %v2185
  %v2187 = vpop.f32.mrb[0].mxu0
  %v2188 = vpop.f32.mrb[0].mxu0
  %v2189 = vadd.f32 0.0, %v2188
  %v2190 = vpop.f32.mrb[0].mxu0
  %2191 = vmatprep.mubr.bf16.mxu0 %v1192
  %2192 = vmatmul.mubr.bf16.gmra.mrb[0].mxu0 %v1191
  %v2193 = vpop.f32.mrb[0].mxu0
  %v2194 = vadd.f32 0.0, %v2193
  %v2195 = vpop.f32.mrb[0].mxu0
  %v2196 = vpop.f32.mrb[0].mxu0
  %v2197 = vadd.f32 0.0, %v2196
  %v2198 = vpop.f32.mrb[0].mxu0
  %2199 = vmatprep.mubr.bf16.mxu0 %v1194
  %2200 = vmatmul.mubr.bf16.gmra.mrb[0].mxu0 %v1193
  %v2201 = vpop.f32.mrb[0].mxu0
  %v2202 = vadd.f32 0.0, %v2201
  %v2203 = vpop.f32.mrb[0].mxu0
  %v2204 = vpop.f32.mrb[0].mxu0
  %v2205 = vadd.f32 0.0, %v2204
  %v2206 = vpop.f32.mrb[0].mxu0
  %2207 = vmatprep.mubr.bf16.mxu0 %v1196
  %2208 = vmatmul.mubr.bf16.gmra.mrb[0].mxu0 %v1195
  %v2209 = vpop.f32.mrb[0].mxu0
  %v2210 = vadd.f32 0.0, %v2209
  %v2211 = vpop.f32.mrb[0].mxu0
  %v2212 = vpop.f32.mrb[0].mxu0
  %v2213 = vadd.f32 0.0, %v2212
  %v2214 = vpop.f32.mrb[0].mxu0
  %2215 = vmatprep.mubr.bf16.mxu0 %v1198
  %2216 = vmatmul.mubr.bf16.gmra.mrb[0].mxu0 %v1197
  %v2217 = vpop.f32.mrb[0].mxu0
  %v2218 = vadd.f32 0.0, %v2217
  %v2219 = vpop.f32.mrb[0].mxu0
  %v2220 = vpop.f32.mrb[0].mxu0
  %v2221 = vadd.f32 0.0, %v2220
  %v2222 = vpop.f32.mrb[0].mxu0
  %2223 = vmatprep.mubr.bf16.mxu0 %v1200
  %2224 = vmatmul.mubr.bf16.gmra.mrb[0].mxu0 %v1199
  %v2225 = vpop.f32.mrb[0].mxu0
  %v2226 = vadd.f32 0.0, %v2225
  %v2227 = vpop.f32.mrb[0].mxu0
  %v2228 = vpop.f32.mrb[0].mxu0
  %v2229 = vadd.f32 0.0, %v2228
  %v2230 = vpop.f32.mrb[0].mxu0
  %2231 = vmatprep.mubr.bf16.mxu0 %v1202
  %2232 = vmatmul.mubr.bf16.gmra.mrb[0].mxu0 %v1201
  %v2233 = vpop.f32.mrb[0].mxu0
  %v2234 = vadd.f32 0.0, %v2233
  %v2235 = vpop.f32.mrb[0].mxu0
  %v2236 = vpop.f32.mrb[0].mxu0
  %v2237 = vadd.f32 0.0, %v2236
  %v2238 = vpop.f32.mrb[0].mxu0
  %2239 = vmatprep.mubr.bf16.mxu0 %v1204
  %2240 = vmatmul.mubr.bf16.gmra.mrb[0].mxu0 %v1203
  %v2241 = vpop.f32.mrb[0].mxu0
  %v2242 = vadd.f32 0.0, %v2241
  %v2243 = vpop.f32.mrb[0].mxu0
  %v2244 = vpop.f32.mrb[0].mxu0
  %v2245 = vadd.f32 0.0, %v2244
  %v2246 = vpop.f32.mrb[0].mxu0
  %2247 = vmatprep.mubr.bf16.mxu0 %v1206
  %2248 = vmatmul.mubr.bf16.gmra.mrb[0].mxu0 %v1205
  %v2249 = vpop.f32.mrb[0].mxu0
  %v2250 = vadd.f32 0.0, %v2249
  %v2251 = vpop.f32.mrb[0].mxu0
  %v2252 = vpop.f32.mrb[0].mxu0
  %v2253 = vadd.f32 0.0, %v2252
  %v2254 = vpop.f32.mrb[0].mxu0
  %2255 = vmatprep.mubr.bf16.mxu0 %v1208
  %2256 = vmatmul.mubr.bf16.gmra.mrb[0].mxu0 %v1207
  %v2257 = vpop.f32.mrb[0].mxu0
  %v2258 = vadd.f32 0.0, %v2257
  %v2259 = vpop.f32.mrb[0].mxu0
  %v2260 = vpop.f32.mrb[0].mxu0
  %v2261 = vadd.f32 0.0, %v2260
  %v2262 = vpop.f32.mrb[0].mxu0
  %2263 = vmatprep.mubr.bf16.mxu0 %v1210
  %2264 = vmatmul.mubr.bf16.gmra.mrb[0].mxu0 %v1209
  %v2265 = vpop.f32.mrb[0].mxu0
  %v2266 = vadd.f32 0.0, %v2265
  %v2267 = vpop.f32.mrb[0].mxu0
  %v2268 = vpop.f32.mrb[0].mxu0
  %v2269 = vadd.f32 0.0, %v2268
  %v2270 = vpop.f32.mrb[0].mxu0
  %2271 = vmatprep.mubr.bf16.mxu0 %v1212
  %2272 = vmatmul.mubr.bf16.gmra.mrb[0].mxu0 %v1211
  %v2273 = vpop.f32.mrb[0].mxu0
  %v2274 = vadd.f32 0.0, %v2273
  %v2275 = vpop.f32.mrb[0].mxu0
  %v2276 = vpop.f32.mrb[0].mxu0
  %v2277 = vadd.f32 0.0, %v2276
  %v2278 = vpop.f32.mrb[0].mxu0
  %2279 = vmatprep.mubr.bf16.mxu0 %v1214
  %2280 = vmatmul.mubr.bf16.gmra.mrb[0].mxu0 %v1213
  %v2281 = vpop.f32.mrb[0].mxu0
  %v2282 = vadd.f32 0.0, %v2281
  %v2283 = vpop.f32.mrb[0].mxu0
  %v2284 = vpop.f32.mrb[0].mxu0
  %v2285 = vadd.f32 0.0, %v2284
  %v2286 = vpop.f32.mrb[0].mxu0
  %2287 = vmatprep.mubr.bf16.mxu0 %v1216
  %2288 = vmatmul.mubr.bf16.gmra.mrb[0].mxu0 %v1215
  %v2289 = vpop.f32.mrb[0].mxu0
  %v2290 = vadd.f32 0.0, %v2289
  %v2291 = vpop.f32.mrb[0].mxu0
  %v2292 = vpop.f32.mrb[0].mxu0
  %v2293 = vadd.f32 0.0, %v2292
  %v2294 = vpop.f32.mrb[0].mxu0
  %2295 = vmatprep.mubr.bf16.mxu0 %v1218
  %2296 = vmatmul.mubr.bf16.gmra.mrb[0].mxu0 %v1217
  %v2297 = vpop.f32.mrb[0].mxu0
  %v2298 = vadd.f32 0.0, %v2297
  %v2299 = vpop.f32.mrb[0].mxu0
  %v2300 = vpop.f32.mrb[0].mxu0
  %v2301 = vadd.f32 0.0, %v2300
  %v2302 = vpop.f32.mrb[0].mxu0
  %2303 = vmatprep.mubr.bf16.mxu0 %v1220
  %2304 = vmatmul.mubr.bf16.gmra.mrb[0].mxu0 %v1219
  %v2305 = vpop.f32.mrb[0].mxu0
  %v2306 = vadd.f32 0.0, %v2305
  %v2307 = vpop.f32.mrb[0].mxu0
  %v2308 = vpop.f32.mrb[0].mxu0
  %v2309 = vadd.f32 0.0, %v2308
  %v2310 = vpop.f32.mrb[0].mxu0
  %2311 = vmatprep.mubr.bf16.mxu0 %v1222
  %2312 = vmatmul.mubr.bf16.gmra.mrb[0].mxu0 %v1221
  %v2313 = vpop.f32.mrb[0].mxu0
  %v2314 = vadd.f32 0.0, %v2313
  %v2315 = vpop.f32.mrb[0].mxu0
  %v2316 = vpop.f32.mrb[0].mxu0
  %v2317 = vadd.f32 0.0, %v2316
  %v2318 = vpop.f32.mrb[0].mxu0
  %2319 = vmatprep.mubr.bf16.mxu0 %v1224
  %2320 = vmatmul.mubr.bf16.gmra.mrb[0].mxu0 %v1223
  %v2321 = vpop.f32.mrb[0].mxu0
  %v2322 = vadd.f32 0.0, %v2321
  %v2323 = vpop.f32.mrb[0].mxu0
  %v2324 = vpop.f32.mrb[0].mxu0
  %v2325 = vadd.f32 0.0, %v2324
  %v2326 = vpop.f32.mrb[0].mxu0
  %2327 = vmatprep.mubr.bf16.mxu0 %v1226
  %2328 = vmatmul.mubr.bf16.gmra.mrb[0].mxu0 %v1225
  %v2329 = vpop.f32.mrb[0].mxu0
  %v2330 = vadd.f32 0.0, %v2329
  %v2331 = vpop.f32.mrb[0].mxu0
  %v2332 = vpop.f32.mrb[0].mxu0
  %v2333 = vadd.f32 0.0, %v2332
  %v2334 = vpop.f32.mrb[0].mxu0
  %2335 = vmatprep.mubr.bf16.mxu0 %v1228
  %2336 = vmatmul.mubr.bf16.gmra.mrb[0].mxu0 %v1227
  %v2337 = vpop.f32.mrb[0].mxu0
  %v2338 = vadd.f32 0.0, %v2337
  %v2339 = vpop.f32.mrb[0].mxu0
  %v2340 = vpop.f32.mrb[0].mxu0
  %v2341 = vadd.f32 0.0, %v2340
  %v2342 = vpop.f32.mrb[0].mxu0
  %2343 = vmatprep.mubr.bf16.mxu0 %v1230
  %2344 = vmatmul.mubr.bf16.gmra.mrb[0].mxu0 %v1229
  %v2345 = vpop.f32.mrb[0].mxu0
  %v2346 = vadd.f32 0.0, %v2345
  %v2347 = vpop.f32.mrb[0].mxu0
  %v2348 = vpop.f32.mrb[0].mxu0
  %v2349 = vadd.f32 0.0, %v2348
  %v2350 = vpop.f32.mrb[0].mxu0
  %2351 = vmatprep.mubr.bf16.mxu0 %v1232
  %2352 = vmatmul.mubr.bf16.gmra.mrb[0].mxu0 %v1231
  %v2353 = vpop.f32.mrb[0].mxu0
  %v2354 = vadd.f32 0.0, %v2353
  %v2355 = vpop.f32.mrb[0].mxu0
  %v2356 = vpop.f32.mrb[0].mxu0
  %v2357 = vadd.f32 0.0, %v2356
  %v2358 = vpop.f32.mrb[0].mxu0
  %2359 = vmatprep.mubr.bf16.mxu0 %v1234
  %2360 = vmatmul.mubr.bf16.gmra.mrb[0].mxu0 %v1233
  %v2361 = vpop.f32.mrb[0].mxu0
  %v2362 = vadd.f32 0.0, %v2361
  %v2363 = vpop.f32.mrb[0].mxu0
  %v2364 = vpop.f32.mrb[0].mxu0
  %v2365 = vadd.f32 0.0, %v2364
  %v2366 = vpop.f32.mrb[0].mxu0
  %2367 = vmatprep.mubr.bf16.mxu0 %v1236
  %2368 = vmatmul.mubr.bf16.gmra.mrb[0].mxu0 %v1235
  %v2369 = vpop.f32.mrb[0].mxu0
  %v2370 = vadd.f32 0.0, %v2369
  %v2371 = vpop.f32.mrb[0].mxu0
  %v2372 = vpop.f32.mrb[0].mxu0
  %v2373 = vadd.f32 0.0, %v2372
  %v2374 = vpop.f32.mrb[0].mxu0
  %2375 = vmatprep.mubr.bf16.mxu0 %v1238
  %2376 = vmatmul.mubr.bf16.gmra.mrb[0].mxu0 %v1237
  %v2377 = vpop.f32.mrb[0].mxu0
  %v2378 = vadd.f32 0.0, %v2377
  %v2379 = vpop.f32.mrb[0].mxu0
  %v2380 = vpop.f32.mrb[0].mxu0
  %v2381 = vadd.f32 0.0, %v2380
  %v2382 = vpop.f32.mrb[0].mxu0
  %2383 = vmatprep.mubr.bf16.mxu0 %v1240
  %2384 = vmatmul.mubr.bf16.gmra.mrb[0].mxu0 %v1239
  %v2385 = vpop.f32.mrb[0].mxu0
  %v2386 = vadd.f32 0.0, %v2385
  %v2387 = vpop.f32.mrb[0].mxu0
  %v2388 = vpop.f32.mrb[0].mxu0
  %v2389 = vadd.f32 0.0, %v2388
  %v2390 = vpop.f32.mrb[0].mxu0
  %2391 = vmatprep.mubr.bf16.mxu0 %v1242
  %2392 = vmatmul.mubr.bf16.gmra.mrb[0].mxu0 %v1241
  %v2393 = vpop.f32.mrb[0].mxu0
  %v2394 = vadd.f32 0.0, %v2393
  %v2395 = vpop.f32.mrb[0].mxu0
  %v2396 = vpop.f32.mrb[0].mxu0
  %v2397 = vadd.f32 0.0, %v2396
  %v2398 = vpop.f32.mrb[0].mxu0
  %2399 = vmatprep.mubr.bf16.mxu0 %v1244
  %2400 = vmatmul.mubr.bf16.gmra.mrb[0].mxu0 %v1243
  %v2401 = vpop.f32.mrb[0].mxu0
  %v2402 = vadd.f32 0.0, %v2401
  %v2403 = vpop.f32.mrb[0].mxu0
  %v2404 = vpop.f32.mrb[0].mxu0
  %v2405 = vadd.f32 0.0, %v2404
  %v2406 = vpop.f32.mrb[0].mxu0
  %2407 = vmatprep.mubr.bf16.mxu0 %v1246
  %2408 = vmatmul.mubr.bf16.gmra.mrb[0].mxu0 %v1245
  %v2409 = vpop.f32.mrb[0].mxu0
  %v2410 = vadd.f32 0.0, %v2409
  %v2411 = vpop.f32.mrb[0].mxu0
  %v2412 = vpop.f32.mrb[0].mxu0
  %v2413 = vadd.f32 0.0, %v2412
  %v2414 = vpop.f32.mrb[0].mxu0
  %2415 = vmatprep.mubr.bf16.mxu0 %v1248
  %2416 = vmatmul.mubr.bf16.gmra.mrb[0].mxu0 %v1247
  %v2417 = vpop.f32.mrb[0].mxu0
  %v2418 = vadd.f32 0.0, %v2417
  %v2419 = vpop.f32.mrb[0].mxu0
  %v2420 = vpop.f32.mrb[0].mxu0
  %v2421 = vadd.f32 0.0, %v2420
  %v2422 = vpop.f32.mrb[0].mxu0
  %2423 = vmatprep.mubr.bf16.mxu0 %v1250
  %2424 = vmatmul.mubr.bf16.gmra.mrb[0].mxu0 %v1249
  %v2425 = vpop.f32.mrb[0].mxu0
  %v2426 = vadd.f32 0.0, %v2425
  %v2427 = vpop.f32.mrb[0].mxu0
  %v2428 = vpop.f32.mrb[0].mxu0
  %v2429 = vadd.f32 0.0, %v2428
  %v2430 = vpop.f32.mrb[0].mxu0
  %2431 = vmatprep.mubr.bf16.mxu0 %v1252
  %2432 = vmatmul.mubr.bf16.gmra.mrb[0].mxu0 %v1251
  %v2433 = vpop.f32.mrb[0].mxu0
  %v2434 = vadd.f32 0.0, %v2433
  %v2435 = vpop.f32.mrb[0].mxu0
  %v2436 = vpop.f32.mrb[0].mxu0
  %v2437 = vadd.f32 0.0, %v2436
  %v2438 = vpop.f32.mrb[0].mxu0
  %2439 = vmatprep.mubr.bf16.mxu0 %v1254
  %2440 = vmatmul.mubr.bf16.gmra.mrb[0].mxu0 %v1253
  %v2441 = vpop.f32.mrb[0].mxu0
  %v2442 = vadd.f32 0.0, %v2441
  %v2443 = vpop.f32.mrb[0].mxu0
  %v2444 = vpop.f32.mrb[0].mxu0
  %v2445 = vadd.f32 0.0, %v2444
  %v2446 = vpop.f32.mrb[0].mxu0
  %2447 = vmatprep.mubr.bf16.mxu0 %v1256
  %2448 = vmatmul.mubr.bf16.gmra.mrb[0].mxu0 %v1255
  %v2449 = vpop.f32.mrb[0].mxu0
  %v2450 = vadd.f32 0.0, %v2449
  %v2451 = vpop.f32.mrb[0].mxu0
  %v2452 = vpop.f32.mrb[0].mxu0
  %v2453 = vadd.f32 0.0, %v2452
  %v2454 = vpop.f32.mrb[0].mxu0
  %2455 = vmatprep.mubr.bf16.mxu0 %v1258
  %2456 = vmatmul.mubr.bf16.gmra.mrb[0].mxu0 %v1257
  %v2457 = vpop.f32.mrb[0].mxu0
  %v2458 = vadd.f32 0.0, %v2457
  %v2459 = vpop.f32.mrb[0].mxu0
  %v2460 = vpop.f32.mrb[0].mxu0
  %v2461 = vadd.f32 0.0, %v2460
  %v2462 = vpop.f32.mrb[0].mxu0
  %2463 = vmatprep.mubr.bf16.mxu0 %v1260
  %2464 = vmatmul.mubr.bf16.gmra.mrb[0].mxu0 %v1259
  %v2465 = vpop.f32.mrb[0].mxu0
  %v2466 = vadd.f32 0.0, %v2465
  %v2467 = vpop.f32.mrb[0].mxu0
  %v2468 = vpop.f32.mrb[0].mxu0
  %v2469 = vadd.f32 0.0, %v2468
  %v2470 = vpop.f32.mrb[0].mxu0
  %2471 = vmatprep.mubr.bf16.mxu0 %v1262
  %2472 = vmatmul.mubr.bf16.gmra.mrb[0].mxu0 %v1261
  %v2473 = vpop.f32.mrb[0].mxu0
  %v2474 = vadd.f32 0.0, %v2473
  %v2475 = vpop.f32.mrb[0].mxu0
  %v2476 = vpop.f32.mrb[0].mxu0
  %v2477 = vadd.f32 0.0, %v2476
  %v2478 = vpop.f32.mrb[0].mxu0
  %2479 = vmatprep.mubr.bf16.mxu0 %v1264
  %2480 = vmatmul.mubr.bf16.gmra.mrb[0].mxu0 %v1263
  %v2481 = vpop.f32.mrb[0].mxu0
  %v2482 = vadd.f32 0.0, %v2481
  %v2483 = vpop.f32.mrb[0].mxu0
  %v2484 = vpop.f32.mrb[0].mxu0
  %v2485 = vadd.f32 0.0, %v2484
  %v2486 = vpop.f32.mrb[0].mxu0
  %2487 = vmatprep.mubr.bf16.mxu0 %v1266
  %2488 = vmatmul.mubr.bf16.gmra.mrb[0].mxu0 %v1265
  %v2489 = vpop.f32.mrb[0].mxu0
  %v2490 = vadd.f32 0.0, %v2489
  %v2491 = vpop.f32.mrb[0].mxu0
  %v2492 = vpop.f32.mrb[0].mxu0
  %v2493 = vadd.f32 0.0, %v2492
  %v2494 = vpop.f32.mrb[0].mxu0
  %2495 = vmatprep.mubr.bf16.mxu0 %v1268
  %2496 = vmatmul.mubr.bf16.gmra.mrb[0].mxu0 %v1267
  %v2497 = vpop.f32.mrb[0].mxu0
  %v2498 = vadd.f32 0.0, %v2497
  %v2499 = vpop.f32.mrb[0].mxu0
  %v2500 = vpop.f32.mrb[0].mxu0
  %v2501 = vadd.f32 0.0, %v2500
  %v2502 = vpop.f32.mrb[0].mxu0
  %2503 = vmatprep.mubr.bf16.mxu0 %v1270
  %2504 = vmatmul.mubr.bf16.gmra.mrb[0].mxu0 %v1269
  %v2505 = vpop.f32.mrb[0].mxu0
  %v2506 = vadd.f32 0.0, %v2505
  %v2507 = vpop.f32.mrb[0].mxu0
  %v2508 = vpop.f32.mrb[0].mxu0
  %v2509 = vadd.f32 0.0, %v2508
  %v2510 = vpop.f32.mrb[0].mxu0
  %2511 = vmatprep.mubr.bf16.mxu0 %v1272
  %2512 = vmatmul.mubr.bf16.gmra.mrb[0].mxu0 %v1271
  %v2513 = vpop.f32.mrb[0].mxu0
  %v2514 = vadd.f32 0.0, %v2513
  %v2515 = vpop.f32.mrb[0].mxu0
  %v2516 = vpop.f32.mrb[0].mxu0
  %v2517 = vadd.f32 0.0, %v2516
  %v2518 = vpop.f32.mrb[0].mxu0
  %2519 = vmatprep.mubr.bf16.mxu0 %v1274
  %2520 = vmatmul.mubr.bf16.gmra.mrb[0].mxu0 %v1273
  %v2521 = vpop.f32.mrb[0].mxu0
  %v2522 = vadd.f32 0.0, %v2521
  %v2523 = vpop.f32.mrb[0].mxu0
  %v2524 = vpop.f32.mrb[0].mxu0
  %v2525 = vadd.f32 0.0, %v2524
  %v2526 = vpop.f32.mrb[0].mxu0
  %2527 = vmatprep.mubr.bf16.mxu0 %v1276
  %2528 = vmatmul.mubr.bf16.gmra.mrb[0].mxu0 %v1275
  %v2529 = vpop.f32.mrb[0].mxu0
  %v2530 = vadd.f32 0.0, %v2529
  %v2531 = vpop.f32.mrb[0].mxu0
  %v2532 = vpop.f32.mrb[0].mxu0
  %v2533 = vadd.f32 0.0, %v2532
  %v2534 = vpop.f32.mrb[0].mxu0
  %2535 = vmatprep.mubr.bf16.mxu0 %v1278
  %2536 = vmatmul.mubr.bf16.gmra.mrb[0].mxu0 %v1277
  %v2537 = vpop.f32.mrb[0].mxu0
  %v2538 = vadd.f32 0.0, %v2537
  %v2539 = vpop.f32.mrb[0].mxu0
  %v2540 = vpop.f32.mrb[0].mxu0
  %v2541 = vadd.f32 0.0, %v2540
  %v2542 = vpop.f32.mrb[0].mxu0
  %2543 = vmatprep.mubr.bf16.mxu0 %v1280
  %2544 = vmatmul.mubr.bf16.gmra.mrb[0].mxu0 %v1279
  %v2545 = vpop.f32.mrb[0].mxu0
  %v2546 = vadd.f32 0.0, %v2545
  %v2547 = vpop.f32.mrb[0].mxu0
  %v2548 = vpop.f32.mrb[0].mxu0
  %v2549 = vadd.f32 0.0, %v2548
  %v2550 = vpop.f32.mrb[0].mxu0
  %2551 = vmatprep.mubr.bf16.mxu0 %v1282
  %2552 = vmatmul.mubr.bf16.gmra.mrb[0].mxu0 %v1281
  %v2553 = vpop.f32.mrb[0].mxu0
  %v2554 = vadd.f32 0.0, %v2553
  %v2555 = vpop.f32.mrb[0].mxu0
  %v2556 = vpop.f32.mrb[0].mxu0
  %v2557 = vadd.f32 0.0, %v2556
  %v2558 = vpop.f32.mrb[0].mxu0
  %2559 = vmatprep.mubr.bf16.mxu0 %v1284
  %2560 = vmatmul.mubr.bf16.gmra.mrb[0].mxu0 %v1283
  %v2561 = vpop.f32.mrb[0].mxu0
  %v2562 = vadd.f32 0.0, %v2561
  %v2563 = vpop.f32.mrb[0].mxu0
  %v2564 = vpop.f32.mrb[0].mxu0
  %v2565 = vadd.f32 0.0, %v2564
  %v2566 = vpop.f32.mrb[0].mxu0
  %2567 = vmatprep.mubr.bf16.mxu0 %v1286
  %2568 = vmatmul.mubr.bf16.gmra.mrb[0].mxu0 %v1285
  %v2569 = vpop.f32.mrb[0].mxu0
  %v2570 = vadd.f32 0.0, %v2569
  %v2571 = vpop.f32.mrb[0].mxu0
  %v2572 = vpop.f32.mrb[0].mxu0
  %v2573 = vadd.f32 0.0, %v2572
  %v2574 = vpop.f32.mrb[0].mxu0
  %2575 = vmatprep.mubr.bf16.mxu0 %v1288
  %2576 = vmatmul.mubr.bf16.gmra.mrb[0].mxu0 %v1287
  %v2577 = vpop.f32.mrb[0].mxu0
  %v2578 = vadd.f32 0.0, %v2577
  %v2579 = vpop.f32.mrb[0].mxu0
  %v2580 = vpop.f32.mrb[0].mxu0
  %v2581 = vadd.f32 0.0, %v2580
  %v2582 = vpop.f32.mrb[0].mxu0
  %2583 = vmatprep.mubr.bf16.mxu0 %v1290
  %2584 = vmatmul.mubr.bf16.gmra.mrb[0].mxu0 %v1289
  %v2585 = vpop.f32.mrb[0].mxu0
  %v2586 = vadd.f32 0.0, %v2585
  %v2587 = vpop.f32.mrb[0].mxu0
  %v2588 = vpop.f32.mrb[0].mxu0
  %v2589 = vadd.f32 0.0, %v2588
  %v2590 = vpop.f32.mrb[0].mxu0
  %2591 = vmatprep.mubr.bf16.mxu0 %v1292
  %2592 = vmatmul.mubr.bf16.gmra.mrb[0].mxu0 %v1291
  %v2593 = vpop.f32.mrb[0].mxu0
  %v2594 = vadd.f32 0.0, %v2593
  %v2595 = vpop.f32.mrb[0].mxu0
  %v2596 = vpop.f32.mrb[0].mxu0
  %v2597 = vadd.f32 0.0, %v2596
  %v2598 = vpop.f32.mrb[0].mxu0
  %2599 = vmatprep.mubr.bf16.mxu0 %v1294
  %2600 = vmatmul.mubr.bf16.gmra.mrb[0].mxu0 %v1293
  %v2601 = vpop.f32.mrb[0].mxu0
  %v2602 = vadd.f32 0.0, %v2601
  %v2603 = vpop.f32.mrb[0].mxu0
  %v2604 = vpop.f32.mrb[0].mxu0
  %v2605 = vadd.f32 0.0, %v2604
  %v2606 = vpop.f32.mrb[0].mxu0
  %2607 = vmatprep.mubr.bf16.mxu0 %v1296
  %2608 = vmatmul.mubr.bf16.gmra.mrb[0].mxu0 %v1295
  %v2609 = vpop.f32.mrb[0].mxu0
  %v2610 = vadd.f32 0.0, %v2609
  %v2611 = vpop.f32.mrb[0].mxu0
  %v2612 = vpop.f32.mrb[0].mxu0
  %v2613 = vadd.f32 0.0, %v2612
  %v2614 = vpop.f32.mrb[0].mxu0
  %2615 = vmatprep.mubr.bf16.mxu0 %v1298
  %2616 = vmatmul.mubr.bf16.gmra.mrb[0].mxu0 %v1297
  %v2617 = vpop.f32.mrb[0].mxu0
  %v2618 = vadd.f32 0.0, %v2617
  %v2619 = vpop.f32.mrb[0].mxu0
  %v2620 = vpop.f32.mrb[0].mxu0
  %v2621 = vadd.f32 0.0, %v2620
  %v2622 = vpop.f32.mrb[0].mxu0
  %2623 = vmatprep.mubr.bf16.mxu0 %v1300
  %2624 = vmatmul.mubr.bf16.gmra.mrb[0].mxu0 %v1299
  %v2625 = vpop.f32.mrb[0].mxu0
  %v2626 = vadd.f32 0.0, %v2625
  %v2627 = vpop.f32.mrb[0].mxu0
  %v2628 = vpop.f32.mrb[0].mxu0
  %v2629 = vadd.f32 0.0, %v2628
  %v2630 = vpop.f32.mrb[0].mxu0
  %2631 = vmatprep.mubr.bf16.mxu0 %v1302
  %2632 = vmatmul.mubr.bf16.gmra.mrb[0].mxu0 %v1301
  %v2633 = vpop.f32.mrb[0].mxu0
  %v2634 = vadd.f32 0.0, %v2633
  %v2635 = vpop.f32.mrb[0].mxu0
  %v2636 = vpop.f32.mrb[0].mxu0
  %v2637 = vadd.f32 0.0, %v2636
  %v2638 = vpop.f32.mrb[0].mxu0
  %2639 = vmatprep.mubr.bf16.mxu0 %v1304
  %2640 = vmatmul.mubr.bf16.gmra.mrb[0].mxu0 %v1303
  %v2641 = vpop.f32.mrb[0].mxu0
  %v2642 = vadd.f32 0.0, %v2641
  %v2643 = vpop.f32.mrb[0].mxu0
  %v2644 = vpop.f32.mrb[0].mxu0
  %v2645 = vadd.f32 0.0, %v2644
  %v2646 = vpop.f32.mrb[0].mxu0
  %2647 = vmatprep.mubr.bf16.mxu0 %v1306
  %2648 = vmatmul.mubr.bf16.gmra.mrb[0].mxu0 %v1305
  %v2649 = vpop.f32.mrb[0].mxu0
  %v2650 = vadd.f32 0.0, %v2649
  %v2651 = vpop.f32.mrb[0].mxu0
  %v2652 = vpop.f32.mrb[0].mxu0
  %v2653 = vadd.f32 0.0, %v2652
  %v2654 = vpop.f32.mrb[0].mxu0
  %2655 = vmatprep.mubr.bf16.mxu0 %v1308
  %2656 = vmatmul.mubr.bf16.gmra.mrb[0].mxu0 %v1307
  %v2657 = vpop.f32.mrb[0].mxu0
  %v2658 = vadd.f32 0.0, %v2657
  %v2659 = vpop.f32.mrb[0].mxu0
  %v2660 = vpop.f32.mrb[0].mxu0
  %v2661 = vadd.f32 0.0, %v2660
  %v2662 = vpop.f32.mrb[0].mxu0
  %2663 = vmatprep.mubr.bf16.mxu0 %v1310
  %2664 = vmatmul.mubr.bf16.gmra.mrb[0].mxu0 %v1309
  %v2665 = vpop.f32.mrb[0].mxu0
  %v2666 = vadd.f32 0.0, %v2665
  %v2667 = vpop.f32.mrb[0].mxu0
  %v2668 = vpop.f32.mrb[0].mxu0
  %v2669 = vadd.f32 0.0, %v2668
  %v2670 = vpop.f32.mrb[0].mxu0
  %2671 = vmatprep.mubr.bf16.mxu0 %v1312
  %2672 = vmatmul.mubr.bf16.gmra.mrb[0].mxu0 %v1311
  %v2673 = vpop.f32.mrb[0].mxu0
  %v2674 = vadd.f32 0.0, %v2673
  %v2675 = vpop.f32.mrb[0].mxu0
  %v2676 = vpop.f32.mrb[0].mxu0
  %v2677 = vadd.f32 0.0, %v2676
  %v2678 = vpop.f32.mrb[0].mxu0
  %2679 = vmatprep.mubr.bf16.mxu0 %v1314
  %2680 = vmatmul.mubr.bf16.gmra.mrb[0].mxu0 %v1313
  %v2681 = vpop.f32.mrb[0].mxu0
  %v2682 = vadd.f32 0.0, %v2681
  %v2683 = vpop.f32.mrb[0].mxu0
  %v2684 = vpop.f32.mrb[0].mxu0
  %v2685 = vadd.f32 0.0, %v2684
  %v2686 = vpop.f32.mrb[0].mxu0
  %2687 = vmatprep.mubr.bf16.mxu0 %v1316
  %2688 = vmatmul.mubr.bf16.gmra.mrb[0].mxu0 %v1315
  %v2689 = vpop.f32.mrb[0].mxu0
  %v2690 = vadd.f32 0.0, %v2689
  %v2691 = vpop.f32.mrb[0].mxu0
  %v2692 = vpop.f32.mrb[0].mxu0
  %v2693 = vadd.f32 0.0, %v2692
  %v2694 = vpop.f32.mrb[0].mxu0
  %2695 = vmatprep.mubr.bf16.mxu0 %v1318
  %2696 = vmatmul.mubr.bf16.gmra.mrb[0].mxu0 %v1317
  %v2697 = vpop.f32.mrb[0].mxu0
  %v2698 = vadd.f32 0.0, %v2697
  %v2699 = vpop.f32.mrb[0].mxu0
  %v2700 = vpop.f32.mrb[0].mxu0
  %v2701 = vadd.f32 0.0, %v2700
  %v2702 = vpop.f32.mrb[0].mxu0
  %2703 = vmatprep.mubr.bf16.mxu0 %v1320
  %2704 = vmatmul.mubr.bf16.gmra.mrb[0].mxu0 %v1319
  %v2705 = vpop.f32.mrb[0].mxu0
  %v2706 = vadd.f32 0.0, %v2705
  %v2707 = vpop.f32.mrb[0].mxu0
  %v2708 = vpop.f32.mrb[0].mxu0
  %v2709 = vadd.f32 0.0, %v2708
  %v2710 = vpop.f32.mrb[0].mxu0
  %2711 = vmatprep.mubr.bf16.mxu0 %v1322
  %2712 = vmatmul.mubr.bf16.gmra.mrb[0].mxu0 %v1321
  %v2713 = vpop.f32.mrb[0].mxu0
  %v2714 = vadd.f32 0.0, %v2713
  %v2715 = vpop.f32.mrb[0].mxu0
  %v2716 = vpop.f32.mrb[0].mxu0
  %v2717 = vadd.f32 0.0, %v2716
  %v2718 = vpop.f32.mrb[0].mxu0
  %2719 = vmatprep.mubr.bf16.mxu0 %v1324
  %2720 = vmatmul.mubr.bf16.gmra.mrb[0].mxu0 %v1323
  %v2721 = vpop.f32.mrb[0].mxu0
  %v2722 = vadd.f32 0.0, %v2721
  %v2723 = vpop.f32.mrb[0].mxu0
  %v2724 = vpop.f32.mrb[0].mxu0
  %v2725 = vadd.f32 0.0, %v2724
  %v2726 = vpop.f32.mrb[0].mxu0
  %2727 = vmatprep.mubr.bf16.mxu0 %v1326
  %2728 = vmatmul.mubr.bf16.gmra.mrb[0].mxu0 %v1325
  %v2729 = vpop.f32.mrb[0].mxu0
  %v2730 = vadd.f32 0.0, %v2729
  %v2731 = vpop.f32.mrb[0].mxu0
  %v2732 = vpop.f32.mrb[0].mxu0
  %v2733 = vadd.f32 0.0, %v2732
  %v2734 = vpop.f32.mrb[0].mxu0
  %2735 = vdwg.mxu0
  %2736 = vst [vmem:[%s2] sm:$0xff] %v1714
  %2737 = vst [vmem:[%s2 + $0x8] sm:$0xff] %v1717
  %2738 = vst [vmem:[%s2 + $0x10] sm:$0xff] %v1722
  %2739 = vst [vmem:[%s2 + $0x18] sm:$0xff] %v1725
  %2740 = vst [vmem:[%s2 + $0x20] sm:$0xff] %v1730
  %2741 = vst [vmem:[%s2 + $0x28] sm:$0xff] %v1733
  %2742 = vst [vmem:[%s2 + $0x30] sm:$0xff] %v1738
  %2743 = vst [vmem:[%s2 + $0x38] sm:$0xff] %v1741
  %2744 = vst [vmem:[%s2 + $0x40] sm:$0xff] %v1746
  %2745 = vst [vmem:[%s2 + $0x48] sm:$0xff] %v1749
  %2746 = vst [vmem:[%s2 + $0x50] sm:$0xff] %v1754
  %2747 = vst [vmem:[%s2 + $0x58] sm:$0xff] %v1757
  %2748 = vst [vmem:[%s2 + $0x60] sm:$0xff] %v1762
  %2749 = vst [vmem:[%s2 + $0x68] sm:$0xff] %v1765
  %2750 = vst [vmem:[%s2 + $0x70] sm:$0xff] %v1770
  %2751 = vst [vmem:[%s2 + $0x78] sm:$0xff] %v1773
  %2752 = vst [vmem:[%s2 + $0x80] sm:$0xff] %v1778
  %2753 = vst [vmem:[%s2 + $0x88] sm:$0xff] %v1781
  %2754 = vst [vmem:[%s2 + $0x90] sm:$0xff] %v1786
  %2755 = vst [vmem:[%s2 + $0x98] sm:$0xff] %v1789
  %2756 = vst [vmem:[%s2 + $0xa0] sm:$0xff] %v1794
  %2757 = vst [vmem:[%s2 + $0xa8] sm:$0xff] %v1797
  %2758 = vst [vmem:[%s2 + $0xb0] sm:$0xff] %v1802
  %2759 = vst [vmem:[%s2 + $0xb8] sm:$0xff] %v1805
  %2760 = vst [vmem:[%s2 + $0xc0] sm:$0xff] %v1810
  %2761 = vst [vmem:[%s2 + $0xc8] sm:$0xff] %v1813
  %2762 = vst [vmem:[%s2 + $0xd0] sm:$0xff] %v1818
  %2763 = vst [vmem:[%s2 + $0xd8] sm:$0xff] %v1821
  %2764 = vst [vmem:[%s2 + $0xe0] sm:$0xff] %v1826
  %2765 = vst [vmem:[%s2 + $0xe8] sm:$0xff] %v1829
  %2766 = vst [vmem:[%s2 + $0xf0] sm:$0xff] %v1834
  %2767 = vst [vmem:[%s2 + $0xf8] sm:$0xff] %v1837
  %2768 = vst [vmem:[%s2 + $0x100] sm:$0xff] %v1842
  %2769 = vst [vmem:[%s2 + $0x108] sm:$0xff] %v1845
  %2770 = vst [vmem:[%s2 + $0x110] sm:$0xff] %v1850
  %2771 = vst [vmem:[%s2 + $0x118] sm:$0xff] %v1853
  %2772 = vst [vmem:[%s2 + $0x120] sm:$0xff] %v1858
  %2773 = vst [vmem:[%s2 + $0x128] sm:$0xff] %v1861
  %2774 = vst [vmem:[%s2 + $0x130] sm:$0xff] %v1866
  %2775 = vst [vmem:[%s2 + $0x138] sm:$0xff] %v1869
  %2776 = vst [vmem:[%s2 + $0x140] sm:$0xff] %v1874
  %2777 = vst [vmem:[%s2 + $0x148] sm:$0xff] %v1877
  %2778 = vst [vmem:[%s2 + $0x150] sm:$0xff] %v1882
  %2779 = vst [vmem:[%s2 + $0x158] sm:$0xff] %v1885
  %2780 = vst [vmem:[%s2 + $0x160] sm:$0xff] %v1890
  %2781 = vst [vmem:[%s2 + $0x168] sm:$0xff] %v1893
  %2782 = vst [vmem:[%s2 + $0x170] sm:$0xff] %v1898
  %2783 = vst [vmem:[%s2 + $0x178] sm:$0xff] %v1901
  %2784 = vst [vmem:[%s2 + $0x180] sm:$0xff] %v1906
  %2785 = vst [vmem:[%s2 + $0x188] sm:$0xff] %v1909
  %2786 = vst [vmem:[%s2 + $0x190] sm:$0xff] %v1914
  %2787 = vst [vmem:[%s2 + $0x198] sm:$0xff] %v1917
  %2788 = vst [vmem:[%s2 + $0x1a0] sm:$0xff] %v1922
  %2789 = vst [vmem:[%s2 + $0x1a8] sm:$0xff] %v1925
  %2790 = vst [vmem:[%s2 + $0x1b0] sm:$0xff] %v1930
  %2791 = vst [vmem:[%s2 + $0x1b8] sm:$0xff] %v1933
  %2792 = vst [vmem:[%s2 + $0x1c0] sm:$0xff] %v1938
  %2793 = vst [vmem:[%s2 + $0x1c8] sm:$0xff] %v1941
  %2794 = vst [vmem:[%s2 + $0x1d0] sm:$0xff] %v1946
  %2795 = vst [vmem:[%s2 + $0x1d8] sm:$0xff] %v1949
  %2796 = vst [vmem:[%s2 + $0x1e0] sm:$0xff] %v1954
  %2797 = vst [vmem:[%s2 + $0x1e8] sm:$0xff] %v1957
  %2798 = vst [vmem:[%s2 + $0x1f0] sm:$0xff] %v1962
  %2799 = vst [vmem:[%s2 + $0x1f8] sm:$0xff] %v1965
  %2800 = vst [vmem:[%s2 + $0x200] sm:$0xff] %v1970
  %2801 = vst [vmem:[%s2 + $0x208] sm:$0xff] %v1973
  %2802 = vst [vmem:[%s2 + $0x210] sm:$0xff] %v1978
  %2803 = vst [vmem:[%s2 + $0x218] sm:$0xff] %v1981
  %2804 = vst [vmem:[%s2 + $0x220] sm:$0xff] %v1986
  %2805 = vst [vmem:[%s2 + $0x228] sm:$0xff] %v1989
  %2806 = vst [vmem:[%s2 + $0x230] sm:$0xff] %v1994
  %2807 = vst [vmem:[%s2 + $0x238] sm:$0xff] %v1997
  %2808 = vst [vmem:[%s2 + $0x240] sm:$0xff] %v2002
  %2809 = vst [vmem:[%s2 + $0x248] sm:$0xff] %v2005
  %2810 = vst [vmem:[%s2 + $0x250] sm:$0xff] %v2010
  %2811 = vst [vmem:[%s2 + $0x258] sm:$0xff] %v2013
  %2812 = vst [vmem:[%s2 + $0x260] sm:$0xff] %v2018
  %2813 = vst [vmem:[%s2 + $0x268] sm:$0xff] %v2021
  %2814 = vst [vmem:[%s2 + $0x270] sm:$0xff] %v2026
  %2815 = vst [vmem:[%s2 + $0x278] sm:$0xff] %v2029
  %2816 = vst [vmem:[%s2 + $0x280] sm:$0xff] %v2034
  %2817 = vst [vmem:[%s2 + $0x288] sm:$0xff] %v2037
  %2818 = vst [vmem:[%s2 + $0x290] sm:$0xff] %v2042
  %2819 = vst [vmem:[%s2 + $0x298] sm:$0xff] %v2045
  %2820 = vst [vmem:[%s2 + $0x2a0] sm:$0xff] %v2050
  %2821 = vst [vmem:[%s2 + $0x2a8] sm:$0xff] %v2053
  %2822 = vst [vmem:[%s2 + $0x2b0] sm:$0xff] %v2058
  %2823 = vst [vmem:[%s2 + $0x2b8] sm:$0xff] %v2061
  %2824 = vst [vmem:[%s2 + $0x2c0] sm:$0xff] %v2066
  %2825 = vst [vmem:[%s2 + $0x2c8] sm:$0xff] %v2069
  %2826 = vst [vmem:[%s2 + $0x2d0] sm:$0xff] %v2074
  %2827 = vst [vmem:[%s2 + $0x2d8] sm:$0xff] %v2077
  %2828 = vst [vmem:[%s2 + $0x2e0] sm:$0xff] %v2082
  %2829 = vst [vmem:[%s2 + $0x2e8] sm:$0xff] %v2085
  %2830 = vst [vmem:[%s2 + $0x2f0] sm:$0xff] %v2090
  %2831 = vst [vmem:[%s2 + $0x2f8] sm:$0xff] %v2093
  %2832 = vst [vmem:[%s2 + $0x300] sm:$0xff] %v2098
  %2833 = vst [vmem:[%s2 + $0x308] sm:$0xff] %v2101
  %2834 = vst [vmem:[%s2 + $0x310] sm:$0xff] %v2106
  %2835 = vst [vmem:[%s2 + $0x318] sm:$0xff] %v2109
  %2836 = vst [vmem:[%s2 + $0x320] sm:$0xff] %v2114
  %2837 = vst [vmem:[%s2 + $0x328] sm:$0xff] %v2117
  %2838 = vst [vmem:[%s2 + $0x330] sm:$0xff] %v2122
  %2839 = vst [vmem:[%s2 + $0x338] sm:$0xff] %v2125
  %2840 = vst [vmem:[%s2 + $0x340] sm:$0xff] %v2130
  %2841 = vst [vmem:[%s2 + $0x348] sm:$0xff] %v2133
  %2842 = vst [vmem:[%s2 + $0x350] sm:$0xff] %v2138
  %2843 = vst [vmem:[%s2 + $0x358] sm:$0xff] %v2141
  %2844 = vst [vmem:[%s2 + $0x360] sm:$0xff] %v2146
  %2845 = vst [vmem:[%s2 + $0x368] sm:$0xff] %v2149
  %2846 = vst [vmem:[%s2 + $0x370] sm:$0xff] %v2154
  %2847 = vst [vmem:[%s2 + $0x378] sm:$0xff] %v2157
  %2848 = vst [vmem:[%s2 + $0x380] sm:$0xff] %v2162
  %2849 = vst [vmem:[%s2 + $0x388] sm:$0xff] %v2165
  %2850 = vst [vmem:[%s2 + $0x390] sm:$0xff] %v2170
  %2851 = vst [vmem:[%s2 + $0x398] sm:$0xff] %v2173
  %2852 = vst [vmem:[%s2 + $0x3a0] sm:$0xff] %v2178
  %2853 = vst [vmem:[%s2 + $0x3a8] sm:$0xff] %v2181
  %2854 = vst [vmem:[%s2 + $0x3b0] sm:$0xff] %v2186
  %2855 = vst [vmem:[%s2 + $0x3b8] sm:$0xff] %v2189
  %2856 = vst [vmem:[%s2 + $0x3c0] sm:$0xff] %v2194
  %2857 = vst [vmem:[%s2 + $0x3c8] sm:$0xff] %v2197
  %2858 = vst [vmem:[%s2 + $0x3d0] sm:$0xff] %v2202
  %2859 = vst [vmem:[%s2 + $0x3d8] sm:$0xff] %v2205
  %2860 = vst [vmem:[%s2 + $0x3e0] sm:$0xff] %v2210
  %2861 = vst [vmem:[%s2 + $0x3e8] sm:$0xff] %v2213
  %2862 = vst [vmem:[%s2 + $0x3f0] sm:$0xff] %v2218
  %2863 = vst [vmem:[%s2 + $0x3f8] sm:$0xff] %v2221
  %2864 = vst [vmem:[%s2 + $0x400] sm:$0xff] %v2226
  %2865 = vst [vmem:[%s2 + $0x408] sm:$0xff] %v2229
  %2866 = vst [vmem:[%s2 + $0x410] sm:$0xff] %v2234
  %2867 = vst [vmem:[%s2 + $0x418] sm:$0xff] %v2237
  %2868 = vst [vmem:[%s2 + $0x420] sm:$0xff] %v2242
  %2869 = vst [vmem:[%s2 + $0x428] sm:$0xff] %v2245
  %2870 = vst [vmem:[%s2 + $0x430] sm:$0xff] %v2250
  %2871 = vst [vmem:[%s2 + $0x438] sm:$0xff] %v2253
  %2872 = vst [vmem:[%s2 + $0x440] sm:$0xff] %v2258
  %2873 = vst [vmem:[%s2 + $0x448] sm:$0xff] %v2261
  %2874 = vst [vmem:[%s2 + $0x450] sm:$0xff] %v2266
  %2875 = vst [vmem:[%s2 + $0x458] sm:$0xff] %v2269
  %2876 = vst [vmem:[%s2 + $0x460] sm:$0xff] %v2274
  %2877 = vst [vmem:[%s2 + $0x468] sm:$0xff] %v2277
  %2878 = vst [vmem:[%s2 + $0x470] sm:$0xff] %v2282
  %2879 = vst [vmem:[%s2 + $0x478] sm:$0xff] %v2285
  %2880 = vst [vmem:[%s2 + $0x480] sm:$0xff] %v2290
  %2881 = vst [vmem:[%s2 + $0x488] sm:$0xff] %v2293
  %2882 = vst [vmem:[%s2 + $0x490] sm:$0xff] %v2298
  %2883 = vst [vmem:[%s2 + $0x498] sm:$0xff] %v2301
  %2884 = vst [vmem:[%s2 + $0x4a0] sm:$0xff] %v2306
  %2885 = vst [vmem:[%s2 + $0x4a8] sm:$0xff] %v2309
  %2886 = vst [vmem:[%s2 + $0x4b0] sm:$0xff] %v2314
  %2887 = vst [vmem:[%s2 + $0x4b8] sm:$0xff] %v2317
  %2888 = vst [vmem:[%s2 + $0x4c0] sm:$0xff] %v2322
  %2889 = vst [vmem:[%s2 + $0x4c8] sm:$0xff] %v2325
  %2890 = vst [vmem:[%s2 + $0x4d0] sm:$0xff] %v2330
  %2891 = vst [vmem:[%s2 + $0x4d8] sm:$0xff] %v2333
  %2892 = vst [vmem:[%s2 + $0x4e0] sm:$0xff] %v2338
  %2893 = vst [vmem:[%s2 + $0x4e8] sm:$0xff] %v2341
  %2894 = vst [vmem:[%s2 + $0x4f0] sm:$0xff] %v2346
  %2895 = vst [vmem:[%s2 + $0x4f8] sm:$0xff] %v2349
  %2896 = vst [vmem:[%s2 + $0x500] sm:$0xff] %v2354
  %2897 = vst [vmem:[%s2 + $0x508] sm:$0xff] %v2357
  %2898 = vst [vmem:[%s2 + $0x510] sm:$0xff] %v2362
  %2899 = vst [vmem:[%s2 + $0x518] sm:$0xff] %v2365
  %2900 = vst [vmem:[%s2 + $0x520] sm:$0xff] %v2370
  %2901 = vst [vmem:[%s2 + $0x528] sm:$0xff] %v2373
  %2902 = vst [vmem:[%s2 + $0x530] sm:$0xff] %v2378
  %2903 = vst [vmem:[%s2 + $0x538] sm:$0xff] %v2381
  %2904 = vst [vmem:[%s2 + $0x540] sm:$0xff] %v2386
  %2905 = vst [vmem:[%s2 + $0x548] sm:$0xff] %v2389
  %2906 = vst [vmem:[%s2 + $0x550] sm:$0xff] %v2394
  %2907 = vst [vmem:[%s2 + $0x558] sm:$0xff] %v2397
  %2908 = vst [vmem:[%s2 + $0x560] sm:$0xff] %v2402
  %2909 = vst [vmem:[%s2 + $0x568] sm:$0xff] %v2405
  %2910 = vst [vmem:[%s2 + $0x570] sm:$0xff] %v2410
  %2911 = vst [vmem:[%s2 + $0x578] sm:$0xff] %v2413
  %2912 = vst [vmem:[%s2 + $0x580] sm:$0xff] %v2418
  %2913 = vst [vmem:[%s2 + $0x588] sm:$0xff] %v2421
  %2914 = vst [vmem:[%s2 + $0x590] sm:$0xff] %v2426
  %2915 = vst [vmem:[%s2 + $0x598] sm:$0xff] %v2429
  %2916 = vst [vmem:[%s2 + $0x5a0] sm:$0xff] %v2434
  %2917 = vst [vmem:[%s2 + $0x5a8] sm:$0xff] %v2437
  %2918 = vst [vmem:[%s2 + $0x5b0] sm:$0xff] %v2442
  %2919 = vst [vmem:[%s2 + $0x5b8] sm:$0xff] %v2445
  %2920 = vst [vmem:[%s2 + $0x5c0] sm:$0xff] %v2450
  %2921 = vst [vmem:[%s2 + $0x5c8] sm:$0xff] %v2453
  %2922 = vst [vmem:[%s2 + $0x5d0] sm:$0xff] %v2458
  %2923 = vst [vmem:[%s2 + $0x5d8] sm:$0xff] %v2461
  %2924 = vst [vmem:[%s2 + $0x5e0] sm:$0xff] %v2466
  %2925 = vst [vmem:[%s2 + $0x5e8] sm:$0xff] %v2469
  %2926 = vst [vmem:[%s2 + $0x5f0] sm:$0xff] %v2474
  %2927 = vst [vmem:[%s2 + $0x5f8] sm:$0xff] %v2477
  %2928 = vst [vmem:[%s2 + $0x600] sm:$0xff] %v2482
  %2929 = vst [vmem:[%s2 + $0x608] sm:$0xff] %v2485
  %2930 = vst [vmem:[%s2 + $0x610] sm:$0xff] %v2490
  %2931 = vst [vmem:[%s2 + $0x618] sm:$0xff] %v2493
  %2932 = vst [vmem:[%s2 + $0x620] sm:$0xff] %v2498
  %2933 = vst [vmem:[%s2 + $0x628] sm:$0xff] %v2501
  %2934 = vst [vmem:[%s2 + $0x630] sm:$0xff] %v2506
  %2935 = vst [vmem:[%s2 + $0x638] sm:$0xff] %v2509
  %2936 = vst [vmem:[%s2 + $0x640] sm:$0xff] %v2514
  %2937 = vst [vmem:[%s2 + $0x648] sm:$0xff] %v2517
  %2938 = vst [vmem:[%s2 + $0x650] sm:$0xff] %v2522
  %2939 = vst [vmem:[%s2 + $0x658] sm:$0xff] %v2525
  %2940 = vst [vmem:[%s2 + $0x660] sm:$0xff] %v2530
  %2941 = vst [vmem:[%s2 + $0x668] sm:$0xff] %v2533
  %2942 = vst [vmem:[%s2 + $0x670] sm:$0xff] %v2538
  %2943 = vst [vmem:[%s2 + $0x678] sm:$0xff] %v2541
  %2944 = vst [vmem:[%s2 + $0x680] sm:$0xff] %v2546
  %2945 = vst [vmem:[%s2 + $0x688] sm:$0xff] %v2549
  %2946 = vst [vmem:[%s2 + $0x690] sm:$0xff] %v2554
  %2947 = vst [vmem:[%s2 + $0x698] sm:$0xff] %v2557
  %2948 = vst [vmem:[%s2 + $0x6a0] sm:$0xff] %v2562
  %2949 = vst [vmem:[%s2 + $0x6a8] sm:$0xff] %v2565
  %2950 = vst [vmem:[%s2 + $0x6b0] sm:$0xff] %v2570
  %2951 = vst [vmem:[%s2 + $0x6b8] sm:$0xff] %v2573
  %2952 = vst [vmem:[%s2 + $0x6c0] sm:$0xff] %v2578
  %2953 = vst [vmem:[%s2 + $0x6c8] sm:$0xff] %v2581
  %2954 = vst [vmem:[%s2 + $0x6d0] sm:$0xff] %v2586
  %2955 = vst [vmem:[%s2 + $0x6d8] sm:$0xff] %v2589
  %2956 = vst [vmem:[%s2 + $0x6e0] sm:$0xff] %v2594
  %2957 = vst [vmem:[%s2 + $0x6e8] sm:$0xff] %v2597
  %2958 = vst [vmem:[%s2 + $0x6f0] sm:$0xff] %v2602
  %2959 = vst [vmem:[%s2 + $0x6f8] sm:$0xff] %v2605
  %2960 = vst [vmem:[%s2 + $0x700] sm:$0xff] %v2610
  %2961 = vst [vmem:[%s2 + $0x708] sm:$0xff] %v2613
  %2962 = vst [vmem:[%s2 + $0x710] sm:$0xff] %v2618
  %2963 = vst [vmem:[%s2 + $0x718] sm:$0xff] %v2621
  %2964 = vst [vmem:[%s2 + $0x720] sm:$0xff] %v2626
  %2965 = vst [vmem:[%s2 + $0x728] sm:$0xff] %v2629
  %2966 = vst [vmem:[%s2 + $0x730] sm:$0xff] %v2634
  %2967 = vst [vmem:[%s2 + $0x738] sm:$0xff] %v2637
  %2968 = vst [vmem:[%s2 + $0x740] sm:$0xff] %v2642
  %2969 = vst [vmem:[%s2 + $0x748] sm:$0xff] %v2645
  %2970 = vst [vmem:[%s2 + $0x750] sm:$0xff] %v2650
  %2971 = vst [vmem:[%s2 + $0x758] sm:$0xff] %v2653
  %2972 = vst [vmem:[%s2 + $0x760] sm:$0xff] %v2658
  %2973 = vst [vmem:[%s2 + $0x768] sm:$0xff] %v2661
  %2974 = vst [vmem:[%s2 + $0x770] sm:$0xff] %v2666
  %2975 = vst [vmem:[%s2 + $0x778] sm:$0xff] %v2669
  %2976 = vst [vmem:[%s2 + $0x780] sm:$0xff] %v2674
  %2977 = vst [vmem:[%s2 + $0x788] sm:$0xff] %v2677
  %2978 = vst [vmem:[%s2 + $0x790] sm:$0xff] %v2682
  %2979 = vst [vmem:[%s2 + $0x798] sm:$0xff] %v2685
  %2980 = vst [vmem:[%s2 + $0x7a0] sm:$0xff] %v2690
  %2981 = vst [vmem:[%s2 + $0x7a8] sm:$0xff] %v2693
  %2982 = vst [vmem:[%s2 + $0x7b0] sm:$0xff] %v2698
  %2983 = vst [vmem:[%s2 + $0x7b8] sm:$0xff] %v2701
  %2984 = vst [vmem:[%s2 + $0x7c0] sm:$0xff] %v2706
  %2985 = vst [vmem:[%s2 + $0x7c8] sm:$0xff] %v2709
  %2986 = vst [vmem:[%s2 + $0x7d0] sm:$0xff] %v2714
  %2987 = vst [vmem:[%s2 + $0x7d8] sm:$0xff] %v2717
  %2988 = vst [vmem:[%s2 + $0x7e0] sm:$0xff] %v2722
  %2989 = vst [vmem:[%s2 + $0x7e8] sm:$0xff] %v2725
  %2990 = vst [vmem:[%s2 + $0x7f0] sm:$0xff] %v2730
  %2991 = vst [vmem:[%s2 + $0x7f8] sm:$0xff] %v2733
  %v2992 = vadd.f32 %v1714, %v1717
  %v2993 = vadd.f32 %v2992, %v1722
  %v2994 = vadd.f32 %v2993, %v1725
  %v2995 = vadd.f32 %v2994, %v1730
  %v2996 = vadd.f32 %v2995, %v1733
  %v2997 = vadd.f32 %v2996, %v1738
  %v2998 = vadd.f32 %v2997, %v1741
  %v2999 = vadd.f32 %v2998, %v1746
  %v3000 = vadd.f32 %v2999, %v1749
  %v3001 = vadd.f32 %v3000, %v1754
  %v3002 = vadd.f32 %v3001, %v1757
  %v3003 = vadd.f32 %v3002, %v1762
  %v3004 = vadd.f32 %v3003, %v1765
  %v3005 = vadd.f32 %v3004, %v1770
  %v3006 = vadd.f32 %v3005, %v1773
  %v3007 = vadd.f32 %v3006, %v1778
  %v3008 = vadd.f32 %v3007, %v1781
  %v3009 = vadd.f32 %v3008, %v1786
  %v3010 = vadd.f32 %v3009, %v1789
  %v3011 = vadd.f32 %v3010, %v1794
  %v3012 = vadd.f32 %v3011, %v1797
  %v3013 = vadd.f32 %v3012, %v1802
  %v3014 = vadd.f32 %v3013, %v1805
  %v3015 = vadd.f32 %v3014, %v1810
  %v3016 = vadd.f32 %v3015, %v1813
  %v3017 = vadd.f32 %v3016, %v1818
  %v3018 = vadd.f32 %v3017, %v1821
  %v3019 = vadd.f32 %v3018, %v1826
  %v3020 = vadd.f32 %v3019, %v1829
  %v3021 = vadd.f32 %v3020, %v1834
  %v3022 = vadd.f32 %v3021, %v1837
  %v3023 = vadd.f32 %v3022, %v1842
  %v3024 = vadd.f32 %v3023, %v1845
  %v3025 = vadd.f32 %v3024, %v1850
  %v3026 = vadd.f32 %v3025, %v1853
  %v3027 = vadd.f32 %v3026, %v1858
  %v3028 = vadd.f32 %v3027, %v1861
  %v3029 = vadd.f32 %v3028, %v1866
  %v3030 = vadd.f32 %v3029, %v1869
  %v3031 = vadd.f32 %v3030, %v1874
  %v3032 = vadd.f32 %v3031, %v1877
  %v3033 = vadd.f32 %v3032, %v1882
  %v3034 = vadd.f32 %v3033, %v1885
  %v3035 = vadd.f32 %v3034, %v1890
  %v3036 = vadd.f32 %v3035, %v1893
  %v3037 = vadd.f32 %v3036, %v1898
  %v3038 = vadd.f32 %v3037, %v1901
  %v3039 = vadd.f32 %v3038, %v1906
  %v3040 = vadd.f32 %v3039, %v1909
  %v3041 = vadd.f32 %v3040, %v1914
  %v3042 = vadd.f32 %v3041, %v1917
  %v3043 = vadd.f32 %v3042, %v1922
  %v3044 = vadd.f32 %v3043, %v1925
  %v3045 = vadd.f32 %v3044, %v1930
  %v3046 = vadd.f32 %v3045, %v1933
  %v3047 = vadd.f32 %v3046, %v1938
  %v3048 = vadd.f32 %v3047, %v1941
  %v3049 = vadd.f32 %v3048, %v1946
  %v3050 = vadd.f32 %v3049, %v1949
  %v3051 = vadd.f32 %v3050, %v1954
  %v3052 = vadd.f32 %v3051, %v1957
  %v3053 = vadd.f32 %v3052, %v1962
  %v3054 = vadd.f32 %v3053, %v1965
  %v3055 = vadd.f32 %v3054, %v1970
  %v3056 = vadd.f32 %v3055, %v1973
  %v3057 = vadd.f32 %v3056, %v1978
  %v3058 = vadd.f32 %v3057, %v1981
  %v3059 = vadd.f32 %v3058, %v1986
  %v3060 = vadd.f32 %v3059, %v1989
  %v3061 = vadd.f32 %v3060, %v1994
  %v3062 = vadd.f32 %v3061, %v1997
  %v3063 = vadd.f32 %v3062, %v2002
  %v3064 = vadd.f32 %v3063, %v2005
  %v3065 = vadd.f32 %v3064, %v2010
  %v3066 = vadd.f32 %v3065, %v2013
  %v3067 = vadd.f32 %v3066, %v2018
  %v3068 = vadd.f32 %v3067, %v2021
  %v3069 = vadd.f32 %v3068, %v2026
  %v3070 = vadd.f32 %v3069, %v2029
  %v3071 = vadd.f32 %v3070, %v2034
  %v3072 = vadd.f32 %v3071, %v2037
  %v3073 = vadd.f32 %v3072, %v2042
  %v3074 = vadd.f32 %v3073, %v2045
  %v3075 = vadd.f32 %v3074, %v2050
  %v3076 = vadd.f32 %v3075, %v2053
  %v3077 = vadd.f32 %v3076, %v2058
  %v3078 = vadd.f32 %v3077, %v2061
  %v3079 = vadd.f32 %v3078, %v2066
  %v3080 = vadd.f32 %v3079, %v2069
  %v3081 = vadd.f32 %v3080, %v2074
  %v3082 = vadd.f32 %v3081, %v2077
  %v3083 = vadd.f32 %v3082, %v2082
  %v3084 = vadd.f32 %v3083, %v2085
  %v3085 = vadd.f32 %v3084, %v2090
  %v3086 = vadd.f32 %v3085, %v2093
  %v3087 = vadd.f32 %v3086, %v2098
  %v3088 = vadd.f32 %v3087, %v2101
  %v3089 = vadd.f32 %v3088, %v2106
  %v3090 = vadd.f32 %v3089, %v2109
  %v3091 = vadd.f32 %v3090, %v2114
  %v3092 = vadd.f32 %v3091, %v2117
  %v3093 = vadd.f32 %v3092, %v2122
  %v3094 = vadd.f32 %v3093, %v2125
  %v3095 = vadd.f32 %v3094, %v2130
  %v3096 = vadd.f32 %v3095, %v2133
  %v3097 = vadd.f32 %v3096, %v2138
  %v3098 = vadd.f32 %v3097, %v2141
  %v3099 = vadd.f32 %v3098, %v2146
  %v3100 = vadd.f32 %v3099, %v2149
  %v3101 = vadd.f32 %v3100, %v2154
  %v3102 = vadd.f32 %v3101, %v2157
  %v3103 = vadd.f32 %v3102, %v2162
  %v3104 = vadd.f32 %v3103, %v2165
  %v3105 = vadd.f32 %v3104, %v2170
  %v3106 = vadd.f32 %v3105, %v2173
  %v3107 = vadd.f32 %v3106, %v2178
  %v3108 = vadd.f32 %v3107, %v2181
  %v3109 = vadd.f32 %v3108, %v2186
  %v3110 = vadd.f32 %v3109, %v2189
  %v3111 = vadd.f32 %v3110, %v2194
  %v3112 = vadd.f32 %v3111, %v2197
  %v3113 = vadd.f32 %v3112, %v2202
  %v3114 = vadd.f32 %v3113, %v2205
  %v3115 = vadd.f32 %v3114, %v2210
  %v3116 = vadd.f32 %v3115, %v2213
  %v3117 = vadd.f32 %v3116, %v2218
  %v3118 = vadd.f32 %v3117, %v2221
  %v3119 = vadd.f32 %v3118, %v2226
  %v3120 = vadd.f32 %v3119, %v2229
  %v3121 = vadd.f32 %v3120, %v2234
  %v3122 = vadd.f32 %v3121, %v2237
  %v3123 = vadd.f32 %v3122, %v2242
  %v3124 = vadd.f32 %v3123, %v2245
  %v3125 = vadd.f32 %v3124, %v2250
  %v3126 = vadd.f32 %v3125, %v2253
  %v3127 = vadd.f32 %v3126, %v2258
  %v3128 = vadd.f32 %v3127, %v2261
  %v3129 = vadd.f32 %v3128, %v2266
  %v3130 = vadd.f32 %v3129, %v2269
  %v3131 = vadd.f32 %v3130, %v2274
  %v3132 = vadd.f32 %v3131, %v2277
  %v3133 = vadd.f32 %v3132, %v2282
  %v3134 = vadd.f32 %v3133, %v2285
  %v3135 = vadd.f32 %v3134, %v2290
  %v3136 = vadd.f32 %v3135, %v2293
  %v3137 = vadd.f32 %v3136, %v2298
  %v3138 = vadd.f32 %v3137, %v2301
  %v3139 = vadd.f32 %v3138, %v2306
  %v3140 = vadd.f32 %v3139, %v2309
  %v3141 = vadd.f32 %v3140, %v2314
  %v3142 = vadd.f32 %v3141, %v2317
  %v3143 = vadd.f32 %v3142, %v2322
  %v3144 = vadd.f32 %v3143, %v2325
  %v3145 = vadd.f32 %v3144, %v2330
  %v3146 = vadd.f32 %v3145, %v2333
  %v3147 = vadd.f32 %v3146, %v2338
  %v3148 = vadd.f32 %v3147, %v2341
  %v3149 = vadd.f32 %v3148, %v2346
  %v3150 = vadd.f32 %v3149, %v2349
  %v3151 = vadd.f32 %v3150, %v2354
  %v3152 = vadd.f32 %v3151, %v2357
  %v3153 = vadd.f32 %v3152, %v2362
  %v3154 = vadd.f32 %v3153, %v2365
  %v3155 = vadd.f32 %v3154, %v2370
  %v3156 = vadd.f32 %v3155, %v2373
  %v3157 = vadd.f32 %v3156, %v2378
  %v3158 = vadd.f32 %v3157, %v2381
  %v3159 = vadd.f32 %v3158, %v2386
  %v3160 = vadd.f32 %v3159, %v2389
  %v3161 = vadd.f32 %v3160, %v2394
  %v3162 = vadd.f32 %v3161, %v2397
  %v3163 = vadd.f32 %v3162, %v2402
  %v3164 = vadd.f32 %v3163, %v2405
  %v3165 = vadd.f32 %v3164, %v2410
  %v3166 = vadd.f32 %v3165, %v2413
  %v3167 = vadd.f32 %v3166, %v2418
  %v3168 = vadd.f32 %v3167, %v2421
  %v3169 = vadd.f32 %v3168, %v2426
  %v3170 = vadd.f32 %v3169, %v2429
  %v3171 = vadd.f32 %v3170, %v2434
  %v3172 = vadd.f32 %v3171, %v2437
  %v3173 = vadd.f32 %v3172, %v2442
  %v3174 = vadd.f32 %v3173, %v2445
  %v3175 = vadd.f32 %v3174, %v2450
  %v3176 = vadd.f32 %v3175, %v2453
  %v3177 = vadd.f32 %v3176, %v2458
  %v3178 = vadd.f32 %v3177, %v2461
  %v3179 = vadd.f32 %v3178, %v2466
  %v3180 = vadd.f32 %v3179, %v2469
  %v3181 = vadd.f32 %v3180, %v2474
  %v3182 = vadd.f32 %v3181, %v2477
  %v3183 = vadd.f32 %v3182, %v2482
  %v3184 = vadd.f32 %v3183, %v2485
  %v3185 = vadd.f32 %v3184, %v2490
  %v3186 = vadd.f32 %v3185, %v2493
  %v3187 = vadd.f32 %v3186, %v2498
  %v3188 = vadd.f32 %v3187, %v2501
  %v3189 = vadd.f32 %v3188, %v2506
  %v3190 = vadd.f32 %v3189, %v2509
  %v3191 = vadd.f32 %v3190, %v2514
  %v3192 = vadd.f32 %v3191, %v2517
  %v3193 = vadd.f32 %v3192, %v2522
  %v3194 = vadd.f32 %v3193, %v2525
  %v3195 = vadd.f32 %v3194, %v2530
  %v3196 = vadd.f32 %v3195, %v2533
  %v3197 = vadd.f32 %v3196, %v2538
  %v3198 = vadd.f32 %v3197, %v2541
  %v3199 = vadd.f32 %v3198, %v2546
  %v3200 = vadd.f32 %v3199, %v2549
  %v3201 = vadd.f32 %v3200, %v2554
  %v3202 = vadd.f32 %v3201, %v2557
  %v3203 = vadd.f32 %v3202, %v2562
  %v3204 = vadd.f32 %v3203, %v2565
  %v3205 = vadd.f32 %v3204, %v2570
  %v3206 = vadd.f32 %v3205, %v2573
  %v3207 = vadd.f32 %v3206, %v2578
  %v3208 = vadd.f32 %v3207, %v2581
  %v3209 = vadd.f32 %v3208, %v2586
  %v3210 = vadd.f32 %v3209, %v2589
  %v3211 = vadd.f32 %v3210, %v2594
  %v3212 = vadd.f32 %v3211, %v2597
  %v3213 = vadd.f32 %v3212, %v2602
  %v3214 = vadd.f32 %v3213, %v2605
  %v3215 = vadd.f32 %v3214, %v2610
  %v3216 = vadd.f32 %v3215, %v2613
  %v3217 = vadd.f32 %v3216, %v2618
  %v3218 = vadd.f32 %v3217, %v2621
  %v3219 = vadd.f32 %v3218, %v2626
  %v3220 = vadd.f32 %v3219, %v2629
  %v3221 = vadd.f32 %v3220, %v2634
  %v3222 = vadd.f32 %v3221, %v2637
  %v3223 = vadd.f32 %v3222, %v2642
  %v3224 = vadd.f32 %v3223, %v2645
  %v3225 = vadd.f32 %v3224, %v2650
  %v3226 = vadd.f32 %v3225, %v2653
  %v3227 = vadd.f32 %v3226, %v2658
  %v3228 = vadd.f32 %v3227, %v2661
  %v3229 = vadd.f32 %v3228, %v2666
  %v3230 = vadd.f32 %v3229, %v2669
  %v3231 = vadd.f32 %v3230, %v2674
  %v3232 = vadd.f32 %v3231, %v2677
  %v3233 = vadd.f32 %v3232, %v2682
  %v3234 = vadd.f32 %v3233, %v2685
  %v3235 = vadd.f32 %v3234, %v2690
  %v3236 = vadd.f32 %v3235, %v2693
  %v3237 = vadd.f32 %v3236, %v2698
  %v3238 = vadd.f32 %v3237, %v2701
  %v3239 = vadd.f32 %v3238, %v2706
  %v3240 = vadd.f32 %v3239, %v2709
  %v3241 = vadd.f32 %v3240, %v2714
  %v3242 = vadd.f32 %v3241, %v2717
  %v3243 = vadd.f32 %v3242, %v2722
  %v3244 = vadd.f32 %v3243, %v2725
  %v3245 = vadd.f32 %v3244, %v2730
  %v3246 = vadd.f32 %v3245, %v2733
  %v3247 = vrot.slane %v3246, 4
  %v3248 = vadd.f32 %v3246, %v3247
  %v3249 = vrot.slane %v3248, 2
  %v3250 = vadd.f32 %v3248, %v3249
  %v3251 = vrot.slane %v3250, 1
  %v3252 = vadd.f32 %v3250, %v3251
  %3253 = vst [vmem:[%s3] sm:$0x1] %v3252
  %v3254 = vmul.f32 %v1714, %v1714
  %v3255 = vmul.f32 %v1717, %v1717
  %v3256 = vmul.f32 %v1722, %v1722
  %v3257 = vmul.f32 %v1725, %v1725
  %v3258 = vmul.f32 %v1730, %v1730
  %v3259 = vmul.f32 %v1733, %v1733
  %v3260 = vmul.f32 %v1738, %v1738
  %v3261 = vmul.f32 %v1741, %v1741
  %v3262 = vmul.f32 %v1746, %v1746
  %v3263 = vmul.f32 %v1749, %v1749
  %v3264 = vmul.f32 %v1754, %v1754
  %v3265 = vmul.f32 %v1757, %v1757
  %v3266 = vmul.f32 %v1762, %v1762
  %v3267 = vmul.f32 %v1765, %v1765
  %v3268 = vmul.f32 %v1770, %v1770
  %v3269 = vmul.f32 %v1773, %v1773
  %v3270 = vmul.f32 %v1778, %v1778
  %v3271 = vmul.f32 %v1781, %v1781
  %v3272 = vmul.f32 %v1786, %v1786
  %v3273 = vmul.f32 %v1789, %v1789
  %v3274 = vmul.f32 %v1794, %v1794
  %v3275 = vmul.f32 %v1797, %v1797
  %v3276 = vmul.f32 %v1802, %v1802
  %v3277 = vmul.f32 %v1805, %v1805
  %v3278 = vmul.f32 %v1810, %v1810
  %v3279 = vmul.f32 %v1813, %v1813
  %v3280 = vmul.f32 %v1818, %v1818
  %v3281 = vmul.f32 %v1821, %v1821
  %v3282 = vmul.f32 %v1826, %v1826
  %v3283 = vmul.f32 %v1829, %v1829
  %v3284 = vmul.f32 %v1834, %v1834
  %v3285 = vmul.f32 %v1837, %v1837
  %v3286 = vmul.f32 %v1842, %v1842
  %v3287 = vmul.f32 %v1845, %v1845
  %v3288 = vmul.f32 %v1850, %v1850
  %v3289 = vmul.f32 %v1853, %v1853
  %v3290 = vmul.f32 %v1858, %v1858
  %v3291 = vmul.f32 %v1861, %v1861
  %v3292 = vmul.f32 %v1866, %v1866
  %v3293 = vmul.f32 %v1869, %v1869
  %v3294 = vmul.f32 %v1874, %v1874
  %v3295 = vmul.f32 %v1877, %v1877
  %v3296 = vmul.f32 %v1882, %v1882
  %v3297 = vmul.f32 %v1885, %v1885
  %v3298 = vmul.f32 %v1890, %v1890
  %v3299 = vmul.f32 %v1893, %v1893
  %v3300 = vmul.f32 %v1898, %v1898
  %v3301 = vmul.f32 %v1901, %v1901
  %v3302 = vmul.f32 %v1906, %v1906
  %v3303 = vmul.f32 %v1909, %v1909
  %v3304 = vmul.f32 %v1914, %v1914
  %v3305 = vmul.f32 %v1917, %v1917
  %v3306 = vmul.f32 %v1922, %v1922
  %v3307 = vmul.f32 %v1925, %v1925
  %v3308 = vmul.f32 %v1930, %v1930
  %v3309 = vmul.f32 %v1933, %v1933
  %v3310 = vmul.f32 %v1938, %v1938
  %v3311 = vmul.f32 %v1941, %v1941
  %v3312 = vmul.f32 %v1946, %v1946
  %v3313 = vmul.f32 %v1949, %v1949
  %v3314 = vmul.f32 %v1954, %v1954
  %v3315 = vmul.f32 %v1957, %v1957
  %v3316 = vmul.f32 %v1962, %v1962
  %v3317 = vmul.f32 %v1965, %v1965
  %v3318 = vmul.f32 %v1970, %v1970
  %v3319 = vmul.f32 %v1973, %v1973
  %v3320 = vmul.f32 %v1978, %v1978
  %v3321 = vmul.f32 %v1981, %v1981
  %v3322 = vmul.f32 %v1986, %v1986
  %v3323 = vmul.f32 %v1989, %v1989
  %v3324 = vmul.f32 %v1994, %v1994
  %v3325 = vmul.f32 %v1997, %v1997
  %v3326 = vmul.f32 %v2002, %v2002
  %v3327 = vmul.f32 %v2005, %v2005
  %v3328 = vmul.f32 %v2010, %v2010
  %v3329 = vmul.f32 %v2013, %v2013
  %v3330 = vmul.f32 %v2018, %v2018
  %v3331 = vmul.f32 %v2021, %v2021
  %v3332 = vmul.f32 %v2026, %v2026
  %v3333 = vmul.f32 %v2029, %v2029
  %v3334 = vmul.f32 %v2034, %v2034
  %v3335 = vmul.f32 %v2037, %v2037
  %v3336 = vmul.f32 %v2042, %v2042
  %v3337 = vmul.f32 %v2045, %v2045
  %v3338 = vmul.f32 %v2050, %v2050
  %v3339 = vmul.f32 %v2053, %v2053
  %v3340 = vmul.f32 %v2058, %v2058
  %v3341 = vmul.f32 %v2061, %v2061
  %v3342 = vmul.f32 %v2066, %v2066
  %v3343 = vmul.f32 %v2069, %v2069
  %v3344 = vmul.f32 %v2074, %v2074
  %v3345 = vmul.f32 %v2077, %v2077
  %v3346 = vmul.f32 %v2082, %v2082
  %v3347 = vmul.f32 %v2085, %v2085
  %v3348 = vmul.f32 %v2090, %v2090
  %v3349 = vmul.f32 %v2093, %v2093
  %v3350 = vmul.f32 %v2098, %v2098
  %v3351 = vmul.f32 %v2101, %v2101
  %v3352 = vmul.f32 %v2106, %v2106
  %v3353 = vmul.f32 %v2109, %v2109
  %v3354 = vmul.f32 %v2114, %v2114
  %v3355 = vmul.f32 %v2117, %v2117
  %v3356 = vmul.f32 %v2122, %v2122
  %v3357 = vmul.f32 %v2125, %v2125
  %v3358 = vmul.f32 %v2130, %v2130
  %v3359 = vmul.f32 %v2133, %v2133
  %v3360 = vmul.f32 %v2138, %v2138
  %v3361 = vmul.f32 %v2141, %v2141
  %v3362 = vmul.f32 %v2146, %v2146
  %v3363 = vmul.f32 %v2149, %v2149
  %v3364 = vmul.f32 %v2154, %v2154
  %v3365 = vmul.f32 %v2157, %v2157
  %v3366 = vmul.f32 %v2162, %v2162
  %v3367 = vmul.f32 %v2165, %v2165
  %v3368 = vmul.f32 %v2170, %v2170
  %v3369 = vmul.f32 %v2173, %v2173
  %v3370 = vmul.f32 %v2178, %v2178
  %v3371 = vmul.f32 %v2181, %v2181
  %v3372 = vmul.f32 %v2186, %v2186
  %v3373 = vmul.f32 %v2189, %v2189
  %v3374 = vmul.f32 %v2194, %v2194
  %v3375 = vmul.f32 %v2197, %v2197
  %v3376 = vmul.f32 %v2202, %v2202
  %v3377 = vmul.f32 %v2205, %v2205
  %v3378 = vmul.f32 %v2210, %v2210
  %v3379 = vmul.f32 %v2213, %v2213
  %v3380 = vmul.f32 %v2218, %v2218
  %v3381 = vmul.f32 %v2221, %v2221
  %v3382 = vmul.f32 %v2226, %v2226
  %v3383 = vmul.f32 %v2229, %v2229
  %v3384 = vmul.f32 %v2234, %v2234
  %v3385 = vmul.f32 %v2237, %v2237
  %v3386 = vmul.f32 %v2242, %v2242
  %v3387 = vmul.f32 %v2245, %v2245
  %v3388 = vmul.f32 %v2250, %v2250
  %v3389 = vmul.f32 %v2253, %v2253
  %v3390 = vmul.f32 %v2258, %v2258
  %v3391 = vmul.f32 %v2261, %v2261
  %v3392 = vmul.f32 %v2266, %v2266
  %v3393 = vmul.f32 %v2269, %v2269
  %v3394 = vmul.f32 %v2274, %v2274
  %v3395 = vmul.f32 %v2277, %v2277
  %v3396 = vmul.f32 %v2282, %v2282
  %v3397 = vmul.f32 %v2285, %v2285
  %v3398 = vmul.f32 %v2290, %v2290
  %v3399 = vmul.f32 %v2293, %v2293
  %v3400 = vmul.f32 %v2298, %v2298
  %v3401 = vmul.f32 %v2301, %v2301
  %v3402 = vmul.f32 %v2306, %v2306
  %v3403 = vmul.f32 %v2309, %v2309
  %v3404 = vmul.f32 %v2314, %v2314
  %v3405 = vmul.f32 %v2317, %v2317
  %v3406 = vmul.f32 %v2322, %v2322
  %v3407 = vmul.f32 %v2325, %v2325
  %v3408 = vmul.f32 %v2330, %v2330
  %v3409 = vmul.f32 %v2333, %v2333
  %v3410 = vmul.f32 %v2338, %v2338
  %v3411 = vmul.f32 %v2341, %v2341
  %v3412 = vmul.f32 %v2346, %v2346
  %v3413 = vmul.f32 %v2349, %v2349
  %v3414 = vmul.f32 %v2354, %v2354
  %v3415 = vmul.f32 %v2357, %v2357
  %v3416 = vmul.f32 %v2362, %v2362
  %v3417 = vmul.f32 %v2365, %v2365
  %v3418 = vmul.f32 %v2370, %v2370
  %v3419 = vmul.f32 %v2373, %v2373
  %v3420 = vmul.f32 %v2378, %v2378
  %v3421 = vmul.f32 %v2381, %v2381
  %v3422 = vmul.f32 %v2386, %v2386
  %v3423 = vmul.f32 %v2389, %v2389
  %v3424 = vmul.f32 %v2394, %v2394
  %v3425 = vmul.f32 %v2397, %v2397
  %v3426 = vmul.f32 %v2402, %v2402
  %v3427 = vmul.f32 %v2405, %v2405
  %v3428 = vmul.f32 %v2410, %v2410
  %v3429 = vmul.f32 %v2413, %v2413
  %v3430 = vmul.f32 %v2418, %v2418
  %v3431 = vmul.f32 %v2421, %v2421
  %v3432 = vmul.f32 %v2426, %v2426
  %v3433 = vmul.f32 %v2429, %v2429
  %v3434 = vmul.f32 %v2434, %v2434
  %v3435 = vmul.f32 %v2437, %v2437
  %v3436 = vmul.f32 %v2442, %v2442
  %v3437 = vmul.f32 %v2445, %v2445
  %v3438 = vmul.f32 %v2450, %v2450
  %v3439 = vmul.f32 %v2453, %v2453
  %v3440 = vmul.f32 %v2458, %v2458
  %v3441 = vmul.f32 %v2461, %v2461
  %v3442 = vmul.f32 %v2466, %v2466
  %v3443 = vmul.f32 %v2469, %v2469
  %v3444 = vmul.f32 %v2474, %v2474
  %v3445 = vmul.f32 %v2477, %v2477
  %v3446 = vmul.f32 %v2482, %v2482
  %v3447 = vmul.f32 %v2485, %v2485
  %v3448 = vmul.f32 %v2490, %v2490
  %v3449 = vmul.f32 %v2493, %v2493
  %v3450 = vmul.f32 %v2498, %v2498
  %v3451 = vmul.f32 %v2501, %v2501
  %v3452 = vmul.f32 %v2506, %v2506
  %v3453 = vmul.f32 %v2509, %v2509
  %v3454 = vmul.f32 %v2514, %v2514
  %v3455 = vmul.f32 %v2517, %v2517
  %v3456 = vmul.f32 %v2522, %v2522
  %v3457 = vmul.f32 %v2525, %v2525
  %v3458 = vmul.f32 %v2530, %v2530
  %v3459 = vmul.f32 %v2533, %v2533
  %v3460 = vmul.f32 %v2538, %v2538
  %v3461 = vmul.f32 %v2541, %v2541
  %v3462 = vmul.f32 %v2546, %v2546
  %v3463 = vmul.f32 %v2549, %v2549
  %v3464 = vmul.f32 %v2554, %v2554
  %v3465 = vmul.f32 %v2557, %v2557
  %v3466 = vmul.f32 %v2562, %v2562
  %v3467 = vmul.f32 %v2565, %v2565
  %v3468 = vmul.f32 %v2570, %v2570
  %v3469 = vmul.f32 %v2573, %v2573
  %v3470 = vmul.f32 %v2578, %v2578
  %v3471 = vmul.f32 %v2581, %v2581
  %v3472 = vmul.f32 %v2586, %v2586
  %v3473 = vmul.f32 %v2589, %v2589
  %v3474 = vmul.f32 %v2594, %v2594
  %v3475 = vmul.f32 %v2597, %v2597
  %v3476 = vmul.f32 %v2602, %v2602
  %v3477 = vmul.f32 %v2605, %v2605
  %v3478 = vmul.f32 %v2610, %v2610
  %v3479 = vmul.f32 %v2613, %v2613
  %v3480 = vmul.f32 %v2618, %v2618
  %v3481 = vmul.f32 %v2621, %v2621
  %v3482 = vmul.f32 %v2626, %v2626
  %v3483 = vmul.f32 %v2629, %v2629
  %v3484 = vmul.f32 %v2634, %v2634
  %v3485 = vmul.f32 %v2637, %v2637
  %v3486 = vmul.f32 %v2642, %v2642
  %v3487 = vmul.f32 %v2645, %v2645
  %v3488 = vmul.f32 %v2650, %v2650
  %v3489 = vmul.f32 %v2653, %v2653
  %v3490 = vmul.f32 %v2658, %v2658
  %v3491 = vmul.f32 %v2661, %v2661
  %v3492 = vmul.f32 %v2666, %v2666
  %v3493 = vmul.f32 %v2669, %v2669
  %v3494 = vmul.f32 %v2674, %v2674
  %v3495 = vmul.f32 %v2677, %v2677
  %v3496 = vmul.f32 %v2682, %v2682
  %v3497 = vmul.f32 %v2685, %v2685
  %v3498 = vmul.f32 %v2690, %v2690
  %v3499 = vmul.f32 %v2693, %v2693
  %v3500 = vmul.f32 %v2698, %v2698
  %v3501 = vmul.f32 %v2701, %v2701
  %v3502 = vmul.f32 %v2706, %v2706
  %v3503 = vmul.f32 %v2709, %v2709
  %v3504 = vmul.f32 %v2714, %v2714
  %v3505 = vmul.f32 %v2717, %v2717
  %v3506 = vmul.f32 %v2722, %v2722
  %v3507 = vmul.f32 %v2725, %v2725
  %v3508 = vmul.f32 %v2730, %v2730
  %v3509 = vmul.f32 %v2733, %v2733
  %v3510 = vadd.f32 %v3254, %v3255
  %v3511 = vadd.f32 %v3510, %v3256
  %v3512 = vadd.f32 %v3511, %v3257
  %v3513 = vadd.f32 %v3512, %v3258
  %v3514 = vadd.f32 %v3513, %v3259
  %v3515 = vadd.f32 %v3514, %v3260
  %v3516 = vadd.f32 %v3515, %v3261
  %v3517 = vadd.f32 %v3516, %v3262
  %v3518 = vadd.f32 %v3517, %v3263
  %v3519 = vadd.f32 %v3518, %v3264
  %v3520 = vadd.f32 %v3519, %v3265
  %v3521 = vadd.f32 %v3520, %v3266
  %v3522 = vadd.f32 %v3521, %v3267
  %v3523 = vadd.f32 %v3522, %v3268
  %v3524 = vadd.f32 %v3523, %v3269
  %v3525 = vadd.f32 %v3524, %v3270
  %v3526 = vadd.f32 %v3525, %v3271
  %v3527 = vadd.f32 %v3526, %v3272
  %v3528 = vadd.f32 %v3527, %v3273
  %v3529 = vadd.f32 %v3528, %v3274
  %v3530 = vadd.f32 %v3529, %v3275
  %v3531 = vadd.f32 %v3530, %v3276
  %v3532 = vadd.f32 %v3531, %v3277
  %v3533 = vadd.f32 %v3532, %v3278
  %v3534 = vadd.f32 %v3533, %v3279
  %v3535 = vadd.f32 %v3534, %v3280
  %v3536 = vadd.f32 %v3535, %v3281
  %v3537 = vadd.f32 %v3536, %v3282
  %v3538 = vadd.f32 %v3537, %v3283
  %v3539 = vadd.f32 %v3538, %v3284
  %v3540 = vadd.f32 %v3539, %v3285
  %v3541 = vadd.f32 %v3540, %v3286
  %v3542 = vadd.f32 %v3541, %v3287
  %v3543 = vadd.f32 %v3542, %v3288
  %v3544 = vadd.f32 %v3543, %v3289
  %v3545 = vadd.f32 %v3544, %v3290
  %v3546 = vadd.f32 %v3545, %v3291
  %v3547 = vadd.f32 %v3546, %v3292
  %v3548 = vadd.f32 %v3547, %v3293
  %v3549 = vadd.f32 %v3548, %v3294
  %v3550 = vadd.f32 %v3549, %v3295
  %v3551 = vadd.f32 %v3550, %v3296
  %v3552 = vadd.f32 %v3551, %v3297
  %v3553 = vadd.f32 %v3552, %v3298
  %v3554 = vadd.f32 %v3553, %v3299
  %v3555 = vadd.f32 %v3554, %v3300
  %v3556 = vadd.f32 %v3555, %v3301
  %v3557 = vadd.f32 %v3556, %v3302
  %v3558 = vadd.f32 %v3557, %v3303
  %v3559 = vadd.f32 %v3558, %v3304
  %v3560 = vadd.f32 %v3559, %v3305
  %v3561 = vadd.f32 %v3560, %v3306
  %v3562 = vadd.f32 %v3561, %v3307
  %v3563 = vadd.f32 %v3562, %v3308
  %v3564 = vadd.f32 %v3563, %v3309
  %v3565 = vadd.f32 %v3564, %v3310
  %v3566 = vadd.f32 %v3565, %v3311
  %v3567 = vadd.f32 %v3566, %v3312
  %v3568 = vadd.f32 %v3567, %v3313
  %v3569 = vadd.f32 %v3568, %v3314
  %v3570 = vadd.f32 %v3569, %v3315
  %v3571 = vadd.f32 %v3570, %v3316
  %v3572 = vadd.f32 %v3571, %v3317
  %v3573 = vadd.f32 %v3572, %v3318
  %v3574 = vadd.f32 %v3573, %v3319
  %v3575 = vadd.f32 %v3574, %v3320
  %v3576 = vadd.f32 %v3575, %v3321
  %v3577 = vadd.f32 %v3576, %v3322
  %v3578 = vadd.f32 %v3577, %v3323
  %v3579 = vadd.f32 %v3578, %v3324
  %v3580 = vadd.f32 %v3579, %v3325
  %v3581 = vadd.f32 %v3580, %v3326
  %v3582 = vadd.f32 %v3581, %v3327
  %v3583 = vadd.f32 %v3582, %v3328
  %v3584 = vadd.f32 %v3583, %v3329
  %v3585 = vadd.f32 %v3584, %v3330
  %v3586 = vadd.f32 %v3585, %v3331
  %v3587 = vadd.f32 %v3586, %v3332
  %v3588 = vadd.f32 %v3587, %v3333
  %v3589 = vadd.f32 %v3588, %v3334
  %v3590 = vadd.f32 %v3589, %v3335
  %v3591 = vadd.f32 %v3590, %v3336
  %v3592 = vadd.f32 %v3591, %v3337
  %v3593 = vadd.f32 %v3592, %v3338
  %v3594 = vadd.f32 %v3593, %v3339
  %v3595 = vadd.f32 %v3594, %v3340
  %v3596 = vadd.f32 %v3595, %v3341
  %v3597 = vadd.f32 %v3596, %v3342
  %v3598 = vadd.f32 %v3597, %v3343
  %v3599 = vadd.f32 %v3598, %v3344
  %v3600 = vadd.f32 %v3599, %v3345
  %v3601 = vadd.f32 %v3600, %v3346
  %v3602 = vadd.f32 %v3601, %v3347
  %v3603 = vadd.f32 %v3602, %v3348
  %v3604 = vadd.f32 %v3603, %v3349
  %v3605 = vadd.f32 %v3604, %v3350
  %v3606 = vadd.f32 %v3605, %v3351
  %v3607 = vadd.f32 %v3606, %v3352
  %v3608 = vadd.f32 %v3607, %v3353
  %v3609 = vadd.f32 %v3608, %v3354
  %v3610 = vadd.f32 %v3609, %v3355
  %v3611 = vadd.f32 %v3610, %v3356
  %v3612 = vadd.f32 %v3611, %v3357
  %v3613 = vadd.f32 %v3612, %v3358
  %v3614 = vadd.f32 %v3613, %v3359
  %v3615 = vadd.f32 %v3614, %v3360
  %v3616 = vadd.f32 %v3615, %v3361
  %v3617 = vadd.f32 %v3616, %v3362
  %v3618 = vadd.f32 %v3617, %v3363
  %v3619 = vadd.f32 %v3618, %v3364
  %v3620 = vadd.f32 %v3619, %v3365
  %v3621 = vadd.f32 %v3620, %v3366
  %v3622 = vadd.f32 %v3621, %v3367
  %v3623 = vadd.f32 %v3622, %v3368
  %v3624 = vadd.f32 %v3623, %v3369
  %v3625 = vadd.f32 %v3624, %v3370
  %v3626 = vadd.f32 %v3625, %v3371
  %v3627 = vadd.f32 %v3626, %v3372
  %v3628 = vadd.f32 %v3627, %v3373
  %v3629 = vadd.f32 %v3628, %v3374
  %v3630 = vadd.f32 %v3629, %v3375
  %v3631 = vadd.f32 %v3630, %v3376
  %v3632 = vadd.f32 %v3631, %v3377
  %v3633 = vadd.f32 %v3632, %v3378
  %v3634 = vadd.f32 %v3633, %v3379
  %v3635 = vadd.f32 %v3634, %v3380
  %v3636 = vadd.f32 %v3635, %v3381
  %v3637 = vadd.f32 %v3636, %v3382
  %v3638 = vadd.f32 %v3637, %v3383
  %v3639 = vadd.f32 %v3638, %v3384
  %v3640 = vadd.f32 %v3639, %v3385
  %v3641 = vadd.f32 %v3640, %v3386
  %v3642 = vadd.f32 %v3641, %v3387
  %v3643 = vadd.f32 %v3642, %v3388
  %v3644 = vadd.f32 %v3643, %v3389
  %v3645 = vadd.f32 %v3644, %v3390
  %v3646 = vadd.f32 %v3645, %v3391
  %v3647 = vadd.f32 %v3646, %v3392
  %v3648 = vadd.f32 %v3647, %v3393
  %v3649 = vadd.f32 %v3648, %v3394
  %v3650 = vadd.f32 %v3649, %v3395
  %v3651 = vadd.f32 %v3650, %v3396
  %v3652 = vadd.f32 %v3651, %v3397
  %v3653 = vadd.f32 %v3652, %v3398
  %v3654 = vadd.f32 %v3653, %v3399
  %v3655 = vadd.f32 %v3654, %v3400
  %v3656 = vadd.f32 %v3655, %v3401
  %v3657 = vadd.f32 %v3656, %v3402
  %v3658 = vadd.f32 %v3657, %v3403
  %v3659 = vadd.f32 %v3658, %v3404
  %v3660 = vadd.f32 %v3659, %v3405
  %v3661 = vadd.f32 %v3660, %v3406
  %v3662 = vadd.f32 %v3661, %v3407
  %v3663 = vadd.f32 %v3662, %v3408
  %v3664 = vadd.f32 %v3663, %v3409
  %v3665 = vadd.f32 %v3664, %v3410
  %v3666 = vadd.f32 %v3665, %v3411
  %v3667 = vadd.f32 %v3666, %v3412
  %v3668 = vadd.f32 %v3667, %v3413
  %v3669 = vadd.f32 %v3668, %v3414
  %v3670 = vadd.f32 %v3669, %v3415
  %v3671 = vadd.f32 %v3670, %v3416
  %v3672 = vadd.f32 %v3671, %v3417
  %v3673 = vadd.f32 %v3672, %v3418
  %v3674 = vadd.f32 %v3673, %v3419
  %v3675 = vadd.f32 %v3674, %v3420
  %v3676 = vadd.f32 %v3675, %v3421
  %v3677 = vadd.f32 %v3676, %v3422
  %v3678 = vadd.f32 %v3677, %v3423
  %v3679 = vadd.f32 %v3678, %v3424
  %v3680 = vadd.f32 %v3679, %v3425
  %v3681 = vadd.f32 %v3680, %v3426
  %v3682 = vadd.f32 %v3681, %v3427
  %v3683 = vadd.f32 %v3682, %v3428
  %v3684 = vadd.f32 %v3683, %v3429
  %v3685 = vadd.f32 %v3684, %v3430
  %v3686 = vadd.f32 %v3685, %v3431
  %v3687 = vadd.f32 %v3686, %v3432
  %v3688 = vadd.f32 %v3687, %v3433
  %v3689 = vadd.f32 %v3688, %v3434
  %v3690 = vadd.f32 %v3689, %v3435
  %v3691 = vadd.f32 %v3690, %v3436
  %v3692 = vadd.f32 %v3691, %v3437
  %v3693 = vadd.f32 %v3692, %v3438
  %v3694 = vadd.f32 %v3693, %v3439
  %v3695 = vadd.f32 %v3694, %v3440
  %v3696 = vadd.f32 %v3695, %v3441
  %v3697 = vadd.f32 %v3696, %v3442
  %v3698 = vadd.f32 %v3697, %v3443
  %v3699 = vadd.f32 %v3698, %v3444
  %v3700 = vadd.f32 %v3699, %v3445
  %v3701 = vadd.f32 %v3700, %v3446
  %v3702 = vadd.f32 %v3701, %v3447
  %v3703 = vadd.f32 %v3702, %v3448
  %v3704 = vadd.f32 %v3703, %v3449
  %v3705 = vadd.f32 %v3704, %v3450
  %v3706 = vadd.f32 %v3705, %v3451
  %v3707 = vadd.f32 %v3706, %v3452
  %v3708 = vadd.f32 %v3707, %v3453
  %v3709 = vadd.f32 %v3708, %v3454
  %v3710 = vadd.f32 %v3709, %v3455
  %v3711 = vadd.f32 %v3710, %v3456
  %v3712 = vadd.f32 %v3711, %v3457
  %v3713 = vadd.f32 %v3712, %v3458
  %v3714 = vadd.f32 %v3713, %v3459
  %v3715 = vadd.f32 %v3714, %v3460
  %v3716 = vadd.f32 %v3715, %v3461
  %v3717 = vadd.f32 %v3716, %v3462
  %v3718 = vadd.f32 %v3717, %v3463
  %v3719 = vadd.f32 %v3718, %v3464
  %v3720 = vadd.f32 %v3719, %v3465
  %v3721 = vadd.f32 %v3720, %v3466
  %v3722 = vadd.f32 %v3721, %v3467
  %v3723 = vadd.f32 %v3722, %v3468
  %v3724 = vadd.f32 %v3723, %v3469
  %v3725 = vadd.f32 %v3724, %v3470
  %v3726 = vadd.f32 %v3725, %v3471
  %v3727 = vadd.f32 %v3726, %v3472
  %v3728 = vadd.f32 %v3727, %v3473
  %v3729 = vadd.f32 %v3728, %v3474
  %v3730 = vadd.f32 %v3729, %v3475
  %v3731 = vadd.f32 %v3730, %v3476
  %v3732 = vadd.f32 %v3731, %v3477
  %v3733 = vadd.f32 %v3732, %v3478
  %v3734 = vadd.f32 %v3733, %v3479
  %v3735 = vadd.f32 %v3734, %v3480
  %v3736 = vadd.f32 %v3735, %v3481
  %v3737 = vadd.f32 %v3736, %v3482
  %v3738 = vadd.f32 %v3737, %v3483
  %v3739 = vadd.f32 %v3738, %v3484
  %v3740 = vadd.f32 %v3739, %v3485
  %v3741 = vadd.f32 %v3740, %v3486
  %v3742 = vadd.f32 %v3741, %v3487
  %v3743 = vadd.f32 %v3742, %v3488
  %v3744 = vadd.f32 %v3743, %v3489
  %v3745 = vadd.f32 %v3744, %v3490
  %v3746 = vadd.f32 %v3745, %v3491
  %v3747 = vadd.f32 %v3746, %v3492
  %v3748 = vadd.f32 %v3747, %v3493
  %v3749 = vadd.f32 %v3748, %v3494
  %v3750 = vadd.f32 %v3749, %v3495
  %v3751 = vadd.f32 %v3750, %v3496
  %v3752 = vadd.f32 %v3751, %v3497
  %v3753 = vadd.f32 %v3752, %v3498
  %v3754 = vadd.f32 %v3753, %v3499
  %v3755 = vadd.f32 %v3754, %v3500
  %v3756 = vadd.f32 %v3755, %v3501
  %v3757 = vadd.f32 %v3756, %v3502
  %v3758 = vadd.f32 %v3757, %v3503
  %v3759 = vadd.f32 %v3758, %v3504
  %v3760 = vadd.f32 %v3759, %v3505
  %v3761 = vadd.f32 %v3760, %v3506
  %v3762 = vadd.f32 %v3761, %v3507
  %v3763 = vadd.f32 %v3762, %v3508
  %v3764 = vadd.f32 %v3763, %v3509
  %v3765 = vrot.slane %v3764, 4
  %v3766 = vadd.f32 %v3764, %v3765
  %v3767 = vrot.slane %v3766, 2
  %v3768 = vadd.f32 %v3766, %v3767
  %v3769 = vrot.slane %v3768, 1
  %v3770 = vadd.f32 %v3768, %v3769
  %3771 = vst [vmem:[%s4] sm:$0x1] %v3770
  // Predicated region
  $region10: #{_lambda_.15} parent=0 // pred_check
    _
  $region11: #{_lambda_.15} parent=0 // pred_check_branch
    %3773 = sbr.rel (0) target = $region13
  $region12: #{_lambda_.15} parent=0 // pred_region
    _
  $region13: #{_lambda_.15} parent=0 // pred_fallthru
    _
  // Predicated region
  $region14: #{_lambda_.15} parent=0 // pred_check
    _
  $region15: #{_lambda_.15} parent=0 // pred_check_branch
    %3775 = sbr.rel (0) target = $region17
  $region16: #{_lambda_.15} parent=0 // pred_region
    _
  $region17: #{_lambda_.15} parent=0 // pred_fallthru
    _
  // Predicated region
  $region18: #{_lambda_.15} parent=0 // pred_check
    _
  $region19: #{_lambda_.15} parent=0 // pred_check_branch
    %3777 = sbr.rel (0) target = $region21
  $region20: #{_lambda_.15} parent=0 // pred_region
    _
  $region21: #{_lambda_.15} parent=0 // pred_fallthru
    _
  // Predicated region
  $region22: #{_lambda_.15} parent=0 // pred_check
    _
  $region23: #{_lambda_.15} parent=0 // pred_check_branch
    %3779 = sbr.rel (0) target = $region25
  $region24: #{_lambda_.15} parent=0 // pred_region
    _
  $region25: #{_lambda_.15} parent=0 // pred_fallthru
    _
  // Predicated region
  $region26: #{_lambda_.15} parent=0 // pred_check
    _
  $region27: #{_lambda_.15} parent=0 // pred_check_branch
    %3781 = sbr.rel (0) target = $region29
  $region28: #{_lambda_.15} parent=0 // pred_region
    _
  $region29: #{_lambda_.15} parent=0 // pred_fallthru
    _
  // Predicated region
  $region30: #{_lambda_.15} parent=0 // pred_check
    _
  $region31: #{_lambda_.15} parent=0 // pred_check_branch
    %3783 = sbr.rel (0) target = $region33
  $region32: #{_lambda_.15} parent=0 // pred_region
    _
  $region33: #{_lambda_.15} parent=0 // pred_fallthru
    _

// kernel: _lambda_.16
$region0: #{_lambda_.16}
  #allocation0 [shape = 'u32[]', space=smem, size = 0x4, offset = 0x4, fixed_abs, tag = 'smem constant byte address 0x4 - core index']
  #allocation1 [shape = 'u32[144,128]{1,0:T(1,128)}', space=vmem, size = 0x12000, scoped, tag = 'internal scratch']
  %s0 = inlined_call_operand.vmem [shape: f32[2048,128], index: 0, kind: input, shape index: {}]
  %s1 = inlined_call_operand.vmem [shape: f32[1,128], index: 1, kind: input, shape index: {}]
  %s2 = inlined_call_operand.vmem [shape: f32[1,128], index: 2, kind: input, shape index: {}]
  %s3 = inlined_call_operand.vmem [shape: bf16[2048,128], index: 3, kind: output, shape index: {}]
  %s4 = sld [smem:[#allocation0]]
  $region22: #{_lambda_.16} parent=0
    _
  %s6 = ssub.s32 1, %s4
  %s7 = scalar_select 0, %s6, %s4
  // Predicated region
  $region2: #{_lambda_.16} parent=0 // pred_check
    _
  $region3: #{_lambda_.16} parent=0 // pred_check_branch
    %9 = sbr.rel (0) target = $region5
  $region4: #{_lambda_.16} parent=0 // pred_region
    _
  $region5: #{_lambda_.16} parent=0 // pred_fallthru
    _
  // Predicated region
  $region6: #{_lambda_.16} parent=0 // pred_check
    _
  $region7: #{_lambda_.16} parent=0 // pred_check_branch
    %11 = sbr.rel (0) target = $region9
  $region8: #{_lambda_.16} parent=0 // pred_region
    _
  $region9: #{_lambda_.16} parent=0 // pred_fallthru
    _
  // Predicated region
  $region10: #{_lambda_.16} parent=0 // pred_check
    _
  $region11: #{_lambda_.16} parent=0 // pred_check_branch
    %13 = sbr.rel (0) target = $region13
  $region12: #{_lambda_.16} parent=0 // pred_region
    _
  $region13: #{_lambda_.16} parent=0 // pred_fallthru
    _
  %v14 = vld [vmem:[%s0] sm:$0xff]
  %v15 = vld [vmem:[%s0 + $0x8] sm:$0xff]
  %v16 = vld [vmem:[%s0 + $0x10] sm:$0xff]
  %v17 = vld [vmem:[%s0 + $0x18] sm:$0xff]
  %v18 = vld [vmem:[%s0 + $0x20] sm:$0xff]
  %v19 = vld [vmem:[%s0 + $0x28] sm:$0xff]
  %v20 = vld [vmem:[%s0 + $0x30] sm:$0xff]
  %v21 = vld [vmem:[%s0 + $0x38] sm:$0xff]
  %v22 = vld [vmem:[%s0 + $0x40] sm:$0xff]
  %v23 = vld [vmem:[%s0 + $0x48] sm:$0xff]
  %v24 = vld [vmem:[%s0 + $0x50] sm:$0xff]
  %v25 = vld [vmem:[%s0 + $0x58] sm:$0xff]
  %v26 = vld [vmem:[%s0 + $0x60] sm:$0xff]
  %v27 = vld [vmem:[%s0 + $0x68] sm:$0xff]
  %v28 = vld [vmem:[%s0 + $0x70] sm:$0xff]
  %v29 = vld [vmem:[%s0 + $0x78] sm:$0xff]
  %v30 = vld [vmem:[%s0 + $0x80] sm:$0xff]
  %v31 = vld [vmem:[%s0 + $0x88] sm:$0xff]
  %v32 = vld [vmem:[%s0 + $0x90] sm:$0xff]
  %v33 = vld [vmem:[%s0 + $0x98] sm:$0xff]
  %v34 = vld [vmem:[%s0 + $0xa0] sm:$0xff]
  %v35 = vld [vmem:[%s0 + $0xa8] sm:$0xff]
  %v36 = vld [vmem:[%s0 + $0xb0] sm:$0xff]
  %v37 = vld [vmem:[%s0 + $0xb8] sm:$0xff]
  %v38 = vld [vmem:[%s0 + $0xc0] sm:$0xff]
  %v39 = vld [vmem:[%s0 + $0xc8] sm:$0xff]
  %v40 = vld [vmem:[%s0 + $0xd0] sm:$0xff]
  %v41 = vld [vmem:[%s0 + $0xd8] sm:$0xff]
  %v42 = vld [vmem:[%s0 + $0xe0] sm:$0xff]
  %v43 = vld [vmem:[%s0 + $0xe8] sm:$0xff]
  %v44 = vld [vmem:[%s0 + $0xf0] sm:$0xff]
  %v45 = vld [vmem:[%s0 + $0xf8] sm:$0xff]
  %v46 = vld [vmem:[%s0 + $0x100] sm:$0xff]
  %v47 = vld [vmem:[%s0 + $0x108] sm:$0xff]
  %v48 = vld [vmem:[%s0 + $0x110] sm:$0xff]
  %v49 = vld [vmem:[%s0 + $0x118] sm:$0xff]
  %v50 = vld [vmem:[%s0 + $0x120] sm:$0xff]
  %v51 = vld [vmem:[%s0 + $0x128] sm:$0xff]
  %v52 = vld [vmem:[%s0 + $0x130] sm:$0xff]
  %v53 = vld [vmem:[%s0 + $0x138] sm:$0xff]
  %v54 = vld [vmem:[%s0 + $0x140] sm:$0xff]
  %v55 = vld [vmem:[%s0 + $0x148] sm:$0xff]
  %v56 = vld [vmem:[%s0 + $0x150] sm:$0xff]
  %v57 = vld [vmem:[%s0 + $0x158] sm:$0xff]
  %v58 = vld [vmem:[%s0 + $0x160] sm:$0xff]
  %v59 = vld [vmem:[%s0 + $0x168] sm:$0xff]
  %v60 = vld [vmem:[%s0 + $0x170] sm:$0xff]
  %v61 = vld [vmem:[%s0 + $0x178] sm:$0xff]
  %v62 = vld [vmem:[%s0 + $0x180] sm:$0xff]
  %v63 = vld [vmem:[%s0 + $0x188] sm:$0xff]
  %v64 = vld [vmem:[%s0 + $0x190] sm:$0xff]
  %v65 = vld [vmem:[%s0 + $0x198] sm:$0xff]
  %v66 = vld [vmem:[%s0 + $0x1a0] sm:$0xff]
  %v67 = vld [vmem:[%s0 + $0x1a8] sm:$0xff]
  %v68 = vld [vmem:[%s0 + $0x1b0] sm:$0xff]
  %v69 = vld [vmem:[%s0 + $0x1b8] sm:$0xff]
  %v70 = vld [vmem:[%s0 + $0x1c0] sm:$0xff]
  %v71 = vld [vmem:[%s0 + $0x1c8] sm:$0xff]
  %v72 = vld [vmem:[%s0 + $0x1d0] sm:$0xff]
  %v73 = vld [vmem:[%s0 + $0x1d8] sm:$0xff]
  %v74 = vld [vmem:[%s0 + $0x1e0] sm:$0xff]
  %v75 = vld [vmem:[%s0 + $0x1e8] sm:$0xff]
  %v76 = vld [vmem:[%s0 + $0x1f0] sm:$0xff]
  %v77 = vld [vmem:[%s0 + $0x1f8] sm:$0xff]
  %v78 = vld [vmem:[%s0 + $0x200] sm:$0xff]
  %v79 = vld [vmem:[%s0 + $0x208] sm:$0xff]
  %v80 = vld [vmem:[%s0 + $0x210] sm:$0xff]
  %v81 = vld [vmem:[%s0 + $0x218] sm:$0xff]
  %v82 = vld [vmem:[%s0 + $0x220] sm:$0xff]
  %v83 = vld [vmem:[%s0 + $0x228] sm:$0xff]
  %v84 = vld [vmem:[%s0 + $0x230] sm:$0xff]
  %v85 = vld [vmem:[%s0 + $0x238] sm:$0xff]
  %v86 = vld [vmem:[%s0 + $0x240] sm:$0xff]
  %v87 = vld [vmem:[%s0 + $0x248] sm:$0xff]
  %v88 = vld [vmem:[%s0 + $0x250] sm:$0xff]
  %v89 = vld [vmem:[%s0 + $0x258] sm:$0xff]
  %v90 = vld [vmem:[%s0 + $0x260] sm:$0xff]
  %v91 = vld [vmem:[%s0 + $0x268] sm:$0xff]
  %v92 = vld [vmem:[%s0 + $0x270] sm:$0xff]
  %v93 = vld [vmem:[%s0 + $0x278] sm:$0xff]
  %v94 = vld [vmem:[%s0 + $0x280] sm:$0xff]
  %v95 = vld [vmem:[%s0 + $0x288] sm:$0xff]
  %v96 = vld [vmem:[%s0 + $0x290] sm:$0xff]
  %v97 = vld [vmem:[%s0 + $0x298] sm:$0xff]
  %v98 = vld [vmem:[%s0 + $0x2a0] sm:$0xff]
  %v99 = vld [vmem:[%s0 + $0x2a8] sm:$0xff]
  %v100 = vld [vmem:[%s0 + $0x2b0] sm:$0xff]
  %v101 = vld [vmem:[%s0 + $0x2b8] sm:$0xff]
  %v102 = vld [vmem:[%s0 + $0x2c0] sm:$0xff]
  %v103 = vld [vmem:[%s0 + $0x2c8] sm:$0xff]
  %v104 = vld [vmem:[%s0 + $0x2d0] sm:$0xff]
  %v105 = vld [vmem:[%s0 + $0x2d8] sm:$0xff]
  %v106 = vld [vmem:[%s0 + $0x2e0] sm:$0xff]
  %v107 = vld [vmem:[%s0 + $0x2e8] sm:$0xff]
  %v108 = vld [vmem:[%s0 + $0x2f0] sm:$0xff]
  %v109 = vld [vmem:[%s0 + $0x2f8] sm:$0xff]
  %v110 = vld [vmem:[%s0 + $0x300] sm:$0xff]
  %v111 = vld [vmem:[%s0 + $0x308] sm:$0xff]
  %v112 = vld [vmem:[%s0 + $0x310] sm:$0xff]
  %v113 = vld [vmem:[%s0 + $0x318] sm:$0xff]
  %v114 = vld [vmem:[%s0 + $0x320] sm:$0xff]
  %v115 = vld [vmem:[%s0 + $0x328] sm:$0xff]
  %v116 = vld [vmem:[%s0 + $0x330] sm:$0xff]
  %v117 = vld [vmem:[%s0 + $0x338] sm:$0xff]
  %v118 = vld [vmem:[%s0 + $0x340] sm:$0xff]
  %v119 = vld [vmem:[%s0 + $0x348] sm:$0xff]
  %v120 = vld [vmem:[%s0 + $0x350] sm:$0xff]
  %v121 = vld [vmem:[%s0 + $0x358] sm:$0xff]
  %v122 = vld [vmem:[%s0 + $0x360] sm:$0xff]
  %v123 = vld [vmem:[%s0 + $0x368] sm:$0xff]
  %v124 = vld [vmem:[%s0 + $0x370] sm:$0xff]
  %v125 = vld [vmem:[%s0 + $0x378] sm:$0xff]
  %v126 = vld [vmem:[%s0 + $0x380] sm:$0xff]
  %v127 = vld [vmem:[%s0 + $0x388] sm:$0xff]
  %v128 = vld [vmem:[%s0 + $0x390] sm:$0xff]
  %v129 = vld [vmem:[%s0 + $0x398] sm:$0xff]
  %v130 = vld [vmem:[%s0 + $0x3a0] sm:$0xff]
  %v131 = vld [vmem:[%s0 + $0x3a8] sm:$0xff]
  %v132 = vld [vmem:[%s0 + $0x3b0] sm:$0xff]
  %v133 = vld [vmem:[%s0 + $0x3b8] sm:$0xff]
  %v134 = vld [vmem:[%s0 + $0x3c0] sm:$0xff]
  %v135 = vld [vmem:[%s0 + $0x3c8] sm:$0xff]
  %v136 = vld [vmem:[%s0 + $0x3d0] sm:$0xff]
  %v137 = vld [vmem:[%s0 + $0x3d8] sm:$0xff]
  %v138 = vld [vmem:[%s0 + $0x3e0] sm:$0xff]
  %v139 = vld [vmem:[%s0 + $0x3e8] sm:$0xff]
  %v140 = vld [vmem:[%s0 + $0x3f0] sm:$0xff]
  %v141 = vld [vmem:[%s0 + $0x3f8] sm:$0xff]
  %v142 = vld [vmem:[%s0 + $0x400] sm:$0xff]
  %v143 = vld [vmem:[%s0 + $0x408] sm:$0xff]
  %v144 = vld [vmem:[%s0 + $0x410] sm:$0xff]
  %v145 = vld [vmem:[%s0 + $0x418] sm:$0xff]
  %v146 = vld [vmem:[%s0 + $0x420] sm:$0xff]
  %v147 = vld [vmem:[%s0 + $0x428] sm:$0xff]
  %v148 = vld [vmem:[%s0 + $0x430] sm:$0xff]
  %v149 = vld [vmem:[%s0 + $0x438] sm:$0xff]
  %v150 = vld [vmem:[%s0 + $0x440] sm:$0xff]
  %v151 = vld [vmem:[%s0 + $0x448] sm:$0xff]
  %v152 = vld [vmem:[%s0 + $0x450] sm:$0xff]
  %v153 = vld [vmem:[%s0 + $0x458] sm:$0xff]
  %v154 = vld [vmem:[%s0 + $0x460] sm:$0xff]
  %v155 = vld [vmem:[%s0 + $0x468] sm:$0xff]
  %v156 = vld [vmem:[%s0 + $0x470] sm:$0xff]
  %v157 = vld [vmem:[%s0 + $0x478] sm:$0xff]
  %v158 = vld [vmem:[%s0 + $0x480] sm:$0xff]
  %v159 = vld [vmem:[%s0 + $0x488] sm:$0xff]
  %v160 = vld [vmem:[%s0 + $0x490] sm:$0xff]
  %v161 = vld [vmem:[%s0 + $0x498] sm:$0xff]
  %v162 = vld [vmem:[%s0 + $0x4a0] sm:$0xff]
  %v163 = vld [vmem:[%s0 + $0x4a8] sm:$0xff]
  %v164 = vld [vmem:[%s0 + $0x4b0] sm:$0xff]
  %v165 = vld [vmem:[%s0 + $0x4b8] sm:$0xff]
  %v166 = vld [vmem:[%s0 + $0x4c0] sm:$0xff]
  %v167 = vld [vmem:[%s0 + $0x4c8] sm:$0xff]
  %v168 = vld [vmem:[%s0 + $0x4d0] sm:$0xff]
  %v169 = vld [vmem:[%s0 + $0x4d8] sm:$0xff]
  %v170 = vld [vmem:[%s0 + $0x4e0] sm:$0xff]
  %v171 = vld [vmem:[%s0 + $0x4e8] sm:$0xff]
  %v172 = vld [vmem:[%s0 + $0x4f0] sm:$0xff]
  %v173 = vld [vmem:[%s0 + $0x4f8] sm:$0xff]
  %v174 = vld [vmem:[%s0 + $0x500] sm:$0xff]
  %v175 = vld [vmem:[%s0 + $0x508] sm:$0xff]
  %v176 = vld [vmem:[%s0 + $0x510] sm:$0xff]
  %v177 = vld [vmem:[%s0 + $0x518] sm:$0xff]
  %v178 = vld [vmem:[%s0 + $0x520] sm:$0xff]
  %v179 = vld [vmem:[%s0 + $0x528] sm:$0xff]
  %v180 = vld [vmem:[%s0 + $0x530] sm:$0xff]
  %v181 = vld [vmem:[%s0 + $0x538] sm:$0xff]
  %v182 = vld [vmem:[%s0 + $0x540] sm:$0xff]
  %v183 = vld [vmem:[%s0 + $0x548] sm:$0xff]
  %v184 = vld [vmem:[%s0 + $0x550] sm:$0xff]
  %v185 = vld [vmem:[%s0 + $0x558] sm:$0xff]
  %v186 = vld [vmem:[%s0 + $0x560] sm:$0xff]
  %v187 = vld [vmem:[%s0 + $0x568] sm:$0xff]
  %v188 = vld [vmem:[%s0 + $0x570] sm:$0xff]
  %v189 = vld [vmem:[%s0 + $0x578] sm:$0xff]
  %v190 = vld [vmem:[%s0 + $0x580] sm:$0xff]
  %v191 = vld [vmem:[%s0 + $0x588] sm:$0xff]
  %v192 = vld [vmem:[%s0 + $0x590] sm:$0xff]
  %v193 = vld [vmem:[%s0 + $0x598] sm:$0xff]
  %v194 = vld [vmem:[%s0 + $0x5a0] sm:$0xff]
  %v195 = vld [vmem:[%s0 + $0x5a8] sm:$0xff]
  %v196 = vld [vmem:[%s0 + $0x5b0] sm:$0xff]
  %v197 = vld [vmem:[%s0 + $0x5b8] sm:$0xff]
  %v198 = vld [vmem:[%s0 + $0x5c0] sm:$0xff]
  %v199 = vld [vmem:[%s0 + $0x5c8] sm:$0xff]
  %v200 = vld [vmem:[%s0 + $0x5d0] sm:$0xff]
  %v201 = vld [vmem:[%s0 + $0x5d8] sm:$0xff]
  %v202 = vld [vmem:[%s0 + $0x5e0] sm:$0xff]
  %v203 = vld [vmem:[%s0 + $0x5e8] sm:$0xff]
  %v204 = vld [vmem:[%s0 + $0x5f0] sm:$0xff]
  %v205 = vld [vmem:[%s0 + $0x5f8] sm:$0xff]
  %v206 = vld [vmem:[%s0 + $0x600] sm:$0xff]
  %v207 = vld [vmem:[%s0 + $0x608] sm:$0xff]
  %v208 = vld [vmem:[%s0 + $0x610] sm:$0xff]
  %v209 = vld [vmem:[%s0 + $0x618] sm:$0xff]
  %v210 = vld [vmem:[%s0 + $0x620] sm:$0xff]
  %v211 = vld [vmem:[%s0 + $0x628] sm:$0xff]
  %v212 = vld [vmem:[%s0 + $0x630] sm:$0xff]
  %v213 = vld [vmem:[%s0 + $0x638] sm:$0xff]
  %v214 = vld [vmem:[%s0 + $0x640] sm:$0xff]
  %v215 = vld [vmem:[%s0 + $0x648] sm:$0xff]
  %v216 = vld [vmem:[%s0 + $0x650] sm:$0xff]
  %v217 = vld [vmem:[%s0 + $0x658] sm:$0xff]
  %v218 = vld [vmem:[%s0 + $0x660] sm:$0xff]
  %v219 = vld [vmem:[%s0 + $0x668] sm:$0xff]
  %v220 = vld [vmem:[%s0 + $0x670] sm:$0xff]
  %v221 = vld [vmem:[%s0 + $0x678] sm:$0xff]
  %v222 = vld [vmem:[%s0 + $0x680] sm:$0xff]
  %v223 = vld [vmem:[%s0 + $0x688] sm:$0xff]
  %v224 = vld [vmem:[%s0 + $0x690] sm:$0xff]
  %v225 = vld [vmem:[%s0 + $0x698] sm:$0xff]
  %v226 = vld [vmem:[%s0 + $0x6a0] sm:$0xff]
  %v227 = vld [vmem:[%s0 + $0x6a8] sm:$0xff]
  %v228 = vld [vmem:[%s0 + $0x6b0] sm:$0xff]
  %v229 = vld [vmem:[%s0 + $0x6b8] sm:$0xff]
  %v230 = vld [vmem:[%s0 + $0x6c0] sm:$0xff]
  %v231 = vld [vmem:[%s0 + $0x6c8] sm:$0xff]
  %v232 = vld [vmem:[%s0 + $0x6d0] sm:$0xff]
  %v233 = vld [vmem:[%s0 + $0x6d8] sm:$0xff]
  %v234 = vld [vmem:[%s0 + $0x6e0] sm:$0xff]
  %v235 = vld [vmem:[%s0 + $0x6e8] sm:$0xff]
  %v236 = vld [vmem:[%s0 + $0x6f0] sm:$0xff]
  %v237 = vld [vmem:[%s0 + $0x6f8] sm:$0xff]
  %v238 = vld [vmem:[%s0 + $0x700] sm:$0xff]
  %v239 = vld [vmem:[%s0 + $0x708] sm:$0xff]
  %v240 = vld [vmem:[%s0 + $0x710] sm:$0xff]
  %v241 = vld [vmem:[%s0 + $0x718] sm:$0xff]
  %v242 = vld [vmem:[%s0 + $0x720] sm:$0xff]
  %v243 = vld [vmem:[%s0 + $0x728] sm:$0xff]
  %v244 = vld [vmem:[%s0 + $0x730] sm:$0xff]
  %v245 = vld [vmem:[%s0 + $0x738] sm:$0xff]
  %v246 = vld [vmem:[%s0 + $0x740] sm:$0xff]
  %v247 = vld [vmem:[%s0 + $0x748] sm:$0xff]
  %v248 = vld [vmem:[%s0 + $0x750] sm:$0xff]
  %v249 = vld [vmem:[%s0 + $0x758] sm:$0xff]
  %v250 = vld [vmem:[%s0 + $0x760] sm:$0xff]
  %v251 = vld [vmem:[%s0 + $0x768] sm:$0xff]
  %v252 = vld [vmem:[%s0 + $0x770] sm:$0xff]
  %v253 = vld [vmem:[%s0 + $0x778] sm:$0xff]
  %v254 = vld [vmem:[%s0 + $0x780] sm:$0xff]
  %v255 = vld [vmem:[%s0 + $0x788] sm:$0xff]
  %v256 = vld [vmem:[%s0 + $0x790] sm:$0xff]
  %v257 = vld [vmem:[%s0 + $0x798] sm:$0xff]
  %v258 = vld [vmem:[%s0 + $0x7a0] sm:$0xff]
  %v259 = vld [vmem:[%s0 + $0x7a8] sm:$0xff]
  %v260 = vld [vmem:[%s0 + $0x7b0] sm:$0xff]
  %v261 = vld [vmem:[%s0 + $0x7b8] sm:$0xff]
  %v262 = vld [vmem:[%s0 + $0x7c0] sm:$0xff]
  %v263 = vld [vmem:[%s0 + $0x7c8] sm:$0xff]
  %v264 = vld [vmem:[%s0 + $0x7d0] sm:$0xff]
  %v265 = vld [vmem:[%s0 + $0x7d8] sm:$0xff]
  %v266 = vld [vmem:[%s0 + $0x7e0] sm:$0xff]
  %v267 = vld [vmem:[%s0 + $0x7e8] sm:$0xff]
  %v268 = vld [vmem:[%s0 + $0x7f0] sm:$0xff]
  %v269 = vld [vmem:[%s0 + $0x7f8] sm:$0xff]
  %v270 = vld [vmem:[%s1] sm:$0x1]
  %v272 = vlaneseq
  %v273 = vshrl.u32 %v272, 7
  %v274 = vsub.s32 0, %v273
  %v275 = vrot.slane %v270, %v274
  %v277 = vmul.f32 %v14, %v275
  %v278 = vmul.f32 %v15, %v275
  %v279 = vmul.f32 %v16, %v275
  %v280 = vmul.f32 %v17, %v275
  %v281 = vmul.f32 %v18, %v275
  %v282 = vmul.f32 %v19, %v275
  %v283 = vmul.f32 %v20, %v275
  %v284 = vmul.f32 %v21, %v275
  %v285 = vmul.f32 %v22, %v275
  %v286 = vmul.f32 %v23, %v275
  %v287 = vmul.f32 %v24, %v275
  %v288 = vmul.f32 %v25, %v275
  %v289 = vmul.f32 %v26, %v275
  %v290 = vmul.f32 %v27, %v275
  %v291 = vmul.f32 %v28, %v275
  %v292 = vmul.f32 %v29, %v275
  %v293 = vmul.f32 %v30, %v275
  %v294 = vmul.f32 %v31, %v275
  %v295 = vmul.f32 %v32, %v275
  %v296 = vmul.f32 %v33, %v275
  %v297 = vmul.f32 %v34, %v275
  %v298 = vmul.f32 %v35, %v275
  %v299 = vmul.f32 %v36, %v275
  %v300 = vmul.f32 %v37, %v275
  %v301 = vmul.f32 %v38, %v275
  %v302 = vmul.f32 %v39, %v275
  %v303 = vmul.f32 %v40, %v275
  %v304 = vmul.f32 %v41, %v275
  %v305 = vmul.f32 %v42, %v275
  %v306 = vmul.f32 %v43, %v275
  %v307 = vmul.f32 %v44, %v275
  %v308 = vmul.f32 %v45, %v275
  %v309 = vmul.f32 %v46, %v275
  %v310 = vmul.f32 %v47, %v275
  %v311 = vmul.f32 %v48, %v275
  %v312 = vmul.f32 %v49, %v275
  %v313 = vmul.f32 %v50, %v275
  %v314 = vmul.f32 %v51, %v275
  %v315 = vmul.f32 %v52, %v275
  %v316 = vmul.f32 %v53, %v275
  %v317 = vmul.f32 %v54, %v275
  %v318 = vmul.f32 %v55, %v275
  %v319 = vmul.f32 %v56, %v275
  %v320 = vmul.f32 %v57, %v275
  %v321 = vmul.f32 %v58, %v275
  %v322 = vmul.f32 %v59, %v275
  %v323 = vmul.f32 %v60, %v275
  %v324 = vmul.f32 %v61, %v275
  %v325 = vmul.f32 %v62, %v275
  %v326 = vmul.f32 %v63, %v275
  %v327 = vmul.f32 %v64, %v275
  %v328 = vmul.f32 %v65, %v275
  %v329 = vmul.f32 %v66, %v275
  %v330 = vmul.f32 %v67, %v275
  %v331 = vmul.f32 %v68, %v275
  %v332 = vmul.f32 %v69, %v275
  %v333 = vmul.f32 %v70, %v275
  %v334 = vmul.f32 %v71, %v275
  %v335 = vmul.f32 %v72, %v275
  %v336 = vmul.f32 %v73, %v275
  %v337 = vmul.f32 %v74, %v275
  %v338 = vmul.f32 %v75, %v275
  %v339 = vmul.f32 %v76, %v275
  %v340 = vmul.f32 %v77, %v275
  %v341 = vmul.f32 %v78, %v275
  %v342 = vmul.f32 %v79, %v275
  %v343 = vmul.f32 %v80, %v275
  %v344 = vmul.f32 %v81, %v275
  %v345 = vmul.f32 %v82, %v275
  %v346 = vmul.f32 %v83, %v275
  %v347 = vmul.f32 %v84, %v275
  %v348 = vmul.f32 %v85, %v275
  %v349 = vmul.f32 %v86, %v275
  %v350 = vmul.f32 %v87, %v275
  %v351 = vmul.f32 %v88, %v275
  %v352 = vmul.f32 %v89, %v275
  %v353 = vmul.f32 %v90, %v275
  %v354 = vmul.f32 %v91, %v275
  %v355 = vmul.f32 %v92, %v275
  %v356 = vmul.f32 %v93, %v275
  %v357 = vmul.f32 %v94, %v275
  %v358 = vmul.f32 %v95, %v275
  %v359 = vmul.f32 %v96, %v275
  %v360 = vmul.f32 %v97, %v275
  %v361 = vmul.f32 %v98, %v275
  %v362 = vmul.f32 %v99, %v275
  %v363 = vmul.f32 %v100, %v275
  %v364 = vmul.f32 %v101, %v275
  %v365 = vmul.f32 %v102, %v275
  %v366 = vmul.f32 %v103, %v275
  %v367 = vmul.f32 %v104, %v275
  %v368 = vmul.f32 %v105, %v275
  %v369 = vmul.f32 %v106, %v275
  %v370 = vmul.f32 %v107, %v275
  %v371 = vmul.f32 %v108, %v275
  %v372 = vmul.f32 %v109, %v275
  %v373 = vmul.f32 %v110, %v275
  %v374 = vmul.f32 %v111, %v275
  %v375 = vmul.f32 %v112, %v275
  %v376 = vmul.f32 %v113, %v275
  %v377 = vmul.f32 %v114, %v275
  %v378 = vmul.f32 %v115, %v275
  %v379 = vmul.f32 %v116, %v275
  %v380 = vmul.f32 %v117, %v275
  %v381 = vmul.f32 %v118, %v275
  %v382 = vmul.f32 %v119, %v275
  %v383 = vmul.f32 %v120, %v275
  %v384 = vmul.f32 %v121, %v275
  %v385 = vmul.f32 %v122, %v275
  %v386 = vmul.f32 %v123, %v275
  %v387 = vmul.f32 %v124, %v275
  %v388 = vmul.f32 %v125, %v275
  %v389 = vmul.f32 %v126, %v275
  %v390 = vmul.f32 %v127, %v275
  %v391 = vmul.f32 %v128, %v275
  %v392 = vmul.f32 %v129, %v275
  %v393 = vmul.f32 %v130, %v275
  %v394 = vmul.f32 %v131, %v275
  %v395 = vmul.f32 %v132, %v275
  %v396 = vmul.f32 %v133, %v275
  %v397 = vmul.f32 %v134, %v275
  %v398 = vmul.f32 %v135, %v275
  %v399 = vmul.f32 %v136, %v275
  %v400 = vmul.f32 %v137, %v275
  %v401 = vmul.f32 %v138, %v275
  %v402 = vmul.f32 %v139, %v275
  %v403 = vmul.f32 %v140, %v275
  %v404 = vmul.f32 %v141, %v275
  %v405 = vmul.f32 %v142, %v275
  %v406 = vmul.f32 %v143, %v275
  %v407 = vmul.f32 %v144, %v275
  %v408 = vmul.f32 %v145, %v275
  %v409 = vmul.f32 %v146, %v275
  %v410 = vmul.f32 %v147, %v275
  %v411 = vmul.f32 %v148, %v275
  %v412 = vmul.f32 %v149, %v275
  %v413 = vmul.f32 %v150, %v275
  %v414 = vmul.f32 %v151, %v275
  %v415 = vmul.f32 %v152, %v275
  %v416 = vmul.f32 %v153, %v275
  %v417 = vmul.f32 %v154, %v275
  %v418 = vmul.f32 %v155, %v275
  %v419 = vmul.f32 %v156, %v275
  %v420 = vmul.f32 %v157, %v275
  %v421 = vmul.f32 %v158, %v275
  %v422 = vmul.f32 %v159, %v275
  %v423 = vmul.f32 %v160, %v275
  %v424 = vmul.f32 %v161, %v275
  %v425 = vmul.f32 %v162, %v275
  %v426 = vmul.f32 %v163, %v275
  %v427 = vmul.f32 %v164, %v275
  %v428 = vmul.f32 %v165, %v275
  %v429 = vmul.f32 %v166, %v275
  %v430 = vmul.f32 %v167, %v275
  %v431 = vmul.f32 %v168, %v275
  %v432 = vmul.f32 %v169, %v275
  %v433 = vmul.f32 %v170, %v275
  %v434 = vmul.f32 %v171, %v275
  %v435 = vmul.f32 %v172, %v275
  %v436 = vmul.f32 %v173, %v275
  %v437 = vmul.f32 %v174, %v275
  %v438 = vmul.f32 %v175, %v275
  %v439 = vmul.f32 %v176, %v275
  %v440 = vmul.f32 %v177, %v275
  %v441 = vmul.f32 %v178, %v275
  %v442 = vmul.f32 %v179, %v275
  %v443 = vmul.f32 %v180, %v275
  %v444 = vmul.f32 %v181, %v275
  %v445 = vmul.f32 %v182, %v275
  %v446 = vmul.f32 %v183, %v275
  %v447 = vmul.f32 %v184, %v275
  %v448 = vmul.f32 %v185, %v275
  %v449 = vmul.f32 %v186, %v275
  %v450 = vmul.f32 %v187, %v275
  %v451 = vmul.f32 %v188, %v275
  %v452 = vmul.f32 %v189, %v275
  %v453 = vmul.f32 %v190, %v275
  %v454 = vmul.f32 %v191, %v275
  %v455 = vmul.f32 %v192, %v275
  %v456 = vmul.f32 %v193, %v275
  %v457 = vmul.f32 %v194, %v275
  %v458 = vmul.f32 %v195, %v275
  %v459 = vmul.f32 %v196, %v275
  %v460 = vmul.f32 %v197, %v275
  %v461 = vmul.f32 %v198, %v275
  %v462 = vmul.f32 %v199, %v275
  %v463 = vmul.f32 %v200, %v275
  %v464 = vmul.f32 %v201, %v275
  %v465 = vmul.f32 %v202, %v275
  %v466 = vmul.f32 %v203, %v275
  %v467 = vmul.f32 %v204, %v275
  %v468 = vmul.f32 %v205, %v275
  %v469 = vmul.f32 %v206, %v275
  %v470 = vmul.f32 %v207, %v275
  %v471 = vmul.f32 %v208, %v275
  %v472 = vmul.f32 %v209, %v275
  %v473 = vmul.f32 %v210, %v275
  %v474 = vmul.f32 %v211, %v275
  %v475 = vmul.f32 %v212, %v275
  %v476 = vmul.f32 %v213, %v275
  %v477 = vmul.f32 %v214, %v275
  %v478 = vmul.f32 %v215, %v275
  %v479 = vmul.f32 %v216, %v275
  %v480 = vmul.f32 %v217, %v275
  %v481 = vmul.f32 %v218, %v275
  %v482 = vmul.f32 %v219, %v275
  %v483 = vmul.f32 %v220, %v275
  %v484 = vmul.f32 %v221, %v275
  %v485 = vmul.f32 %v222, %v275
  %v486 = vmul.f32 %v223, %v275
  %v487 = vmul.f32 %v224, %v275
  %v488 = vmul.f32 %v225, %v275
  %v489 = vmul.f32 %v226, %v275
  %v490 = vmul.f32 %v227, %v275
  %v491 = vmul.f32 %v228, %v275
  %v492 = vmul.f32 %v229, %v275
  %v493 = vmul.f32 %v230, %v275
  %v494 = vmul.f32 %v231, %v275
  %v495 = vmul.f32 %v232, %v275
  %v496 = vmul.f32 %v233, %v275
  %v497 = vmul.f32 %v234, %v275
  %v498 = vmul.f32 %v235, %v275
  %v499 = vmul.f32 %v236, %v275
  %v500 = vmul.f32 %v237, %v275
  %v501 = vmul.f32 %v238, %v275
  %v502 = vmul.f32 %v239, %v275
  %v503 = vmul.f32 %v240, %v275
  %v504 = vmul.f32 %v241, %v275
  %v505 = vmul.f32 %v242, %v275
  %v506 = vmul.f32 %v243, %v275
  %v507 = vmul.f32 %v244, %v275
  %v508 = vmul.f32 %v245, %v275
  %v509 = vmul.f32 %v246, %v275
  %v510 = vmul.f32 %v247, %v275
  %v511 = vmul.f32 %v248, %v275
  %v512 = vmul.f32 %v249, %v275
  %v513 = vmul.f32 %v250, %v275
  %v514 = vmul.f32 %v251, %v275
  %v515 = vmul.f32 %v252, %v275
  %v516 = vmul.f32 %v253, %v275
  %v517 = vmul.f32 %v254, %v275
  %v518 = vmul.f32 %v255, %v275
  %v519 = vmul.f32 %v256, %v275
  %v520 = vmul.f32 %v257, %v275
  %v521 = vmul.f32 %v258, %v275
  %v522 = vmul.f32 %v259, %v275
  %v523 = vmul.f32 %v260, %v275
  %v524 = vmul.f32 %v261, %v275
  %v525 = vmul.f32 %v262, %v275
  %v526 = vmul.f32 %v263, %v275
  %v527 = vmul.f32 %v264, %v275
  %v528 = vmul.f32 %v265, %v275
  %v529 = vmul.f32 %v266, %v275
  %v530 = vmul.f32 %v267, %v275
  %v531 = vmul.f32 %v268, %v275
  %v532 = vmul.f32 %v269, %v275
  %v533 = vld [vmem:[%s2] sm:$0x1]
  %v535 = vlaneseq
  %v536 = vshrl.u32 %v535, 7
  %v537 = vsub.s32 0, %v536
  %v538 = vrot.slane %v533, %v537
  %v540 = vadd.f32 %v277, %v538
  %v541 = vadd.f32 %v278, %v538
  %v542 = vadd.f32 %v279, %v538
  %v543 = vadd.f32 %v280, %v538
  %v544 = vadd.f32 %v281, %v538
  %v545 = vadd.f32 %v282, %v538
  %v546 = vadd.f32 %v283, %v538
  %v547 = vadd.f32 %v284, %v538
  %v548 = vadd.f32 %v285, %v538
  %v549 = vadd.f32 %v286, %v538
  %v550 = vadd.f32 %v287, %v538
  %v551 = vadd.f32 %v288, %v538
  %v552 = vadd.f32 %v289, %v538
  %v553 = vadd.f32 %v290, %v538
  %v554 = vadd.f32 %v291, %v538
  %v555 = vadd.f32 %v292, %v538
  %v556 = vadd.f32 %v293, %v538
  %v557 = vadd.f32 %v294, %v538
  %v558 = vadd.f32 %v295, %v538
  %v559 = vadd.f32 %v296, %v538
  %v560 = vadd.f32 %v297, %v538
  %v561 = vadd.f32 %v298, %v538
  %v562 = vadd.f32 %v299, %v538
  %v563 = vadd.f32 %v300, %v538
  %v564 = vadd.f32 %v301, %v538
  %v565 = vadd.f32 %v302, %v538
  %v566 = vadd.f32 %v303, %v538
  %v567 = vadd.f32 %v304, %v538
  %v568 = vadd.f32 %v305, %v538
  %v569 = vadd.f32 %v306, %v538
  %v570 = vadd.f32 %v307, %v538
  %v571 = vadd.f32 %v308, %v538
  %v572 = vadd.f32 %v309, %v538
  %v573 = vadd.f32 %v310, %v538
  %v574 = vadd.f32 %v311, %v538
  %v575 = vadd.f32 %v312, %v538
  %v576 = vadd.f32 %v313, %v538
  %v577 = vadd.f32 %v314, %v538
  %v578 = vadd.f32 %v315, %v538
  %v579 = vadd.f32 %v316, %v538
  %v580 = vadd.f32 %v317, %v538
  %v581 = vadd.f32 %v318, %v538
  %v582 = vadd.f32 %v319, %v538
  %v583 = vadd.f32 %v320, %v538
  %v584 = vadd.f32 %v321, %v538
  %v585 = vadd.f32 %v322, %v538
  %v586 = vadd.f32 %v323, %v538
  %v587 = vadd.f32 %v324, %v538
  %v588 = vadd.f32 %v325, %v538
  %v589 = vadd.f32 %v326, %v538
  %v590 = vadd.f32 %v327, %v538
  %v591 = vadd.f32 %v328, %v538
  %v592 = vadd.f32 %v329, %v538
  %v593 = vadd.f32 %v330, %v538
  %v594 = vadd.f32 %v331, %v538
  %v595 = vadd.f32 %v332, %v538
  %v596 = vadd.f32 %v333, %v538
  %v597 = vadd.f32 %v334, %v538
  %v598 = vadd.f32 %v335, %v538
  %v599 = vadd.f32 %v336, %v538
  %v600 = vadd.f32 %v337, %v538
  %v601 = vadd.f32 %v338, %v538
  %v602 = vadd.f32 %v339, %v538
  %v603 = vadd.f32 %v340, %v538
  %v604 = vadd.f32 %v341, %v538
  %v605 = vadd.f32 %v342, %v538
  %v606 = vadd.f32 %v343, %v538
  %v607 = vadd.f32 %v344, %v538
  %v608 = vadd.f32 %v345, %v538
  %v609 = vadd.f32 %v346, %v538
  %v610 = vadd.f32 %v347, %v538
  %v611 = vadd.f32 %v348, %v538
  %v612 = vadd.f32 %v349, %v538
  %v613 = vadd.f32 %v350, %v538
  %v614 = vadd.f32 %v351, %v538
  %v615 = vadd.f32 %v352, %v538
  %v616 = vadd.f32 %v353, %v538
  %v617 = vadd.f32 %v354, %v538
  %v618 = vadd.f32 %v355, %v538
  %v619 = vadd.f32 %v356, %v538
  %v620 = vadd.f32 %v357, %v538
  %v621 = vadd.f32 %v358, %v538
  %v622 = vadd.f32 %v359, %v538
  %v623 = vadd.f32 %v360, %v538
  %v624 = vadd.f32 %v361, %v538
  %v625 = vadd.f32 %v362, %v538
  %v626 = vadd.f32 %v363, %v538
  %v627 = vadd.f32 %v364, %v538
  %v628 = vadd.f32 %v365, %v538
  %v629 = vadd.f32 %v366, %v538
  %v630 = vadd.f32 %v367, %v538
  %v631 = vadd.f32 %v368, %v538
  %v632 = vadd.f32 %v369, %v538
  %v633 = vadd.f32 %v370, %v538
  %v634 = vadd.f32 %v371, %v538
  %v635 = vadd.f32 %v372, %v538
  %v636 = vadd.f32 %v373, %v538
  %v637 = vadd.f32 %v374, %v538
  %v638 = vadd.f32 %v375, %v538
  %v639 = vadd.f32 %v376, %v538
  %v640 = vadd.f32 %v377, %v538
  %v641 = vadd.f32 %v378, %v538
  %v642 = vadd.f32 %v379, %v538
  %v643 = vadd.f32 %v380, %v538
  %v644 = vadd.f32 %v381, %v538
  %v645 = vadd.f32 %v382, %v538
  %v646 = vadd.f32 %v383, %v538
  %v647 = vadd.f32 %v384, %v538
  %v648 = vadd.f32 %v385, %v538
  %v649 = vadd.f32 %v386, %v538
  %v650 = vadd.f32 %v387, %v538
  %v651 = vadd.f32 %v388, %v538
  %v652 = vadd.f32 %v389, %v538
  %v653 = vadd.f32 %v390, %v538
  %v654 = vadd.f32 %v391, %v538
  %v655 = vadd.f32 %v392, %v538
  %v656 = vadd.f32 %v393, %v538
  %v657 = vadd.f32 %v394, %v538
  %v658 = vadd.f32 %v395, %v538
  %v659 = vadd.f32 %v396, %v538
  %v660 = vadd.f32 %v397, %v538
  %v661 = vadd.f32 %v398, %v538
  %v662 = vadd.f32 %v399, %v538
  %v663 = vadd.f32 %v400, %v538
  %v664 = vadd.f32 %v401, %v538
  %v665 = vadd.f32 %v402, %v538
  %v666 = vadd.f32 %v403, %v538
  %v667 = vadd.f32 %v404, %v538
  %v668 = vadd.f32 %v405, %v538
  %v669 = vadd.f32 %v406, %v538
  %v670 = vadd.f32 %v407, %v538
  %v671 = vadd.f32 %v408, %v538
  %v672 = vadd.f32 %v409, %v538
  %v673 = vadd.f32 %v410, %v538
  %v674 = vadd.f32 %v411, %v538
  %v675 = vadd.f32 %v412, %v538
  %v676 = vadd.f32 %v413, %v538
  %v677 = vadd.f32 %v414, %v538
  %v678 = vadd.f32 %v415, %v538
  %v679 = vadd.f32 %v416, %v538
  %v680 = vadd.f32 %v417, %v538
  %v681 = vadd.f32 %v418, %v538
  %v682 = vadd.f32 %v419, %v538
  %v683 = vadd.f32 %v420, %v538
  %v684 = vadd.f32 %v421, %v538
  %v685 = vadd.f32 %v422, %v538
  %v686 = vadd.f32 %v423, %v538
  %v687 = vadd.f32 %v424, %v538
  %v688 = vadd.f32 %v425, %v538
  %v689 = vadd.f32 %v426, %v538
  %v690 = vadd.f32 %v427, %v538
  %v691 = vadd.f32 %v428, %v538
  %v692 = vadd.f32 %v429, %v538
  %v693 = vadd.f32 %v430, %v538
  %v694 = vadd.f32 %v431, %v538
  %v695 = vadd.f32 %v432, %v538
  %v696 = vadd.f32 %v433, %v538
  %v697 = vadd.f32 %v434, %v538
  %v698 = vadd.f32 %v435, %v538
  %v699 = vadd.f32 %v436, %v538
  %v700 = vadd.f32 %v437, %v538
  %v701 = vadd.f32 %v438, %v538
  %v702 = vadd.f32 %v439, %v538
  %v703 = vadd.f32 %v440, %v538
  %v704 = vadd.f32 %v441, %v538
  %v705 = vadd.f32 %v442, %v538
  %v706 = vadd.f32 %v443, %v538
  %v707 = vadd.f32 %v444, %v538
  %v708 = vadd.f32 %v445, %v538
  %v709 = vadd.f32 %v446, %v538
  %v710 = vadd.f32 %v447, %v538
  %v711 = vadd.f32 %v448, %v538
  %v712 = vadd.f32 %v449, %v538
  %v713 = vadd.f32 %v450, %v538
  %v714 = vadd.f32 %v451, %v538
  %v715 = vadd.f32 %v452, %v538
  %v716 = vadd.f32 %v453, %v538
  %v717 = vadd.f32 %v454, %v538
  %v718 = vadd.f32 %v455, %v538
  %v719 = vadd.f32 %v456, %v538
  %v720 = vadd.f32 %v457, %v538
  %v721 = vadd.f32 %v458, %v538
  %v722 = vadd.f32 %v459, %v538
  %v723 = vadd.f32 %v460, %v538
  %v724 = vadd.f32 %v461, %v538
  %v725 = vadd.f32 %v462, %v538
  %v726 = vadd.f32 %v463, %v538
  %v727 = vadd.f32 %v464, %v538
  %v728 = vadd.f32 %v465, %v538
  %v729 = vadd.f32 %v466, %v538
  %v730 = vadd.f32 %v467, %v538
  %v731 = vadd.f32 %v468, %v538
  %v732 = vadd.f32 %v469, %v538
  %v733 = vadd.f32 %v470, %v538
  %v734 = vadd.f32 %v471, %v538
  %v735 = vadd.f32 %v472, %v538
  %v736 = vadd.f32 %v473, %v538
  %v737 = vadd.f32 %v474, %v538
  %v738 = vadd.f32 %v475, %v538
  %v739 = vadd.f32 %v476, %v538
  %v740 = vadd.f32 %v477, %v538
  %v741 = vadd.f32 %v478, %v538
  %v742 = vadd.f32 %v479, %v538
  %v743 = vadd.f32 %v480, %v538
  %v744 = vadd.f32 %v481, %v538
  %v745 = vadd.f32 %v482, %v538
  %v746 = vadd.f32 %v483, %v538
  %v747 = vadd.f32 %v484, %v538
  %v748 = vadd.f32 %v485, %v538
  %v749 = vadd.f32 %v486, %v538
  %v750 = vadd.f32 %v487, %v538
  %v751 = vadd.f32 %v488, %v538
  %v752 = vadd.f32 %v489, %v538
  %v753 = vadd.f32 %v490, %v538
  %v754 = vadd.f32 %v491, %v538
  %v755 = vadd.f32 %v492, %v538
  %v756 = vadd.f32 %v493, %v538
  %v757 = vadd.f32 %v494, %v538
  %v758 = vadd.f32 %v495, %v538
  %v759 = vadd.f32 %v496, %v538
  %v760 = vadd.f32 %v497, %v538
  %v761 = vadd.f32 %v498, %v538
  %v762 = vadd.f32 %v499, %v538
  %v763 = vadd.f32 %v500, %v538
  %v764 = vadd.f32 %v501, %v538
  %v765 = vadd.f32 %v502, %v538
  %v766 = vadd.f32 %v503, %v538
  %v767 = vadd.f32 %v504, %v538
  %v768 = vadd.f32 %v505, %v538
  %v769 = vadd.f32 %v506, %v538
  %v770 = vadd.f32 %v507, %v538
  %v771 = vadd.f32 %v508, %v538
  %v772 = vadd.f32 %v509, %v538
  %v773 = vadd.f32 %v510, %v538
  %v774 = vadd.f32 %v511, %v538
  %v775 = vadd.f32 %v512, %v538
  %v776 = vadd.f32 %v513, %v538
  %v777 = vadd.f32 %v514, %v538
  %v778 = vadd.f32 %v515, %v538
  %v779 = vadd.f32 %v516, %v538
  %v780 = vadd.f32 %v517, %v538
  %v781 = vadd.f32 %v518, %v538
  %v782 = vadd.f32 %v519, %v538
  %v783 = vadd.f32 %v520, %v538
  %v784 = vadd.f32 %v521, %v538
  %v785 = vadd.f32 %v522, %v538
  %v786 = vadd.f32 %v523, %v538
  %v787 = vadd.f32 %v524, %v538
  %v788 = vadd.f32 %v525, %v538
  %v789 = vadd.f32 %v526, %v538
  %v790 = vadd.f32 %v527, %v538
  %v791 = vadd.f32 %v528, %v538
  %v792 = vadd.f32 %v529, %v538
  %v793 = vadd.f32 %v530, %v538
  %v794 = vadd.f32 %v531, %v538
  %v795 = vadd.f32 %v532, %v538
  %v796 = vmax.f32 %v540, 0.0
  %v797 = vmax.f32 %v541, 0.0
  %v798 = vmax.f32 %v542, 0.0
  %v799 = vmax.f32 %v543, 0.0
  %v800 = vmax.f32 %v544, 0.0
  %v801 = vmax.f32 %v545, 0.0
  %v802 = vmax.f32 %v546, 0.0
  %v803 = vmax.f32 %v547, 0.0
  %v804 = vmax.f32 %v548, 0.0
  %v805 = vmax.f32 %v549, 0.0
  %v806 = vmax.f32 %v550, 0.0
  %v807 = vmax.f32 %v551, 0.0
  %v808 = vmax.f32 %v552, 0.0
  %v809 = vmax.f32 %v553, 0.0
  %v810 = vmax.f32 %v554, 0.0
  %v811 = vmax.f32 %v555, 0.0
  %v812 = vmax.f32 %v556, 0.0
  %v813 = vmax.f32 %v557, 0.0
  %v814 = vmax.f32 %v558, 0.0
  %v815 = vmax.f32 %v559, 0.0
  %v816 = vmax.f32 %v560, 0.0
  %v817 = vmax.f32 %v561, 0.0
  %v818 = vmax.f32 %v562, 0.0
  %v819 = vmax.f32 %v563, 0.0
  %v820 = vmax.f32 %v564, 0.0
  %v821 = vmax.f32 %v565, 0.0
  %v822 = vmax.f32 %v566, 0.0
  %v823 = vmax.f32 %v567, 0.0
  %v824 = vmax.f32 %v568, 0.0
  %v825 = vmax.f32 %v569, 0.0
  %v826 = vmax.f32 %v570, 0.0
  %v827 = vmax.f32 %v571, 0.0
  %v828 = vmax.f32 %v572, 0.0
  %v829 = vmax.f32 %v573, 0.0
  %v830 = vmax.f32 %v574, 0.0
  %v831 = vmax.f32 %v575, 0.0
  %v832 = vmax.f32 %v576, 0.0
  %v833 = vmax.f32 %v577, 0.0
  %v834 = vmax.f32 %v578, 0.0
  %v835 = vmax.f32 %v579, 0.0
  %v836 = vmax.f32 %v580, 0.0
  %v837 = vmax.f32 %v581, 0.0
  %v838 = vmax.f32 %v582, 0.0
  %v839 = vmax.f32 %v583, 0.0
  %v840 = vmax.f32 %v584, 0.0
  %v841 = vmax.f32 %v585, 0.0
  %v842 = vmax.f32 %v586, 0.0
  %v843 = vmax.f32 %v587, 0.0
  %v844 = vmax.f32 %v588, 0.0
  %v845 = vmax.f32 %v589, 0.0
  %v846 = vmax.f32 %v590, 0.0
  %v847 = vmax.f32 %v591, 0.0
  %v848 = vmax.f32 %v592, 0.0
  %v849 = vmax.f32 %v593, 0.0
  %v850 = vmax.f32 %v594, 0.0
  %v851 = vmax.f32 %v595, 0.0
  %v852 = vmax.f32 %v596, 0.0
  %v853 = vmax.f32 %v597, 0.0
  %v854 = vmax.f32 %v598, 0.0
  %v855 = vmax.f32 %v599, 0.0
  %v856 = vmax.f32 %v600, 0.0
  %v857 = vmax.f32 %v601, 0.0
  %v858 = vmax.f32 %v602, 0.0
  %v859 = vmax.f32 %v603, 0.0
  %v860 = vmax.f32 %v604, 0.0
  %v861 = vmax.f32 %v605, 0.0
  %v862 = vmax.f32 %v606, 0.0
  %v863 = vmax.f32 %v607, 0.0
  %v864 = vmax.f32 %v608, 0.0
  %v865 = vmax.f32 %v609, 0.0
  %v866 = vmax.f32 %v610, 0.0
  %v867 = vmax.f32 %v611, 0.0
  %v868 = vmax.f32 %v612, 0.0
  %v869 = vmax.f32 %v613, 0.0
  %v870 = vmax.f32 %v614, 0.0
  %v871 = vmax.f32 %v615, 0.0
  %v872 = vmax.f32 %v616, 0.0
  %v873 = vmax.f32 %v617, 0.0
  %v874 = vmax.f32 %v618, 0.0
  %v875 = vmax.f32 %v619, 0.0
  %v876 = vmax.f32 %v620, 0.0
  %v877 = vmax.f32 %v621, 0.0
  %v878 = vmax.f32 %v622, 0.0
  %v879 = vmax.f32 %v623, 0.0
  %v880 = vmax.f32 %v624, 0.0
  %v881 = vmax.f32 %v625, 0.0
  %v882 = vmax.f32 %v626, 0.0
  %v883 = vmax.f32 %v627, 0.0
  %v884 = vmax.f32 %v628, 0.0
  %v885 = vmax.f32 %v629, 0.0
  %v886 = vmax.f32 %v630, 0.0
  %v887 = vmax.f32 %v631, 0.0
  %v888 = vmax.f32 %v632, 0.0
  %v889 = vmax.f32 %v633, 0.0
  %v890 = vmax.f32 %v634, 0.0
  %v891 = vmax.f32 %v635, 0.0
  %v892 = vmax.f32 %v636, 0.0
  %v893 = vmax.f32 %v637, 0.0
  %v894 = vmax.f32 %v638, 0.0
  %v895 = vmax.f32 %v639, 0.0
  %v896 = vmax.f32 %v640, 0.0
  %v897 = vmax.f32 %v641, 0.0
  %v898 = vmax.f32 %v642, 0.0
  %v899 = vmax.f32 %v643, 0.0
  %v900 = vmax.f32 %v644, 0.0
  %v901 = vmax.f32 %v645, 0.0
  %v902 = vmax.f32 %v646, 0.0
  %v903 = vmax.f32 %v647, 0.0
  %v904 = vmax.f32 %v648, 0.0
  %v905 = vmax.f32 %v649, 0.0
  %v906 = vmax.f32 %v650, 0.0
  %v907 = vmax.f32 %v651, 0.0
  %v908 = vmax.f32 %v652, 0.0
  %v909 = vmax.f32 %v653, 0.0
  %v910 = vmax.f32 %v654, 0.0
  %v911 = vmax.f32 %v655, 0.0
  %v912 = vmax.f32 %v656, 0.0
  %v913 = vmax.f32 %v657, 0.0
  %v914 = vmax.f32 %v658, 0.0
  %v915 = vmax.f32 %v659, 0.0
  %v916 = vmax.f32 %v660, 0.0
  %v917 = vmax.f32 %v661, 0.0
  %v918 = vmax.f32 %v662, 0.0
  %v919 = vmax.f32 %v663, 0.0
  %v920 = vmax.f32 %v664, 0.0
  %v921 = vmax.f32 %v665, 0.0
  %v922 = vmax.f32 %v666, 0.0
  %v923 = vmax.f32 %v667, 0.0
  %v924 = vmax.f32 %v668, 0.0
  %v925 = vmax.f32 %v669, 0.0
  %v926 = vmax.f32 %v670, 0.0
  %v927 = vmax.f32 %v671, 0.0
  %v928 = vmax.f32 %v672, 0.0
  %v929 = vmax.f32 %v673, 0.0
  %v930 = vmax.f32 %v674, 0.0
  %v931 = vmax.f32 %v675, 0.0
  %v932 = vmax.f32 %v676, 0.0
  %v933 = vmax.f32 %v677, 0.0
  %v934 = vmax.f32 %v678, 0.0
  %v935 = vmax.f32 %v679, 0.0
  %v936 = vmax.f32 %v680, 0.0
  %v937 = vmax.f32 %v681, 0.0
  %v938 = vmax.f32 %v682, 0.0
  %v939 = vmax.f32 %v683, 0.0
  %v940 = vmax.f32 %v684, 0.0
  %v941 = vmax.f32 %v685, 0.0
  %v942 = vmax.f32 %v686, 0.0
  %v943 = vmax.f32 %v687, 0.0
  %v944 = vmax.f32 %v688, 0.0
  %v945 = vmax.f32 %v689, 0.0
  %v946 = vmax.f32 %v690, 0.0
  %v947 = vmax.f32 %v691, 0.0
  %v948 = vmax.f32 %v692, 0.0
  %v949 = vmax.f32 %v693, 0.0
  %v950 = vmax.f32 %v694, 0.0
  %v951 = vmax.f32 %v695, 0.0
  %v952 = vmax.f32 %v696, 0.0
  %v953 = vmax.f32 %v697, 0.0
  %v954 = vmax.f32 %v698, 0.0
  %v955 = vmax.f32 %v699, 0.0
  %v956 = vmax.f32 %v700, 0.0
  %v957 = vmax.f32 %v701, 0.0
  %v958 = vmax.f32 %v702, 0.0
  %v959 = vmax.f32 %v703, 0.0
  %v960 = vmax.f32 %v704, 0.0
  %v961 = vmax.f32 %v705, 0.0
  %v962 = vmax.f32 %v706, 0.0
  %v963 = vmax.f32 %v707, 0.0
  %v964 = vmax.f32 %v708, 0.0
  %v965 = vmax.f32 %v709, 0.0
  %v966 = vmax.f32 %v710, 0.0
  %v967 = vmax.f32 %v711, 0.0
  %v968 = vmax.f32 %v712, 0.0
  %v969 = vmax.f32 %v713, 0.0
  %v970 = vmax.f32 %v714, 0.0
  %v971 = vmax.f32 %v715, 0.0
  %v972 = vmax.f32 %v716, 0.0
  %v973 = vmax.f32 %v717, 0.0
  %v974 = vmax.f32 %v718, 0.0
  %v975 = vmax.f32 %v719, 0.0
  %v976 = vmax.f32 %v720, 0.0
  %v977 = vmax.f32 %v721, 0.0
  %v978 = vmax.f32 %v722, 0.0
  %v979 = vmax.f32 %v723, 0.0
  %v980 = vmax.f32 %v724, 0.0
  %v981 = vmax.f32 %v725, 0.0
  %v982 = vmax.f32 %v726, 0.0
  %v983 = vmax.f32 %v727, 0.0
  %v984 = vmax.f32 %v728, 0.0
  %v985 = vmax.f32 %v729, 0.0
  %v986 = vmax.f32 %v730, 0.0
  %v987 = vmax.f32 %v731, 0.0
  %v988 = vmax.f32 %v732, 0.0
  %v989 = vmax.f32 %v733, 0.0
  %v990 = vmax.f32 %v734, 0.0
  %v991 = vmax.f32 %v735, 0.0
  %v992 = vmax.f32 %v736, 0.0
  %v993 = vmax.f32 %v737, 0.0
  %v994 = vmax.f32 %v738, 0.0
  %v995 = vmax.f32 %v739, 0.0
  %v996 = vmax.f32 %v740, 0.0
  %v997 = vmax.f32 %v741, 0.0
  %v998 = vmax.f32 %v742, 0.0
  %v999 = vmax.f32 %v743, 0.0
  %v1000 = vmax.f32 %v744, 0.0
  %v1001 = vmax.f32 %v745, 0.0
  %v1002 = vmax.f32 %v746, 0.0
  %v1003 = vmax.f32 %v747, 0.0
  %v1004 = vmax.f32 %v748, 0.0
  %v1005 = vmax.f32 %v749, 0.0
  %v1006 = vmax.f32 %v750, 0.0
  %v1007 = vmax.f32 %v751, 0.0
  %v1008 = vmax.f32 %v752, 0.0
  %v1009 = vmax.f32 %v753, 0.0
  %v1010 = vmax.f32 %v754, 0.0
  %v1011 = vmax.f32 %v755, 0.0
  %v1012 = vmax.f32 %v756, 0.0
  %v1013 = vmax.f32 %v757, 0.0
  %v1014 = vmax.f32 %v758, 0.0
  %v1015 = vmax.f32 %v759, 0.0
  %v1016 = vmax.f32 %v760, 0.0
  %v1017 = vmax.f32 %v761, 0.0
  %v1018 = vmax.f32 %v762, 0.0
  %v1019 = vmax.f32 %v763, 0.0
  %v1020 = vmax.f32 %v764, 0.0
  %v1021 = vmax.f32 %v765, 0.0
  %v1022 = vmax.f32 %v766, 0.0
  %v1023 = vmax.f32 %v767, 0.0
  %v1024 = vmax.f32 %v768, 0.0
  %v1025 = vmax.f32 %v769, 0.0
  %v1026 = vmax.f32 %v770, 0.0
  %v1027 = vmax.f32 %v771, 0.0
  %v1028 = vmax.f32 %v772, 0.0
  %v1029 = vmax.f32 %v773, 0.0
  %v1030 = vmax.f32 %v774, 0.0
  %v1031 = vmax.f32 %v775, 0.0
  %v1032 = vmax.f32 %v776, 0.0
  %v1033 = vmax.f32 %v777, 0.0
  %v1034 = vmax.f32 %v778, 0.0
  %v1035 = vmax.f32 %v779, 0.0
  %v1036 = vmax.f32 %v780, 0.0
  %v1037 = vmax.f32 %v781, 0.0
  %v1038 = vmax.f32 %v782, 0.0
  %v1039 = vmax.f32 %v783, 0.0
  %v1040 = vmax.f32 %v784, 0.0
  %v1041 = vmax.f32 %v785, 0.0
  %v1042 = vmax.f32 %v786, 0.0
  %v1043 = vmax.f32 %v787, 0.0
  %v1044 = vmax.f32 %v788, 0.0
  %v1045 = vmax.f32 %v789, 0.0
  %v1046 = vmax.f32 %v790, 0.0
  %v1047 = vmax.f32 %v791, 0.0
  %v1048 = vmax.f32 %v792, 0.0
  %v1049 = vmax.f32 %v793, 0.0
  %v1050 = vmax.f32 %v794, 0.0
  %v1051 = vmax.f32 %v795, 0.0
  %v1052 = vpack.c.bf16 %v797, %v796
  %v1053 = vpack.c.bf16 %v799, %v798
  %v1054 = vpack.c.bf16 %v801, %v800
  %v1055 = vpack.c.bf16 %v803, %v802
  %v1056 = vpack.c.bf16 %v805, %v804
  %v1057 = vpack.c.bf16 %v807, %v806
  %v1058 = vpack.c.bf16 %v809, %v808
  %v1059 = vpack.c.bf16 %v811, %v810
  %v1060 = vpack.c.bf16 %v813, %v812
  %v1061 = vpack.c.bf16 %v815, %v814
  %v1062 = vpack.c.bf16 %v817, %v816
  %v1063 = vpack.c.bf16 %v819, %v818
  %v1064 = vpack.c.bf16 %v821, %v820
  %v1065 = vpack.c.bf16 %v823, %v822
  %v1066 = vpack.c.bf16 %v825, %v824
  %v1067 = vpack.c.bf16 %v827, %v826
  %v1068 = vpack.c.bf16 %v829, %v828
  %v1069 = vpack.c.bf16 %v831, %v830
  %v1070 = vpack.c.bf16 %v833, %v832
  %v1071 = vpack.c.bf16 %v835, %v834
  %v1072 = vpack.c.bf16 %v837, %v836
  %v1073 = vpack.c.bf16 %v839, %v838
  %v1074 = vpack.c.bf16 %v841, %v840
  %v1075 = vpack.c.bf16 %v843, %v842
  %v1076 = vpack.c.bf16 %v845, %v844
  %v1077 = vpack.c.bf16 %v847, %v846
  %v1078 = vpack.c.bf16 %v849, %v848
  %v1079 = vpack.c.bf16 %v851, %v850
  %v1080 = vpack.c.bf16 %v853, %v852
  %v1081 = vpack.c.bf16 %v855, %v854
  %v1082 = vpack.c.bf16 %v857, %v856
  %v1083 = vpack.c.bf16 %v859, %v858
  %v1084 = vpack.c.bf16 %v861, %v860
  %v1085 = vpack.c.bf16 %v863, %v862
  %v1086 = vpack.c.bf16 %v865, %v864
  %v1087 = vpack.c.bf16 %v867, %v866
  %v1088 = vpack.c.bf16 %v869, %v868
  %v1089 = vpack.c.bf16 %v871, %v870
  %v1090 = vpack.c.bf16 %v873, %v872
  %v1091 = vpack.c.bf16 %v875, %v874
  %v1092 = vpack.c.bf16 %v877, %v876
  %v1093 = vpack.c.bf16 %v879, %v878
  %v1094 = vpack.c.bf16 %v881, %v880
  %v1095 = vpack.c.bf16 %v883, %v882
  %v1096 = vpack.c.bf16 %v885, %v884
  %v1097 = vpack.c.bf16 %v887, %v886
  %v1098 = vpack.c.bf16 %v889, %v888
  %v1099 = vpack.c.bf16 %v891, %v890
  %v1100 = vpack.c.bf16 %v893, %v892
  %v1101 = vpack.c.bf16 %v895, %v894
  %v1102 = vpack.c.bf16 %v897, %v896
  %v1103 = vpack.c.bf16 %v899, %v898
  %v1104 = vpack.c.bf16 %v901, %v900
  %v1105 = vpack.c.bf16 %v903, %v902
  %v1106 = vpack.c.bf16 %v905, %v904
  %v1107 = vpack.c.bf16 %v907, %v906
  %v1108 = vpack.c.bf16 %v909, %v908
  %v1109 = vpack.c.bf16 %v911, %v910
  %v1110 = vpack.c.bf16 %v913, %v912
  %v1111 = vpack.c.bf16 %v915, %v914
  %v1112 = vpack.c.bf16 %v917, %v916
  %v1113 = vpack.c.bf16 %v919, %v918
  %v1114 = vpack.c.bf16 %v921, %v920
  %v1115 = vpack.c.bf16 %v923, %v922
  %v1116 = vpack.c.bf16 %v925, %v924
  %v1117 = vpack.c.bf16 %v927, %v926
  %v1118 = vpack.c.bf16 %v929, %v928
  %v1119 = vpack.c.bf16 %v931, %v930
  %v1120 = vpack.c.bf16 %v933, %v932
  %v1121 = vpack.c.bf16 %v935, %v934
  %v1122 = vpack.c.bf16 %v937, %v936
  %v1123 = vpack.c.bf16 %v939, %v938
  %v1124 = vpack.c.bf16 %v941, %v940
  %v1125 = vpack.c.bf16 %v943, %v942
  %v1126 = vpack.c.bf16 %v945, %v944
  %v1127 = vpack.c.bf16 %v947, %v946
  %v1128 = vpack.c.bf16 %v949, %v948
  %v1129 = vpack.c.bf16 %v951, %v950
  %v1130 = vpack.c.bf16 %v953, %v952
  %v1131 = vpack.c.bf16 %v955, %v954
  %v1132 = vpack.c.bf16 %v957, %v956
  %v1133 = vpack.c.bf16 %v959, %v958
  %v1134 = vpack.c.bf16 %v961, %v960
  %v1135 = vpack.c.bf16 %v963, %v962
  %v1136 = vpack.c.bf16 %v965, %v964
  %v1137 = vpack.c.bf16 %v967, %v966
  %v1138 = vpack.c.bf16 %v969, %v968
  %v1139 = vpack.c.bf16 %v971, %v970
  %v1140 = vpack.c.bf16 %v973, %v972
  %v1141 = vpack.c.bf16 %v975, %v974
  %v1142 = vpack.c.bf16 %v977, %v976
  %v1143 = vpack.c.bf16 %v979, %v978
  %v1144 = vpack.c.bf16 %v981, %v980
  %v1145 = vpack.c.bf16 %v983, %v982
  %v1146 = vpack.c.bf16 %v985, %v984
  %v1147 = vpack.c.bf16 %v987, %v986
  %v1148 = vpack.c.bf16 %v989, %v988
  %v1149 = vpack.c.bf16 %v991, %v990
  %v1150 = vpack.c.bf16 %v993, %v992
  %v1151 = vpack.c.bf16 %v995, %v994
  %v1152 = vpack.c.bf16 %v997, %v996
  %v1153 = vpack.c.bf16 %v999, %v998
  %v1154 = vpack.c.bf16 %v1001, %v1000
  %v1155 = vpack.c.bf16 %v1003, %v1002
  %v1156 = vpack.c.bf16 %v1005, %v1004
  %v1157 = vpack.c.bf16 %v1007, %v1006
  %v1158 = vpack.c.bf16 %v1009, %v1008
  %v1159 = vpack.c.bf16 %v1011, %v1010
  %v1160 = vpack.c.bf16 %v1013, %v1012
  %v1161 = vpack.c.bf16 %v1015, %v1014
  %v1162 = vpack.c.bf16 %v1017, %v1016
  %v1163 = vpack.c.bf16 %v1019, %v1018
  %v1164 = vpack.c.bf16 %v1021, %v1020
  %v1165 = vpack.c.bf16 %v1023, %v1022
  %v1166 = vpack.c.bf16 %v1025, %v1024
  %v1167 = vpack.c.bf16 %v1027, %v1026
  %v1168 = vpack.c.bf16 %v1029, %v1028
  %v1169 = vpack.c.bf16 %v1031, %v1030
  %v1170 = vpack.c.bf16 %v1033, %v1032
  %v1171 = vpack.c.bf16 %v1035, %v1034
  %v1172 = vpack.c.bf16 %v1037, %v1036
  %v1173 = vpack.c.bf16 %v1039, %v1038
  %v1174 = vpack.c.bf16 %v1041, %v1040
  %v1175 = vpack.c.bf16 %v1043, %v1042
  %v1176 = vpack.c.bf16 %v1045, %v1044
  %v1177 = vpack.c.bf16 %v1047, %v1046
  %v1178 = vpack.c.bf16 %v1049, %v1048
  %v1179 = vpack.c.bf16 %v1051, %v1050
  %v1308 = vunpack.c.l.b16 %v1052
  %v1309 = vunpack.c.h.b16 %v1052
  %v1310 = vunpack.c.l.b16 %v1053
  %v1311 = vunpack.c.h.b16 %v1053
  %v1312 = vunpack.c.l.b16 %v1054
  %v1313 = vunpack.c.h.b16 %v1054
  %v1314 = vunpack.c.l.b16 %v1055
  %v1315 = vunpack.c.h.b16 %v1055
  %v1316 = vunpack.c.l.b16 %v1056
  %v1317 = vunpack.c.h.b16 %v1056
  %v1318 = vunpack.c.l.b16 %v1057
  %v1319 = vunpack.c.h.b16 %v1057
  %v1320 = vunpack.c.l.b16 %v1058
  %v1321 = vunpack.c.h.b16 %v1058
  %v1322 = vunpack.c.l.b16 %v1059
  %v1323 = vunpack.c.h.b16 %v1059
  %v1324 = vunpack.c.l.b16 %v1060
  %v1325 = vunpack.c.h.b16 %v1060
  %v1326 = vunpack.c.l.b16 %v1061
  %v1327 = vunpack.c.h.b16 %v1061
  %v1328 = vunpack.c.l.b16 %v1062
  %v1329 = vunpack.c.h.b16 %v1062
  %v1330 = vunpack.c.l.b16 %v1063
  %v1331 = vunpack.c.h.b16 %v1063
  %v1332 = vunpack.c.l.b16 %v1064
  %v1333 = vunpack.c.h.b16 %v1064
  %v1334 = vunpack.c.l.b16 %v1065
  %v1335 = vunpack.c.h.b16 %v1065
  %v1336 = vunpack.c.l.b16 %v1066
  %v1337 = vunpack.c.h.b16 %v1066
  %v1338 = vunpack.c.l.b16 %v1067
  %v1339 = vunpack.c.h.b16 %v1067
  %v1340 = vunpack.c.l.b16 %v1068
  %v1341 = vunpack.c.h.b16 %v1068
  %v1342 = vunpack.c.l.b16 %v1069
  %v1343 = vunpack.c.h.b16 %v1069
  %v1344 = vunpack.c.l.b16 %v1070
  %v1345 = vunpack.c.h.b16 %v1070
  %v1346 = vunpack.c.l.b16 %v1071
  %v1347 = vunpack.c.h.b16 %v1071
  %v1348 = vunpack.c.l.b16 %v1072
  %v1349 = vunpack.c.h.b16 %v1072
  %v1350 = vunpack.c.l.b16 %v1073
  %v1351 = vunpack.c.h.b16 %v1073
  %v1352 = vunpack.c.l.b16 %v1074
  %v1353 = vunpack.c.h.b16 %v1074
  %v1354 = vunpack.c.l.b16 %v1075
  %v1355 = vunpack.c.h.b16 %v1075
  %v1356 = vunpack.c.l.b16 %v1076
  %v1357 = vunpack.c.h.b16 %v1076
  %v1358 = vunpack.c.l.b16 %v1077
  %v1359 = vunpack.c.h.b16 %v1077
  %v1360 = vunpack.c.l.b16 %v1078
  %v1361 = vunpack.c.h.b16 %v1078
  %v1362 = vunpack.c.l.b16 %v1079
  %v1363 = vunpack.c.h.b16 %v1079
  %v1364 = vunpack.c.l.b16 %v1080
  %v1365 = vunpack.c.h.b16 %v1080
  %v1366 = vunpack.c.l.b16 %v1081
  %v1367 = vunpack.c.h.b16 %v1081
  %v1368 = vunpack.c.l.b16 %v1082
  %v1369 = vunpack.c.h.b16 %v1082
  %v1370 = vunpack.c.l.b16 %v1083
  %v1371 = vunpack.c.h.b16 %v1083
  %v1372 = vunpack.c.l.b16 %v1084
  %v1373 = vunpack.c.h.b16 %v1084
  %v1374 = vunpack.c.l.b16 %v1085
  %v1375 = vunpack.c.h.b16 %v1085
  %v1376 = vunpack.c.l.b16 %v1086
  %v1377 = vunpack.c.h.b16 %v1086
  %v1378 = vunpack.c.l.b16 %v1087
  %v1379 = vunpack.c.h.b16 %v1087
  %v1380 = vunpack.c.l.b16 %v1088
  %v1381 = vunpack.c.h.b16 %v1088
  %v1382 = vunpack.c.l.b16 %v1089
  %v1383 = vunpack.c.h.b16 %v1089
  %v1384 = vunpack.c.l.b16 %v1090
  %v1385 = vunpack.c.h.b16 %v1090
  %v1386 = vunpack.c.l.b16 %v1091
  %v1387 = vunpack.c.h.b16 %v1091
  %v1388 = vunpack.c.l.b16 %v1092
  %v1389 = vunpack.c.h.b16 %v1092
  %v1390 = vunpack.c.l.b16 %v1093
  %v1391 = vunpack.c.h.b16 %v1093
  %v1392 = vunpack.c.l.b16 %v1094
  %v1393 = vunpack.c.h.b16 %v1094
  %v1394 = vunpack.c.l.b16 %v1095
  %v1395 = vunpack.c.h.b16 %v1095
  %v1396 = vunpack.c.l.b16 %v1096
  %v1397 = vunpack.c.h.b16 %v1096
  %v1398 = vunpack.c.l.b16 %v1097
  %v1399 = vunpack.c.h.b16 %v1097
  %v1400 = vunpack.c.l.b16 %v1098
  %v1401 = vunpack.c.h.b16 %v1098
  %v1402 = vunpack.c.l.b16 %v1099
  %v1403 = vunpack.c.h.b16 %v1099
  %v1404 = vunpack.c.l.b16 %v1100
  %v1405 = vunpack.c.h.b16 %v1100
  %v1406 = vunpack.c.l.b16 %v1101
  %v1407 = vunpack.c.h.b16 %v1101
  %v1408 = vunpack.c.l.b16 %v1102
  %v1409 = vunpack.c.h.b16 %v1102
  %v1410 = vunpack.c.l.b16 %v1103
  %v1411 = vunpack.c.h.b16 %v1103
  %v1412 = vunpack.c.l.b16 %v1104
  %v1413 = vunpack.c.h.b16 %v1104
  %v1414 = vunpack.c.l.b16 %v1105
  %v1415 = vunpack.c.h.b16 %v1105
  %v1416 = vunpack.c.l.b16 %v1106
  %v1417 = vunpack.c.h.b16 %v1106
  %v1418 = vunpack.c.l.b16 %v1107
  %v1419 = vunpack.c.h.b16 %v1107
  %v1420 = vunpack.c.l.b16 %v1108
  %v1421 = vunpack.c.h.b16 %v1108
  %v1422 = vunpack.c.l.b16 %v1109
  %v1423 = vunpack.c.h.b16 %v1109
  %v1424 = vunpack.c.l.b16 %v1110
  %v1425 = vunpack.c.h.b16 %v1110
  %v1426 = vunpack.c.l.b16 %v1111
  %v1427 = vunpack.c.h.b16 %v1111
  %v1428 = vunpack.c.l.b16 %v1112
  %v1429 = vunpack.c.h.b16 %v1112
  %v1430 = vunpack.c.l.b16 %v1113
  %v1431 = vunpack.c.h.b16 %v1113
  %v1432 = vunpack.c.l.b16 %v1114
  %v1433 = vunpack.c.h.b16 %v1114
  %v1434 = vunpack.c.l.b16 %v1115
  %v1435 = vunpack.c.h.b16 %v1115
  %v1436 = vunpack.c.l.b16 %v1116
  %v1437 = vunpack.c.h.b16 %v1116
  %v1438 = vunpack.c.l.b16 %v1117
  %v1439 = vunpack.c.h.b16 %v1117
  %v1440 = vunpack.c.l.b16 %v1118
  %v1441 = vunpack.c.h.b16 %v1118
  %v1442 = vunpack.c.l.b16 %v1119
  %v1443 = vunpack.c.h.b16 %v1119
  %v1444 = vunpack.c.l.b16 %v1120
  %v1445 = vunpack.c.h.b16 %v1120
  %v1446 = vunpack.c.l.b16 %v1121
  %v1447 = vunpack.c.h.b16 %v1121
  %v1448 = vunpack.c.l.b16 %v1122
  %v1449 = vunpack.c.h.b16 %v1122
  %v1450 = vunpack.c.l.b16 %v1123
  %v1451 = vunpack.c.h.b16 %v1123
  %v1452 = vunpack.c.l.b16 %v1124
  %v1453 = vunpack.c.h.b16 %v1124
  %v1454 = vunpack.c.l.b16 %v1125
  %v1455 = vunpack.c.h.b16 %v1125
  %v1456 = vunpack.c.l.b16 %v1126
  %v1457 = vunpack.c.h.b16 %v1126
  %v1458 = vunpack.c.l.b16 %v1127
  %v1459 = vunpack.c.h.b16 %v1127
  %v1460 = vunpack.c.l.b16 %v1128
  %v1461 = vunpack.c.h.b16 %v1128
  %v1462 = vunpack.c.l.b16 %v1129
  %v1463 = vunpack.c.h.b16 %v1129
  %v1464 = vunpack.c.l.b16 %v1130
  %v1465 = vunpack.c.h.b16 %v1130
  %v1466 = vunpack.c.l.b16 %v1131
  %v1467 = vunpack.c.h.b16 %v1131
  %v1468 = vunpack.c.l.b16 %v1132
  %v1469 = vunpack.c.h.b16 %v1132
  %v1470 = vunpack.c.l.b16 %v1133
  %v1471 = vunpack.c.h.b16 %v1133
  %v1472 = vunpack.c.l.b16 %v1134
  %v1473 = vunpack.c.h.b16 %v1134
  %v1474 = vunpack.c.l.b16 %v1135
  %v1475 = vunpack.c.h.b16 %v1135
  %v1476 = vunpack.c.l.b16 %v1136
  %v1477 = vunpack.c.h.b16 %v1136
  %v1478 = vunpack.c.l.b16 %v1137
  %v1479 = vunpack.c.h.b16 %v1137
  %v1480 = vunpack.c.l.b16 %v1138
  %v1481 = vunpack.c.h.b16 %v1138
  %v1482 = vunpack.c.l.b16 %v1139
  %v1483 = vunpack.c.h.b16 %v1139
  %v1484 = vunpack.c.l.b16 %v1140
  %v1485 = vunpack.c.h.b16 %v1140
  %v1486 = vunpack.c.l.b16 %v1141
  %v1487 = vunpack.c.h.b16 %v1141
  %v1488 = vunpack.c.l.b16 %v1142
  %v1489 = vunpack.c.h.b16 %v1142
  %v1490 = vunpack.c.l.b16 %v1143
  %v1491 = vunpack.c.h.b16 %v1143
  %v1492 = vunpack.c.l.b16 %v1144
  %v1493 = vunpack.c.h.b16 %v1144
  %v1494 = vunpack.c.l.b16 %v1145
  %v1495 = vunpack.c.h.b16 %v1145
  %v1496 = vunpack.c.l.b16 %v1146
  %v1497 = vunpack.c.h.b16 %v1146
  %v1498 = vunpack.c.l.b16 %v1147
  %v1499 = vunpack.c.h.b16 %v1147
  %v1500 = vunpack.c.l.b16 %v1148
  %v1501 = vunpack.c.h.b16 %v1148
  %v1502 = vunpack.c.l.b16 %v1149
  %v1503 = vunpack.c.h.b16 %v1149
  %v1504 = vunpack.c.l.b16 %v1150
  %v1505 = vunpack.c.h.b16 %v1150
  %v1506 = vunpack.c.l.b16 %v1151
  %v1507 = vunpack.c.h.b16 %v1151
  %v1508 = vunpack.c.l.b16 %v1152
  %v1509 = vunpack.c.h.b16 %v1152
  %v1510 = vunpack.c.l.b16 %v1153
  %v1511 = vunpack.c.h.b16 %v1153
  %v1512 = vunpack.c.l.b16 %v1154
  %v1513 = vunpack.c.h.b16 %v1154
  %v1514 = vunpack.c.l.b16 %v1155
  %v1515 = vunpack.c.h.b16 %v1155
  %v1516 = vunpack.c.l.b16 %v1156
  %v1517 = vunpack.c.h.b16 %v1156
  %v1518 = vunpack.c.l.b16 %v1157
  %v1519 = vunpack.c.h.b16 %v1157
  %v1520 = vunpack.c.l.b16 %v1158
  %v1521 = vunpack.c.h.b16 %v1158
  %v1522 = vunpack.c.l.b16 %v1159
  %v1523 = vunpack.c.h.b16 %v1159
  %v1524 = vunpack.c.l.b16 %v1160
  %v1525 = vunpack.c.h.b16 %v1160
  %v1526 = vunpack.c.l.b16 %v1161
  %v1527 = vunpack.c.h.b16 %v1161
  %v1528 = vunpack.c.l.b16 %v1162
  %v1529 = vunpack.c.h.b16 %v1162
  %v1530 = vunpack.c.l.b16 %v1163
  %v1531 = vunpack.c.h.b16 %v1163
  %v1532 = vunpack.c.l.b16 %v1164
  %v1533 = vunpack.c.h.b16 %v1164
  %v1534 = vunpack.c.l.b16 %v1165
  %v1535 = vunpack.c.h.b16 %v1165
  %v1536 = vunpack.c.l.b16 %v1166
  %v1537 = vunpack.c.h.b16 %v1166
  %v1538 = vunpack.c.l.b16 %v1167
  %v1539 = vunpack.c.h.b16 %v1167
  %v1540 = vunpack.c.l.b16 %v1168
  %v1541 = vunpack.c.h.b16 %v1168
  %v1542 = vunpack.c.l.b16 %v1169
  %v1543 = vunpack.c.h.b16 %v1169
  %v1544 = vunpack.c.l.b16 %v1170
  %v1545 = vunpack.c.h.b16 %v1170
  %v1546 = vunpack.c.l.b16 %v1171
  %v1547 = vunpack.c.h.b16 %v1171
  %v1548 = vunpack.c.l.b16 %v1172
  %v1549 = vunpack.c.h.b16 %v1172
  %v1550 = vunpack.c.l.b16 %v1173
  %v1551 = vunpack.c.h.b16 %v1173
  %v1552 = vunpack.c.l.b16 %v1174
  %v1553 = vunpack.c.h.b16 %v1174
  %v1554 = vunpack.c.l.b16 %v1175
  %v1555 = vunpack.c.h.b16 %v1175
  %v1556 = vunpack.c.l.b16 %v1176
  %v1557 = vunpack.c.h.b16 %v1176
  %v1558 = vunpack.c.l.b16 %v1177
  %v1559 = vunpack.c.h.b16 %v1177
  %v1560 = vunpack.c.l.b16 %v1178
  %v1561 = vunpack.c.h.b16 %v1178
  %v1562 = vunpack.c.l.b16 %v1179
  %v1563 = vunpack.c.h.b16 %v1179
  %v1564 = vpack.c.b16 %v1308, %v1308
  %v1565 = vpack.c.b16 %v1309, %v1309
  %v1566 = vpack.c.b16 %v1310, %v1310
  %v1567 = vpack.c.b16 %v1311, %v1311
  %v1568 = vpack.c.b16 %v1312, %v1312
  %v1569 = vpack.c.b16 %v1313, %v1313
  %v1570 = vpack.c.b16 %v1314, %v1314
  %v1571 = vpack.c.b16 %v1315, %v1315
  %v1572 = vpack.c.b16 %v1316, %v1316
  %v1573 = vpack.c.b16 %v1317, %v1317
  %v1574 = vpack.c.b16 %v1318, %v1318
  %v1575 = vpack.c.b16 %v1319, %v1319
  %v1576 = vpack.c.b16 %v1320, %v1320
  %v1577 = vpack.c.b16 %v1321, %v1321
  %v1578 = vpack.c.b16 %v1322, %v1322
  %v1579 = vpack.c.b16 %v1323, %v1323
  %v1580 = vpack.c.b16 %v1324, %v1324
  %v1581 = vpack.c.b16 %v1325, %v1325
  %v1582 = vpack.c.b16 %v1326, %v1326
  %v1583 = vpack.c.b16 %v1327, %v1327
  %v1584 = vpack.c.b16 %v1328, %v1328
  %v1585 = vpack.c.b16 %v1329, %v1329
  %v1586 = vpack.c.b16 %v1330, %v1330
  %v1587 = vpack.c.b16 %v1331, %v1331
  %v1588 = vpack.c.b16 %v1332, %v1332
  %v1589 = vpack.c.b16 %v1333, %v1333
  %v1590 = vpack.c.b16 %v1334, %v1334
  %v1591 = vpack.c.b16 %v1335, %v1335
  %v1592 = vpack.c.b16 %v1336, %v1336
  %v1593 = vpack.c.b16 %v1337, %v1337
  %v1594 = vpack.c.b16 %v1338, %v1338
  %v1595 = vpack.c.b16 %v1339, %v1339
  %v1596 = vpack.c.b16 %v1340, %v1340
  %v1597 = vpack.c.b16 %v1341, %v1341
  %v1598 = vpack.c.b16 %v1342, %v1342
  %v1599 = vpack.c.b16 %v1343, %v1343
  %v1600 = vpack.c.b16 %v1344, %v1344
  %v1601 = vpack.c.b16 %v1345, %v1345
  %v1602 = vpack.c.b16 %v1346, %v1346
  %v1603 = vpack.c.b16 %v1347, %v1347
  %v1604 = vpack.c.b16 %v1348, %v1348
  %v1605 = vpack.c.b16 %v1349, %v1349
  %v1606 = vpack.c.b16 %v1350, %v1350
  %v1607 = vpack.c.b16 %v1351, %v1351
  %v1608 = vpack.c.b16 %v1352, %v1352
  %v1609 = vpack.c.b16 %v1353, %v1353
  %v1610 = vpack.c.b16 %v1354, %v1354
  %v1611 = vpack.c.b16 %v1355, %v1355
  %v1612 = vpack.c.b16 %v1356, %v1356
  %v1613 = vpack.c.b16 %v1357, %v1357
  %v1614 = vpack.c.b16 %v1358, %v1358
  %v1615 = vpack.c.b16 %v1359, %v1359
  %v1616 = vpack.c.b16 %v1360, %v1360
  %v1617 = vpack.c.b16 %v1361, %v1361
  %v1618 = vpack.c.b16 %v1362, %v1362
  %v1619 = vpack.c.b16 %v1363, %v1363
  %v1620 = vpack.c.b16 %v1364, %v1364
  %v1621 = vpack.c.b16 %v1365, %v1365
  %v1622 = vpack.c.b16 %v1366, %v1366
  %v1623 = vpack.c.b16 %v1367, %v1367
  %v1624 = vpack.c.b16 %v1368, %v1368
  %v1625 = vpack.c.b16 %v1369, %v1369
  %v1626 = vpack.c.b16 %v1370, %v1370
  %v1627 = vpack.c.b16 %v1371, %v1371
  %v1628 = vpack.c.b16 %v1372, %v1372
  %v1629 = vpack.c.b16 %v1373, %v1373
  %v1630 = vpack.c.b16 %v1374, %v1374
  %v1631 = vpack.c.b16 %v1375, %v1375
  %v1632 = vpack.c.b16 %v1376, %v1376
  %v1633 = vpack.c.b16 %v1377, %v1377
  %v1634 = vpack.c.b16 %v1378, %v1378
  %v1635 = vpack.c.b16 %v1379, %v1379
  %v1636 = vpack.c.b16 %v1380, %v1380
  %v1637 = vpack.c.b16 %v1381, %v1381
  %v1638 = vpack.c.b16 %v1382, %v1382
  %v1639 = vpack.c.b16 %v1383, %v1383
  %v1640 = vpack.c.b16 %v1384, %v1384
  %v1641 = vpack.c.b16 %v1385, %v1385
  %v1642 = vpack.c.b16 %v1386, %v1386
  %v1643 = vpack.c.b16 %v1387, %v1387
  %v1644 = vpack.c.b16 %v1388, %v1388
  %v1645 = vpack.c.b16 %v1389, %v1389
  %v1646 = vpack.c.b16 %v1390, %v1390
  %v1647 = vpack.c.b16 %v1391, %v1391
  %v1648 = vpack.c.b16 %v1392, %v1392
  %v1649 = vpack.c.b16 %v1393, %v1393
  %v1650 = vpack.c.b16 %v1394, %v1394
  %v1651 = vpack.c.b16 %v1395, %v1395
  %v1652 = vpack.c.b16 %v1396, %v1396
  %v1653 = vpack.c.b16 %v1397, %v1397
  %v1654 = vpack.c.b16 %v1398, %v1398
  %v1655 = vpack.c.b16 %v1399, %v1399
  %v1656 = vpack.c.b16 %v1400, %v1400
  %v1657 = vpack.c.b16 %v1401, %v1401
  %v1658 = vpack.c.b16 %v1402, %v1402
  %v1659 = vpack.c.b16 %v1403, %v1403
  %v1660 = vpack.c.b16 %v1404, %v1404
  %v1661 = vpack.c.b16 %v1405, %v1405
  %v1662 = vpack.c.b16 %v1406, %v1406
  %v1663 = vpack.c.b16 %v1407, %v1407
  %v1664 = vpack.c.b16 %v1408, %v1408
  %v1665 = vpack.c.b16 %v1409, %v1409
  %v1666 = vpack.c.b16 %v1410, %v1410
  %v1667 = vpack.c.b16 %v1411, %v1411
  %v1668 = vpack.c.b16 %v1412, %v1412
  %v1669 = vpack.c.b16 %v1413, %v1413
  %v1670 = vpack.c.b16 %v1414, %v1414
  %v1671 = vpack.c.b16 %v1415, %v1415
  %v1672 = vpack.c.b16 %v1416, %v1416
  %v1673 = vpack.c.b16 %v1417, %v1417
  %v1674 = vpack.c.b16 %v1418, %v1418
  %v1675 = vpack.c.b16 %v1419, %v1419
  %v1676 = vpack.c.b16 %v1420, %v1420
  %v1677 = vpack.c.b16 %v1421, %v1421
  %v1678 = vpack.c.b16 %v1422, %v1422
  %v1679 = vpack.c.b16 %v1423, %v1423
  %v1680 = vpack.c.b16 %v1424, %v1424
  %v1681 = vpack.c.b16 %v1425, %v1425
  %v1682 = vpack.c.b16 %v1426, %v1426
  %v1683 = vpack.c.b16 %v1427, %v1427
  %v1684 = vpack.c.b16 %v1428, %v1428
  %v1685 = vpack.c.b16 %v1429, %v1429
  %v1686 = vpack.c.b16 %v1430, %v1430
  %v1687 = vpack.c.b16 %v1431, %v1431
  %v1688 = vpack.c.b16 %v1432, %v1432
  %v1689 = vpack.c.b16 %v1433, %v1433
  %v1690 = vpack.c.b16 %v1434, %v1434
  %v1691 = vpack.c.b16 %v1435, %v1435
  %v1692 = vpack.c.b16 %v1436, %v1436
  %v1693 = vpack.c.b16 %v1437, %v1437
  %v1694 = vpack.c.b16 %v1438, %v1438
  %v1695 = vpack.c.b16 %v1439, %v1439
  %v1696 = vpack.c.b16 %v1440, %v1440
  %v1697 = vpack.c.b16 %v1441, %v1441
  %v1698 = vpack.c.b16 %v1442, %v1442
  %v1699 = vpack.c.b16 %v1443, %v1443
  %v1700 = vpack.c.b16 %v1444, %v1444
  %v1701 = vpack.c.b16 %v1445, %v1445
  %v1702 = vpack.c.b16 %v1446, %v1446
  %v1703 = vpack.c.b16 %v1447, %v1447
  %v1704 = vpack.c.b16 %v1448, %v1448
  %v1705 = vpack.c.b16 %v1449, %v1449
  %v1706 = vpack.c.b16 %v1450, %v1450
  %v1707 = vpack.c.b16 %v1451, %v1451
  %v1708 = vpack.c.b16 %v1452, %v1452
  %v1709 = vpack.c.b16 %v1453, %v1453
  %v1710 = vpack.c.b16 %v1454, %v1454
  %v1711 = vpack.c.b16 %v1455, %v1455
  %v1712 = vpack.c.b16 %v1456, %v1456
  %v1713 = vpack.c.b16 %v1457, %v1457
  %v1714 = vpack.c.b16 %v1458, %v1458
  %v1715 = vpack.c.b16 %v1459, %v1459
  %v1716 = vpack.c.b16 %v1460, %v1460
  %v1717 = vpack.c.b16 %v1461, %v1461
  %v1718 = vpack.c.b16 %v1462, %v1462
  %v1719 = vpack.c.b16 %v1463, %v1463
  %v1720 = vpack.c.b16 %v1464, %v1464
  %v1721 = vpack.c.b16 %v1465, %v1465
  %v1722 = vpack.c.b16 %v1466, %v1466
  %v1723 = vpack.c.b16 %v1467, %v1467
  %v1724 = vpack.c.b16 %v1468, %v1468
  %v1725 = vpack.c.b16 %v1469, %v1469
  %v1726 = vpack.c.b16 %v1470, %v1470
  %v1727 = vpack.c.b16 %v1471, %v1471
  %v1728 = vpack.c.b16 %v1472, %v1472
  %v1729 = vpack.c.b16 %v1473, %v1473
  %v1730 = vpack.c.b16 %v1474, %v1474
  %v1731 = vpack.c.b16 %v1475, %v1475
  %v1732 = vpack.c.b16 %v1476, %v1476
  %v1733 = vpack.c.b16 %v1477, %v1477
  %v1734 = vpack.c.b16 %v1478, %v1478
  %v1735 = vpack.c.b16 %v1479, %v1479
  %v1736 = vpack.c.b16 %v1480, %v1480
  %v1737 = vpack.c.b16 %v1481, %v1481
  %v1738 = vpack.c.b16 %v1482, %v1482
  %v1739 = vpack.c.b16 %v1483, %v1483
  %v1740 = vpack.c.b16 %v1484, %v1484
  %v1741 = vpack.c.b16 %v1485, %v1485
  %v1742 = vpack.c.b16 %v1486, %v1486
  %v1743 = vpack.c.b16 %v1487, %v1487
  %v1744 = vpack.c.b16 %v1488, %v1488
  %v1745 = vpack.c.b16 %v1489, %v1489
  %v1746 = vpack.c.b16 %v1490, %v1490
  %v1747 = vpack.c.b16 %v1491, %v1491
  %v1748 = vpack.c.b16 %v1492, %v1492
  %v1749 = vpack.c.b16 %v1493, %v1493
  %v1750 = vpack.c.b16 %v1494, %v1494
  %v1751 = vpack.c.b16 %v1495, %v1495
  %v1752 = vpack.c.b16 %v1496, %v1496
  %v1753 = vpack.c.b16 %v1497, %v1497
  %v1754 = vpack.c.b16 %v1498, %v1498
  %v1755 = vpack.c.b16 %v1499, %v1499
  %v1756 = vpack.c.b16 %v1500, %v1500
  %v1757 = vpack.c.b16 %v1501, %v1501
  %v1758 = vpack.c.b16 %v1502, %v1502
  %v1759 = vpack.c.b16 %v1503, %v1503
  %v1760 = vpack.c.b16 %v1504, %v1504
  %v1761 = vpack.c.b16 %v1505, %v1505
  %v1762 = vpack.c.b16 %v1506, %v1506
  %v1763 = vpack.c.b16 %v1507, %v1507
  %v1764 = vpack.c.b16 %v1508, %v1508
  %v1765 = vpack.c.b16 %v1509, %v1509
  %v1766 = vpack.c.b16 %v1510, %v1510
  %v1767 = vpack.c.b16 %v1511, %v1511
  %v1768 = vpack.c.b16 %v1512, %v1512
  %v1769 = vpack.c.b16 %v1513, %v1513
  %v1770 = vpack.c.b16 %v1514, %v1514
  %v1771 = vpack.c.b16 %v1515, %v1515
  %v1772 = vpack.c.b16 %v1516, %v1516
  %v1773 = vpack.c.b16 %v1517, %v1517
  %v1774 = vpack.c.b16 %v1518, %v1518
  %v1775 = vpack.c.b16 %v1519, %v1519
  %v1776 = vpack.c.b16 %v1520, %v1520
  %v1777 = vpack.c.b16 %v1521, %v1521
  %v1778 = vpack.c.b16 %v1522, %v1522
  %v1779 = vpack.c.b16 %v1523, %v1523
  %v1780 = vpack.c.b16 %v1524, %v1524
  %v1781 = vpack.c.b16 %v1525, %v1525
  %v1782 = vpack.c.b16 %v1526, %v1526
  %v1783 = vpack.c.b16 %v1527, %v1527
  %v1784 = vpack.c.b16 %v1528, %v1528
  %v1785 = vpack.c.b16 %v1529, %v1529
  %v1786 = vpack.c.b16 %v1530, %v1530
  %v1787 = vpack.c.b16 %v1531, %v1531
  %v1788 = vpack.c.b16 %v1532, %v1532
  %v1789 = vpack.c.b16 %v1533, %v1533
  %v1790 = vpack.c.b16 %v1534, %v1534
  %v1791 = vpack.c.b16 %v1535, %v1535
  %v1792 = vpack.c.b16 %v1536, %v1536
  %v1793 = vpack.c.b16 %v1537, %v1537
  %v1794 = vpack.c.b16 %v1538, %v1538
  %v1795 = vpack.c.b16 %v1539, %v1539
  %v1796 = vpack.c.b16 %v1540, %v1540
  %v1797 = vpack.c.b16 %v1541, %v1541
  %v1798 = vpack.c.b16 %v1542, %v1542
  %v1799 = vpack.c.b16 %v1543, %v1543
  %v1800 = vpack.c.b16 %v1544, %v1544
  %v1801 = vpack.c.b16 %v1545, %v1545
  %v1802 = vpack.c.b16 %v1546, %v1546
  %v1803 = vpack.c.b16 %v1547, %v1547
  %v1804 = vpack.c.b16 %v1548, %v1548
  %v1805 = vpack.c.b16 %v1549, %v1549
  %v1806 = vpack.c.b16 %v1550, %v1550
  %v1807 = vpack.c.b16 %v1551, %v1551
  %v1808 = vpack.c.b16 %v1552, %v1552
  %v1809 = vpack.c.b16 %v1553, %v1553
  %v1810 = vpack.c.b16 %v1554, %v1554
  %v1811 = vpack.c.b16 %v1555, %v1555
  %v1812 = vpack.c.b16 %v1556, %v1556
  %v1813 = vpack.c.b16 %v1557, %v1557
  %v1814 = vpack.c.b16 %v1558, %v1558
  %v1815 = vpack.c.b16 %v1559, %v1559
  %v1816 = vpack.c.b16 %v1560, %v1560
  %v1817 = vpack.c.b16 %v1561, %v1561
  %v1818 = vpack.c.b16 %v1562, %v1562
  %v1819 = vpack.c.b16 %v1563, %v1563
  %2076 = vst [vmem:[%s3] sm:$0xf] %v1564
  %2077 = vst [vmem:[%s3 + $0x4] sm:$0xf] %v1565
  %2078 = vst [vmem:[%s3 + $0x8] sm:$0xf] %v1566
  %2079 = vst [vmem:[%s3 + $0xc] sm:$0xf] %v1567
  %2080 = vst [vmem:[%s3 + $0x10] sm:$0xf] %v1568
  %2081 = vst [vmem:[%s3 + $0x14] sm:$0xf] %v1569
  %2082 = vst [vmem:[%s3 + $0x18] sm:$0xf] %v1570
  %2083 = vst [vmem:[%s3 + $0x1c] sm:$0xf] %v1571
  %2084 = vst [vmem:[%s3 + $0x20] sm:$0xf] %v1572
  %2085 = vst [vmem:[%s3 + $0x24] sm:$0xf] %v1573
  %2086 = vst [vmem:[%s3 + $0x28] sm:$0xf] %v1574
  %2087 = vst [vmem:[%s3 + $0x2c] sm:$0xf] %v1575
  %2088 = vst [vmem:[%s3 + $0x30] sm:$0xf] %v1576
  %2089 = vst [vmem:[%s3 + $0x34] sm:$0xf] %v1577
  %2090 = vst [vmem:[%s3 + $0x38] sm:$0xf] %v1578
  %2091 = vst [vmem:[%s3 + $0x3c] sm:$0xf] %v1579
  %2092 = vst [vmem:[%s3 + $0x40] sm:$0xf] %v1580
  %2093 = vst [vmem:[%s3 + $0x44] sm:$0xf] %v1581
  %2094 = vst [vmem:[%s3 + $0x48] sm:$0xf] %v1582
  %2095 = vst [vmem:[%s3 + $0x4c] sm:$0xf] %v1583
  %2096 = vst [vmem:[%s3 + $0x50] sm:$0xf] %v1584
  %2097 = vst [vmem:[%s3 + $0x54] sm:$0xf] %v1585
  %2098 = vst [vmem:[%s3 + $0x58] sm:$0xf] %v1586
  %2099 = vst [vmem:[%s3 + $0x5c] sm:$0xf] %v1587
  %2100 = vst [vmem:[%s3 + $0x60] sm:$0xf] %v1588
  %2101 = vst [vmem:[%s3 + $0x64] sm:$0xf] %v1589
  %2102 = vst [vmem:[%s3 + $0x68] sm:$0xf] %v1590
  %2103 = vst [vmem:[%s3 + $0x6c] sm:$0xf] %v1591
  %2104 = vst [vmem:[%s3 + $0x70] sm:$0xf] %v1592
  %2105 = vst [vmem:[%s3 + $0x74] sm:$0xf] %v1593
  %2106 = vst [vmem:[%s3 + $0x78] sm:$0xf] %v1594
  %2107 = vst [vmem:[%s3 + $0x7c] sm:$0xf] %v1595
  %2108 = vst [vmem:[%s3 + $0x80] sm:$0xf] %v1596
  %2109 = vst [vmem:[%s3 + $0x84] sm:$0xf] %v1597
  %2110 = vst [vmem:[%s3 + $0x88] sm:$0xf] %v1598
  %2111 = vst [vmem:[%s3 + $0x8c] sm:$0xf] %v1599
  %2112 = vst [vmem:[%s3 + $0x90] sm:$0xf] %v1600
  %2113 = vst [vmem:[%s3 + $0x94] sm:$0xf] %v1601
  %2114 = vst [vmem:[%s3 + $0x98] sm:$0xf] %v1602
  %2115 = vst [vmem:[%s3 + $0x9c] sm:$0xf] %v1603
  %2116 = vst [vmem:[%s3 + $0xa0] sm:$0xf] %v1604
  %2117 = vst [vmem:[%s3 + $0xa4] sm:$0xf] %v1605
  %2118 = vst [vmem:[%s3 + $0xa8] sm:$0xf] %v1606
  %2119 = vst [vmem:[%s3 + $0xac] sm:$0xf] %v1607
  %2120 = vst [vmem:[%s3 + $0xb0] sm:$0xf] %v1608
  %2121 = vst [vmem:[%s3 + $0xb4] sm:$0xf] %v1609
  %2122 = vst [vmem:[%s3 + $0xb8] sm:$0xf] %v1610
  %2123 = vst [vmem:[%s3 + $0xbc] sm:$0xf] %v1611
  %2124 = vst [vmem:[%s3 + $0xc0] sm:$0xf] %v1612
  %2125 = vst [vmem:[%s3 + $0xc4] sm:$0xf] %v1613
  %2126 = vst [vmem:[%s3 + $0xc8] sm:$0xf] %v1614
  %2127 = vst [vmem:[%s3 + $0xcc] sm:$0xf] %v1615
  %2128 = vst [vmem:[%s3 + $0xd0] sm:$0xf] %v1616
  %2129 = vst [vmem:[%s3 + $0xd4] sm:$0xf] %v1617
  %2130 = vst [vmem:[%s3 + $0xd8] sm:$0xf] %v1618
  %2131 = vst [vmem:[%s3 + $0xdc] sm:$0xf] %v1619
  %2132 = vst [vmem:[%s3 + $0xe0] sm:$0xf] %v1620
  %2133 = vst [vmem:[%s3 + $0xe4] sm:$0xf] %v1621
  %2134 = vst [vmem:[%s3 + $0xe8] sm:$0xf] %v1622
  %2135 = vst [vmem:[%s3 + $0xec] sm:$0xf] %v1623
  %2136 = vst [vmem:[%s3 + $0xf0] sm:$0xf] %v1624
  %2137 = vst [vmem:[%s3 + $0xf4] sm:$0xf] %v1625
  %2138 = vst [vmem:[%s3 + $0xf8] sm:$0xf] %v1626
  %2139 = vst [vmem:[%s3 + $0xfc] sm:$0xf] %v1627
  %2140 = vst [vmem:[%s3 + $0x100] sm:$0xf] %v1628
  %2141 = vst [vmem:[%s3 + $0x104] sm:$0xf] %v1629
  %2142 = vst [vmem:[%s3 + $0x108] sm:$0xf] %v1630
  %2143 = vst [vmem:[%s3 + $0x10c] sm:$0xf] %v1631
  %2144 = vst [vmem:[%s3 + $0x110] sm:$0xf] %v1632
  %2145 = vst [vmem:[%s3 + $0x114] sm:$0xf] %v1633
  %2146 = vst [vmem:[%s3 + $0x118] sm:$0xf] %v1634
  %2147 = vst [vmem:[%s3 + $0x11c] sm:$0xf] %v1635
  %2148 = vst [vmem:[%s3 + $0x120] sm:$0xf] %v1636
  %2149 = vst [vmem:[%s3 + $0x124] sm:$0xf] %v1637
  %2150 = vst [vmem:[%s3 + $0x128] sm:$0xf] %v1638
  %2151 = vst [vmem:[%s3 + $0x12c] sm:$0xf] %v1639
  %2152 = vst [vmem:[%s3 + $0x130] sm:$0xf] %v1640
  %2153 = vst [vmem:[%s3 + $0x134] sm:$0xf] %v1641
  %2154 = vst [vmem:[%s3 + $0x138] sm:$0xf] %v1642
  %2155 = vst [vmem:[%s3 + $0x13c] sm:$0xf] %v1643
  %2156 = vst [vmem:[%s3 + $0x140] sm:$0xf] %v1644
  %2157 = vst [vmem:[%s3 + $0x144] sm:$0xf] %v1645
  %2158 = vst [vmem:[%s3 + $0x148] sm:$0xf] %v1646
  %2159 = vst [vmem:[%s3 + $0x14c] sm:$0xf] %v1647
  %2160 = vst [vmem:[%s3 + $0x150] sm:$0xf] %v1648
  %2161 = vst [vmem:[%s3 + $0x154] sm:$0xf] %v1649
  %2162 = vst [vmem:[%s3 + $0x158] sm:$0xf] %v1650
  %2163 = vst [vmem:[%s3 + $0x15c] sm:$0xf] %v1651
  %2164 = vst [vmem:[%s3 + $0x160] sm:$0xf] %v1652
  %2165 = vst [vmem:[%s3 + $0x164] sm:$0xf] %v1653
  %2166 = vst [vmem:[%s3 + $0x168] sm:$0xf] %v1654
  %2167 = vst [vmem:[%s3 + $0x16c] sm:$0xf] %v1655
  %2168 = vst [vmem:[%s3 + $0x170] sm:$0xf] %v1656
  %2169 = vst [vmem:[%s3 + $0x174] sm:$0xf] %v1657
  %2170 = vst [vmem:[%s3 + $0x178] sm:$0xf] %v1658
  %2171 = vst [vmem:[%s3 + $0x17c] sm:$0xf] %v1659
  %2172 = vst [vmem:[%s3 + $0x180] sm:$0xf] %v1660
  %2173 = vst [vmem:[%s3 + $0x184] sm:$0xf] %v1661
  %2174 = vst [vmem:[%s3 + $0x188] sm:$0xf] %v1662
  %2175 = vst [vmem:[%s3 + $0x18c] sm:$0xf] %v1663
  %2176 = vst [vmem:[%s3 + $0x190] sm:$0xf] %v1664
  %2177 = vst [vmem:[%s3 + $0x194] sm:$0xf] %v1665
  %2178 = vst [vmem:[%s3 + $0x198] sm:$0xf] %v1666
  %2179 = vst [vmem:[%s3 + $0x19c] sm:$0xf] %v1667
  %2180 = vst [vmem:[%s3 + $0x1a0] sm:$0xf] %v1668
  %2181 = vst [vmem:[%s3 + $0x1a4] sm:$0xf] %v1669
  %2182 = vst [vmem:[%s3 + $0x1a8] sm:$0xf] %v1670
  %2183 = vst [vmem:[%s3 + $0x1ac] sm:$0xf] %v1671
  %2184 = vst [vmem:[%s3 + $0x1b0] sm:$0xf] %v1672
  %2185 = vst [vmem:[%s3 + $0x1b4] sm:$0xf] %v1673
  %2186 = vst [vmem:[%s3 + $0x1b8] sm:$0xf] %v1674
  %2187 = vst [vmem:[%s3 + $0x1bc] sm:$0xf] %v1675
  %2188 = vst [vmem:[%s3 + $0x1c0] sm:$0xf] %v1676
  %2189 = vst [vmem:[%s3 + $0x1c4] sm:$0xf] %v1677
  %2190 = vst [vmem:[%s3 + $0x1c8] sm:$0xf] %v1678
  %2191 = vst [vmem:[%s3 + $0x1cc] sm:$0xf] %v1679
  %2192 = vst [vmem:[%s3 + $0x1d0] sm:$0xf] %v1680
  %2193 = vst [vmem:[%s3 + $0x1d4] sm:$0xf] %v1681
  %2194 = vst [vmem:[%s3 + $0x1d8] sm:$0xf] %v1682
  %2195 = vst [vmem:[%s3 + $0x1dc] sm:$0xf] %v1683
  %2196 = vst [vmem:[%s3 + $0x1e0] sm:$0xf] %v1684
  %2197 = vst [vmem:[%s3 + $0x1e4] sm:$0xf] %v1685
  %2198 = vst [vmem:[%s3 + $0x1e8] sm:$0xf] %v1686
  %2199 = vst [vmem:[%s3 + $0x1ec] sm:$0xf] %v1687
  %2200 = vst [vmem:[%s3 + $0x1f0] sm:$0xf] %v1688
  %2201 = vst [vmem:[%s3 + $0x1f4] sm:$0xf] %v1689
  %2202 = vst [vmem:[%s3 + $0x1f8] sm:$0xf] %v1690
  %2203 = vst [vmem:[%s3 + $0x1fc] sm:$0xf] %v1691
  %2204 = vst [vmem:[%s3 + $0x200] sm:$0xf] %v1692
  %2205 = vst [vmem:[%s3 + $0x204] sm:$0xf] %v1693
  %2206 = vst [vmem:[%s3 + $0x208] sm:$0xf] %v1694
  %2207 = vst [vmem:[%s3 + $0x20c] sm:$0xf] %v1695
  %2208 = vst [vmem:[%s3 + $0x210] sm:$0xf] %v1696
  %2209 = vst [vmem:[%s3 + $0x214] sm:$0xf] %v1697
  %2210 = vst [vmem:[%s3 + $0x218] sm:$0xf] %v1698
  %2211 = vst [vmem:[%s3 + $0x21c] sm:$0xf] %v1699
  %2212 = vst [vmem:[%s3 + $0x220] sm:$0xf] %v1700
  %2213 = vst [vmem:[%s3 + $0x224] sm:$0xf] %v1701
  %2214 = vst [vmem:[%s3 + $0x228] sm:$0xf] %v1702
  %2215 = vst [vmem:[%s3 + $0x22c] sm:$0xf] %v1703
  %2216 = vst [vmem:[%s3 + $0x230] sm:$0xf] %v1704
  %2217 = vst [vmem:[%s3 + $0x234] sm:$0xf] %v1705
  %2218 = vst [vmem:[%s3 + $0x238] sm:$0xf] %v1706
  %2219 = vst [vmem:[%s3 + $0x23c] sm:$0xf] %v1707
  %2220 = vst [vmem:[%s3 + $0x240] sm:$0xf] %v1708
  %2221 = vst [vmem:[%s3 + $0x244] sm:$0xf] %v1709
  %2222 = vst [vmem:[%s3 + $0x248] sm:$0xf] %v1710
  %2223 = vst [vmem:[%s3 + $0x24c] sm:$0xf] %v1711
  %2224 = vst [vmem:[%s3 + $0x250] sm:$0xf] %v1712
  %2225 = vst [vmem:[%s3 + $0x254] sm:$0xf] %v1713
  %2226 = vst [vmem:[%s3 + $0x258] sm:$0xf] %v1714
  %2227 = vst [vmem:[%s3 + $0x25c] sm:$0xf] %v1715
  %2228 = vst [vmem:[%s3 + $0x260] sm:$0xf] %v1716
  %2229 = vst [vmem:[%s3 + $0x264] sm:$0xf] %v1717
  %2230 = vst [vmem:[%s3 + $0x268] sm:$0xf] %v1718
  %2231 = vst [vmem:[%s3 + $0x26c] sm:$0xf] %v1719
  %2232 = vst [vmem:[%s3 + $0x270] sm:$0xf] %v1720
  %2233 = vst [vmem:[%s3 + $0x274] sm:$0xf] %v1721
  %2234 = vst [vmem:[%s3 + $0x278] sm:$0xf] %v1722
  %2235 = vst [vmem:[%s3 + $0x27c] sm:$0xf] %v1723
  %2236 = vst [vmem:[%s3 + $0x280] sm:$0xf] %v1724
  %2237 = vst [vmem:[%s3 + $0x284] sm:$0xf] %v1725
  %2238 = vst [vmem:[%s3 + $0x288] sm:$0xf] %v1726
  %2239 = vst [vmem:[%s3 + $0x28c] sm:$0xf] %v1727
  %2240 = vst [vmem:[%s3 + $0x290] sm:$0xf] %v1728
  %2241 = vst [vmem:[%s3 + $0x294] sm:$0xf] %v1729
  %2242 = vst [vmem:[%s3 + $0x298] sm:$0xf] %v1730
  %2243 = vst [vmem:[%s3 + $0x29c] sm:$0xf] %v1731
  %2244 = vst [vmem:[%s3 + $0x2a0] sm:$0xf] %v1732
  %2245 = vst [vmem:[%s3 + $0x2a4] sm:$0xf] %v1733
  %2246 = vst [vmem:[%s3 + $0x2a8] sm:$0xf] %v1734
  %2247 = vst [vmem:[%s3 + $0x2ac] sm:$0xf] %v1735
  %2248 = vst [vmem:[%s3 + $0x2b0] sm:$0xf] %v1736
  %2249 = vst [vmem:[%s3 + $0x2b4] sm:$0xf] %v1737
  %2250 = vst [vmem:[%s3 + $0x2b8] sm:$0xf] %v1738
  %2251 = vst [vmem:[%s3 + $0x2bc] sm:$0xf] %v1739
  %2252 = vst [vmem:[%s3 + $0x2c0] sm:$0xf] %v1740
  %2253 = vst [vmem:[%s3 + $0x2c4] sm:$0xf] %v1741
  %2254 = vst [vmem:[%s3 + $0x2c8] sm:$0xf] %v1742
  %2255 = vst [vmem:[%s3 + $0x2cc] sm:$0xf] %v1743
  %2256 = vst [vmem:[%s3 + $0x2d0] sm:$0xf] %v1744
  %2257 = vst [vmem:[%s3 + $0x2d4] sm:$0xf] %v1745
  %2258 = vst [vmem:[%s3 + $0x2d8] sm:$0xf] %v1746
  %2259 = vst [vmem:[%s3 + $0x2dc] sm:$0xf] %v1747
  %2260 = vst [vmem:[%s3 + $0x2e0] sm:$0xf] %v1748
  %2261 = vst [vmem:[%s3 + $0x2e4] sm:$0xf] %v1749
  %2262 = vst [vmem:[%s3 + $0x2e8] sm:$0xf] %v1750
  %2263 = vst [vmem:[%s3 + $0x2ec] sm:$0xf] %v1751
  %2264 = vst [vmem:[%s3 + $0x2f0] sm:$0xf] %v1752
  %2265 = vst [vmem:[%s3 + $0x2f4] sm:$0xf] %v1753
  %2266 = vst [vmem:[%s3 + $0x2f8] sm:$0xf] %v1754
  %2267 = vst [vmem:[%s3 + $0x2fc] sm:$0xf] %v1755
  %2268 = vst [vmem:[%s3 + $0x300] sm:$0xf] %v1756
  %2269 = vst [vmem:[%s3 + $0x304] sm:$0xf] %v1757
  %2270 = vst [vmem:[%s3 + $0x308] sm:$0xf] %v1758
  %2271 = vst [vmem:[%s3 + $0x30c] sm:$0xf] %v1759
  %2272 = vst [vmem:[%s3 + $0x310] sm:$0xf] %v1760
  %2273 = vst [vmem:[%s3 + $0x314] sm:$0xf] %v1761
  %2274 = vst [vmem:[%s3 + $0x318] sm:$0xf] %v1762
  %2275 = vst [vmem:[%s3 + $0x31c] sm:$0xf] %v1763
  %2276 = vst [vmem:[%s3 + $0x320] sm:$0xf] %v1764
  %2277 = vst [vmem:[%s3 + $0x324] sm:$0xf] %v1765
  %2278 = vst [vmem:[%s3 + $0x328] sm:$0xf] %v1766
  %2279 = vst [vmem:[%s3 + $0x32c] sm:$0xf] %v1767
  %2280 = vst [vmem:[%s3 + $0x330] sm:$0xf] %v1768
  %2281 = vst [vmem:[%s3 + $0x334] sm:$0xf] %v1769
  %2282 = vst [vmem:[%s3 + $0x338] sm:$0xf] %v1770
  %2283 = vst [vmem:[%s3 + $0x33c] sm:$0xf] %v1771
  %2284 = vst [vmem:[%s3 + $0x340] sm:$0xf] %v1772
  %2285 = vst [vmem:[%s3 + $0x344] sm:$0xf] %v1773
  %2286 = vst [vmem:[%s3 + $0x348] sm:$0xf] %v1774
  %2287 = vst [vmem:[%s3 + $0x34c] sm:$0xf] %v1775
  %2288 = vst [vmem:[%s3 + $0x350] sm:$0xf] %v1776
  %2289 = vst [vmem:[%s3 + $0x354] sm:$0xf] %v1777
  %2290 = vst [vmem:[%s3 + $0x358] sm:$0xf] %v1778
  %2291 = vst [vmem:[%s3 + $0x35c] sm:$0xf] %v1779
  %2292 = vst [vmem:[%s3 + $0x360] sm:$0xf] %v1780
  %2293 = vst [vmem:[%s3 + $0x364] sm:$0xf] %v1781
  %2294 = vst [vmem:[%s3 + $0x368] sm:$0xf] %v1782
  %2295 = vst [vmem:[%s3 + $0x36c] sm:$0xf] %v1783
  %2296 = vst [vmem:[%s3 + $0x370] sm:$0xf] %v1784
  %2297 = vst [vmem:[%s3 + $0x374] sm:$0xf] %v1785
  %2298 = vst [vmem:[%s3 + $0x378] sm:$0xf] %v1786
  %2299 = vst [vmem:[%s3 + $0x37c] sm:$0xf] %v1787
  %2300 = vst [vmem:[%s3 + $0x380] sm:$0xf] %v1788
  %2301 = vst [vmem:[%s3 + $0x384] sm:$0xf] %v1789
  %2302 = vst [vmem:[%s3 + $0x388] sm:$0xf] %v1790
  %2303 = vst [vmem:[%s3 + $0x38c] sm:$0xf] %v1791
  %2304 = vst [vmem:[%s3 + $0x390] sm:$0xf] %v1792
  %2305 = vst [vmem:[%s3 + $0x394] sm:$0xf] %v1793
  %2306 = vst [vmem:[%s3 + $0x398] sm:$0xf] %v1794
  %2307 = vst [vmem:[%s3 + $0x39c] sm:$0xf] %v1795
  %2308 = vst [vmem:[%s3 + $0x3a0] sm:$0xf] %v1796
  %2309 = vst [vmem:[%s3 + $0x3a4] sm:$0xf] %v1797
  %2310 = vst [vmem:[%s3 + $0x3a8] sm:$0xf] %v1798
  %2311 = vst [vmem:[%s3 + $0x3ac] sm:$0xf] %v1799
  %2312 = vst [vmem:[%s3 + $0x3b0] sm:$0xf] %v1800
  %2313 = vst [vmem:[%s3 + $0x3b4] sm:$0xf] %v1801
  %2314 = vst [vmem:[%s3 + $0x3b8] sm:$0xf] %v1802
  %2315 = vst [vmem:[%s3 + $0x3bc] sm:$0xf] %v1803
  %2316 = vst [vmem:[%s3 + $0x3c0] sm:$0xf] %v1804
  %2317 = vst [vmem:[%s3 + $0x3c4] sm:$0xf] %v1805
  %2318 = vst [vmem:[%s3 + $0x3c8] sm:$0xf] %v1806
  %2319 = vst [vmem:[%s3 + $0x3cc] sm:$0xf] %v1807
  %2320 = vst [vmem:[%s3 + $0x3d0] sm:$0xf] %v1808
  %2321 = vst [vmem:[%s3 + $0x3d4] sm:$0xf] %v1809
  %2322 = vst [vmem:[%s3 + $0x3d8] sm:$0xf] %v1810
  %2323 = vst [vmem:[%s3 + $0x3dc] sm:$0xf] %v1811
  %2324 = vst [vmem:[%s3 + $0x3e0] sm:$0xf] %v1812
  %2325 = vst [vmem:[%s3 + $0x3e4] sm:$0xf] %v1813
  %2326 = vst [vmem:[%s3 + $0x3e8] sm:$0xf] %v1814
  %2327 = vst [vmem:[%s3 + $0x3ec] sm:$0xf] %v1815
  %2328 = vst [vmem:[%s3 + $0x3f0] sm:$0xf] %v1816
  %2329 = vst [vmem:[%s3 + $0x3f4] sm:$0xf] %v1817
  %2330 = vst [vmem:[%s3 + $0x3f8] sm:$0xf] %v1818
  %2331 = vst [vmem:[%s3 + $0x3fc] sm:$0xf] %v1819
  // Predicated region
  $region14: #{_lambda_.16} parent=0 // pred_check
    _
  $region15: #{_lambda_.16} parent=0 // pred_check_branch
    %2333 = sbr.rel (0) target = $region17
  $region16: #{_lambda_.16} parent=0 // pred_region
    _
  $region17: #{_lambda_.16} parent=0 // pred_fallthru
    _
  // Predicated region
  $region18: #{_lambda_.16} parent=0 // pred_check
    _
  $region19: #{_lambda_.16} parent=0 // pred_check_branch
    %2335 = sbr.rel (0) target = $region21
  $region20: #{_lambda_.16} parent=0 // pred_region
    _
  $region21: #{_lambda_.16} parent=0 // pred_fallthru
    _

// kernel: _lambda_.17
$region0: #{_lambda_.17}
  #allocation0 [shape = 'u32[]', space=smem, size = 0x4, offset = 0x4, fixed_abs, tag = 'smem constant byte address 0x4 - core index']
  #allocation1 [shape = 'u32[144,128]{1,0:T(1,128)}', space=vmem, size = 0x12000, scoped, tag = 'internal scratch']
  %s0 = inlined_call_operand.vmem [shape: bf16[8192,128], index: 0, kind: input, shape index: {}]
  %s1 = inlined_call_operand.vmem [shape: bf16[128,128], index: 1, kind: input, shape index: {}]
  %s2 = inlined_call_operand.vmem [shape: f32[8192,128], index: 2, kind: output, shape index: {}]
  %s3 = sld [smem:[#allocation0]]
  $region41: #{_lambda_.17} parent=0
    _
  %s5 = ssub.s32 1, %s3
  %s6 = scalar_select 0, %s5, %s3
  loop: start=0, step=1, limit=6
  $region2: #{_lambda_.17} parent=0 // loop_pre_header
    _
  $region3: #{_lambda_.17} parent=0 // loop_header
    %s8 = sphi 0, %s12
    %p9 = scmp.ge.s32.totalorder %s8, 6
    %s18 = sphi 0, %s20
    %s21 = sphi 0, %s18
    %s22 = sphi 0, %s21
    %s38 = sphi 0, %s22
    %s42 = sphi 0, %s42
    %s44 = sphi 0, %s42
    %s45 = sphi 0, %s44
    %s59 = sphi 0, %s45
    %s65 = sphi 0, %s67
    %s68 = sphi 0, %s65
    %s69 = sphi 0, %s68
    %s85 = sphi 0, %s69
  $region4: #{_lambda_.17} parent=0 // loop_header_branch
    %11 = sbr.rel (%p9) target = $region8
  $region5: #{_lambda_.17} parent=0 // loop_body
    %s13 = ssub.s32 %s8, 1
    %s14 = ssub.s32 %s8, 2
    %s15 = sadd.s32 %s8, 1
    %s16 = ssub.s32 %s8, %s15
    %p17 = scmp.eq.s32.totalorder %s16, 0
    %s19 = sadd.s32 %s18, 1
    %s20 = scalar_select %p17, %s18, %s19
    %p23 = pneg %p17
    %p24 = scmp.eq.s32.totalorder %s8, 3
    %p25 = por %p23, %p24
    %p26 = scmp.ne.s32.totalorder %s18, %s21
    %p27 = scmp.eq.s32.totalorder %s8, 0
    %p28 = por %p26, %p27
    %p29 = scmp.ne.s32.totalorder %s18, %s21
    %p30 = scmp.eq.s32.totalorder %s13, 3
    %p31 = por %p29, %p30
    %p32 = scmp.ne.s32.totalorder %s21, %s22
    %p33 = scmp.eq.s32.totalorder %s13, 0
    %p34 = por %p32, %p33
    %p35 = scmp.ne.s32.totalorder %s21, %s22
    %p36 = scmp.eq.s32.totalorder %s14, 3
    %p37 = por %p35, %p36
    %p39 = scmp.ne.s32.totalorder %s22, %s38
    %p40 = scmp.eq.s32.totalorder %s14, 0
    %p41 = por %p39, %p40
    %s43 = sadd.s32 %s42, 1
    %p46 = scmp.eq.s32.totalorder %s8, 3
    %p47 = scmp.ne.s32.totalorder %s42, %s44
    %p48 = scmp.eq.s32.totalorder %s8, 0
    %p49 = por %p47, %p48
    %p50 = scmp.ne.s32.totalorder %s42, %s44
    %p51 = scmp.eq.s32.totalorder %s13, 3
    %p52 = por %p50, %p51
    %p53 = scmp.ne.s32.totalorder %s44, %s45
    %p54 = scmp.eq.s32.totalorder %s13, 0
    %p55 = por %p53, %p54
    %p56 = scmp.ne.s32.totalorder %s44, %s45
    %p57 = scmp.eq.s32.totalorder %s14, 3
    %p58 = por %p56, %p57
    %p60 = scmp.ne.s32.totalorder %s45, %s59
    %p61 = scmp.eq.s32.totalorder %s14, 0
    %p62 = por %p60, %p61
    %s63 = ssub.s32 %s8, %s15
    %p64 = scmp.eq.s32.totalorder %s63, 0
    %s66 = sadd.s32 %s65, 1
    %s67 = scalar_select %p64, %s65, %s66
    %p70 = pneg %p64
    %p71 = scmp.eq.s32.totalorder %s8, 3
    %p72 = por %p70, %p71
    %p73 = scmp.ne.s32.totalorder %s65, %s68
    %p74 = scmp.eq.s32.totalorder %s8, 0
    %p75 = por %p73, %p74
    %p76 = scmp.ne.s32.totalorder %s65, %s68
    %p77 = scmp.eq.s32.totalorder %s13, 3
    %p78 = por %p76, %p77
    %p79 = scmp.ne.s32.totalorder %s68, %s69
    %p80 = scmp.eq.s32.totalorder %s13, 0
    %p81 = por %p79, %p80
    %p82 = scmp.ne.s32.totalorder %s68, %s69
    %p83 = scmp.eq.s32.totalorder %s14, 3
    %p84 = por %p82, %p83
    %p86 = scmp.ne.s32.totalorder %s69, %s85
    %p87 = scmp.eq.s32.totalorder %s14, 0
    %p88 = por %p86, %p87
    %p89 = scmp.le.s32.totalorder 1, %s8
    %p90 = scmp.lt.s32.totalorder %s8, 5
    %p91 = pnand %p89, %p90
    %p92 = pneg %p91
    // Predicated region
    $region9: #{_lambda_.17} parent=5 // pred_check
      _
    $region10: #{_lambda_.17} parent=5 // pred_check_branch
      %94 = sbr.rel (%p91) target = $region12
    $region11: #{_lambda_.17} parent=5 // pred_region
      %s95 = ssub.s32 %s8, 1
      // Predicated region
      $region13: #{_lambda_.17} parent=11 // pred_check
        %p96 = pneg %p55
      $region14: #{_lambda_.17} parent=11 // pred_check_branch
        %98 = sbr.rel (%p96) target = $region16
      $region15: #{_lambda_.17} parent=11 // pred_region
        _
      $region16: #{_lambda_.17} parent=11 // pred_fallthru
        _
    $region12: #{_lambda_.17} parent=5 // pred_fallthru
      _
    %p99 = scmp.lt.s32.totalorder %s8, 4
    // Predicated region
    $region17: #{_lambda_.17} parent=5 // pred_check
      %p100 = pneg %p99
    $region18: #{_lambda_.17} parent=5 // pred_check_branch
      %102 = sbr.rel (%p100) target = $region20
    $region19: #{_lambda_.17} parent=5 // pred_region
      // Predicated region
      $region21: #{_lambda_.17} parent=19 // pred_check
        %p103 = pneg %p28
      $region22: #{_lambda_.17} parent=19 // pred_check_branch
        %105 = sbr.rel (%p103) target = $region24
      $region23: #{_lambda_.17} parent=19 // pred_region
        %s106 = smul.u32 256, %s8
        %p107 = scmp.lt.s32.totalorder %s106, 1023
        %s108 = scalar_select %p107, %s106, 1023
        %s109 = smul.addr %s108, 4
        %s110 = scalar_lea.vmem %s0, %s109
        %s111 = smul.u32 256, %s8
      $region24: #{_lambda_.17} parent=19 // pred_fallthru
        _
    $region20: #{_lambda_.17} parent=5 // pred_fallthru
      _
    %p112 = scmp.le.s32.totalorder 1, %s8
    %p113 = scmp.lt.s32.totalorder %s8, 5
    %p114 = pnand %p112, %p113
    %p115 = pneg %p114
    // Predicated region
    $region25: #{_lambda_.17} parent=5 // pred_check
      _
    $region26: #{_lambda_.17} parent=5 // pred_check_branch
      %117 = sbr.rel (%p114) target = $region28
    $region27: #{_lambda_.17} parent=5 // pred_region
      %s118 = ssub.s32 %s8, 1
      %s119 = smul.u32 256, %s13
      %p120 = scmp.lt.s32.totalorder %s119, 1023
      %s121 = scalar_select %p120, %s119, 1023
      %s122 = smul.addr %s121, 4
      %s123 = scalar_lea.vmem %s0, %s122
      %p124 = pneg %p34
      %p125 = pneg %p31
      %p126 = pneg %p55
      %p127 = pneg %p52
      %p128 = pneg %p81
      %p129 = pneg %p78
      %s130 = smul.u32 256, %s13
      %p131 = scmp.lt.s32.totalorder %s130, 1023
      %s132 = scalar_select %p131, %s130, 1023
      %s133 = smul.addr %s132, 8
      %s134 = scalar_lea.vmem %s2, %s133
      %s135 = smul.u32 256, %s13
      %p136 = scmp.lt.s32.totalorder %s135, 1023
      %s137 = scalar_select %p136, %s135, 1023
      %s138 = smul.addr %s137, 4
      %s139 = scalar_lea.vmem %s0, %s138
      %s140 = smul.u32 256, %s13
      %s141 = smul.u32 256, %s13
      %p142 = scmp.lt.s32.totalorder %s141, 1023
      %s143 = scalar_select %p142, %s141, 1023
      %s144 = smul.addr %s143, 8
      %s145 = scalar_lea.vmem %s2, %s144
      %s146 = smul.u32 256, %s13
      %v148 = vld [vmem:[%s139] sm:$0xf]
      %v149 = vld [vmem:[%s139 + $0x4] sm:$0xf]
      %v150 = vld [vmem:[%s139 + $0x8] sm:$0xf]
      %v151 = vld [vmem:[%s139 + $0xc] sm:$0xf]
      %v152 = vld [vmem:[%s139 + $0x10] sm:$0xf]
      %v153 = vld [vmem:[%s139 + $0x14] sm:$0xf]
      %v154 = vld [vmem:[%s139 + $0x18] sm:$0xf]
      %v155 = vld [vmem:[%s139 + $0x1c] sm:$0xf]
      %v156 = vld [vmem:[%s139 + $0x20] sm:$0xf]
      %v157 = vld [vmem:[%s139 + $0x24] sm:$0xf]
      %v158 = vld [vmem:[%s139 + $0x28] sm:$0xf]
      %v159 = vld [vmem:[%s139 + $0x2c] sm:$0xf]
      %v160 = vld [vmem:[%s139 + $0x30] sm:$0xf]
      %v161 = vld [vmem:[%s139 + $0x34] sm:$0xf]
      %v162 = vld [vmem:[%s139 + $0x38] sm:$0xf]
      %v163 = vld [vmem:[%s139 + $0x3c] sm:$0xf]
      %v164 = vld [vmem:[%s139 + $0x40] sm:$0xf]
      %v165 = vld [vmem:[%s139 + $0x44] sm:$0xf]
      %v166 = vld [vmem:[%s139 + $0x48] sm:$0xf]
      %v167 = vld [vmem:[%s139 + $0x4c] sm:$0xf]
      %v168 = vld [vmem:[%s139 + $0x50] sm:$0xf]
      %v169 = vld [vmem:[%s139 + $0x54] sm:$0xf]
      %v170 = vld [vmem:[%s139 + $0x58] sm:$0xf]
      %v171 = vld [vmem:[%s139 + $0x5c] sm:$0xf]
      %v172 = vld [vmem:[%s139 + $0x60] sm:$0xf]
      %v173 = vld [vmem:[%s139 + $0x64] sm:$0xf]
      %v174 = vld [vmem:[%s139 + $0x68] sm:$0xf]
      %v175 = vld [vmem:[%s139 + $0x6c] sm:$0xf]
      %v176 = vld [vmem:[%s139 + $0x70] sm:$0xf]
      %v177 = vld [vmem:[%s139 + $0x74] sm:$0xf]
      %v178 = vld [vmem:[%s139 + $0x78] sm:$0xf]
      %v179 = vld [vmem:[%s139 + $0x7c] sm:$0xf]
      %v180 = vld [vmem:[%s139 + $0x80] sm:$0xf]
      %v181 = vld [vmem:[%s139 + $0x84] sm:$0xf]
      %v182 = vld [vmem:[%s139 + $0x88] sm:$0xf]
      %v183 = vld [vmem:[%s139 + $0x8c] sm:$0xf]
      %v184 = vld [vmem:[%s139 + $0x90] sm:$0xf]
      %v185 = vld [vmem:[%s139 + $0x94] sm:$0xf]
      %v186 = vld [vmem:[%s139 + $0x98] sm:$0xf]
      %v187 = vld [vmem:[%s139 + $0x9c] sm:$0xf]
      %v188 = vld [vmem:[%s139 + $0xa0] sm:$0xf]
      %v189 = vld [vmem:[%s139 + $0xa4] sm:$0xf]
      %v190 = vld [vmem:[%s139 + $0xa8] sm:$0xf]
      %v191 = vld [vmem:[%s139 + $0xac] sm:$0xf]
      %v192 = vld [vmem:[%s139 + $0xb0] sm:$0xf]
      %v193 = vld [vmem:[%s139 + $0xb4] sm:$0xf]
      %v194 = vld [vmem:[%s139 + $0xb8] sm:$0xf]
      %v195 = vld [vmem:[%s139 + $0xbc] sm:$0xf]
      %v196 = vld [vmem:[%s139 + $0xc0] sm:$0xf]
      %v197 = vld [vmem:[%s139 + $0xc4] sm:$0xf]
      %v198 = vld [vmem:[%s139 + $0xc8] sm:$0xf]
      %v199 = vld [vmem:[%s139 + $0xcc] sm:$0xf]
      %v200 = vld [vmem:[%s139 + $0xd0] sm:$0xf]
      %v201 = vld [vmem:[%s139 + $0xd4] sm:$0xf]
      %v202 = vld [vmem:[%s139 + $0xd8] sm:$0xf]
      %v203 = vld [vmem:[%s139 + $0xdc] sm:$0xf]
      %v204 = vld [vmem:[%s139 + $0xe0] sm:$0xf]
      %v205 = vld [vmem:[%s139 + $0xe4] sm:$0xf]
      %v206 = vld [vmem:[%s139 + $0xe8] sm:$0xf]
      %v207 = vld [vmem:[%s139 + $0xec] sm:$0xf]
      %v208 = vld [vmem:[%s139 + $0xf0] sm:$0xf]
      %v209 = vld [vmem:[%s139 + $0xf4] sm:$0xf]
      %v210 = vld [vmem:[%s139 + $0xf8] sm:$0xf]
      %v211 = vld [vmem:[%s139 + $0xfc] sm:$0xf]
      %v212 = vld [vmem:[%s139 + $0x100] sm:$0xf]
      %v213 = vld [vmem:[%s139 + $0x104] sm:$0xf]
      %v214 = vld [vmem:[%s139 + $0x108] sm:$0xf]
      %v215 = vld [vmem:[%s139 + $0x10c] sm:$0xf]
      %v216 = vld [vmem:[%s139 + $0x110] sm:$0xf]
      %v217 = vld [vmem:[%s139 + $0x114] sm:$0xf]
      %v218 = vld [vmem:[%s139 + $0x118] sm:$0xf]
      %v219 = vld [vmem:[%s139 + $0x11c] sm:$0xf]
      %v220 = vld [vmem:[%s139 + $0x120] sm:$0xf]
      %v221 = vld [vmem:[%s139 + $0x124] sm:$0xf]
      %v222 = vld [vmem:[%s139 + $0x128] sm:$0xf]
      %v223 = vld [vmem:[%s139 + $0x12c] sm:$0xf]
      %v224 = vld [vmem:[%s139 + $0x130] sm:$0xf]
      %v225 = vld [vmem:[%s139 + $0x134] sm:$0xf]
      %v226 = vld [vmem:[%s139 + $0x138] sm:$0xf]
      %v227 = vld [vmem:[%s139 + $0x13c] sm:$0xf]
      %v228 = vld [vmem:[%s139 + $0x140] sm:$0xf]
      %v229 = vld [vmem:[%s139 + $0x144] sm:$0xf]
      %v230 = vld [vmem:[%s139 + $0x148] sm:$0xf]
      %v231 = vld [vmem:[%s139 + $0x14c] sm:$0xf]
      %v232 = vld [vmem:[%s139 + $0x150] sm:$0xf]
      %v233 = vld [vmem:[%s139 + $0x154] sm:$0xf]
      %v234 = vld [vmem:[%s139 + $0x158] sm:$0xf]
      %v235 = vld [vmem:[%s139 + $0x15c] sm:$0xf]
      %v236 = vld [vmem:[%s139 + $0x160] sm:$0xf]
      %v237 = vld [vmem:[%s139 + $0x164] sm:$0xf]
      %v238 = vld [vmem:[%s139 + $0x168] sm:$0xf]
      %v239 = vld [vmem:[%s139 + $0x16c] sm:$0xf]
      %v240 = vld [vmem:[%s139 + $0x170] sm:$0xf]
      %v241 = vld [vmem:[%s139 + $0x174] sm:$0xf]
      %v242 = vld [vmem:[%s139 + $0x178] sm:$0xf]
      %v243 = vld [vmem:[%s139 + $0x17c] sm:$0xf]
      %v244 = vld [vmem:[%s139 + $0x180] sm:$0xf]
      %v245 = vld [vmem:[%s139 + $0x184] sm:$0xf]
      %v246 = vld [vmem:[%s139 + $0x188] sm:$0xf]
      %v247 = vld [vmem:[%s139 + $0x18c] sm:$0xf]
      %v248 = vld [vmem:[%s139 + $0x190] sm:$0xf]
      %v249 = vld [vmem:[%s139 + $0x194] sm:$0xf]
      %v250 = vld [vmem:[%s139 + $0x198] sm:$0xf]
      %v251 = vld [vmem:[%s139 + $0x19c] sm:$0xf]
      %v252 = vld [vmem:[%s139 + $0x1a0] sm:$0xf]
      %v253 = vld [vmem:[%s139 + $0x1a4] sm:$0xf]
      %v254 = vld [vmem:[%s139 + $0x1a8] sm:$0xf]
      %v255 = vld [vmem:[%s139 + $0x1ac] sm:$0xf]
      %v256 = vld [vmem:[%s139 + $0x1b0] sm:$0xf]
      %v257 = vld [vmem:[%s139 + $0x1b4] sm:$0xf]
      %v258 = vld [vmem:[%s139 + $0x1b8] sm:$0xf]
      %v259 = vld [vmem:[%s139 + $0x1bc] sm:$0xf]
      %v260 = vld [vmem:[%s139 + $0x1c0] sm:$0xf]
      %v261 = vld [vmem:[%s139 + $0x1c4] sm:$0xf]
      %v262 = vld [vmem:[%s139 + $0x1c8] sm:$0xf]
      %v263 = vld [vmem:[%s139 + $0x1cc] sm:$0xf]
      %v264 = vld [vmem:[%s139 + $0x1d0] sm:$0xf]
      %v265 = vld [vmem:[%s139 + $0x1d4] sm:$0xf]
      %v266 = vld [vmem:[%s139 + $0x1d8] sm:$0xf]
      %v267 = vld [vmem:[%s139 + $0x1dc] sm:$0xf]
      %v268 = vld [vmem:[%s139 + $0x1e0] sm:$0xf]
      %v269 = vld [vmem:[%s139 + $0x1e4] sm:$0xf]
      %v270 = vld [vmem:[%s139 + $0x1e8] sm:$0xf]
      %v271 = vld [vmem:[%s139 + $0x1ec] sm:$0xf]
      %v272 = vld [vmem:[%s139 + $0x1f0] sm:$0xf]
      %v273 = vld [vmem:[%s139 + $0x1f4] sm:$0xf]
      %v274 = vld [vmem:[%s139 + $0x1f8] sm:$0xf]
      %v275 = vld [vmem:[%s139 + $0x1fc] sm:$0xf]
      %v276 = vld [vmem:[%s139 + $0x200] sm:$0xf]
      %v277 = vld [vmem:[%s139 + $0x204] sm:$0xf]
      %v278 = vld [vmem:[%s139 + $0x208] sm:$0xf]
      %v279 = vld [vmem:[%s139 + $0x20c] sm:$0xf]
      %v280 = vld [vmem:[%s139 + $0x210] sm:$0xf]
      %v281 = vld [vmem:[%s139 + $0x214] sm:$0xf]
      %v282 = vld [vmem:[%s139 + $0x218] sm:$0xf]
      %v283 = vld [vmem:[%s139 + $0x21c] sm:$0xf]
      %v284 = vld [vmem:[%s139 + $0x220] sm:$0xf]
      %v285 = vld [vmem:[%s139 + $0x224] sm:$0xf]
      %v286 = vld [vmem:[%s139 + $0x228] sm:$0xf]
      %v287 = vld [vmem:[%s139 + $0x22c] sm:$0xf]
      %v288 = vld [vmem:[%s139 + $0x230] sm:$0xf]
      %v289 = vld [vmem:[%s139 + $0x234] sm:$0xf]
      %v290 = vld [vmem:[%s139 + $0x238] sm:$0xf]
      %v291 = vld [vmem:[%s139 + $0x23c] sm:$0xf]
      %v292 = vld [vmem:[%s139 + $0x240] sm:$0xf]
      %v293 = vld [vmem:[%s139 + $0x244] sm:$0xf]
      %v294 = vld [vmem:[%s139 + $0x248] sm:$0xf]
      %v295 = vld [vmem:[%s139 + $0x24c] sm:$0xf]
      %v296 = vld [vmem:[%s139 + $0x250] sm:$0xf]
      %v297 = vld [vmem:[%s139 + $0x254] sm:$0xf]
      %v298 = vld [vmem:[%s139 + $0x258] sm:$0xf]
      %v299 = vld [vmem:[%s139 + $0x25c] sm:$0xf]
      %v300 = vld [vmem:[%s139 + $0x260] sm:$0xf]
      %v301 = vld [vmem:[%s139 + $0x264] sm:$0xf]
      %v302 = vld [vmem:[%s139 + $0x268] sm:$0xf]
      %v303 = vld [vmem:[%s139 + $0x26c] sm:$0xf]
      %v304 = vld [vmem:[%s139 + $0x270] sm:$0xf]
      %v305 = vld [vmem:[%s139 + $0x274] sm:$0xf]
      %v306 = vld [vmem:[%s139 + $0x278] sm:$0xf]
      %v307 = vld [vmem:[%s139 + $0x27c] sm:$0xf]
      %v308 = vld [vmem:[%s139 + $0x280] sm:$0xf]
      %v309 = vld [vmem:[%s139 + $0x284] sm:$0xf]
      %v310 = vld [vmem:[%s139 + $0x288] sm:$0xf]
      %v311 = vld [vmem:[%s139 + $0x28c] sm:$0xf]
      %v312 = vld [vmem:[%s139 + $0x290] sm:$0xf]
      %v313 = vld [vmem:[%s139 + $0x294] sm:$0xf]
      %v314 = vld [vmem:[%s139 + $0x298] sm:$0xf]
      %v315 = vld [vmem:[%s139 + $0x29c] sm:$0xf]
      %v316 = vld [vmem:[%s139 + $0x2a0] sm:$0xf]
      %v317 = vld [vmem:[%s139 + $0x2a4] sm:$0xf]
      %v318 = vld [vmem:[%s139 + $0x2a8] sm:$0xf]
      %v319 = vld [vmem:[%s139 + $0x2ac] sm:$0xf]
      %v320 = vld [vmem:[%s139 + $0x2b0] sm:$0xf]
      %v321 = vld [vmem:[%s139 + $0x2b4] sm:$0xf]
      %v322 = vld [vmem:[%s139 + $0x2b8] sm:$0xf]
      %v323 = vld [vmem:[%s139 + $0x2bc] sm:$0xf]
      %v324 = vld [vmem:[%s139 + $0x2c0] sm:$0xf]
      %v325 = vld [vmem:[%s139 + $0x2c4] sm:$0xf]
      %v326 = vld [vmem:[%s139 + $0x2c8] sm:$0xf]
      %v327 = vld [vmem:[%s139 + $0x2cc] sm:$0xf]
      %v328 = vld [vmem:[%s139 + $0x2d0] sm:$0xf]
      %v329 = vld [vmem:[%s139 + $0x2d4] sm:$0xf]
      %v330 = vld [vmem:[%s139 + $0x2d8] sm:$0xf]
      %v331 = vld [vmem:[%s139 + $0x2dc] sm:$0xf]
      %v332 = vld [vmem:[%s139 + $0x2e0] sm:$0xf]
      %v333 = vld [vmem:[%s139 + $0x2e4] sm:$0xf]
      %v334 = vld [vmem:[%s139 + $0x2e8] sm:$0xf]
      %v335 = vld [vmem:[%s139 + $0x2ec] sm:$0xf]
      %v336 = vld [vmem:[%s139 + $0x2f0] sm:$0xf]
      %v337 = vld [vmem:[%s139 + $0x2f4] sm:$0xf]
      %v338 = vld [vmem:[%s139 + $0x2f8] sm:$0xf]
      %v339 = vld [vmem:[%s139 + $0x2fc] sm:$0xf]
      %v340 = vld [vmem:[%s139 + $0x300] sm:$0xf]
      %v341 = vld [vmem:[%s139 + $0x304] sm:$0xf]
      %v342 = vld [vmem:[%s139 + $0x308] sm:$0xf]
      %v343 = vld [vmem:[%s139 + $0x30c] sm:$0xf]
      %v344 = vld [vmem:[%s139 + $0x310] sm:$0xf]
      %v345 = vld [vmem:[%s139 + $0x314] sm:$0xf]
      %v346 = vld [vmem:[%s139 + $0x318] sm:$0xf]
      %v347 = vld [vmem:[%s139 + $0x31c] sm:$0xf]
      %v348 = vld [vmem:[%s139 + $0x320] sm:$0xf]
      %v349 = vld [vmem:[%s139 + $0x324] sm:$0xf]
      %v350 = vld [vmem:[%s139 + $0x328] sm:$0xf]
      %v351 = vld [vmem:[%s139 + $0x32c] sm:$0xf]
      %v352 = vld [vmem:[%s139 + $0x330] sm:$0xf]
      %v353 = vld [vmem:[%s139 + $0x334] sm:$0xf]
      %v354 = vld [vmem:[%s139 + $0x338] sm:$0xf]
      %v355 = vld [vmem:[%s139 + $0x33c] sm:$0xf]
      %v356 = vld [vmem:[%s139 + $0x340] sm:$0xf]
      %v357 = vld [vmem:[%s139 + $0x344] sm:$0xf]
      %v358 = vld [vmem:[%s139 + $0x348] sm:$0xf]
      %v359 = vld [vmem:[%s139 + $0x34c] sm:$0xf]
      %v360 = vld [vmem:[%s139 + $0x350] sm:$0xf]
      %v361 = vld [vmem:[%s139 + $0x354] sm:$0xf]
      %v362 = vld [vmem:[%s139 + $0x358] sm:$0xf]
      %v363 = vld [vmem:[%s139 + $0x35c] sm:$0xf]
      %v364 = vld [vmem:[%s139 + $0x360] sm:$0xf]
      %v365 = vld [vmem:[%s139 + $0x364] sm:$0xf]
      %v366 = vld [vmem:[%s139 + $0x368] sm:$0xf]
      %v367 = vld [vmem:[%s139 + $0x36c] sm:$0xf]
      %v368 = vld [vmem:[%s139 + $0x370] sm:$0xf]
      %v369 = vld [vmem:[%s139 + $0x374] sm:$0xf]
      %v370 = vld [vmem:[%s139 + $0x378] sm:$0xf]
      %v371 = vld [vmem:[%s139 + $0x37c] sm:$0xf]
      %v372 = vld [vmem:[%s139 + $0x380] sm:$0xf]
      %v373 = vld [vmem:[%s139 + $0x384] sm:$0xf]
      %v374 = vld [vmem:[%s139 + $0x388] sm:$0xf]
      %v375 = vld [vmem:[%s139 + $0x38c] sm:$0xf]
      %v376 = vld [vmem:[%s139 + $0x390] sm:$0xf]
      %v377 = vld [vmem:[%s139 + $0x394] sm:$0xf]
      %v378 = vld [vmem:[%s139 + $0x398] sm:$0xf]
      %v379 = vld [vmem:[%s139 + $0x39c] sm:$0xf]
      %v380 = vld [vmem:[%s139 + $0x3a0] sm:$0xf]
      %v381 = vld [vmem:[%s139 + $0x3a4] sm:$0xf]
      %v382 = vld [vmem:[%s139 + $0x3a8] sm:$0xf]
      %v383 = vld [vmem:[%s139 + $0x3ac] sm:$0xf]
      %v384 = vld [vmem:[%s139 + $0x3b0] sm:$0xf]
      %v385 = vld [vmem:[%s139 + $0x3b4] sm:$0xf]
      %v386 = vld [vmem:[%s139 + $0x3b8] sm:$0xf]
      %v387 = vld [vmem:[%s139 + $0x3bc] sm:$0xf]
      %v388 = vld [vmem:[%s139 + $0x3c0] sm:$0xf]
      %v389 = vld [vmem:[%s139 + $0x3c4] sm:$0xf]
      %v390 = vld [vmem:[%s139 + $0x3c8] sm:$0xf]
      %v391 = vld [vmem:[%s139 + $0x3cc] sm:$0xf]
      %v392 = vld [vmem:[%s139 + $0x3d0] sm:$0xf]
      %v393 = vld [vmem:[%s139 + $0x3d4] sm:$0xf]
      %v394 = vld [vmem:[%s139 + $0x3d8] sm:$0xf]
      %v395 = vld [vmem:[%s139 + $0x3dc] sm:$0xf]
      %v396 = vld [vmem:[%s139 + $0x3e0] sm:$0xf]
      %v397 = vld [vmem:[%s139 + $0x3e4] sm:$0xf]
      %v398 = vld [vmem:[%s139 + $0x3e8] sm:$0xf]
      %v399 = vld [vmem:[%s139 + $0x3ec] sm:$0xf]
      %v400 = vld [vmem:[%s139 + $0x3f0] sm:$0xf]
      %v401 = vld [vmem:[%s139 + $0x3f4] sm:$0xf]
      %v402 = vld [vmem:[%s139 + $0x3f8] sm:$0xf]
      %v403 = vld [vmem:[%s139 + $0x3fc] sm:$0xf]
      %v404 = vld [vmem:[%s1] sm:$0xf]
      %v405 = vld [vmem:[%s1 + $0x4] sm:$0xf]
      %v406 = vld [vmem:[%s1 + $0x8] sm:$0xf]
      %v407 = vld [vmem:[%s1 + $0xc] sm:$0xf]
      %v408 = vld [vmem:[%s1 + $0x10] sm:$0xf]
      %v409 = vld [vmem:[%s1 + $0x14] sm:$0xf]
      %v410 = vld [vmem:[%s1 + $0x18] sm:$0xf]
      %v411 = vld [vmem:[%s1 + $0x1c] sm:$0xf]
      %v412 = vld [vmem:[%s1 + $0x20] sm:$0xf]
      %v413 = vld [vmem:[%s1 + $0x24] sm:$0xf]
      %v414 = vld [vmem:[%s1 + $0x28] sm:$0xf]
      %v415 = vld [vmem:[%s1 + $0x2c] sm:$0xf]
      %v416 = vld [vmem:[%s1 + $0x30] sm:$0xf]
      %v417 = vld [vmem:[%s1 + $0x34] sm:$0xf]
      %v418 = vld [vmem:[%s1 + $0x38] sm:$0xf]
      %v419 = vld [vmem:[%s1 + $0x3c] sm:$0xf]
      %v676 = vunpack.c.l.b16 %v148
      %v677 = vunpack.c.l.b16 %v149
      %v678 = vunpack.c.l.b16 %v150
      %v679 = vunpack.c.l.b16 %v151
      %v680 = vunpack.c.l.b16 %v152
      %v681 = vunpack.c.l.b16 %v153
      %v682 = vunpack.c.l.b16 %v154
      %v683 = vunpack.c.l.b16 %v155
      %v684 = vunpack.c.l.b16 %v156
      %v685 = vunpack.c.l.b16 %v157
      %v686 = vunpack.c.l.b16 %v158
      %v687 = vunpack.c.l.b16 %v159
      %v688 = vunpack.c.l.b16 %v160
      %v689 = vunpack.c.l.b16 %v161
      %v690 = vunpack.c.l.b16 %v162
      %v691 = vunpack.c.l.b16 %v163
      %v692 = vunpack.c.l.b16 %v164
      %v693 = vunpack.c.l.b16 %v165
      %v694 = vunpack.c.l.b16 %v166
      %v695 = vunpack.c.l.b16 %v167
      %v696 = vunpack.c.l.b16 %v168
      %v697 = vunpack.c.l.b16 %v169
      %v698 = vunpack.c.l.b16 %v170
      %v699 = vunpack.c.l.b16 %v171
      %v700 = vunpack.c.l.b16 %v172
      %v701 = vunpack.c.l.b16 %v173
      %v702 = vunpack.c.l.b16 %v174
      %v703 = vunpack.c.l.b16 %v175
      %v704 = vunpack.c.l.b16 %v176
      %v705 = vunpack.c.l.b16 %v177
      %v706 = vunpack.c.l.b16 %v178
      %v707 = vunpack.c.l.b16 %v179
      %v708 = vunpack.c.l.b16 %v180
      %v709 = vunpack.c.l.b16 %v181
      %v710 = vunpack.c.l.b16 %v182
      %v711 = vunpack.c.l.b16 %v183
      %v712 = vunpack.c.l.b16 %v184
      %v713 = vunpack.c.l.b16 %v185
      %v714 = vunpack.c.l.b16 %v186
      %v715 = vunpack.c.l.b16 %v187
      %v716 = vunpack.c.l.b16 %v188
      %v717 = vunpack.c.l.b16 %v189
      %v718 = vunpack.c.l.b16 %v190
      %v719 = vunpack.c.l.b16 %v191
      %v720 = vunpack.c.l.b16 %v192
      %v721 = vunpack.c.l.b16 %v193
      %v722 = vunpack.c.l.b16 %v194
      %v723 = vunpack.c.l.b16 %v195
      %v724 = vunpack.c.l.b16 %v196
      %v725 = vunpack.c.l.b16 %v197
      %v726 = vunpack.c.l.b16 %v198
      %v727 = vunpack.c.l.b16 %v199
      %v728 = vunpack.c.l.b16 %v200
      %v729 = vunpack.c.l.b16 %v201
      %v730 = vunpack.c.l.b16 %v202
      %v731 = vunpack.c.l.b16 %v203
      %v732 = vunpack.c.l.b16 %v204
      %v733 = vunpack.c.l.b16 %v205
      %v734 = vunpack.c.l.b16 %v206
      %v735 = vunpack.c.l.b16 %v207
      %v736 = vunpack.c.l.b16 %v208
      %v737 = vunpack.c.l.b16 %v209
      %v738 = vunpack.c.l.b16 %v210
      %v739 = vunpack.c.l.b16 %v211
      %v740 = vunpack.c.l.b16 %v212
      %v741 = vunpack.c.l.b16 %v213
      %v742 = vunpack.c.l.b16 %v214
      %v743 = vunpack.c.l.b16 %v215
      %v744 = vunpack.c.l.b16 %v216
      %v745 = vunpack.c.l.b16 %v217
      %v746 = vunpack.c.l.b16 %v218
      %v747 = vunpack.c.l.b16 %v219
      %v748 = vunpack.c.l.b16 %v220
      %v749 = vunpack.c.l.b16 %v221
      %v750 = vunpack.c.l.b16 %v222
      %v751 = vunpack.c.l.b16 %v223
      %v752 = vunpack.c.l.b16 %v224
      %v753 = vunpack.c.l.b16 %v225
      %v754 = vunpack.c.l.b16 %v226
      %v755 = vunpack.c.l.b16 %v227
      %v756 = vunpack.c.l.b16 %v228
      %v757 = vunpack.c.l.b16 %v229
      %v758 = vunpack.c.l.b16 %v230
      %v759 = vunpack.c.l.b16 %v231
      %v760 = vunpack.c.l.b16 %v232
      %v761 = vunpack.c.l.b16 %v233
      %v762 = vunpack.c.l.b16 %v234
      %v763 = vunpack.c.l.b16 %v235
      %v764 = vunpack.c.l.b16 %v236
      %v765 = vunpack.c.l.b16 %v237
      %v766 = vunpack.c.l.b16 %v238
      %v767 = vunpack.c.l.b16 %v239
      %v768 = vunpack.c.l.b16 %v240
      %v769 = vunpack.c.l.b16 %v241
      %v770 = vunpack.c.l.b16 %v242
      %v771 = vunpack.c.l.b16 %v243
      %v772 = vunpack.c.l.b16 %v244
      %v773 = vunpack.c.l.b16 %v245
      %v774 = vunpack.c.l.b16 %v246
      %v775 = vunpack.c.l.b16 %v247
      %v776 = vunpack.c.l.b16 %v248
      %v777 = vunpack.c.l.b16 %v249
      %v778 = vunpack.c.l.b16 %v250
      %v779 = vunpack.c.l.b16 %v251
      %v780 = vunpack.c.l.b16 %v252
      %v781 = vunpack.c.l.b16 %v253
      %v782 = vunpack.c.l.b16 %v254
      %v783 = vunpack.c.l.b16 %v255
      %v784 = vunpack.c.l.b16 %v256
      %v785 = vunpack.c.l.b16 %v257
      %v786 = vunpack.c.l.b16 %v258
      %v787 = vunpack.c.l.b16 %v259
      %v788 = vunpack.c.l.b16 %v260
      %v789 = vunpack.c.l.b16 %v261
      %v790 = vunpack.c.l.b16 %v262
      %v791 = vunpack.c.l.b16 %v263
      %v792 = vunpack.c.l.b16 %v264
      %v793 = vunpack.c.l.b16 %v265
      %v794 = vunpack.c.l.b16 %v266
      %v795 = vunpack.c.l.b16 %v267
      %v796 = vunpack.c.l.b16 %v268
      %v797 = vunpack.c.l.b16 %v269
      %v798 = vunpack.c.l.b16 %v270
      %v799 = vunpack.c.l.b16 %v271
      %v800 = vunpack.c.l.b16 %v272
      %v801 = vunpack.c.l.b16 %v273
      %v802 = vunpack.c.l.b16 %v274
      %v803 = vunpack.c.l.b16 %v275
      %v804 = vunpack.c.l.b16 %v276
      %v805 = vunpack.c.l.b16 %v277
      %v806 = vunpack.c.l.b16 %v278
      %v807 = vunpack.c.l.b16 %v279
      %v808 = vunpack.c.l.b16 %v280
      %v809 = vunpack.c.l.b16 %v281
      %v810 = vunpack.c.l.b16 %v282
      %v811 = vunpack.c.l.b16 %v283
      %v812 = vunpack.c.l.b16 %v284
      %v813 = vunpack.c.l.b16 %v285
      %v814 = vunpack.c.l.b16 %v286
      %v815 = vunpack.c.l.b16 %v287
      %v816 = vunpack.c.l.b16 %v288
      %v817 = vunpack.c.l.b16 %v289
      %v818 = vunpack.c.l.b16 %v290
      %v819 = vunpack.c.l.b16 %v291
      %v820 = vunpack.c.l.b16 %v292
      %v821 = vunpack.c.l.b16 %v293
      %v822 = vunpack.c.l.b16 %v294
      %v823 = vunpack.c.l.b16 %v295
      %v824 = vunpack.c.l.b16 %v296
      %v825 = vunpack.c.l.b16 %v297
      %v826 = vunpack.c.l.b16 %v298
      %v827 = vunpack.c.l.b16 %v299
      %v828 = vunpack.c.l.b16 %v300
      %v829 = vunpack.c.l.b16 %v301
      %v830 = vunpack.c.l.b16 %v302
      %v831 = vunpack.c.l.b16 %v303
      %v832 = vunpack.c.l.b16 %v304
      %v833 = vunpack.c.l.b16 %v305
      %v834 = vunpack.c.l.b16 %v306
      %v835 = vunpack.c.l.b16 %v307
      %v836 = vunpack.c.l.b16 %v308
      %v837 = vunpack.c.l.b16 %v309
      %v838 = vunpack.c.l.b16 %v310
      %v839 = vunpack.c.l.b16 %v311
      %v840 = vunpack.c.l.b16 %v312
      %v841 = vunpack.c.l.b16 %v313
      %v842 = vunpack.c.l.b16 %v314
      %v843 = vunpack.c.l.b16 %v315
      %v844 = vunpack.c.l.b16 %v316
      %v845 = vunpack.c.l.b16 %v317
      %v846 = vunpack.c.l.b16 %v318
      %v847 = vunpack.c.l.b16 %v319
      %v848 = vunpack.c.l.b16 %v320
      %v849 = vunpack.c.l.b16 %v321
      %v850 = vunpack.c.l.b16 %v322
      %v851 = vunpack.c.l.b16 %v323
      %v852 = vunpack.c.l.b16 %v324
      %v853 = vunpack.c.l.b16 %v325
      %v854 = vunpack.c.l.b16 %v326
      %v855 = vunpack.c.l.b16 %v327
      %v856 = vunpack.c.l.b16 %v328
      %v857 = vunpack.c.l.b16 %v329
      %v858 = vunpack.c.l.b16 %v330
      %v859 = vunpack.c.l.b16 %v331
      %v860 = vunpack.c.l.b16 %v332
      %v861 = vunpack.c.l.b16 %v333
      %v862 = vunpack.c.l.b16 %v334
      %v863 = vunpack.c.l.b16 %v335
      %v864 = vunpack.c.l.b16 %v336
      %v865 = vunpack.c.l.b16 %v337
      %v866 = vunpack.c.l.b16 %v338
      %v867 = vunpack.c.l.b16 %v339
      %v868 = vunpack.c.l.b16 %v340
      %v869 = vunpack.c.l.b16 %v341
      %v870 = vunpack.c.l.b16 %v342
      %v871 = vunpack.c.l.b16 %v343
      %v872 = vunpack.c.l.b16 %v344
      %v873 = vunpack.c.l.b16 %v345
      %v874 = vunpack.c.l.b16 %v346
      %v875 = vunpack.c.l.b16 %v347
      %v876 = vunpack.c.l.b16 %v348
      %v877 = vunpack.c.l.b16 %v349
      %v878 = vunpack.c.l.b16 %v350
      %v879 = vunpack.c.l.b16 %v351
      %v880 = vunpack.c.l.b16 %v352
      %v881 = vunpack.c.l.b16 %v353
      %v882 = vunpack.c.l.b16 %v354
      %v883 = vunpack.c.l.b16 %v355
      %v884 = vunpack.c.l.b16 %v356
      %v885 = vunpack.c.l.b16 %v357
      %v886 = vunpack.c.l.b16 %v358
      %v887 = vunpack.c.l.b16 %v359
      %v888 = vunpack.c.l.b16 %v360
      %v889 = vunpack.c.l.b16 %v361
      %v890 = vunpack.c.l.b16 %v362
      %v891 = vunpack.c.l.b16 %v363
      %v892 = vunpack.c.l.b16 %v364
      %v893 = vunpack.c.l.b16 %v365
      %v894 = vunpack.c.l.b16 %v366
      %v895 = vunpack.c.l.b16 %v367
      %v896 = vunpack.c.l.b16 %v368
      %v897 = vunpack.c.l.b16 %v369
      %v898 = vunpack.c.l.b16 %v370
      %v899 = vunpack.c.l.b16 %v371
      %v900 = vunpack.c.l.b16 %v372
      %v901 = vunpack.c.l.b16 %v373
      %v902 = vunpack.c.l.b16 %v374
      %v903 = vunpack.c.l.b16 %v375
      %v904 = vunpack.c.l.b16 %v376
      %v905 = vunpack.c.l.b16 %v377
      %v906 = vunpack.c.l.b16 %v378
      %v907 = vunpack.c.l.b16 %v379
      %v908 = vunpack.c.l.b16 %v380
      %v909 = vunpack.c.l.b16 %v381
      %v910 = vunpack.c.l.b16 %v382
      %v911 = vunpack.c.l.b16 %v383
      %v912 = vunpack.c.l.b16 %v384
      %v913 = vunpack.c.l.b16 %v385
      %v914 = vunpack.c.l.b16 %v386
      %v915 = vunpack.c.l.b16 %v387
      %v916 = vunpack.c.l.b16 %v388
      %v917 = vunpack.c.l.b16 %v389
      %v918 = vunpack.c.l.b16 %v390
      %v919 = vunpack.c.l.b16 %v391
      %v920 = vunpack.c.l.b16 %v392
      %v921 = vunpack.c.l.b16 %v393
      %v922 = vunpack.c.l.b16 %v394
      %v923 = vunpack.c.l.b16 %v395
      %v924 = vunpack.c.l.b16 %v396
      %v925 = vunpack.c.l.b16 %v397
      %v926 = vunpack.c.l.b16 %v398
      %v927 = vunpack.c.l.b16 %v399
      %v928 = vunpack.c.l.b16 %v400
      %v929 = vunpack.c.l.b16 %v401
      %v930 = vunpack.c.l.b16 %v402
      %v931 = vunpack.c.l.b16 %v403
      %v932 = vpack.c.b16 %v677, %v676
      %v933 = vpack.c.b16 %v679, %v678
      %v934 = vpack.c.b16 %v681, %v680
      %v935 = vpack.c.b16 %v683, %v682
      %v936 = vpack.c.b16 %v685, %v684
      %v937 = vpack.c.b16 %v687, %v686
      %v938 = vpack.c.b16 %v689, %v688
      %v939 = vpack.c.b16 %v691, %v690
      %v940 = vpack.c.b16 %v693, %v692
      %v941 = vpack.c.b16 %v695, %v694
      %v942 = vpack.c.b16 %v697, %v696
      %v943 = vpack.c.b16 %v699, %v698
      %v944 = vpack.c.b16 %v701, %v700
      %v945 = vpack.c.b16 %v703, %v702
      %v946 = vpack.c.b16 %v705, %v704
      %v947 = vpack.c.b16 %v707, %v706
      %v948 = vpack.c.b16 %v709, %v708
      %v949 = vpack.c.b16 %v711, %v710
      %v950 = vpack.c.b16 %v713, %v712
      %v951 = vpack.c.b16 %v715, %v714
      %v952 = vpack.c.b16 %v717, %v716
      %v953 = vpack.c.b16 %v719, %v718
      %v954 = vpack.c.b16 %v721, %v720
      %v955 = vpack.c.b16 %v723, %v722
      %v956 = vpack.c.b16 %v725, %v724
      %v957 = vpack.c.b16 %v727, %v726
      %v958 = vpack.c.b16 %v729, %v728
      %v959 = vpack.c.b16 %v731, %v730
      %v960 = vpack.c.b16 %v733, %v732
      %v961 = vpack.c.b16 %v735, %v734
      %v962 = vpack.c.b16 %v737, %v736
      %v963 = vpack.c.b16 %v739, %v738
      %v964 = vpack.c.b16 %v741, %v740
      %v965 = vpack.c.b16 %v743, %v742
      %v966 = vpack.c.b16 %v745, %v744
      %v967 = vpack.c.b16 %v747, %v746
      %v968 = vpack.c.b16 %v749, %v748
      %v969 = vpack.c.b16 %v751, %v750
      %v970 = vpack.c.b16 %v753, %v752
      %v971 = vpack.c.b16 %v755, %v754
      %v972 = vpack.c.b16 %v757, %v756
      %v973 = vpack.c.b16 %v759, %v758
      %v974 = vpack.c.b16 %v761, %v760
      %v975 = vpack.c.b16 %v763, %v762
      %v976 = vpack.c.b16 %v765, %v764
      %v977 = vpack.c.b16 %v767, %v766
      %v978 = vpack.c.b16 %v769, %v768
      %v979 = vpack.c.b16 %v771, %v770
      %v980 = vpack.c.b16 %v773, %v772
      %v981 = vpack.c.b16 %v775, %v774
      %v982 = vpack.c.b16 %v777, %v776
      %v983 = vpack.c.b16 %v779, %v778
      %v984 = vpack.c.b16 %v781, %v780
      %v985 = vpack.c.b16 %v783, %v782
      %v986 = vpack.c.b16 %v785, %v784
      %v987 = vpack.c.b16 %v787, %v786
      %v988 = vpack.c.b16 %v789, %v788
      %v989 = vpack.c.b16 %v791, %v790
      %v990 = vpack.c.b16 %v793, %v792
      %v991 = vpack.c.b16 %v795, %v794
      %v992 = vpack.c.b16 %v797, %v796
      %v993 = vpack.c.b16 %v799, %v798
      %v994 = vpack.c.b16 %v801, %v800
      %v995 = vpack.c.b16 %v803, %v802
      %v996 = vpack.c.b16 %v805, %v804
      %v997 = vpack.c.b16 %v807, %v806
      %v998 = vpack.c.b16 %v809, %v808
      %v999 = vpack.c.b16 %v811, %v810
      %v1000 = vpack.c.b16 %v813, %v812
      %v1001 = vpack.c.b16 %v815, %v814
      %v1002 = vpack.c.b16 %v817, %v816
      %v1003 = vpack.c.b16 %v819, %v818
      %v1004 = vpack.c.b16 %v821, %v820
      %v1005 = vpack.c.b16 %v823, %v822
      %v1006 = vpack.c.b16 %v825, %v824
      %v1007 = vpack.c.b16 %v827, %v826
      %v1008 = vpack.c.b16 %v829, %v828
      %v1009 = vpack.c.b16 %v831, %v830
      %v1010 = vpack.c.b16 %v833, %v832
      %v1011 = vpack.c.b16 %v835, %v834
      %v1012 = vpack.c.b16 %v837, %v836
      %v1013 = vpack.c.b16 %v839, %v838
      %v1014 = vpack.c.b16 %v841, %v840
      %v1015 = vpack.c.b16 %v843, %v842
      %v1016 = vpack.c.b16 %v845, %v844
      %v1017 = vpack.c.b16 %v847, %v846
      %v1018 = vpack.c.b16 %v849, %v848
      %v1019 = vpack.c.b16 %v851, %v850
      %v1020 = vpack.c.b16 %v853, %v852
      %v1021 = vpack.c.b16 %v855, %v854
      %v1022 = vpack.c.b16 %v857, %v856
      %v1023 = vpack.c.b16 %v859, %v858
      %v1024 = vpack.c.b16 %v861, %v860
      %v1025 = vpack.c.b16 %v863, %v862
      %v1026 = vpack.c.b16 %v865, %v864
      %v1027 = vpack.c.b16 %v867, %v866
      %v1028 = vpack.c.b16 %v869, %v868
      %v1029 = vpack.c.b16 %v871, %v870
      %v1030 = vpack.c.b16 %v873, %v872
      %v1031 = vpack.c.b16 %v875, %v874
      %v1032 = vpack.c.b16 %v877, %v876
      %v1033 = vpack.c.b16 %v879, %v878
      %v1034 = vpack.c.b16 %v881, %v880
      %v1035 = vpack.c.b16 %v883, %v882
      %v1036 = vpack.c.b16 %v885, %v884
      %v1037 = vpack.c.b16 %v887, %v886
      %v1038 = vpack.c.b16 %v889, %v888
      %v1039 = vpack.c.b16 %v891, %v890
      %v1040 = vpack.c.b16 %v893, %v892
      %v1041 = vpack.c.b16 %v895, %v894
      %v1042 = vpack.c.b16 %v897, %v896
      %v1043 = vpack.c.b16 %v899, %v898
      %v1044 = vpack.c.b16 %v901, %v900
      %v1045 = vpack.c.b16 %v903, %v902
      %v1046 = vpack.c.b16 %v905, %v904
      %v1047 = vpack.c.b16 %v907, %v906
      %v1048 = vpack.c.b16 %v909, %v908
      %v1049 = vpack.c.b16 %v911, %v910
      %v1050 = vpack.c.b16 %v913, %v912
      %v1051 = vpack.c.b16 %v915, %v914
      %v1052 = vpack.c.b16 %v917, %v916
      %v1053 = vpack.c.b16 %v919, %v918
      %v1054 = vpack.c.b16 %v921, %v920
      %v1055 = vpack.c.b16 %v923, %v922
      %v1056 = vpack.c.b16 %v925, %v924
      %v1057 = vpack.c.b16 %v927, %v926
      %v1058 = vpack.c.b16 %v929, %v928
      %v1059 = vpack.c.b16 %v931, %v930
      %v1204 = vunpack.c.l.b16 %v404
      %v1205 = vunpack.c.l.b16 %v405
      %v1206 = vunpack.c.l.b16 %v406
      %v1207 = vunpack.c.l.b16 %v407
      %v1208 = vunpack.c.l.b16 %v408
      %v1209 = vunpack.c.l.b16 %v409
      %v1210 = vunpack.c.l.b16 %v410
      %v1211 = vunpack.c.l.b16 %v411
      %v1212 = vunpack.c.l.b16 %v412
      %v1213 = vunpack.c.l.b16 %v413
      %v1214 = vunpack.c.l.b16 %v414
      %v1215 = vunpack.c.l.b16 %v415
      %v1216 = vunpack.c.l.b16 %v416
      %v1217 = vunpack.c.l.b16 %v417
      %v1218 = vunpack.c.l.b16 %v418
      %v1219 = vunpack.c.l.b16 %v419
      %v1220 = vpack.c.b16 %v1205, %v1204
      %v1221 = vpack.c.b16 %v1207, %v1206
      %v1222 = vpack.c.b16 %v1209, %v1208
      %v1223 = vpack.c.b16 %v1211, %v1210
      %v1224 = vpack.c.b16 %v1213, %v1212
      %v1225 = vpack.c.b16 %v1215, %v1214
      %v1226 = vpack.c.b16 %v1217, %v1216
      %v1227 = vpack.c.b16 %v1219, %v1218
      %1236 = vmatprep.subr.bf16.mxu0 0
      %1237 = vmatpush1.bf16.msra.mxu0 %v1220
      %1238 = vmatprep.subr.bf16.mxu0 0
      %1239 = vmatpush1.bf16.msra.mxu0 %v1221
      %1240 = vmatprep.subr.bf16.mxu0 0
      %1241 = vmatpush1.bf16.msra.mxu0 %v1222
      %1242 = vmatprep.subr.bf16.mxu0 0
      %1243 = vmatpush1.bf16.msra.mxu0 %v1223
      %1244 = vmatprep.subr.bf16.mxu0 0
      %1245 = vmatpush1.bf16.msra.mxu0 %v1224
      %1246 = vmatprep.subr.bf16.mxu0 0
      %1247 = vmatpush1.bf16.msra.mxu0 %v1225
      %1248 = vmatprep.subr.bf16.mxu0 0
      %1249 = vmatpush1.bf16.msra.mxu0 %v1226
      %1250 = vmatprep.subr.bf16.mxu0 0
      %1251 = vmatpush1.bf16.msra.mxu0 %v1227
      %1252 = vmatprep.subr.bf16.mxu0 0
      %1253 = vmatpush1.bf16.msra.mxu0 0
      %1254 = vmatprep.subr.bf16.mxu0 0
      %1255 = vmatpush1.bf16.msra.mxu0 0
      %1256 = vmatprep.subr.bf16.mxu0 0
      %1257 = vmatpush1.bf16.msra.mxu0 0
      %1258 = vmatprep.subr.bf16.mxu0 0
      %1259 = vmatpush1.bf16.msra.mxu0 0
      %1260 = vmatprep.subr.bf16.mxu0 0
      %1261 = vmatpush1.bf16.msra.mxu0 0
      %1262 = vmatprep.subr.bf16.mxu0 0
      %1263 = vmatpush1.bf16.msra.mxu0 0
      %1264 = vmatprep.subr.bf16.mxu0 0
      %1265 = vmatpush1.bf16.msra.mxu0 0
      %1266 = vmatprep.subr.bf16.mxu0 0
      %1267 = vmatpush1.bf16.msra.mxu0 0
      %1268 = vmatprep.mubr.bf16.mxu0 0
      %1269 = vmatmul.mubr.bf16.gmra.mrb[0].mxu0 %v932
      %v1270 = vpop.f32.mrb[0].mxu0
      %v1271 = vadd.f32 0.0, %v1270
      %v1272 = vpop.f32.mrb[0].mxu0
      %v1273 = vpop.f32.mrb[0].mxu0
      %v1274 = vadd.f32 0.0, %v1273
      %v1275 = vpop.f32.mrb[0].mxu0
      %1276 = vmatprep.mubr.bf16.mxu0 0
      %1277 = vmatmul.mubr.bf16.gmra.mrb[0].mxu0 %v933
      %v1278 = vpop.f32.mrb[0].mxu0
      %v1279 = vadd.f32 0.0, %v1278
      %v1280 = vpop.f32.mrb[0].mxu0
      %v1281 = vpop.f32.mrb[0].mxu0
      %v1282 = vadd.f32 0.0, %v1281
      %v1283 = vpop.f32.mrb[0].mxu0
      %1284 = vmatprep.mubr.bf16.mxu0 0
      %1285 = vmatmul.mubr.bf16.gmra.mrb[0].mxu0 %v934
      %v1286 = vpop.f32.mrb[0].mxu0
      %v1287 = vadd.f32 0.0, %v1286
      %v1288 = vpop.f32.mrb[0].mxu0
      %v1289 = vpop.f32.mrb[0].mxu0
      %v1290 = vadd.f32 0.0, %v1289
      %v1291 = vpop.f32.mrb[0].mxu0
      %1292 = vmatprep.mubr.bf16.mxu0 0
      %1293 = vmatmul.mubr.bf16.gmra.mrb[0].mxu0 %v935
      %v1294 = vpop.f32.mrb[0].mxu0
      %v1295 = vadd.f32 0.0, %v1294
      %v1296 = vpop.f32.mrb[0].mxu0
      %v1297 = vpop.f32.mrb[0].mxu0
      %v1298 = vadd.f32 0.0, %v1297
      %v1299 = vpop.f32.mrb[0].mxu0
      %1300 = vmatprep.mubr.bf16.mxu0 0
      %1301 = vmatmul.mubr.bf16.gmra.mrb[0].mxu0 %v936
      %v1302 = vpop.f32.mrb[0].mxu0
      %v1303 = vadd.f32 0.0, %v1302
      %v1304 = vpop.f32.mrb[0].mxu0
      %v1305 = vpop.f32.mrb[0].mxu0
      %v1306 = vadd.f32 0.0, %v1305
      %v1307 = vpop.f32.mrb[0].mxu0
      %1308 = vmatprep.mubr.bf16.mxu0 0
      %1309 = vmatmul.mubr.bf16.gmra.mrb[0].mxu0 %v937
      %v1310 = vpop.f32.mrb[0].mxu0
      %v1311 = vadd.f32 0.0, %v1310
      %v1312 = vpop.f32.mrb[0].mxu0
      %v1313 = vpop.f32.mrb[0].mxu0
      %v1314 = vadd.f32 0.0, %v1313
      %v1315 = vpop.f32.mrb[0].mxu0
      %1316 = vmatprep.mubr.bf16.mxu0 0
      %1317 = vmatmul.mubr.bf16.gmra.mrb[0].mxu0 %v938
      %v1318 = vpop.f32.mrb[0].mxu0
      %v1319 = vadd.f32 0.0, %v1318
      %v1320 = vpop.f32.mrb[0].mxu0
      %v1321 = vpop.f32.mrb[0].mxu0
      %v1322 = vadd.f32 0.0, %v1321
      %v1323 = vpop.f32.mrb[0].mxu0
      %1324 = vmatprep.mubr.bf16.mxu0 0
      %1325 = vmatmul.mubr.bf16.gmra.mrb[0].mxu0 %v939
      %v1326 = vpop.f32.mrb[0].mxu0
      %v1327 = vadd.f32 0.0, %v1326
      %v1328 = vpop.f32.mrb[0].mxu0
      %v1329 = vpop.f32.mrb[0].mxu0
      %v1330 = vadd.f32 0.0, %v1329
      %v1331 = vpop.f32.mrb[0].mxu0
      %1332 = vmatprep.mubr.bf16.mxu0 0
      %1333 = vmatmul.mubr.bf16.gmra.mrb[0].mxu0 %v940
      %v1334 = vpop.f32.mrb[0].mxu0
      %v1335 = vadd.f32 0.0, %v1334
      %v1336 = vpop.f32.mrb[0].mxu0
      %v1337 = vpop.f32.mrb[0].mxu0
      %v1338 = vadd.f32 0.0, %v1337
      %v1339 = vpop.f32.mrb[0].mxu0
      %1340 = vmatprep.mubr.bf16.mxu0 0
      %1341 = vmatmul.mubr.bf16.gmra.mrb[0].mxu0 %v941
      %v1342 = vpop.f32.mrb[0].mxu0
      %v1343 = vadd.f32 0.0, %v1342
      %v1344 = vpop.f32.mrb[0].mxu0
      %v1345 = vpop.f32.mrb[0].mxu0
      %v1346 = vadd.f32 0.0, %v1345
      %v1347 = vpop.f32.mrb[0].mxu0
      %1348 = vmatprep.mubr.bf16.mxu0 0
      %1349 = vmatmul.mubr.bf16.gmra.mrb[0].mxu0 %v942
      %v1350 = vpop.f32.mrb[0].mxu0
      %v1351 = vadd.f32 0.0, %v1350
      %v1352 = vpop.f32.mrb[0].mxu0
      %v1353 = vpop.f32.mrb[0].mxu0
      %v1354 = vadd.f32 0.0, %v1353
      %v1355 = vpop.f32.mrb[0].mxu0
      %1356 = vmatprep.mubr.bf16.mxu0 0
      %1357 = vmatmul.mubr.bf16.gmra.mrb[0].mxu0 %v943
      %v1358 = vpop.f32.mrb[0].mxu0
      %v1359 = vadd.f32 0.0, %v1358
      %v1360 = vpop.f32.mrb[0].mxu0
      %v1361 = vpop.f32.mrb[0].mxu0
      %v1362 = vadd.f32 0.0, %v1361
      %v1363 = vpop.f32.mrb[0].mxu0
      %1364 = vmatprep.mubr.bf16.mxu0 0
      %1365 = vmatmul.mubr.bf16.gmra.mrb[0].mxu0 %v944
      %v1366 = vpop.f32.mrb[0].mxu0
      %v1367 = vadd.f32 0.0, %v1366
      %v1368 = vpop.f32.mrb[0].mxu0
      %v1369 = vpop.f32.mrb[0].mxu0
      %v1370 = vadd.f32 0.0, %v1369
      %v1371 = vpop.f32.mrb[0].mxu0
      %1372 = vmatprep.mubr.bf16.mxu0 0
      %1373 = vmatmul.mubr.bf16.gmra.mrb[0].mxu0 %v945
      %v1374 = vpop.f32.mrb[0].mxu0
      %v1375 = vadd.f32 0.0, %v1374
      %v1376 = vpop.f32.mrb[0].mxu0
      %v1377 = vpop.f32.mrb[0].mxu0
      %v1378 = vadd.f32 0.0, %v1377
      %v1379 = vpop.f32.mrb[0].mxu0
      %1380 = vmatprep.mubr.bf16.mxu0 0
      %1381 = vmatmul.mubr.bf16.gmra.mrb[0].mxu0 %v946
      %v1382 = vpop.f32.mrb[0].mxu0
      %v1383 = vadd.f32 0.0, %v1382
      %v1384 = vpop.f32.mrb[0].mxu0
      %v1385 = vpop.f32.mrb[0].mxu0
      %v1386 = vadd.f32 0.0, %v1385
      %v1387 = vpop.f32.mrb[0].mxu0
      %1388 = vmatprep.mubr.bf16.mxu0 0
      %1389 = vmatmul.mubr.bf16.gmra.mrb[0].mxu0 %v947
      %v1390 = vpop.f32.mrb[0].mxu0
      %v1391 = vadd.f32 0.0, %v1390
      %v1392 = vpop.f32.mrb[0].mxu0
      %v1393 = vpop.f32.mrb[0].mxu0
      %v1394 = vadd.f32 0.0, %v1393
      %v1395 = vpop.f32.mrb[0].mxu0
      %1396 = vmatprep.mubr.bf16.mxu0 0
      %1397 = vmatmul.mubr.bf16.gmra.mrb[0].mxu0 %v948
      %v1398 = vpop.f32.mrb[0].mxu0
      %v1399 = vadd.f32 0.0, %v1398
      %v1400 = vpop.f32.mrb[0].mxu0
      %v1401 = vpop.f32.mrb[0].mxu0
      %v1402 = vadd.f32 0.0, %v1401
      %v1403 = vpop.f32.mrb[0].mxu0
      %1404 = vmatprep.mubr.bf16.mxu0 0
      %1405 = vmatmul.mubr.bf16.gmra.mrb[0].mxu0 %v949
      %v1406 = vpop.f32.mrb[0].mxu0
      %v1407 = vadd.f32 0.0, %v1406
      %v1408 = vpop.f32.mrb[0].mxu0
      %v1409 = vpop.f32.mrb[0].mxu0
      %v1410 = vadd.f32 0.0, %v1409
      %v1411 = vpop.f32.mrb[0].mxu0
      %1412 = vmatprep.mubr.bf16.mxu0 0
      %1413 = vmatmul.mubr.bf16.gmra.mrb[0].mxu0 %v950
      %v1414 = vpop.f32.mrb[0].mxu0
      %v1415 = vadd.f32 0.0, %v1414
      %v1416 = vpop.f32.mrb[0].mxu0
      %v1417 = vpop.f32.mrb[0].mxu0
      %v1418 = vadd.f32 0.0, %v1417
      %v1419 = vpop.f32.mrb[0].mxu0
      %1420 = vmatprep.mubr.bf16.mxu0 0
      %1421 = vmatmul.mubr.bf16.gmra.mrb[0].mxu0 %v951
      %v1422 = vpop.f32.mrb[0].mxu0
      %v1423 = vadd.f32 0.0, %v1422
      %v1424 = vpop.f32.mrb[0].mxu0
      %v1425 = vpop.f32.mrb[0].mxu0
      %v1426 = vadd.f32 0.0, %v1425
      %v1427 = vpop.f32.mrb[0].mxu0
      %1428 = vmatprep.mubr.bf16.mxu0 0
      %1429 = vmatmul.mubr.bf16.gmra.mrb[0].mxu0 %v952
      %v1430 = vpop.f32.mrb[0].mxu0
      %v1431 = vadd.f32 0.0, %v1430
      %v1432 = vpop.f32.mrb[0].mxu0
      %v1433 = vpop.f32.mrb[0].mxu0
      %v1434 = vadd.f32 0.0, %v1433
      %v1435 = vpop.f32.mrb[0].mxu0
      %1436 = vmatprep.mubr.bf16.mxu0 0
      %1437 = vmatmul.mubr.bf16.gmra.mrb[0].mxu0 %v953
      %v1438 = vpop.f32.mrb[0].mxu0
      %v1439 = vadd.f32 0.0, %v1438
      %v1440 = vpop.f32.mrb[0].mxu0
      %v1441 = vpop.f32.mrb[0].mxu0
      %v1442 = vadd.f32 0.0, %v1441
      %v1443 = vpop.f32.mrb[0].mxu0
      %1444 = vmatprep.mubr.bf16.mxu0 0
      %1445 = vmatmul.mubr.bf16.gmra.mrb[0].mxu0 %v954
      %v1446 = vpop.f32.mrb[0].mxu0
      %v1447 = vadd.f32 0.0, %v1446
      %v1448 = vpop.f32.mrb[0].mxu0
      %v1449 = vpop.f32.mrb[0].mxu0
      %v1450 = vadd.f32 0.0, %v1449
      %v1451 = vpop.f32.mrb[0].mxu0
      %1452 = vmatprep.mubr.bf16.mxu0 0
      %1453 = vmatmul.mubr.bf16.gmra.mrb[0].mxu0 %v955
      %v1454 = vpop.f32.mrb[0].mxu0
      %v1455 = vadd.f32 0.0, %v1454
      %v1456 = vpop.f32.mrb[0].mxu0
      %v1457 = vpop.f32.mrb[0].mxu0
      %v1458 = vadd.f32 0.0, %v1457
      %v1459 = vpop.f32.mrb[0].mxu0
      %1460 = vmatprep.mubr.bf16.mxu0 0
      %1461 = vmatmul.mubr.bf16.gmra.mrb[0].mxu0 %v956
      %v1462 = vpop.f32.mrb[0].mxu0
      %v1463 = vadd.f32 0.0, %v1462
      %v1464 = vpop.f32.mrb[0].mxu0
      %v1465 = vpop.f32.mrb[0].mxu0
      %v1466 = vadd.f32 0.0, %v1465
      %v1467 = vpop.f32.mrb[0].mxu0
      %1468 = vmatprep.mubr.bf16.mxu0 0
      %1469 = vmatmul.mubr.bf16.gmra.mrb[0].mxu0 %v957
      %v1470 = vpop.f32.mrb[0].mxu0
      %v1471 = vadd.f32 0.0, %v1470
      %v1472 = vpop.f32.mrb[0].mxu0
      %v1473 = vpop.f32.mrb[0].mxu0
      %v1474 = vadd.f32 0.0, %v1473
      %v1475 = vpop.f32.mrb[0].mxu0
      %1476 = vmatprep.mubr.bf16.mxu0 0
      %1477 = vmatmul.mubr.bf16.gmra.mrb[0].mxu0 %v958
      %v1478 = vpop.f32.mrb[0].mxu0
      %v1479 = vadd.f32 0.0, %v1478
      %v1480 = vpop.f32.mrb[0].mxu0
      %v1481 = vpop.f32.mrb[0].mxu0
      %v1482 = vadd.f32 0.0, %v1481
      %v1483 = vpop.f32.mrb[0].mxu0
      %1484 = vmatprep.mubr.bf16.mxu0 0
      %1485 = vmatmul.mubr.bf16.gmra.mrb[0].mxu0 %v959
      %v1486 = vpop.f32.mrb[0].mxu0
      %v1487 = vadd.f32 0.0, %v1486
      %v1488 = vpop.f32.mrb[0].mxu0
      %v1489 = vpop.f32.mrb[0].mxu0
      %v1490 = vadd.f32 0.0, %v1489
      %v1491 = vpop.f32.mrb[0].mxu0
      %1492 = vmatprep.mubr.bf16.mxu0 0
      %1493 = vmatmul.mubr.bf16.gmra.mrb[0].mxu0 %v960
      %v1494 = vpop.f32.mrb[0].mxu0
      %v1495 = vadd.f32 0.0, %v1494
      %v1496 = vpop.f32.mrb[0].mxu0
      %v1497 = vpop.f32.mrb[0].mxu0
      %v1498 = vadd.f32 0.0, %v1497
      %v1499 = vpop.f32.mrb[0].mxu0
      %1500 = vmatprep.mubr.bf16.mxu0 0
      %1501 = vmatmul.mubr.bf16.gmra.mrb[0].mxu0 %v961
      %v1502 = vpop.f32.mrb[0].mxu0
      %v1503 = vadd.f32 0.0, %v1502
      %v1504 = vpop.f32.mrb[0].mxu0
      %v1505 = vpop.f32.mrb[0].mxu0
      %v1506 = vadd.f32 0.0, %v1505
      %v1507 = vpop.f32.mrb[0].mxu0
      %1508 = vmatprep.mubr.bf16.mxu0 0
      %1509 = vmatmul.mubr.bf16.gmra.mrb[0].mxu0 %v962
      %v1510 = vpop.f32.mrb[0].mxu0
      %v1511 = vadd.f32 0.0, %v1510
      %v1512 = vpop.f32.mrb[0].mxu0
      %v1513 = vpop.f32.mrb[0].mxu0
      %v1514 = vadd.f32 0.0, %v1513
      %v1515 = vpop.f32.mrb[0].mxu0
      %1516 = vmatprep.mubr.bf16.mxu0 0
      %1517 = vmatmul.mubr.bf16.gmra.mrb[0].mxu0 %v963
      %v1518 = vpop.f32.mrb[0].mxu0
      %v1519 = vadd.f32 0.0, %v1518
      %v1520 = vpop.f32.mrb[0].mxu0
      %v1521 = vpop.f32.mrb[0].mxu0
      %v1522 = vadd.f32 0.0, %v1521
      %v1523 = vpop.f32.mrb[0].mxu0
      %1524 = vmatprep.mubr.bf16.mxu0 0
      %1525 = vmatmul.mubr.bf16.gmra.mrb[0].mxu0 %v964
      %v1526 = vpop.f32.mrb[0].mxu0
      %v1527 = vadd.f32 0.0, %v1526
      %v1528 = vpop.f32.mrb[0].mxu0
      %v1529 = vpop.f32.mrb[0].mxu0
      %v1530 = vadd.f32 0.0, %v1529
      %v1531 = vpop.f32.mrb[0].mxu0
      %1532 = vmatprep.mubr.bf16.mxu0 0
      %1533 = vmatmul.mubr.bf16.gmra.mrb[0].mxu0 %v965
      %v1534 = vpop.f32.mrb[0].mxu0
      %v1535 = vadd.f32 0.0, %v1534
      %v1536 = vpop.f32.mrb[0].mxu0
      %v1537 = vpop.f32.mrb[0].mxu0
      %v1538 = vadd.f32 0.0, %v1537
      %v1539 = vpop.f32.mrb[0].mxu0
      %1540 = vmatprep.mubr.bf16.mxu0 0
      %1541 = vmatmul.mubr.bf16.gmra.mrb[0].mxu0 %v966
      %v1542 = vpop.f32.mrb[0].mxu0
      %v1543 = vadd.f32 0.0, %v1542
      %v1544 = vpop.f32.mrb[0].mxu0
      %v1545 = vpop.f32.mrb[0].mxu0
      %v1546 = vadd.f32 0.0, %v1545
      %v1547 = vpop.f32.mrb[0].mxu0
      %1548 = vmatprep.mubr.bf16.mxu0 0
      %1549 = vmatmul.mubr.bf16.gmra.mrb[0].mxu0 %v967
      %v1550 = vpop.f32.mrb[0].mxu0
      %v1551 = vadd.f32 0.0, %v1550
      %v1552 = vpop.f32.mrb[0].mxu0
      %v1553 = vpop.f32.mrb[0].mxu0
      %v1554 = vadd.f32 0.0, %v1553
      %v1555 = vpop.f32.mrb[0].mxu0
      %1556 = vmatprep.mubr.bf16.mxu0 0
      %1557 = vmatmul.mubr.bf16.gmra.mrb[0].mxu0 %v968
      %v1558 = vpop.f32.mrb[0].mxu0
      %v1559 = vadd.f32 0.0, %v1558
      %v1560 = vpop.f32.mrb[0].mxu0
      %v1561 = vpop.f32.mrb[0].mxu0
      %v1562 = vadd.f32 0.0, %v1561
      %v1563 = vpop.f32.mrb[0].mxu0
      %1564 = vmatprep.mubr.bf16.mxu0 0
      %1565 = vmatmul.mubr.bf16.gmra.mrb[0].mxu0 %v969
      %v1566 = vpop.f32.mrb[0].mxu0
      %v1567 = vadd.f32 0.0, %v1566
      %v1568 = vpop.f32.mrb[0].mxu0
      %v1569 = vpop.f32.mrb[0].mxu0
      %v1570 = vadd.f32 0.0, %v1569
      %v1571 = vpop.f32.mrb[0].mxu0
      %1572 = vmatprep.mubr.bf16.mxu0 0
      %1573 = vmatmul.mubr.bf16.gmra.mrb[0].mxu0 %v970
      %v1574 = vpop.f32.mrb[0].mxu0
      %v1575 = vadd.f32 0.0, %v1574
      %v1576 = vpop.f32.mrb[0].mxu0
      %v1577 = vpop.f32.mrb[0].mxu0
      %v1578 = vadd.f32 0.0, %v1577
      %v1579 = vpop.f32.mrb[0].mxu0
      %1580 = vmatprep.mubr.bf16.mxu0 0
      %1581 = vmatmul.mubr.bf16.gmra.mrb[0].mxu0 %v971
      %v1582 = vpop.f32.mrb[0].mxu0
      %v1583 = vadd.f32 0.0, %v1582
      %v1584 = vpop.f32.mrb[0].mxu0
      %v1585 = vpop.f32.mrb[0].mxu0
      %v1586 = vadd.f32 0.0, %v1585
      %v1587 = vpop.f32.mrb[0].mxu0
      %1588 = vmatprep.mubr.bf16.mxu0 0
      %1589 = vmatmul.mubr.bf16.gmra.mrb[0].mxu0 %v972
      %v1590 = vpop.f32.mrb[0].mxu0
      %v1591 = vadd.f32 0.0, %v1590
      %v1592 = vpop.f32.mrb[0].mxu0
      %v1593 = vpop.f32.mrb[0].mxu0
      %v1594 = vadd.f32 0.0, %v1593
      %v1595 = vpop.f32.mrb[0].mxu0
      %1596 = vmatprep.mubr.bf16.mxu0 0
      %1597 = vmatmul.mubr.bf16.gmra.mrb[0].mxu0 %v973
      %v1598 = vpop.f32.mrb[0].mxu0
      %v1599 = vadd.f32 0.0, %v1598
      %v1600 = vpop.f32.mrb[0].mxu0
      %v1601 = vpop.f32.mrb[0].mxu0
      %v1602 = vadd.f32 0.0, %v1601
      %v1603 = vpop.f32.mrb[0].mxu0
      %1604 = vmatprep.mubr.bf16.mxu0 0
      %1605 = vmatmul.mubr.bf16.gmra.mrb[0].mxu0 %v974
      %v1606 = vpop.f32.mrb[0].mxu0
      %v1607 = vadd.f32 0.0, %v1606
      %v1608 = vpop.f32.mrb[0].mxu0
      %v1609 = vpop.f32.mrb[0].mxu0
      %v1610 = vadd.f32 0.0, %v1609
      %v1611 = vpop.f32.mrb[0].mxu0
      %1612 = vmatprep.mubr.bf16.mxu0 0
      %1613 = vmatmul.mubr.bf16.gmra.mrb[0].mxu0 %v975
      %v1614 = vpop.f32.mrb[0].mxu0
      %v1615 = vadd.f32 0.0, %v1614
      %v1616 = vpop.f32.mrb[0].mxu0
      %v1617 = vpop.f32.mrb[0].mxu0
      %v1618 = vadd.f32 0.0, %v1617
      %v1619 = vpop.f32.mrb[0].mxu0
      %1620 = vmatprep.mubr.bf16.mxu0 0
      %1621 = vmatmul.mubr.bf16.gmra.mrb[0].mxu0 %v976
      %v1622 = vpop.f32.mrb[0].mxu0
      %v1623 = vadd.f32 0.0, %v1622
      %v1624 = vpop.f32.mrb[0].mxu0
      %v1625 = vpop.f32.mrb[0].mxu0
      %v1626 = vadd.f32 0.0, %v1625
      %v1627 = vpop.f32.mrb[0].mxu0
      %1628 = vmatprep.mubr.bf16.mxu0 0
      %1629 = vmatmul.mubr.bf16.gmra.mrb[0].mxu0 %v977
      %v1630 = vpop.f32.mrb[0].mxu0
      %v1631 = vadd.f32 0.0, %v1630
      %v1632 = vpop.f32.mrb[0].mxu0
      %v1633 = vpop.f32.mrb[0].mxu0
      %v1634 = vadd.f32 0.0, %v1633
      %v1635 = vpop.f32.mrb[0].mxu0
      %1636 = vmatprep.mubr.bf16.mxu0 0
      %1637 = vmatmul.mubr.bf16.gmra.mrb[0].mxu0 %v978
      %v1638 = vpop.f32.mrb[0].mxu0
      %v1639 = vadd.f32 0.0, %v1638
      %v1640 = vpop.f32.mrb[0].mxu0
      %v1641 = vpop.f32.mrb[0].mxu0
      %v1642 = vadd.f32 0.0, %v1641
      %v1643 = vpop.f32.mrb[0].mxu0
      %1644 = vmatprep.mubr.bf16.mxu0 0
      %1645 = vmatmul.mubr.bf16.gmra.mrb[0].mxu0 %v979
      %v1646 = vpop.f32.mrb[0].mxu0
      %v1647 = vadd.f32 0.0, %v1646
      %v1648 = vpop.f32.mrb[0].mxu0
      %v1649 = vpop.f32.mrb[0].mxu0
      %v1650 = vadd.f32 0.0, %v1649
      %v1651 = vpop.f32.mrb[0].mxu0
      %1652 = vmatprep.mubr.bf16.mxu0 0
      %1653 = vmatmul.mubr.bf16.gmra.mrb[0].mxu0 %v980
      %v1654 = vpop.f32.mrb[0].mxu0
      %v1655 = vadd.f32 0.0, %v1654
      %v1656 = vpop.f32.mrb[0].mxu0
      %v1657 = vpop.f32.mrb[0].mxu0
      %v1658 = vadd.f32 0.0, %v1657
      %v1659 = vpop.f32.mrb[0].mxu0
      %1660 = vmatprep.mubr.bf16.mxu0 0
      %1661 = vmatmul.mubr.bf16.gmra.mrb[0].mxu0 %v981
      %v1662 = vpop.f32.mrb[0].mxu0
      %v1663 = vadd.f32 0.0, %v1662
      %v1664 = vpop.f32.mrb[0].mxu0
      %v1665 = vpop.f32.mrb[0].mxu0
      %v1666 = vadd.f32 0.0, %v1665
      %v1667 = vpop.f32.mrb[0].mxu0
      %1668 = vmatprep.mubr.bf16.mxu0 0
      %1669 = vmatmul.mubr.bf16.gmra.mrb[0].mxu0 %v982
      %v1670 = vpop.f32.mrb[0].mxu0
      %v1671 = vadd.f32 0.0, %v1670
      %v1672 = vpop.f32.mrb[0].mxu0
      %v1673 = vpop.f32.mrb[0].mxu0
      %v1674 = vadd.f32 0.0, %v1673
      %v1675 = vpop.f32.mrb[0].mxu0
      %1676 = vmatprep.mubr.bf16.mxu0 0
      %1677 = vmatmul.mubr.bf16.gmra.mrb[0].mxu0 %v983
      %v1678 = vpop.f32.mrb[0].mxu0
      %v1679 = vadd.f32 0.0, %v1678
      %v1680 = vpop.f32.mrb[0].mxu0
      %v1681 = vpop.f32.mrb[0].mxu0
      %v1682 = vadd.f32 0.0, %v1681
      %v1683 = vpop.f32.mrb[0].mxu0
      %1684 = vmatprep.mubr.bf16.mxu0 0
      %1685 = vmatmul.mubr.bf16.gmra.mrb[0].mxu0 %v984
      %v1686 = vpop.f32.mrb[0].mxu0
      %v1687 = vadd.f32 0.0, %v1686
      %v1688 = vpop.f32.mrb[0].mxu0
      %v1689 = vpop.f32.mrb[0].mxu0
      %v1690 = vadd.f32 0.0, %v1689
      %v1691 = vpop.f32.mrb[0].mxu0
      %1692 = vmatprep.mubr.bf16.mxu0 0
      %1693 = vmatmul.mubr.bf16.gmra.mrb[0].mxu0 %v985
      %v1694 = vpop.f32.mrb[0].mxu0
      %v1695 = vadd.f32 0.0, %v1694
      %v1696 = vpop.f32.mrb[0].mxu0
      %v1697 = vpop.f32.mrb[0].mxu0
      %v1698 = vadd.f32 0.0, %v1697
      %v1699 = vpop.f32.mrb[0].mxu0
      %1700 = vmatprep.mubr.bf16.mxu0 0
      %1701 = vmatmul.mubr.bf16.gmra.mrb[0].mxu0 %v986
      %v1702 = vpop.f32.mrb[0].mxu0
      %v1703 = vadd.f32 0.0, %v1702
      %v1704 = vpop.f32.mrb[0].mxu0
      %v1705 = vpop.f32.mrb[0].mxu0
      %v1706 = vadd.f32 0.0, %v1705
      %v1707 = vpop.f32.mrb[0].mxu0
      %1708 = vmatprep.mubr.bf16.mxu0 0
      %1709 = vmatmul.mubr.bf16.gmra.mrb[0].mxu0 %v987
      %v1710 = vpop.f32.mrb[0].mxu0
      %v1711 = vadd.f32 0.0, %v1710
      %v1712 = vpop.f32.mrb[0].mxu0
      %v1713 = vpop.f32.mrb[0].mxu0
      %v1714 = vadd.f32 0.0, %v1713
      %v1715 = vpop.f32.mrb[0].mxu0
      %1716 = vmatprep.mubr.bf16.mxu0 0
      %1717 = vmatmul.mubr.bf16.gmra.mrb[0].mxu0 %v988
      %v1718 = vpop.f32.mrb[0].mxu0
      %v1719 = vadd.f32 0.0, %v1718
      %v1720 = vpop.f32.mrb[0].mxu0
      %v1721 = vpop.f32.mrb[0].mxu0
      %v1722 = vadd.f32 0.0, %v1721
      %v1723 = vpop.f32.mrb[0].mxu0
      %1724 = vmatprep.mubr.bf16.mxu0 0
      %1725 = vmatmul.mubr.bf16.gmra.mrb[0].mxu0 %v989
      %v1726 = vpop.f32.mrb[0].mxu0
      %v1727 = vadd.f32 0.0, %v1726
      %v1728 = vpop.f32.mrb[0].mxu0
      %v1729 = vpop.f32.mrb[0].mxu0
      %v1730 = vadd.f32 0.0, %v1729
      %v1731 = vpop.f32.mrb[0].mxu0
      %1732 = vmatprep.mubr.bf16.mxu0 0
      %1733 = vmatmul.mubr.bf16.gmra.mrb[0].mxu0 %v990
      %v1734 = vpop.f32.mrb[0].mxu0
      %v1735 = vadd.f32 0.0, %v1734
      %v1736 = vpop.f32.mrb[0].mxu0
      %v1737 = vpop.f32.mrb[0].mxu0
      %v1738 = vadd.f32 0.0, %v1737
      %v1739 = vpop.f32.mrb[0].mxu0
      %1740 = vmatprep.mubr.bf16.mxu0 0
      %1741 = vmatmul.mubr.bf16.gmra.mrb[0].mxu0 %v991
      %v1742 = vpop.f32.mrb[0].mxu0
      %v1743 = vadd.f32 0.0, %v1742
      %v1744 = vpop.f32.mrb[0].mxu0
      %v1745 = vpop.f32.mrb[0].mxu0
      %v1746 = vadd.f32 0.0, %v1745
      %v1747 = vpop.f32.mrb[0].mxu0
      %1748 = vmatprep.mubr.bf16.mxu0 0
      %1749 = vmatmul.mubr.bf16.gmra.mrb[0].mxu0 %v992
      %v1750 = vpop.f32.mrb[0].mxu0
      %v1751 = vadd.f32 0.0, %v1750
      %v1752 = vpop.f32.mrb[0].mxu0
      %v1753 = vpop.f32.mrb[0].mxu0
      %v1754 = vadd.f32 0.0, %v1753
      %v1755 = vpop.f32.mrb[0].mxu0
      %1756 = vmatprep.mubr.bf16.mxu0 0
      %1757 = vmatmul.mubr.bf16.gmra.mrb[0].mxu0 %v993
      %v1758 = vpop.f32.mrb[0].mxu0
      %v1759 = vadd.f32 0.0, %v1758
      %v1760 = vpop.f32.mrb[0].mxu0
      %v1761 = vpop.f32.mrb[0].mxu0
      %v1762 = vadd.f32 0.0, %v1761
      %v1763 = vpop.f32.mrb[0].mxu0
      %1764 = vmatprep.mubr.bf16.mxu0 0
      %1765 = vmatmul.mubr.bf16.gmra.mrb[0].mxu0 %v994
      %v1766 = vpop.f32.mrb[0].mxu0
      %v1767 = vadd.f32 0.0, %v1766
      %v1768 = vpop.f32.mrb[0].mxu0
      %v1769 = vpop.f32.mrb[0].mxu0
      %v1770 = vadd.f32 0.0, %v1769
      %v1771 = vpop.f32.mrb[0].mxu0
      %1772 = vmatprep.mubr.bf16.mxu0 0
      %1773 = vmatmul.mubr.bf16.gmra.mrb[0].mxu0 %v995
      %v1774 = vpop.f32.mrb[0].mxu0
      %v1775 = vadd.f32 0.0, %v1774
      %v1776 = vpop.f32.mrb[0].mxu0
      %v1777 = vpop.f32.mrb[0].mxu0
      %v1778 = vadd.f32 0.0, %v1777
      %v1779 = vpop.f32.mrb[0].mxu0
      %1780 = vmatprep.mubr.bf16.mxu0 0
      %1781 = vmatmul.mubr.bf16.gmra.mrb[0].mxu0 %v996
      %v1782 = vpop.f32.mrb[0].mxu0
      %v1783 = vadd.f32 0.0, %v1782
      %v1784 = vpop.f32.mrb[0].mxu0
      %v1785 = vpop.f32.mrb[0].mxu0
      %v1786 = vadd.f32 0.0, %v1785
      %v1787 = vpop.f32.mrb[0].mxu0
      %1788 = vmatprep.mubr.bf16.mxu0 0
      %1789 = vmatmul.mubr.bf16.gmra.mrb[0].mxu0 %v997
      %v1790 = vpop.f32.mrb[0].mxu0
      %v1791 = vadd.f32 0.0, %v1790
      %v1792 = vpop.f32.mrb[0].mxu0
      %v1793 = vpop.f32.mrb[0].mxu0
      %v1794 = vadd.f32 0.0, %v1793
      %v1795 = vpop.f32.mrb[0].mxu0
      %1796 = vmatprep.mubr.bf16.mxu0 0
      %1797 = vmatmul.mubr.bf16.gmra.mrb[0].mxu0 %v998
      %v1798 = vpop.f32.mrb[0].mxu0
      %v1799 = vadd.f32 0.0, %v1798
      %v1800 = vpop.f32.mrb[0].mxu0
      %v1801 = vpop.f32.mrb[0].mxu0
      %v1802 = vadd.f32 0.0, %v1801
      %v1803 = vpop.f32.mrb[0].mxu0
      %1804 = vmatprep.mubr.bf16.mxu0 0
      %1805 = vmatmul.mubr.bf16.gmra.mrb[0].mxu0 %v999
      %v1806 = vpop.f32.mrb[0].mxu0
      %v1807 = vadd.f32 0.0, %v1806
      %v1808 = vpop.f32.mrb[0].mxu0
      %v1809 = vpop.f32.mrb[0].mxu0
      %v1810 = vadd.f32 0.0, %v1809
      %v1811 = vpop.f32.mrb[0].mxu0
      %1812 = vmatprep.mubr.bf16.mxu0 0
      %1813 = vmatmul.mubr.bf16.gmra.mrb[0].mxu0 %v1000
      %v1814 = vpop.f32.mrb[0].mxu0
      %v1815 = vadd.f32 0.0, %v1814
      %v1816 = vpop.f32.mrb[0].mxu0
      %v1817 = vpop.f32.mrb[0].mxu0
      %v1818 = vadd.f32 0.0, %v1817
      %v1819 = vpop.f32.mrb[0].mxu0
      %1820 = vmatprep.mubr.bf16.mxu0 0
      %1821 = vmatmul.mubr.bf16.gmra.mrb[0].mxu0 %v1001
      %v1822 = vpop.f32.mrb[0].mxu0
      %v1823 = vadd.f32 0.0, %v1822
      %v1824 = vpop.f32.mrb[0].mxu0
      %v1825 = vpop.f32.mrb[0].mxu0
      %v1826 = vadd.f32 0.0, %v1825
      %v1827 = vpop.f32.mrb[0].mxu0
      %1828 = vmatprep.mubr.bf16.mxu0 0
      %1829 = vmatmul.mubr.bf16.gmra.mrb[0].mxu0 %v1002
      %v1830 = vpop.f32.mrb[0].mxu0
      %v1831 = vadd.f32 0.0, %v1830
      %v1832 = vpop.f32.mrb[0].mxu0
      %v1833 = vpop.f32.mrb[0].mxu0
      %v1834 = vadd.f32 0.0, %v1833
      %v1835 = vpop.f32.mrb[0].mxu0
      %1836 = vmatprep.mubr.bf16.mxu0 0
      %1837 = vmatmul.mubr.bf16.gmra.mrb[0].mxu0 %v1003
      %v1838 = vpop.f32.mrb[0].mxu0
      %v1839 = vadd.f32 0.0, %v1838
      %v1840 = vpop.f32.mrb[0].mxu0
      %v1841 = vpop.f32.mrb[0].mxu0
      %v1842 = vadd.f32 0.0, %v1841
      %v1843 = vpop.f32.mrb[0].mxu0
      %1844 = vmatprep.mubr.bf16.mxu0 0
      %1845 = vmatmul.mubr.bf16.gmra.mrb[0].mxu0 %v1004
      %v1846 = vpop.f32.mrb[0].mxu0
      %v1847 = vadd.f32 0.0, %v1846
      %v1848 = vpop.f32.mrb[0].mxu0
      %v1849 = vpop.f32.mrb[0].mxu0
      %v1850 = vadd.f32 0.0, %v1849
      %v1851 = vpop.f32.mrb[0].mxu0
      %1852 = vmatprep.mubr.bf16.mxu0 0
      %1853 = vmatmul.mubr.bf16.gmra.mrb[0].mxu0 %v1005
      %v1854 = vpop.f32.mrb[0].mxu0
      %v1855 = vadd.f32 0.0, %v1854
      %v1856 = vpop.f32.mrb[0].mxu0
      %v1857 = vpop.f32.mrb[0].mxu0
      %v1858 = vadd.f32 0.0, %v1857
      %v1859 = vpop.f32.mrb[0].mxu0
      %1860 = vmatprep.mubr.bf16.mxu0 0
      %1861 = vmatmul.mubr.bf16.gmra.mrb[0].mxu0 %v1006
      %v1862 = vpop.f32.mrb[0].mxu0
      %v1863 = vadd.f32 0.0, %v1862
      %v1864 = vpop.f32.mrb[0].mxu0
      %v1865 = vpop.f32.mrb[0].mxu0
      %v1866 = vadd.f32 0.0, %v1865
      %v1867 = vpop.f32.mrb[0].mxu0
      %1868 = vmatprep.mubr.bf16.mxu0 0
      %1869 = vmatmul.mubr.bf16.gmra.mrb[0].mxu0 %v1007
      %v1870 = vpop.f32.mrb[0].mxu0
      %v1871 = vadd.f32 0.0, %v1870
      %v1872 = vpop.f32.mrb[0].mxu0
      %v1873 = vpop.f32.mrb[0].mxu0
      %v1874 = vadd.f32 0.0, %v1873
      %v1875 = vpop.f32.mrb[0].mxu0
      %1876 = vmatprep.mubr.bf16.mxu0 0
      %1877 = vmatmul.mubr.bf16.gmra.mrb[0].mxu0 %v1008
      %v1878 = vpop.f32.mrb[0].mxu0
      %v1879 = vadd.f32 0.0, %v1878
      %v1880 = vpop.f32.mrb[0].mxu0
      %v1881 = vpop.f32.mrb[0].mxu0
      %v1882 = vadd.f32 0.0, %v1881
      %v1883 = vpop.f32.mrb[0].mxu0
      %1884 = vmatprep.mubr.bf16.mxu0 0
      %1885 = vmatmul.mubr.bf16.gmra.mrb[0].mxu0 %v1009
      %v1886 = vpop.f32.mrb[0].mxu0
      %v1887 = vadd.f32 0.0, %v1886
      %v1888 = vpop.f32.mrb[0].mxu0
      %v1889 = vpop.f32.mrb[0].mxu0
      %v1890 = vadd.f32 0.0, %v1889
      %v1891 = vpop.f32.mrb[0].mxu0
      %1892 = vmatprep.mubr.bf16.mxu0 0
      %1893 = vmatmul.mubr.bf16.gmra.mrb[0].mxu0 %v1010
      %v1894 = vpop.f32.mrb[0].mxu0
      %v1895 = vadd.f32 0.0, %v1894
      %v1896 = vpop.f32.mrb[0].mxu0
      %v1897 = vpop.f32.mrb[0].mxu0
      %v1898 = vadd.f32 0.0, %v1897
      %v1899 = vpop.f32.mrb[0].mxu0
      %1900 = vmatprep.mubr.bf16.mxu0 0
      %1901 = vmatmul.mubr.bf16.gmra.mrb[0].mxu0 %v1011
      %v1902 = vpop.f32.mrb[0].mxu0
      %v1903 = vadd.f32 0.0, %v1902
      %v1904 = vpop.f32.mrb[0].mxu0
      %v1905 = vpop.f32.mrb[0].mxu0
      %v1906 = vadd.f32 0.0, %v1905
      %v1907 = vpop.f32.mrb[0].mxu0
      %1908 = vmatprep.mubr.bf16.mxu0 0
      %1909 = vmatmul.mubr.bf16.gmra.mrb[0].mxu0 %v1012
      %v1910 = vpop.f32.mrb[0].mxu0
      %v1911 = vadd.f32 0.0, %v1910
      %v1912 = vpop.f32.mrb[0].mxu0
      %v1913 = vpop.f32.mrb[0].mxu0
      %v1914 = vadd.f32 0.0, %v1913
      %v1915 = vpop.f32.mrb[0].mxu0
      %1916 = vmatprep.mubr.bf16.mxu0 0
      %1917 = vmatmul.mubr.bf16.gmra.mrb[0].mxu0 %v1013
      %v1918 = vpop.f32.mrb[0].mxu0
      %v1919 = vadd.f32 0.0, %v1918
      %v1920 = vpop.f32.mrb[0].mxu0
      %v1921 = vpop.f32.mrb[0].mxu0
      %v1922 = vadd.f32 0.0, %v1921
      %v1923 = vpop.f32.mrb[0].mxu0
      %1924 = vmatprep.mubr.bf16.mxu0 0
      %1925 = vmatmul.mubr.bf16.gmra.mrb[0].mxu0 %v1014
      %v1926 = vpop.f32.mrb[0].mxu0
      %v1927 = vadd.f32 0.0, %v1926
      %v1928 = vpop.f32.mrb[0].mxu0
      %v1929 = vpop.f32.mrb[0].mxu0
      %v1930 = vadd.f32 0.0, %v1929
      %v1931 = vpop.f32.mrb[0].mxu0
      %1932 = vmatprep.mubr.bf16.mxu0 0
      %1933 = vmatmul.mubr.bf16.gmra.mrb[0].mxu0 %v1015
      %v1934 = vpop.f32.mrb[0].mxu0
      %v1935 = vadd.f32 0.0, %v1934
      %v1936 = vpop.f32.mrb[0].mxu0
      %v1937 = vpop.f32.mrb[0].mxu0
      %v1938 = vadd.f32 0.0, %v1937
      %v1939 = vpop.f32.mrb[0].mxu0
      %1940 = vmatprep.mubr.bf16.mxu0 0
      %1941 = vmatmul.mubr.bf16.gmra.mrb[0].mxu0 %v1016
      %v1942 = vpop.f32.mrb[0].mxu0
      %v1943 = vadd.f32 0.0, %v1942
      %v1944 = vpop.f32.mrb[0].mxu0
      %v1945 = vpop.f32.mrb[0].mxu0
      %v1946 = vadd.f32 0.0, %v1945
      %v1947 = vpop.f32.mrb[0].mxu0
      %1948 = vmatprep.mubr.bf16.mxu0 0
      %1949 = vmatmul.mubr.bf16.gmra.mrb[0].mxu0 %v1017
      %v1950 = vpop.f32.mrb[0].mxu0
      %v1951 = vadd.f32 0.0, %v1950
      %v1952 = vpop.f32.mrb[0].mxu0
      %v1953 = vpop.f32.mrb[0].mxu0
      %v1954 = vadd.f32 0.0, %v1953
      %v1955 = vpop.f32.mrb[0].mxu0
      %1956 = vmatprep.mubr.bf16.mxu0 0
      %1957 = vmatmul.mubr.bf16.gmra.mrb[0].mxu0 %v1018
      %v1958 = vpop.f32.mrb[0].mxu0
      %v1959 = vadd.f32 0.0, %v1958
      %v1960 = vpop.f32.mrb[0].mxu0
      %v1961 = vpop.f32.mrb[0].mxu0
      %v1962 = vadd.f32 0.0, %v1961
      %v1963 = vpop.f32.mrb[0].mxu0
      %1964 = vmatprep.mubr.bf16.mxu0 0
      %1965 = vmatmul.mubr.bf16.gmra.mrb[0].mxu0 %v1019
      %v1966 = vpop.f32.mrb[0].mxu0
      %v1967 = vadd.f32 0.0, %v1966
      %v1968 = vpop.f32.mrb[0].mxu0
      %v1969 = vpop.f32.mrb[0].mxu0
      %v1970 = vadd.f32 0.0, %v1969
      %v1971 = vpop.f32.mrb[0].mxu0
      %1972 = vmatprep.mubr.bf16.mxu0 0
      %1973 = vmatmul.mubr.bf16.gmra.mrb[0].mxu0 %v1020
      %v1974 = vpop.f32.mrb[0].mxu0
      %v1975 = vadd.f32 0.0, %v1974
      %v1976 = vpop.f32.mrb[0].mxu0
      %v1977 = vpop.f32.mrb[0].mxu0
      %v1978 = vadd.f32 0.0, %v1977
      %v1979 = vpop.f32.mrb[0].mxu0
      %1980 = vmatprep.mubr.bf16.mxu0 0
      %1981 = vmatmul.mubr.bf16.gmra.mrb[0].mxu0 %v1021
      %v1982 = vpop.f32.mrb[0].mxu0
      %v1983 = vadd.f32 0.0, %v1982
      %v1984 = vpop.f32.mrb[0].mxu0
      %v1985 = vpop.f32.mrb[0].mxu0
      %v1986 = vadd.f32 0.0, %v1985
      %v1987 = vpop.f32.mrb[0].mxu0
      %1988 = vmatprep.mubr.bf16.mxu0 0
      %1989 = vmatmul.mubr.bf16.gmra.mrb[0].mxu0 %v1022
      %v1990 = vpop.f32.mrb[0].mxu0
      %v1991 = vadd.f32 0.0, %v1990
      %v1992 = vpop.f32.mrb[0].mxu0
      %v1993 = vpop.f32.mrb[0].mxu0
      %v1994 = vadd.f32 0.0, %v1993
      %v1995 = vpop.f32.mrb[0].mxu0
      %1996 = vmatprep.mubr.bf16.mxu0 0
      %1997 = vmatmul.mubr.bf16.gmra.mrb[0].mxu0 %v1023
      %v1998 = vpop.f32.mrb[0].mxu0
      %v1999 = vadd.f32 0.0, %v1998
      %v2000 = vpop.f32.mrb[0].mxu0
      %v2001 = vpop.f32.mrb[0].mxu0
      %v2002 = vadd.f32 0.0, %v2001
      %v2003 = vpop.f32.mrb[0].mxu0
      %2004 = vmatprep.mubr.bf16.mxu0 0
      %2005 = vmatmul.mubr.bf16.gmra.mrb[0].mxu0 %v1024
      %v2006 = vpop.f32.mrb[0].mxu0
      %v2007 = vadd.f32 0.0, %v2006
      %v2008 = vpop.f32.mrb[0].mxu0
      %v2009 = vpop.f32.mrb[0].mxu0
      %v2010 = vadd.f32 0.0, %v2009
      %v2011 = vpop.f32.mrb[0].mxu0
      %2012 = vmatprep.mubr.bf16.mxu0 0
      %2013 = vmatmul.mubr.bf16.gmra.mrb[0].mxu0 %v1025
      %v2014 = vpop.f32.mrb[0].mxu0
      %v2015 = vadd.f32 0.0, %v2014
      %v2016 = vpop.f32.mrb[0].mxu0
      %v2017 = vpop.f32.mrb[0].mxu0
      %v2018 = vadd.f32 0.0, %v2017
      %v2019 = vpop.f32.mrb[0].mxu0
      %2020 = vmatprep.mubr.bf16.mxu0 0
      %2021 = vmatmul.mubr.bf16.gmra.mrb[0].mxu0 %v1026
      %v2022 = vpop.f32.mrb[0].mxu0
      %v2023 = vadd.f32 0.0, %v2022
      %v2024 = vpop.f32.mrb[0].mxu0
      %v2025 = vpop.f32.mrb[0].mxu0
      %v2026 = vadd.f32 0.0, %v2025
      %v2027 = vpop.f32.mrb[0].mxu0
      %2028 = vmatprep.mubr.bf16.mxu0 0
      %2029 = vmatmul.mubr.bf16.gmra.mrb[0].mxu0 %v1027
      %v2030 = vpop.f32.mrb[0].mxu0
      %v2031 = vadd.f32 0.0, %v2030
      %v2032 = vpop.f32.mrb[0].mxu0
      %v2033 = vpop.f32.mrb[0].mxu0
      %v2034 = vadd.f32 0.0, %v2033
      %v2035 = vpop.f32.mrb[0].mxu0
      %2036 = vmatprep.mubr.bf16.mxu0 0
      %2037 = vmatmul.mubr.bf16.gmra.mrb[0].mxu0 %v1028
      %v2038 = vpop.f32.mrb[0].mxu0
      %v2039 = vadd.f32 0.0, %v2038
      %v2040 = vpop.f32.mrb[0].mxu0
      %v2041 = vpop.f32.mrb[0].mxu0
      %v2042 = vadd.f32 0.0, %v2041
      %v2043 = vpop.f32.mrb[0].mxu0
      %2044 = vmatprep.mubr.bf16.mxu0 0
      %2045 = vmatmul.mubr.bf16.gmra.mrb[0].mxu0 %v1029
      %v2046 = vpop.f32.mrb[0].mxu0
      %v2047 = vadd.f32 0.0, %v2046
      %v2048 = vpop.f32.mrb[0].mxu0
      %v2049 = vpop.f32.mrb[0].mxu0
      %v2050 = vadd.f32 0.0, %v2049
      %v2051 = vpop.f32.mrb[0].mxu0
      %2052 = vmatprep.mubr.bf16.mxu0 0
      %2053 = vmatmul.mubr.bf16.gmra.mrb[0].mxu0 %v1030
      %v2054 = vpop.f32.mrb[0].mxu0
      %v2055 = vadd.f32 0.0, %v2054
      %v2056 = vpop.f32.mrb[0].mxu0
      %v2057 = vpop.f32.mrb[0].mxu0
      %v2058 = vadd.f32 0.0, %v2057
      %v2059 = vpop.f32.mrb[0].mxu0
      %2060 = vmatprep.mubr.bf16.mxu0 0
      %2061 = vmatmul.mubr.bf16.gmra.mrb[0].mxu0 %v1031
      %v2062 = vpop.f32.mrb[0].mxu0
      %v2063 = vadd.f32 0.0, %v2062
      %v2064 = vpop.f32.mrb[0].mxu0
      %v2065 = vpop.f32.mrb[0].mxu0
      %v2066 = vadd.f32 0.0, %v2065
      %v2067 = vpop.f32.mrb[0].mxu0
      %2068 = vmatprep.mubr.bf16.mxu0 0
      %2069 = vmatmul.mubr.bf16.gmra.mrb[0].mxu0 %v1032
      %v2070 = vpop.f32.mrb[0].mxu0
      %v2071 = vadd.f32 0.0, %v2070
      %v2072 = vpop.f32.mrb[0].mxu0
      %v2073 = vpop.f32.mrb[0].mxu0
      %v2074 = vadd.f32 0.0, %v2073
      %v2075 = vpop.f32.mrb[0].mxu0
      %2076 = vmatprep.mubr.bf16.mxu0 0
      %2077 = vmatmul.mubr.bf16.gmra.mrb[0].mxu0 %v1033
      %v2078 = vpop.f32.mrb[0].mxu0
      %v2079 = vadd.f32 0.0, %v2078
      %v2080 = vpop.f32.mrb[0].mxu0
      %v2081 = vpop.f32.mrb[0].mxu0
      %v2082 = vadd.f32 0.0, %v2081
      %v2083 = vpop.f32.mrb[0].mxu0
      %2084 = vmatprep.mubr.bf16.mxu0 0
      %2085 = vmatmul.mubr.bf16.gmra.mrb[0].mxu0 %v1034
      %v2086 = vpop.f32.mrb[0].mxu0
      %v2087 = vadd.f32 0.0, %v2086
      %v2088 = vpop.f32.mrb[0].mxu0
      %v2089 = vpop.f32.mrb[0].mxu0
      %v2090 = vadd.f32 0.0, %v2089
      %v2091 = vpop.f32.mrb[0].mxu0
      %2092 = vmatprep.mubr.bf16.mxu0 0
      %2093 = vmatmul.mubr.bf16.gmra.mrb[0].mxu0 %v1035
      %v2094 = vpop.f32.mrb[0].mxu0
      %v2095 = vadd.f32 0.0, %v2094
      %v2096 = vpop.f32.mrb[0].mxu0
      %v2097 = vpop.f32.mrb[0].mxu0
      %v2098 = vadd.f32 0.0, %v2097
      %v2099 = vpop.f32.mrb[0].mxu0
      %2100 = vmatprep.mubr.bf16.mxu0 0
      %2101 = vmatmul.mubr.bf16.gmra.mrb[0].mxu0 %v1036
      %v2102 = vpop.f32.mrb[0].mxu0
      %v2103 = vadd.f32 0.0, %v2102
      %v2104 = vpop.f32.mrb[0].mxu0
      %v2105 = vpop.f32.mrb[0].mxu0
      %v2106 = vadd.f32 0.0, %v2105
      %v2107 = vpop.f32.mrb[0].mxu0
      %2108 = vmatprep.mubr.bf16.mxu0 0
      %2109 = vmatmul.mubr.bf16.gmra.mrb[0].mxu0 %v1037
      %v2110 = vpop.f32.mrb[0].mxu0
      %v2111 = vadd.f32 0.0, %v2110
      %v2112 = vpop.f32.mrb[0].mxu0
      %v2113 = vpop.f32.mrb[0].mxu0
      %v2114 = vadd.f32 0.0, %v2113
      %v2115 = vpop.f32.mrb[0].mxu0
      %2116 = vmatprep.mubr.bf16.mxu0 0
      %2117 = vmatmul.mubr.bf16.gmra.mrb[0].mxu0 %v1038
      %v2118 = vpop.f32.mrb[0].mxu0
      %v2119 = vadd.f32 0.0, %v2118
      %v2120 = vpop.f32.mrb[0].mxu0
      %v2121 = vpop.f32.mrb[0].mxu0
      %v2122 = vadd.f32 0.0, %v2121
      %v2123 = vpop.f32.mrb[0].mxu0
      %2124 = vmatprep.mubr.bf16.mxu0 0
      %2125 = vmatmul.mubr.bf16.gmra.mrb[0].mxu0 %v1039
      %v2126 = vpop.f32.mrb[0].mxu0
      %v2127 = vadd.f32 0.0, %v2126
      %v2128 = vpop.f32.mrb[0].mxu0
      %v2129 = vpop.f32.mrb[0].mxu0
      %v2130 = vadd.f32 0.0, %v2129
      %v2131 = vpop.f32.mrb[0].mxu0
      %2132 = vmatprep.mubr.bf16.mxu0 0
      %2133 = vmatmul.mubr.bf16.gmra.mrb[0].mxu0 %v1040
      %v2134 = vpop.f32.mrb[0].mxu0
      %v2135 = vadd.f32 0.0, %v2134
      %v2136 = vpop.f32.mrb[0].mxu0
      %v2137 = vpop.f32.mrb[0].mxu0
      %v2138 = vadd.f32 0.0, %v2137
      %v2139 = vpop.f32.mrb[0].mxu0
      %2140 = vmatprep.mubr.bf16.mxu0 0
      %2141 = vmatmul.mubr.bf16.gmra.mrb[0].mxu0 %v1041
      %v2142 = vpop.f32.mrb[0].mxu0
      %v2143 = vadd.f32 0.0, %v2142
      %v2144 = vpop.f32.mrb[0].mxu0
      %v2145 = vpop.f32.mrb[0].mxu0
      %v2146 = vadd.f32 0.0, %v2145
      %v2147 = vpop.f32.mrb[0].mxu0
      %2148 = vmatprep.mubr.bf16.mxu0 0
      %2149 = vmatmul.mubr.bf16.gmra.mrb[0].mxu0 %v1042
      %v2150 = vpop.f32.mrb[0].mxu0
      %v2151 = vadd.f32 0.0, %v2150
      %v2152 = vpop.f32.mrb[0].mxu0
      %v2153 = vpop.f32.mrb[0].mxu0
      %v2154 = vadd.f32 0.0, %v2153
      %v2155 = vpop.f32.mrb[0].mxu0
      %2156 = vmatprep.mubr.bf16.mxu0 0
      %2157 = vmatmul.mubr.bf16.gmra.mrb[0].mxu0 %v1043
      %v2158 = vpop.f32.mrb[0].mxu0
      %v2159 = vadd.f32 0.0, %v2158
      %v2160 = vpop.f32.mrb[0].mxu0
      %v2161 = vpop.f32.mrb[0].mxu0
      %v2162 = vadd.f32 0.0, %v2161
      %v2163 = vpop.f32.mrb[0].mxu0
      %2164 = vmatprep.mubr.bf16.mxu0 0
      %2165 = vmatmul.mubr.bf16.gmra.mrb[0].mxu0 %v1044
      %v2166 = vpop.f32.mrb[0].mxu0
      %v2167 = vadd.f32 0.0, %v2166
      %v2168 = vpop.f32.mrb[0].mxu0
      %v2169 = vpop.f32.mrb[0].mxu0
      %v2170 = vadd.f32 0.0, %v2169
      %v2171 = vpop.f32.mrb[0].mxu0
      %2172 = vmatprep.mubr.bf16.mxu0 0
      %2173 = vmatmul.mubr.bf16.gmra.mrb[0].mxu0 %v1045
      %v2174 = vpop.f32.mrb[0].mxu0
      %v2175 = vadd.f32 0.0, %v2174
      %v2176 = vpop.f32.mrb[0].mxu0
      %v2177 = vpop.f32.mrb[0].mxu0
      %v2178 = vadd.f32 0.0, %v2177
      %v2179 = vpop.f32.mrb[0].mxu0
      %2180 = vmatprep.mubr.bf16.mxu0 0
      %2181 = vmatmul.mubr.bf16.gmra.mrb[0].mxu0 %v1046
      %v2182 = vpop.f32.mrb[0].mxu0
      %v2183 = vadd.f32 0.0, %v2182
      %v2184 = vpop.f32.mrb[0].mxu0
      %v2185 = vpop.f32.mrb[0].mxu0
      %v2186 = vadd.f32 0.0, %v2185
      %v2187 = vpop.f32.mrb[0].mxu0
      %2188 = vmatprep.mubr.bf16.mxu0 0
      %2189 = vmatmul.mubr.bf16.gmra.mrb[0].mxu0 %v1047
      %v2190 = vpop.f32.mrb[0].mxu0
      %v2191 = vadd.f32 0.0, %v2190
      %v2192 = vpop.f32.mrb[0].mxu0
      %v2193 = vpop.f32.mrb[0].mxu0
      %v2194 = vadd.f32 0.0, %v2193
      %v2195 = vpop.f32.mrb[0].mxu0
      %2196 = vmatprep.mubr.bf16.mxu0 0
      %2197 = vmatmul.mubr.bf16.gmra.mrb[0].mxu0 %v1048
      %v2198 = vpop.f32.mrb[0].mxu0
      %v2199 = vadd.f32 0.0, %v2198
      %v2200 = vpop.f32.mrb[0].mxu0
      %v2201 = vpop.f32.mrb[0].mxu0
      %v2202 = vadd.f32 0.0, %v2201
      %v2203 = vpop.f32.mrb[0].mxu0
      %2204 = vmatprep.mubr.bf16.mxu0 0
      %2205 = vmatmul.mubr.bf16.gmra.mrb[0].mxu0 %v1049
      %v2206 = vpop.f32.mrb[0].mxu0
      %v2207 = vadd.f32 0.0, %v2206
      %v2208 = vpop.f32.mrb[0].mxu0
      %v2209 = vpop.f32.mrb[0].mxu0
      %v2210 = vadd.f32 0.0, %v2209
      %v2211 = vpop.f32.mrb[0].mxu0
      %2212 = vmatprep.mubr.bf16.mxu0 0
      %2213 = vmatmul.mubr.bf16.gmra.mrb[0].mxu0 %v1050
      %v2214 = vpop.f32.mrb[0].mxu0
      %v2215 = vadd.f32 0.0, %v2214
      %v2216 = vpop.f32.mrb[0].mxu0
      %v2217 = vpop.f32.mrb[0].mxu0
      %v2218 = vadd.f32 0.0, %v2217
      %v2219 = vpop.f32.mrb[0].mxu0
      %2220 = vmatprep.mubr.bf16.mxu0 0
      %2221 = vmatmul.mubr.bf16.gmra.mrb[0].mxu0 %v1051
      %v2222 = vpop.f32.mrb[0].mxu0
      %v2223 = vadd.f32 0.0, %v2222
      %v2224 = vpop.f32.mrb[0].mxu0
      %v2225 = vpop.f32.mrb[0].mxu0
      %v2226 = vadd.f32 0.0, %v2225
      %v2227 = vpop.f32.mrb[0].mxu0
      %2228 = vmatprep.mubr.bf16.mxu0 0
      %2229 = vmatmul.mubr.bf16.gmra.mrb[0].mxu0 %v1052
      %v2230 = vpop.f32.mrb[0].mxu0
      %v2231 = vadd.f32 0.0, %v2230
      %v2232 = vpop.f32.mrb[0].mxu0
      %v2233 = vpop.f32.mrb[0].mxu0
      %v2234 = vadd.f32 0.0, %v2233
      %v2235 = vpop.f32.mrb[0].mxu0
      %2236 = vmatprep.mubr.bf16.mxu0 0
      %2237 = vmatmul.mubr.bf16.gmra.mrb[0].mxu0 %v1053
      %v2238 = vpop.f32.mrb[0].mxu0
      %v2239 = vadd.f32 0.0, %v2238
      %v2240 = vpop.f32.mrb[0].mxu0
      %v2241 = vpop.f32.mrb[0].mxu0
      %v2242 = vadd.f32 0.0, %v2241
      %v2243 = vpop.f32.mrb[0].mxu0
      %2244 = vmatprep.mubr.bf16.mxu0 0
      %2245 = vmatmul.mubr.bf16.gmra.mrb[0].mxu0 %v1054
      %v2246 = vpop.f32.mrb[0].mxu0
      %v2247 = vadd.f32 0.0, %v2246
      %v2248 = vpop.f32.mrb[0].mxu0
      %v2249 = vpop.f32.mrb[0].mxu0
      %v2250 = vadd.f32 0.0, %v2249
      %v2251 = vpop.f32.mrb[0].mxu0
      %2252 = vmatprep.mubr.bf16.mxu0 0
      %2253 = vmatmul.mubr.bf16.gmra.mrb[0].mxu0 %v1055
      %v2254 = vpop.f32.mrb[0].mxu0
      %v2255 = vadd.f32 0.0, %v2254
      %v2256 = vpop.f32.mrb[0].mxu0
      %v2257 = vpop.f32.mrb[0].mxu0
      %v2258 = vadd.f32 0.0, %v2257
      %v2259 = vpop.f32.mrb[0].mxu0
      %2260 = vmatprep.mubr.bf16.mxu0 0
      %2261 = vmatmul.mubr.bf16.gmra.mrb[0].mxu0 %v1056
      %v2262 = vpop.f32.mrb[0].mxu0
      %v2263 = vadd.f32 0.0, %v2262
      %v2264 = vpop.f32.mrb[0].mxu0
      %v2265 = vpop.f32.mrb[0].mxu0
      %v2266 = vadd.f32 0.0, %v2265
      %v2267 = vpop.f32.mrb[0].mxu0
      %2268 = vmatprep.mubr.bf16.mxu0 0
      %2269 = vmatmul.mubr.bf16.gmra.mrb[0].mxu0 %v1057
      %v2270 = vpop.f32.mrb[0].mxu0
      %v2271 = vadd.f32 0.0, %v2270
      %v2272 = vpop.f32.mrb[0].mxu0
      %v2273 = vpop.f32.mrb[0].mxu0
      %v2274 = vadd.f32 0.0, %v2273
      %v2275 = vpop.f32.mrb[0].mxu0
      %2276 = vmatprep.mubr.bf16.mxu0 0
      %2277 = vmatmul.mubr.bf16.gmra.mrb[0].mxu0 %v1058
      %v2278 = vpop.f32.mrb[0].mxu0
      %v2279 = vadd.f32 0.0, %v2278
      %v2280 = vpop.f32.mrb[0].mxu0
      %v2281 = vpop.f32.mrb[0].mxu0
      %v2282 = vadd.f32 0.0, %v2281
      %v2283 = vpop.f32.mrb[0].mxu0
      %2284 = vmatprep.mubr.bf16.mxu0 0
      %2285 = vmatmul.mubr.bf16.gmra.mrb[0].mxu0 %v1059
      %v2286 = vpop.f32.mrb[0].mxu0
      %v2287 = vadd.f32 0.0, %v2286
      %v2288 = vpop.f32.mrb[0].mxu0
      %v2289 = vpop.f32.mrb[0].mxu0
      %v2290 = vadd.f32 0.0, %v2289
      %v2291 = vpop.f32.mrb[0].mxu0
      %2292 = vdwg.mxu0
      %v2293 = vtanh.pop %v1271
      %v2294 = vtanh.pop %v1274
      %v2295 = vtanh.pop %v1279
      %v2296 = vtanh.pop %v1282
      %v2297 = vtanh.pop %v1287
      %v2298 = vtanh.pop %v1290
      %v2299 = vtanh.pop %v1295
      %v2300 = vtanh.pop %v1298
      %v2301 = vtanh.pop %v1303
      %v2302 = vtanh.pop %v1306
      %v2303 = vtanh.pop %v1311
      %v2304 = vtanh.pop %v1314
      %v2305 = vtanh.pop %v1319
      %v2306 = vtanh.pop %v1322
      %v2307 = vtanh.pop %v1327
      %v2308 = vtanh.pop %v1330
      %v2309 = vtanh.pop %v1335
      %v2310 = vtanh.pop %v1338
      %v2311 = vtanh.pop %v1343
      %v2312 = vtanh.pop %v1346
      %v2313 = vtanh.pop %v1351
      %v2314 = vtanh.pop %v1354
      %v2315 = vtanh.pop %v1359
      %v2316 = vtanh.pop %v1362
      %v2317 = vtanh.pop %v1367
      %v2318 = vtanh.pop %v1370
      %v2319 = vtanh.pop %v1375
      %v2320 = vtanh.pop %v1378
      %v2321 = vtanh.pop %v1383
      %v2322 = vtanh.pop %v1386
      %v2323 = vtanh.pop %v1391
      %v2324 = vtanh.pop %v1394
      %v2325 = vtanh.pop %v1399
      %v2326 = vtanh.pop %v1402
      %v2327 = vtanh.pop %v1407
      %v2328 = vtanh.pop %v1410
      %v2329 = vtanh.pop %v1415
      %v2330 = vtanh.pop %v1418
      %v2331 = vtanh.pop %v1423
      %v2332 = vtanh.pop %v1426
      %v2333 = vtanh.pop %v1431
      %v2334 = vtanh.pop %v1434
      %v2335 = vtanh.pop %v1439
      %v2336 = vtanh.pop %v1442
      %v2337 = vtanh.pop %v1447
      %v2338 = vtanh.pop %v1450
      %v2339 = vtanh.pop %v1455
      %v2340 = vtanh.pop %v1458
      %v2341 = vtanh.pop %v1463
      %v2342 = vtanh.pop %v1466
      %v2343 = vtanh.pop %v1471
      %v2344 = vtanh.pop %v1474
      %v2345 = vtanh.pop %v1479
      %v2346 = vtanh.pop %v1482
      %v2347 = vtanh.pop %v1487
      %v2348 = vtanh.pop %v1490
      %v2349 = vtanh.pop %v1495
      %v2350 = vtanh.pop %v1498
      %v2351 = vtanh.pop %v1503
      %v2352 = vtanh.pop %v1506
      %v2353 = vtanh.pop %v1511
      %v2354 = vtanh.pop %v1514
      %v2355 = vtanh.pop %v1519
      %v2356 = vtanh.pop %v1522
      %v2357 = vtanh.pop %v1527
      %v2358 = vtanh.pop %v1530
      %v2359 = vtanh.pop %v1535
      %v2360 = vtanh.pop %v1538
      %v2361 = vtanh.pop %v1543
      %v2362 = vtanh.pop %v1546
      %v2363 = vtanh.pop %v1551
      %v2364 = vtanh.pop %v1554
      %v2365 = vtanh.pop %v1559
      %v2366 = vtanh.pop %v1562
      %v2367 = vtanh.pop %v1567
      %v2368 = vtanh.pop %v1570
      %v2369 = vtanh.pop %v1575
      %v2370 = vtanh.pop %v1578
      %v2371 = vtanh.pop %v1583
      %v2372 = vtanh.pop %v1586
      %v2373 = vtanh.pop %v1591
      %v2374 = vtanh.pop %v1594
      %v2375 = vtanh.pop %v1599
      %v2376 = vtanh.pop %v1602
      %v2377 = vtanh.pop %v1607
      %v2378 = vtanh.pop %v1610
      %v2379 = vtanh.pop %v1615
      %v2380 = vtanh.pop %v1618
      %v2381 = vtanh.pop %v1623
      %v2382 = vtanh.pop %v1626
      %v2383 = vtanh.pop %v1631
      %v2384 = vtanh.pop %v1634
      %v2385 = vtanh.pop %v1639
      %v2386 = vtanh.pop %v1642
      %v2387 = vtanh.pop %v1647
      %v2388 = vtanh.pop %v1650
      %v2389 = vtanh.pop %v1655
      %v2390 = vtanh.pop %v1658
      %v2391 = vtanh.pop %v1663
      %v2392 = vtanh.pop %v1666
      %v2393 = vtanh.pop %v1671
      %v2394 = vtanh.pop %v1674
      %v2395 = vtanh.pop %v1679
      %v2396 = vtanh.pop %v1682
      %v2397 = vtanh.pop %v1687
      %v2398 = vtanh.pop %v1690
      %v2399 = vtanh.pop %v1695
      %v2400 = vtanh.pop %v1698
      %v2401 = vtanh.pop %v1703
      %v2402 = vtanh.pop %v1706
      %v2403 = vtanh.pop %v1711
      %v2404 = vtanh.pop %v1714
      %v2405 = vtanh.pop %v1719
      %v2406 = vtanh.pop %v1722
      %v2407 = vtanh.pop %v1727
      %v2408 = vtanh.pop %v1730
      %v2409 = vtanh.pop %v1735
      %v2410 = vtanh.pop %v1738
      %v2411 = vtanh.pop %v1743
      %v2412 = vtanh.pop %v1746
      %v2413 = vtanh.pop %v1751
      %v2414 = vtanh.pop %v1754
      %v2415 = vtanh.pop %v1759
      %v2416 = vtanh.pop %v1762
      %v2417 = vtanh.pop %v1767
      %v2418 = vtanh.pop %v1770
      %v2419 = vtanh.pop %v1775
      %v2420 = vtanh.pop %v1778
      %v2421 = vtanh.pop %v1783
      %v2422 = vtanh.pop %v1786
      %v2423 = vtanh.pop %v1791
      %v2424 = vtanh.pop %v1794
      %v2425 = vtanh.pop %v1799
      %v2426 = vtanh.pop %v1802
      %v2427 = vtanh.pop %v1807
      %v2428 = vtanh.pop %v1810
      %v2429 = vtanh.pop %v1815
      %v2430 = vtanh.pop %v1818
      %v2431 = vtanh.pop %v1823
      %v2432 = vtanh.pop %v1826
      %v2433 = vtanh.pop %v1831
      %v2434 = vtanh.pop %v1834
      %v2435 = vtanh.pop %v1839
      %v2436 = vtanh.pop %v1842
      %v2437 = vtanh.pop %v1847
      %v2438 = vtanh.pop %v1850
      %v2439 = vtanh.pop %v1855
      %v2440 = vtanh.pop %v1858
      %v2441 = vtanh.pop %v1863
      %v2442 = vtanh.pop %v1866
      %v2443 = vtanh.pop %v1871
      %v2444 = vtanh.pop %v1874
      %v2445 = vtanh.pop %v1879
      %v2446 = vtanh.pop %v1882
      %v2447 = vtanh.pop %v1887
      %v2448 = vtanh.pop %v1890
      %v2449 = vtanh.pop %v1895
      %v2450 = vtanh.pop %v1898
      %v2451 = vtanh.pop %v1903
      %v2452 = vtanh.pop %v1906
      %v2453 = vtanh.pop %v1911
      %v2454 = vtanh.pop %v1914
      %v2455 = vtanh.pop %v1919
      %v2456 = vtanh.pop %v1922
      %v2457 = vtanh.pop %v1927
      %v2458 = vtanh.pop %v1930
      %v2459 = vtanh.pop %v1935
      %v2460 = vtanh.pop %v1938
      %v2461 = vtanh.pop %v1943
      %v2462 = vtanh.pop %v1946
      %v2463 = vtanh.pop %v1951
      %v2464 = vtanh.pop %v1954
      %v2465 = vtanh.pop %v1959
      %v2466 = vtanh.pop %v1962
      %v2467 = vtanh.pop %v1967
      %v2468 = vtanh.pop %v1970
      %v2469 = vtanh.pop %v1975
      %v2470 = vtanh.pop %v1978
      %v2471 = vtanh.pop %v1983
      %v2472 = vtanh.pop %v1986
      %v2473 = vtanh.pop %v1991
      %v2474 = vtanh.pop %v1994
      %v2475 = vtanh.pop %v1999
      %v2476 = vtanh.pop %v2002
      %v2477 = vtanh.pop %v2007
      %v2478 = vtanh.pop %v2010
      %v2479 = vtanh.pop %v2015
      %v2480 = vtanh.pop %v2018
      %v2481 = vtanh.pop %v2023
      %v2482 = vtanh.pop %v2026
      %v2483 = vtanh.pop %v2031
      %v2484 = vtanh.pop %v2034
      %v2485 = vtanh.pop %v2039
      %v2486 = vtanh.pop %v2042
      %v2487 = vtanh.pop %v2047
      %v2488 = vtanh.pop %v2050
      %v2489 = vtanh.pop %v2055
      %v2490 = vtanh.pop %v2058
      %v2491 = vtanh.pop %v2063
      %v2492 = vtanh.pop %v2066
      %v2493 = vtanh.pop %v2071
      %v2494 = vtanh.pop %v2074
      %v2495 = vtanh.pop %v2079
      %v2496 = vtanh.pop %v2082
      %v2497 = vtanh.pop %v2087
      %v2498 = vtanh.pop %v2090
      %v2499 = vtanh.pop %v2095
      %v2500 = vtanh.pop %v2098
      %v2501 = vtanh.pop %v2103
      %v2502 = vtanh.pop %v2106
      %v2503 = vtanh.pop %v2111
      %v2504 = vtanh.pop %v2114
      %v2505 = vtanh.pop %v2119
      %v2506 = vtanh.pop %v2122
      %v2507 = vtanh.pop %v2127
      %v2508 = vtanh.pop %v2130
      %v2509 = vtanh.pop %v2135
      %v2510 = vtanh.pop %v2138
      %v2511 = vtanh.pop %v2143
      %v2512 = vtanh.pop %v2146
      %v2513 = vtanh.pop %v2151
      %v2514 = vtanh.pop %v2154
      %v2515 = vtanh.pop %v2159
      %v2516 = vtanh.pop %v2162
      %v2517 = vtanh.pop %v2167
      %v2518 = vtanh.pop %v2170
      %v2519 = vtanh.pop %v2175
      %v2520 = vtanh.pop %v2178
      %v2521 = vtanh.pop %v2183
      %v2522 = vtanh.pop %v2186
      %v2523 = vtanh.pop %v2191
      %v2524 = vtanh.pop %v2194
      %v2525 = vtanh.pop %v2199
      %v2526 = vtanh.pop %v2202
      %v2527 = vtanh.pop %v2207
      %v2528 = vtanh.pop %v2210
      %v2529 = vtanh.pop %v2215
      %v2530 = vtanh.pop %v2218
      %v2531 = vtanh.pop %v2223
      %v2532 = vtanh.pop %v2226
      %v2533 = vtanh.pop %v2231
      %v2534 = vtanh.pop %v2234
      %v2535 = vtanh.pop %v2239
      %v2536 = vtanh.pop %v2242
      %v2537 = vtanh.pop %v2247
      %v2538 = vtanh.pop %v2250
      %v2539 = vtanh.pop %v2255
      %v2540 = vtanh.pop %v2258
      %v2541 = vtanh.pop %v2263
      %v2542 = vtanh.pop %v2266
      %v2543 = vtanh.pop %v2271
      %v2544 = vtanh.pop %v2274
      %v2545 = vtanh.pop %v2279
      %v2546 = vtanh.pop %v2282
      %v2547 = vtanh.pop %v2287
      %v2548 = vtanh.pop %v2290
      %2549 = vst [vmem:[%s145] sm:$0xff] %v2293
      %2550 = vst [vmem:[%s145 + $0x8] sm:$0xff] %v2294
      %2551 = vst [vmem:[%s145 + $0x10] sm:$0xff] %v2295
      %2552 = vst [vmem:[%s145 + $0x18] sm:$0xff] %v2296
      %2553 = vst [vmem:[%s145 + $0x20] sm:$0xff] %v2297
      %2554 = vst [vmem:[%s145 + $0x28] sm:$0xff] %v2298
      %2555 = vst [vmem:[%s145 + $0x30] sm:$0xff] %v2299
      %2556 = vst [vmem:[%s145 + $0x38] sm:$0xff] %v2300
      %2557 = vst [vmem:[%s145 + $0x40] sm:$0xff] %v2301
      %2558 = vst [vmem:[%s145 + $0x48] sm:$0xff] %v2302
      %2559 = vst [vmem:[%s145 + $0x50] sm:$0xff] %v2303
      %2560 = vst [vmem:[%s145 + $0x58] sm:$0xff] %v2304
      %2561 = vst [vmem:[%s145 + $0x60] sm:$0xff] %v2305
      %2562 = vst [vmem:[%s145 + $0x68] sm:$0xff] %v2306
      %2563 = vst [vmem:[%s145 + $0x70] sm:$0xff] %v2307
      %2564 = vst [vmem:[%s145 + $0x78] sm:$0xff] %v2308
      %2565 = vst [vmem:[%s145 + $0x80] sm:$0xff] %v2309
      %2566 = vst [vmem:[%s145 + $0x88] sm:$0xff] %v2310
      %2567 = vst [vmem:[%s145 + $0x90] sm:$0xff] %v2311
      %2568 = vst [vmem:[%s145 + $0x98] sm:$0xff] %v2312
      %2569 = vst [vmem:[%s145 + $0xa0] sm:$0xff] %v2313
      %2570 = vst [vmem:[%s145 + $0xa8] sm:$0xff] %v2314
      %2571 = vst [vmem:[%s145 + $0xb0] sm:$0xff] %v2315
      %2572 = vst [vmem:[%s145 + $0xb8] sm:$0xff] %v2316
      %2573 = vst [vmem:[%s145 + $0xc0] sm:$0xff] %v2317
      %2574 = vst [vmem:[%s145 + $0xc8] sm:$0xff] %v2318
      %2575 = vst [vmem:[%s145 + $0xd0] sm:$0xff] %v2319
      %2576 = vst [vmem:[%s145 + $0xd8] sm:$0xff] %v2320
      %2577 = vst [vmem:[%s145 + $0xe0] sm:$0xff] %v2321
      %2578 = vst [vmem:[%s145 + $0xe8] sm:$0xff] %v2322
      %2579 = vst [vmem:[%s145 + $0xf0] sm:$0xff] %v2323
      %2580 = vst [vmem:[%s145 + $0xf8] sm:$0xff] %v2324
      %2581 = vst [vmem:[%s145 + $0x100] sm:$0xff] %v2325
      %2582 = vst [vmem:[%s145 + $0x108] sm:$0xff] %v2326
      %2583 = vst [vmem:[%s145 + $0x110] sm:$0xff] %v2327
      %2584 = vst [vmem:[%s145 + $0x118] sm:$0xff] %v2328
      %2585 = vst [vmem:[%s145 + $0x120] sm:$0xff] %v2329
      %2586 = vst [vmem:[%s145 + $0x128] sm:$0xff] %v2330
      %2587 = vst [vmem:[%s145 + $0x130] sm:$0xff] %v2331
      %2588 = vst [vmem:[%s145 + $0x138] sm:$0xff] %v2332
      %2589 = vst [vmem:[%s145 + $0x140] sm:$0xff] %v2333
      %2590 = vst [vmem:[%s145 + $0x148] sm:$0xff] %v2334
      %2591 = vst [vmem:[%s145 + $0x150] sm:$0xff] %v2335
      %2592 = vst [vmem:[%s145 + $0x158] sm:$0xff] %v2336
      %2593 = vst [vmem:[%s145 + $0x160] sm:$0xff] %v2337
      %2594 = vst [vmem:[%s145 + $0x168] sm:$0xff] %v2338
      %2595 = vst [vmem:[%s145 + $0x170] sm:$0xff] %v2339
      %2596 = vst [vmem:[%s145 + $0x178] sm:$0xff] %v2340
      %2597 = vst [vmem:[%s145 + $0x180] sm:$0xff] %v2341
      %2598 = vst [vmem:[%s145 + $0x188] sm:$0xff] %v2342
      %2599 = vst [vmem:[%s145 + $0x190] sm:$0xff] %v2343
      %2600 = vst [vmem:[%s145 + $0x198] sm:$0xff] %v2344
      %2601 = vst [vmem:[%s145 + $0x1a0] sm:$0xff] %v2345
      %2602 = vst [vmem:[%s145 + $0x1a8] sm:$0xff] %v2346
      %2603 = vst [vmem:[%s145 + $0x1b0] sm:$0xff] %v2347
      %2604 = vst [vmem:[%s145 + $0x1b8] sm:$0xff] %v2348
      %2605 = vst [vmem:[%s145 + $0x1c0] sm:$0xff] %v2349
      %2606 = vst [vmem:[%s145 + $0x1c8] sm:$0xff] %v2350
      %2607 = vst [vmem:[%s145 + $0x1d0] sm:$0xff] %v2351
      %2608 = vst [vmem:[%s145 + $0x1d8] sm:$0xff] %v2352
      %2609 = vst [vmem:[%s145 + $0x1e0] sm:$0xff] %v2353
      %2610 = vst [vmem:[%s145 + $0x1e8] sm:$0xff] %v2354
      %2611 = vst [vmem:[%s145 + $0x1f0] sm:$0xff] %v2355
      %2612 = vst [vmem:[%s145 + $0x1f8] sm:$0xff] %v2356
      %2613 = vst [vmem:[%s145 + $0x200] sm:$0xff] %v2357
      %2614 = vst [vmem:[%s145 + $0x208] sm:$0xff] %v2358
      %2615 = vst [vmem:[%s145 + $0x210] sm:$0xff] %v2359
      %2616 = vst [vmem:[%s145 + $0x218] sm:$0xff] %v2360
      %2617 = vst [vmem:[%s145 + $0x220] sm:$0xff] %v2361
      %2618 = vst [vmem:[%s145 + $0x228] sm:$0xff] %v2362
      %2619 = vst [vmem:[%s145 + $0x230] sm:$0xff] %v2363
      %2620 = vst [vmem:[%s145 + $0x238] sm:$0xff] %v2364
      %2621 = vst [vmem:[%s145 + $0x240] sm:$0xff] %v2365
      %2622 = vst [vmem:[%s145 + $0x248] sm:$0xff] %v2366
      %2623 = vst [vmem:[%s145 + $0x250] sm:$0xff] %v2367
      %2624 = vst [vmem:[%s145 + $0x258] sm:$0xff] %v2368
      %2625 = vst [vmem:[%s145 + $0x260] sm:$0xff] %v2369
      %2626 = vst [vmem:[%s145 + $0x268] sm:$0xff] %v2370
      %2627 = vst [vmem:[%s145 + $0x270] sm:$0xff] %v2371
      %2628 = vst [vmem:[%s145 + $0x278] sm:$0xff] %v2372
      %2629 = vst [vmem:[%s145 + $0x280] sm:$0xff] %v2373
      %2630 = vst [vmem:[%s145 + $0x288] sm:$0xff] %v2374
      %2631 = vst [vmem:[%s145 + $0x290] sm:$0xff] %v2375
      %2632 = vst [vmem:[%s145 + $0x298] sm:$0xff] %v2376
      %2633 = vst [vmem:[%s145 + $0x2a0] sm:$0xff] %v2377
      %2634 = vst [vmem:[%s145 + $0x2a8] sm:$0xff] %v2378
      %2635 = vst [vmem:[%s145 + $0x2b0] sm:$0xff] %v2379
      %2636 = vst [vmem:[%s145 + $0x2b8] sm:$0xff] %v2380
      %2637 = vst [vmem:[%s145 + $0x2c0] sm:$0xff] %v2381
      %2638 = vst [vmem:[%s145 + $0x2c8] sm:$0xff] %v2382
      %2639 = vst [vmem:[%s145 + $0x2d0] sm:$0xff] %v2383
      %2640 = vst [vmem:[%s145 + $0x2d8] sm:$0xff] %v2384
      %2641 = vst [vmem:[%s145 + $0x2e0] sm:$0xff] %v2385
      %2642 = vst [vmem:[%s145 + $0x2e8] sm:$0xff] %v2386
      %2643 = vst [vmem:[%s145 + $0x2f0] sm:$0xff] %v2387
      %2644 = vst [vmem:[%s145 + $0x2f8] sm:$0xff] %v2388
      %2645 = vst [vmem:[%s145 + $0x300] sm:$0xff] %v2389
      %2646 = vst [vmem:[%s145 + $0x308] sm:$0xff] %v2390
      %2647 = vst [vmem:[%s145 + $0x310] sm:$0xff] %v2391
      %2648 = vst [vmem:[%s145 + $0x318] sm:$0xff] %v2392
      %2649 = vst [vmem:[%s145 + $0x320] sm:$0xff] %v2393
      %2650 = vst [vmem:[%s145 + $0x328] sm:$0xff] %v2394
      %2651 = vst [vmem:[%s145 + $0x330] sm:$0xff] %v2395
      %2652 = vst [vmem:[%s145 + $0x338] sm:$0xff] %v2396
      %2653 = vst [vmem:[%s145 + $0x340] sm:$0xff] %v2397
      %2654 = vst [vmem:[%s145 + $0x348] sm:$0xff] %v2398
      %2655 = vst [vmem:[%s145 + $0x350] sm:$0xff] %v2399
      %2656 = vst [vmem:[%s145 + $0x358] sm:$0xff] %v2400
      %2657 = vst [vmem:[%s145 + $0x360] sm:$0xff] %v2401
      %2658 = vst [vmem:[%s145 + $0x368] sm:$0xff] %v2402
      %2659 = vst [vmem:[%s145 + $0x370] sm:$0xff] %v2403
      %2660 = vst [vmem:[%s145 + $0x378] sm:$0xff] %v2404
      %2661 = vst [vmem:[%s145 + $0x380] sm:$0xff] %v2405
      %2662 = vst [vmem:[%s145 + $0x388] sm:$0xff] %v2406
      %2663 = vst [vmem:[%s145 + $0x390] sm:$0xff] %v2407
      %2664 = vst [vmem:[%s145 + $0x398] sm:$0xff] %v2408
      %2665 = vst [vmem:[%s145 + $0x3a0] sm:$0xff] %v2409
      %2666 = vst [vmem:[%s145 + $0x3a8] sm:$0xff] %v2410
      %2667 = vst [vmem:[%s145 + $0x3b0] sm:$0xff] %v2411
      %2668 = vst [vmem:[%s145 + $0x3b8] sm:$0xff] %v2412
      %2669 = vst [vmem:[%s145 + $0x3c0] sm:$0xff] %v2413
      %2670 = vst [vmem:[%s145 + $0x3c8] sm:$0xff] %v2414
      %2671 = vst [vmem:[%s145 + $0x3d0] sm:$0xff] %v2415
      %2672 = vst [vmem:[%s145 + $0x3d8] sm:$0xff] %v2416
      %2673 = vst [vmem:[%s145 + $0x3e0] sm:$0xff] %v2417
      %2674 = vst [vmem:[%s145 + $0x3e8] sm:$0xff] %v2418
      %2675 = vst [vmem:[%s145 + $0x3f0] sm:$0xff] %v2419
      %2676 = vst [vmem:[%s145 + $0x3f8] sm:$0xff] %v2420
      %2677 = vst [vmem:[%s145 + $0x400] sm:$0xff] %v2421
      %2678 = vst [vmem:[%s145 + $0x408] sm:$0xff] %v2422
      %2679 = vst [vmem:[%s145 + $0x410] sm:$0xff] %v2423
      %2680 = vst [vmem:[%s145 + $0x418] sm:$0xff] %v2424
      %2681 = vst [vmem:[%s145 + $0x420] sm:$0xff] %v2425
      %2682 = vst [vmem:[%s145 + $0x428] sm:$0xff] %v2426
      %2683 = vst [vmem:[%s145 + $0x430] sm:$0xff] %v2427
      %2684 = vst [vmem:[%s145 + $0x438] sm:$0xff] %v2428
      %2685 = vst [vmem:[%s145 + $0x440] sm:$0xff] %v2429
      %2686 = vst [vmem:[%s145 + $0x448] sm:$0xff] %v2430
      %2687 = vst [vmem:[%s145 + $0x450] sm:$0xff] %v2431
      %2688 = vst [vmem:[%s145 + $0x458] sm:$0xff] %v2432
      %2689 = vst [vmem:[%s145 + $0x460] sm:$0xff] %v2433
      %2690 = vst [vmem:[%s145 + $0x468] sm:$0xff] %v2434
      %2691 = vst [vmem:[%s145 + $0x470] sm:$0xff] %v2435
      %2692 = vst [vmem:[%s145 + $0x478] sm:$0xff] %v2436
      %2693 = vst [vmem:[%s145 + $0x480] sm:$0xff] %v2437
      %2694 = vst [vmem:[%s145 + $0x488] sm:$0xff] %v2438
      %2695 = vst [vmem:[%s145 + $0x490] sm:$0xff] %v2439
      %2696 = vst [vmem:[%s145 + $0x498] sm:$0xff] %v2440
      %2697 = vst [vmem:[%s145 + $0x4a0] sm:$0xff] %v2441
      %2698 = vst [vmem:[%s145 + $0x4a8] sm:$0xff] %v2442
      %2699 = vst [vmem:[%s145 + $0x4b0] sm:$0xff] %v2443
      %2700 = vst [vmem:[%s145 + $0x4b8] sm:$0xff] %v2444
      %2701 = vst [vmem:[%s145 + $0x4c0] sm:$0xff] %v2445
      %2702 = vst [vmem:[%s145 + $0x4c8] sm:$0xff] %v2446
      %2703 = vst [vmem:[%s145 + $0x4d0] sm:$0xff] %v2447
      %2704 = vst [vmem:[%s145 + $0x4d8] sm:$0xff] %v2448
      %2705 = vst [vmem:[%s145 + $0x4e0] sm:$0xff] %v2449
      %2706 = vst [vmem:[%s145 + $0x4e8] sm:$0xff] %v2450
      %2707 = vst [vmem:[%s145 + $0x4f0] sm:$0xff] %v2451
      %2708 = vst [vmem:[%s145 + $0x4f8] sm:$0xff] %v2452
      %2709 = vst [vmem:[%s145 + $0x500] sm:$0xff] %v2453
      %2710 = vst [vmem:[%s145 + $0x508] sm:$0xff] %v2454
      %2711 = vst [vmem:[%s145 + $0x510] sm:$0xff] %v2455
      %2712 = vst [vmem:[%s145 + $0x518] sm:$0xff] %v2456
      %2713 = vst [vmem:[%s145 + $0x520] sm:$0xff] %v2457
      %2714 = vst [vmem:[%s145 + $0x528] sm:$0xff] %v2458
      %2715 = vst [vmem:[%s145 + $0x530] sm:$0xff] %v2459
      %2716 = vst [vmem:[%s145 + $0x538] sm:$0xff] %v2460
      %2717 = vst [vmem:[%s145 + $0x540] sm:$0xff] %v2461
      %2718 = vst [vmem:[%s145 + $0x548] sm:$0xff] %v2462
      %2719 = vst [vmem:[%s145 + $0x550] sm:$0xff] %v2463
      %2720 = vst [vmem:[%s145 + $0x558] sm:$0xff] %v2464
      %2721 = vst [vmem:[%s145 + $0x560] sm:$0xff] %v2465
      %2722 = vst [vmem:[%s145 + $0x568] sm:$0xff] %v2466
      %2723 = vst [vmem:[%s145 + $0x570] sm:$0xff] %v2467
      %2724 = vst [vmem:[%s145 + $0x578] sm:$0xff] %v2468
      %2725 = vst [vmem:[%s145 + $0x580] sm:$0xff] %v2469
      %2726 = vst [vmem:[%s145 + $0x588] sm:$0xff] %v2470
      %2727 = vst [vmem:[%s145 + $0x590] sm:$0xff] %v2471
      %2728 = vst [vmem:[%s145 + $0x598] sm:$0xff] %v2472
      %2729 = vst [vmem:[%s145 + $0x5a0] sm:$0xff] %v2473
      %2730 = vst [vmem:[%s145 + $0x5a8] sm:$0xff] %v2474
      %2731 = vst [vmem:[%s145 + $0x5b0] sm:$0xff] %v2475
      %2732 = vst [vmem:[%s145 + $0x5b8] sm:$0xff] %v2476
      %2733 = vst [vmem:[%s145 + $0x5c0] sm:$0xff] %v2477
      %2734 = vst [vmem:[%s145 + $0x5c8] sm:$0xff] %v2478
      %2735 = vst [vmem:[%s145 + $0x5d0] sm:$0xff] %v2479
      %2736 = vst [vmem:[%s145 + $0x5d8] sm:$0xff] %v2480
      %2737 = vst [vmem:[%s145 + $0x5e0] sm:$0xff] %v2481
      %2738 = vst [vmem:[%s145 + $0x5e8] sm:$0xff] %v2482
      %2739 = vst [vmem:[%s145 + $0x5f0] sm:$0xff] %v2483
      %2740 = vst [vmem:[%s145 + $0x5f8] sm:$0xff] %v2484
      %2741 = vst [vmem:[%s145 + $0x600] sm:$0xff] %v2485
      %2742 = vst [vmem:[%s145 + $0x608] sm:$0xff] %v2486
      %2743 = vst [vmem:[%s145 + $0x610] sm:$0xff] %v2487
      %2744 = vst [vmem:[%s145 + $0x618] sm:$0xff] %v2488
      %2745 = vst [vmem:[%s145 + $0x620] sm:$0xff] %v2489
      %2746 = vst [vmem:[%s145 + $0x628] sm:$0xff] %v2490
      %2747 = vst [vmem:[%s145 + $0x630] sm:$0xff] %v2491
      %2748 = vst [vmem:[%s145 + $0x638] sm:$0xff] %v2492
      %2749 = vst [vmem:[%s145 + $0x640] sm:$0xff] %v2493
      %2750 = vst [vmem:[%s145 + $0x648] sm:$0xff] %v2494
      %2751 = vst [vmem:[%s145 + $0x650] sm:$0xff] %v2495
      %2752 = vst [vmem:[%s145 + $0x658] sm:$0xff] %v2496
      %2753 = vst [vmem:[%s145 + $0x660] sm:$0xff] %v2497
      %2754 = vst [vmem:[%s145 + $0x668] sm:$0xff] %v2498
      %2755 = vst [vmem:[%s145 + $0x670] sm:$0xff] %v2499
      %2756 = vst [vmem:[%s145 + $0x678] sm:$0xff] %v2500
      %2757 = vst [vmem:[%s145 + $0x680] sm:$0xff] %v2501
      %2758 = vst [vmem:[%s145 + $0x688] sm:$0xff] %v2502
      %2759 = vst [vmem:[%s145 + $0x690] sm:$0xff] %v2503
      %2760 = vst [vmem:[%s145 + $0x698] sm:$0xff] %v2504
      %2761 = vst [vmem:[%s145 + $0x6a0] sm:$0xff] %v2505
      %2762 = vst [vmem:[%s145 + $0x6a8] sm:$0xff] %v2506
      %2763 = vst [vmem:[%s145 + $0x6b0] sm:$0xff] %v2507
      %2764 = vst [vmem:[%s145 + $0x6b8] sm:$0xff] %v2508
      %2765 = vst [vmem:[%s145 + $0x6c0] sm:$0xff] %v2509
      %2766 = vst [vmem:[%s145 + $0x6c8] sm:$0xff] %v2510
      %2767 = vst [vmem:[%s145 + $0x6d0] sm:$0xff] %v2511
      %2768 = vst [vmem:[%s145 + $0x6d8] sm:$0xff] %v2512
      %2769 = vst [vmem:[%s145 + $0x6e0] sm:$0xff] %v2513
      %2770 = vst [vmem:[%s145 + $0x6e8] sm:$0xff] %v2514
      %2771 = vst [vmem:[%s145 + $0x6f0] sm:$0xff] %v2515
      %2772 = vst [vmem:[%s145 + $0x6f8] sm:$0xff] %v2516
      %2773 = vst [vmem:[%s145 + $0x700] sm:$0xff] %v2517
      %2774 = vst [vmem:[%s145 + $0x708] sm:$0xff] %v2518
      %2775 = vst [vmem:[%s145 + $0x710] sm:$0xff] %v2519
      %2776 = vst [vmem:[%s145 + $0x718] sm:$0xff] %v2520
      %2777 = vst [vmem:[%s145 + $0x720] sm:$0xff] %v2521
      %2778 = vst [vmem:[%s145 + $0x728] sm:$0xff] %v2522
      %2779 = vst [vmem:[%s145 + $0x730] sm:$0xff] %v2523
      %2780 = vst [vmem:[%s145 + $0x738] sm:$0xff] %v2524
      %2781 = vst [vmem:[%s145 + $0x740] sm:$0xff] %v2525
      %2782 = vst [vmem:[%s145 + $0x748] sm:$0xff] %v2526
      %2783 = vst [vmem:[%s145 + $0x750] sm:$0xff] %v2527
      %2784 = vst [vmem:[%s145 + $0x758] sm:$0xff] %v2528
      %2785 = vst [vmem:[%s145 + $0x760] sm:$0xff] %v2529
      %2786 = vst [vmem:[%s145 + $0x768] sm:$0xff] %v2530
      %2787 = vst [vmem:[%s145 + $0x770] sm:$0xff] %v2531
      %2788 = vst [vmem:[%s145 + $0x778] sm:$0xff] %v2532
      %2789 = vst [vmem:[%s145 + $0x780] sm:$0xff] %v2533
      %2790 = vst [vmem:[%s145 + $0x788] sm:$0xff] %v2534
      %2791 = vst [vmem:[%s145 + $0x790] sm:$0xff] %v2535
      %2792 = vst [vmem:[%s145 + $0x798] sm:$0xff] %v2536
      %2793 = vst [vmem:[%s145 + $0x7a0] sm:$0xff] %v2537
      %2794 = vst [vmem:[%s145 + $0x7a8] sm:$0xff] %v2538
      %2795 = vst [vmem:[%s145 + $0x7b0] sm:$0xff] %v2539
      %2796 = vst [vmem:[%s145 + $0x7b8] sm:$0xff] %v2540
      %2797 = vst [vmem:[%s145 + $0x7c0] sm:$0xff] %v2541
      %2798 = vst [vmem:[%s145 + $0x7c8] sm:$0xff] %v2542
      %2799 = vst [vmem:[%s145 + $0x7d0] sm:$0xff] %v2543
      %2800 = vst [vmem:[%s145 + $0x7d8] sm:$0xff] %v2544
      %2801 = vst [vmem:[%s145 + $0x7e0] sm:$0xff] %v2545
      %2802 = vst [vmem:[%s145 + $0x7e8] sm:$0xff] %v2546
      %2803 = vst [vmem:[%s145 + $0x7f0] sm:$0xff] %v2547
      %2804 = vst [vmem:[%s145 + $0x7f8] sm:$0xff] %v2548
      %s2805 = smul.u32 256, %s13
      %p2806 = scmp.lt.s32.totalorder %s2805, 1023
      %s2807 = scalar_select %p2806, %s2805, 1023
      %s2808 = smul.addr %s2807, 8
      %s2809 = scalar_lea.vmem %s2, %s2808
      // Predicated region
      $region29: #{_lambda_.17} parent=27 // pred_check
        %p2810 = pneg %p78
      $region30: #{_lambda_.17} parent=27 // pred_check_branch
        %2812 = sbr.rel (%p2810) target = $region32
      $region31: #{_lambda_.17} parent=27 // pred_region
        %s2813 = smul.u32 256, %s13
      $region32: #{_lambda_.17} parent=27 // pred_fallthru
        _
    $region28: #{_lambda_.17} parent=5 // pred_fallthru
      _
    %p2814 = scmp.le.s32.totalorder 2, %s8
    // Predicated region
    $region33: #{_lambda_.17} parent=5 // pred_check
      %p2815 = pneg %p2814
    $region34: #{_lambda_.17} parent=5 // pred_check_branch
      %2817 = sbr.rel (%p2815) target = $region36
    $region35: #{_lambda_.17} parent=5 // pred_region
      %s2818 = ssub.s32 %s8, 2
      // Predicated region
      $region37: #{_lambda_.17} parent=35 // pred_check
        %p2819 = pneg %p84
      $region38: #{_lambda_.17} parent=35 // pred_check_branch
        %2821 = sbr.rel (%p2819) target = $region40
      $region39: #{_lambda_.17} parent=35 // pred_region
        %s2822 = smul.u32 256, %s14
        %p2823 = scmp.lt.s32.totalorder %s2822, 1023
        %s2824 = scalar_select %p2823, %s2822, 1023
        %s2825 = smul.addr %s2824, 8
        %s2826 = scalar_lea.vmem %s2, %s2825
      $region40: #{_lambda_.17} parent=35 // pred_fallthru
        _
    $region36: #{_lambda_.17} parent=5 // pred_fallthru
      _
  $region6: #{_lambda_.17} parent=0 // loop_footer
    %s12 = sadd.s32 1, %s8
  $region7: #{_lambda_.17} parent=0 // loop_footer_branch
    %7 = sbr.rel target = $region3
  $region8: #{_lambda_.17} parent=0 // loop_exit
    _

</llo_original>
